<compile_context>
chip_gen: v5e
topology: v5e:2x2
jax: 0.10.0
libtpu: 0.0.40
codegen_flags: <defaults>
</compile_context>

<pallas_src>
import math
import functools

import jax
import jax.numpy as jnp
from jax import lax
from jax.experimental import pallas as pl
from jax.experimental.pallas import tpu as pltpu  # noqa: F401  (TPU backend)

NEG_INF = -1e30
LN_EPS = 1e-5

LAYER_KEYS = ('wqkv', 'bqkv', 'wo', 'bo', 'ln1w', 'ln1b', 'ln2w', 'ln2b',
              'w1', 'b1', 'w2', 'b2')


# --------------------------------------------------------------------------
# In-kernel building block: one post-norm nn.TransformerEncoderLayer
# --------------------------------------------------------------------------
def _encoder_layer(h, addm, wqkv, bqkv, wo, bo, ln1w, ln1b, ln2w, ln2b,
                   w1, b1, w2, b2, n_head):
    """One post-norm TransformerEncoderLayer on a (L, E) activation.

    `addm` is an additive attention mask broadcastable against (L, L).
    """
    L, E = h.shape
    hd = E // n_head
    scale = 1.0 / math.sqrt(hd)

    # --- self attention ---
    qkv = jnp.dot(h, wqkv, preferred_element_type=jnp.float32) + bqkv
    q, k, v = qkv[:, :E], qkv[:, E:2 * E], qkv[:, 2 * E:]

    heads = []
    for hh in range(n_head):
        sl = slice(hh * hd, (hh + 1) * hd)
        qh, kh, vh = q[:, sl], k[:, sl], v[:, sl]
        s = lax.dot_general(qh, kh, (((1,), (1,)), ((), ())),
                            preferred_element_type=jnp.float32) * scale
        s = s + addm
        s = s - jnp.max(s, axis=-1, keepdims=True)
        p = jnp.exp(s)
        p = p * pl.reciprocal(jnp.sum(p, axis=-1, keepdims=True), approx=True)
        heads.append(jnp.dot(p, vh, preferred_element_type=jnp.float32))
    attn = jnp.concatenate(heads, axis=-1)                              # (L, E)
    attn = jnp.dot(attn, wo, preferred_element_type=jnp.float32) + bo

    # --- residual + layernorm 1 ---
    h1 = h + attn
    m1 = jnp.mean(h1, axis=-1, keepdims=True)
    v1 = jnp.mean((h1 - m1) ** 2, axis=-1, keepdims=True)
    h1 = (h1 - m1) * lax.rsqrt(v1 + LN_EPS) * ln1w + ln1b

    # --- feed forward ---
    ff = jnp.dot(h1, w1, preferred_element_type=jnp.float32) + b1
    # TODO(synk): PyTorch F.gelu default is erf-exact; tanh-approx GELU used here.
    ff = jax.nn.gelu(ff, approximate=True)
    ff = jnp.dot(ff, w2, preferred_element_type=jnp.float32) + b2

    # --- residual + layernorm 2 ---
    h2 = h1 + ff
    m2 = jnp.mean(h2, axis=-1, keepdims=True)
    v2 = jnp.mean((h2 - m2) ** 2, axis=-1, keepdims=True)
    return (h2 - m2) * lax.rsqrt(v2 + LN_EPS) * ln2w + ln2b


# --------------------------------------------------------------------------
# Fused stream kernels (single block, no grid; weights resident in VMEM)
# --------------------------------------------------------------------------
def _encoder_stack_kernel(act_ref, seq_ref, keypad_ref, pe_ref,
                          tok_w_ref, proj_w_ref, proj_b_ref,
                          wqkv_ref, bqkv_ref, wo_ref, bo_ref,
                          ln1w_ref, ln1b_ref, ln2w_ref, ln2b_ref,
                          w1_ref, b1_ref, w2_ref, b2_ref,
                          o_ref, *, n_head, n_layer):
    """Full encoder stream: token + input projection, PE, n_layer layers.

    Writes the first two sequence positions (mu / logvar tokens) per batch.
    """
    E = proj_w_ref.shape[1]
    B = act_ref.shape[0]
    layer_refs = (wqkv_ref, bqkv_ref, wo_ref, bo_ref,
                  ln1w_ref, ln1b_ref, ln2w_ref, ln2b_ref,
                  w1_ref, b1_ref, w2_ref, b2_ref)

    for b in range(B):                                    # bs is tiny: unrolled
        # mu/std tokens: (1, 2E) -> two sequence rows of width E
        tok = jnp.dot(act_ref[pl.ds(b, 1)], tok_w_ref[...],
                      preferred_element_type=jnp.float32)
        tok2 = jnp.concatenate([tok[:, :E], tok[:, E:]], axis=0)        # (2, E)
        # input projection of the (history[, future]) sequence
        hseq = (jnp.dot(seq_ref[b], proj_w_ref[...],
                        preferred_element_type=jnp.float32) + proj_b_ref[...])
        h = jnp.concatenate([tok2, hseq], axis=0) + pe_ref[...]         # (L, E)
        # key-padding mask rebuilt in-kernel from the (1, L) pad vector
        addm = jnp.where(keypad_ref[pl.ds(b, 1)] > 0.5, NEG_INF, 0.0)   # (1, L)
        for l in range(n_layer):                          # weights stay in VMEM
            h = _encoder_layer(h, addm, *[r[l] for r in layer_refs],
                               n_head=n_head)
        o_ref[b] = h[:2, :]


def _decoder_stack_kernel(z_ref, x_ref, pe_ref,
                          in_w_ref, in_b_ref, out_w_ref, out_b_ref,
                          cond_w_ref, cond_b_ref,
                          wqkv_ref, bqkv_ref, wo_ref, bo_ref,
                          ln1w_ref, ln1b_ref, ln2w_ref, ln2b_ref,
                          w1_ref, b1_ref, w2_ref, b2_ref,
                          o_ref, *, n_head, n_layer, T, Tx):
    """Full decoder stream: CustomTransformerEncoder_v2 + in/out projections."""
    E = in_w_ref.shape[1]
    B = z_ref.shape[0]
    C = 1
    S = Tx + T + C
    layer_refs = (wqkv_ref, bqkv_ref, wo_ref, bo_ref,
                  ln1w_ref, ln1b_ref, ln2w_ref, ln2b_ref,
                  w1_ref, b1_ref, w2_ref, b2_ref)

    # Batch-invariant decoder attention mask, built in-kernel (no HBM tensor):
    # rows < Tx+C may attend to cols < Tx+C; later (future) rows are causal.
    row = lax.broadcasted_iota(jnp.int32, (S, S), 0)
    col = lax.broadcasted_iota(jnp.int32, (S, S), 1)
    allowed = jnp.logical_or(jnp.logical_and(row < Tx + C, col < Tx + C),
                             jnp.logical_and(row >= Tx + C, col <= row))
    addm = jnp.where(allowed, 0.0, NEG_INF)                             # (S, S)

    for b in range(B):
        xb = x_ref[b]                                                   # (Tx, nx)
        hx = (jnp.dot(xb, in_w_ref[...],
                      preferred_element_type=jnp.float32) + in_b_ref[...])
        # ht = hx[list(range(Tx)) + [Tx-1]*T]
        ht = jnp.concatenate(
            [hx, jnp.broadcast_to(hx[Tx - 1:Tx, :], (T, E))], axis=0) + pe_ref[...]
        zb = z_ref[pl.ds(b, 1)]                                         # (1, E)
        out = ht
        for l in range(n_layer):
            cond = (jnp.dot(zb, cond_w_ref[l],
                            preferred_element_type=jnp.float32) + cond_b_ref[l])
            hcat = jnp.concatenate([cond, out], axis=0)                 # (S, E)
            hcat = _encoder_layer(hcat, addm, *[r[l] for r in layer_refs],
                                  n_head=n_head)
            out = hcat[C:, :]                                           # (Tx+T, E)
        yp = (jnp.dot(out[Tx:, :], out_w_ref[...],
                      preferred_element_type=jnp.float32) + out_b_ref[...])
        o_ref[b] = yp + xb[Tx - 1:Tx, :]                                # (T, nx)


# --------------------------------------------------------------------------
# pallas_call wrappers (whole arrays as single VMEM blocks; no grid)
# --------------------------------------------------------------------------
def encoder_stream(act, seq, keypad, pe_slice, tok_w, proj_w, proj_b, stack,
                   *, n_head, n_layer):
    bs = act.shape[0]
    E = proj_w.shape[1]
    kernel = functools.partial(_encoder_stack_kernel,
                               n_head=n_head, n_layer=n_layer)
    return pl.pallas_call(
        kernel,
        out_shape=jax.ShapeDtypeStruct((bs, 2, E), jnp.float32),
    )(act, seq, keypad, pe_slice, tok_w, proj_w, proj_b,
      *[stack[k] for k in LAYER_KEYS])


def decoder_stream(z, x_bm, pe_slice, in_w, in_b, out_w, out_b,
                   cond_w, cond_b, stack, *, n_head, n_layer, T, Tx):
    bs = z.shape[0]
    nx = out_w.shape[1]
    kernel = functools.partial(_decoder_stack_kernel,
                               n_head=n_head, n_layer=n_layer, T=T, Tx=Tx)
    return pl.pallas_call(
        kernel,
        out_shape=jax.ShapeDtypeStruct((bs, T, nx), jnp.float32),
    )(z, x_bm, pe_slice, in_w, in_b, out_w, out_b, cond_w, cond_b,
      *[stack[k] for k in LAYER_KEYS])


# --------------------------------------------------------------------------
# Parameters / positional encoding (deterministic synthetic init)
# --------------------------------------------------------------------------
def init_layer_params(key, E, Dff):
    ks = jax.random.split(key, 4)
    s = 0.05
    return dict(
        wqkv=jax.random.normal(ks[0], (E, 3 * E), jnp.float32) * s,
        bqkv=jnp.zeros((1, 3 * E), jnp.float32),
        wo=jax.random.normal(ks[1], (E, E), jnp.float32) * s,
        bo=jnp.zeros((1, E), jnp.float32),
        ln1w=jnp.ones((1, E), jnp.float32), ln1b=jnp.zeros((1, E), jnp.float32),
        ln2w=jnp.ones((1, E), jnp.float32), ln2b=jnp.zeros((1, E), jnp.float32),
        w1=jax.random.normal(ks[2], (E, Dff), jnp.float32) * s,
        b1=jnp.zeros((1, Dff), jnp.float32),
        w2=jax.random.normal(ks[3], (Dff, E), jnp.float32) * s,
        b2=jnp.zeros((1, E), jnp.float32),
    )


def stack_layers(layer_list):
    # Stack per-layer weights along a leading (n_layer, ...) axis (done once,
    # outside jit) so each fused kernel gets one resident weight slab.
    return {k: jnp.stack([ld[k] for ld in layer_list]) for k in LAYER_KEYS}


def init_params(key, nx, E, Dff, n_action, n_layer):
    counter = [0]

    def nk():
        counter[0] += 1
        return jax.random.fold_in(key, counter[0])

    s = 0.05
    return dict(
        mu_std_token_w=jax.random.normal(nk(), (n_action, 2 * E)) * s,     # no bias
        p_mu_std_token_w=jax.random.normal(nk(), (n_action, 2 * E)) * s,   # no bias
        enc_lin_proj_w=jax.random.normal(nk(), (nx, E)) * s,
        enc_lin_proj_b=jax.random.normal(nk(), (1, E)) * s,
        p_enc_lin_proj_w=jax.random.normal(nk(), (nx, E)) * s,
        p_enc_lin_proj_b=jax.random.normal(nk(), (1, E)) * s,
        dec_lin_proj_in_w=jax.random.normal(nk(), (nx, E)) * s,
        dec_lin_proj_in_b=jax.random.normal(nk(), (1, E)) * s,
        dec_lin_proj_out_w=jax.random.normal(nk(), (E, nx)) * s,
        dec_lin_proj_out_b=jax.random.normal(nk(), (1, nx)) * s,
        enc_stack=stack_layers([init_layer_params(nk(), E, Dff)
                                for _ in range(n_layer)]),
        p_enc_stack=stack_layers([init_layer_params(nk(), E, Dff)
                                  for _ in range(n_layer)]),
        dec_stack=stack_layers([init_layer_params(nk(), E, Dff)
                                for _ in range(n_layer)]),
        dec_cond_w=jnp.stack([jax.random.normal(nk(), (E, E)) * s
                              for _ in range(n_layer)]),
        dec_cond_b=jnp.stack([jax.random.normal(nk(), (1, E)) * s
                              for _ in range(n_layer)]),
    )


def positional_encoding_table(max_len, d_model):
    position = jnp.arange(max_len, dtype=jnp.float32)[:, None]
    div_term = jnp.exp(jnp.arange(0, d_model, 2, dtype=jnp.float32)
                       * (-math.log(10000.0) / d_model))
    pe = jnp.zeros((max_len, d_model), jnp.float32)
    pe = pe.at[:, 0::2].set(jnp.sin(position * div_term))
    pe = pe.at[:, 1::2].set(jnp.cos(position * div_term))
    return pe


# --------------------------------------------------------------------------
# Forward pass (mirrors Tranformer_VAE_v3_2.forward, eval mode)
# --------------------------------------------------------------------------
def transformer_vae_forward(params, x_sbn, y_sbn, act, fn_mask,
                            *, n_head, n_layer, pe):
    Tx, bs, nx = x_sbn.shape
    Ty = y_sbn.shape[0]
    x_bm = jnp.transpose(x_sbn, (1, 0, 2))          # (bs, Tx, nx)
    y_bm = jnp.transpose(y_sbn, (1, 0, 2))          # (bs, Ty, nx)

    # ----------------- encode: posterior (one fused kernel) -----------------
    ycat = jnp.concatenate([x_bm, y_bm], axis=1)                         # (bs, Tx+Ty, nx)
    L1 = 2 + Tx + Ty
    keypad = jnp.concatenate([jnp.zeros((bs, 2 + Tx), jnp.float32),
                              (fn_mask == 0).astype(jnp.float32)], axis=1)
    post = encoder_stream(act, ycat, keypad, pe[:L1],
                          params['mu_std_token_w'],
                          params['enc_lin_proj_w'], params['enc_lin_proj_b'],
                          params['enc_stack'],
                          n_head=n_head, n_layer=n_layer)
    mu, logvar = post[:, 0, :], post[:, 1, :]

    # ----------------- encode: prior (one fused kernel) -----------------
    L2 = 2 + Tx
    zero_pad = jnp.zeros((bs, L2), jnp.float32)
    prior = encoder_stream(act, x_bm, zero_pad, pe[:L2],
                           params['p_mu_std_token_w'],
                           params['p_enc_lin_proj_w'], params['p_enc_lin_proj_b'],
                           params['p_enc_stack'],
                           n_head=n_head, n_layer=n_layer)
    pmu, plogvar = prior[:, 0, :], prior[:, 1, :]

    # ----------------- decode (eval: z = mu, dec_act=False) -----------------
    z = mu
    T = Ty
    yp_bm = decoder_stream(z, x_bm, pe[:Tx + T],
                           params['dec_lin_proj_in_w'], params['dec_lin_proj_in_b'],
                           params['dec_lin_proj_out_w'], params['dec_lin_proj_out_b'],
                           params['dec_cond_w'], params['dec_cond_b'],
                           params['dec_stack'],
                           n_head=n_head, n_layer=n_layer, T=T, Tx=Tx)
    yp = jnp.transpose(yp_bm, (1, 0, 2))                                 # (T, bs, nx)
    return yp, mu, logvar, pmu, plogvar


# --------------------------------------------------------------------------
# Main
# --------------------------------------------------------------------------
if __name__ == "__main__":
    nx, ny, horizon = 16, 16, 8
    specs = dict(n_head=2, n_layer=2, nh_lin=64, nh_emb=32, n_action=6)
    E, Dff = specs['nh_emb'], specs['nh_lin']
    n_head, n_layer, n_action = specs['n_head'], specs['n_layer'], specs['n_action']
    Tx, Ty, bs = 4, 8, 2

    key = jax.random.PRNGKey(0)
    kx, ky, kp = jax.random.split(key, 3)
    x = jax.random.normal(kx, (Tx, bs, nx), jnp.float32)       # history  (seq-major)
    y = jax.random.normal(ky, (Ty, bs, nx), jnp.float32)       # future   (seq-major)
    act = jax.nn.one_hot(jnp.array([1, 3]), n_action, dtype=jnp.float32)   # (bs, n_action)
    fn_mask = jnp.ones((bs, Ty), jnp.float32).at[1, -2:].set(0.0)          # (bs, Ty)

    params = init_params(kp, nx, E, Dff, n_action, n_layer)
    pe = positional_encoding_table(64, E)

    fwd = jax.jit(functools.partial(transformer_vae_forward,
                                    n_head=n_head, n_layer=n_layer, pe=pe))
    yp, mu, logvar, pmu, plogvar = fwd(params, x, y, act, fn_mask)
    jax.block_until_ready((yp, mu, logvar, pmu, plogvar))

    assert yp.shape == (Ty, bs, nx)
    assert mu.shape == (bs, E) and logvar.shape == (bs, E)
    assert pmu.shape == (bs, E) and plogvar.shape == (bs, E)
    assert bool(jnp.all(jnp.isfinite(yp)))
    assert bool(jnp.all(jnp.isfinite(mu))) and bool(jnp.all(jnp.isfinite(pmu)))
    print("KERNEL_OK")
</pallas_src>

<mosaic_0001>
module attributes {stable_mosaic.version = 11 : i64} {
  func.func @_decoder_stack_kernel(%arg0: memref<2x32xf32, #tpu.memory_space<vmem>>, %arg1: memref<2x4x16xf32, #tpu.memory_space<vmem>>, %arg2: memref<12x32xf32, #tpu.memory_space<vmem>>, %arg3: memref<16x32xf32, #tpu.memory_space<vmem>>, %arg4: memref<1x32xf32, #tpu.memory_space<vmem>>, %arg5: memref<32x16xf32, #tpu.memory_space<vmem>>, %arg6: memref<1x16xf32, #tpu.memory_space<vmem>>, %arg7: memref<2x32x32xf32, #tpu.memory_space<vmem>>, %arg8: memref<2x1x32xf32, #tpu.memory_space<vmem>>, %arg9: memref<2x32x96xf32, #tpu.memory_space<vmem>>, %arg10: memref<2x1x96xf32, #tpu.memory_space<vmem>>, %arg11: memref<2x32x32xf32, #tpu.memory_space<vmem>>, %arg12: memref<2x1x32xf32, #tpu.memory_space<vmem>>, %arg13: memref<2x1x32xf32, #tpu.memory_space<vmem>>, %arg14: memref<2x1x32xf32, #tpu.memory_space<vmem>>, %arg15: memref<2x1x32xf32, #tpu.memory_space<vmem>>, %arg16: memref<2x1x32xf32, #tpu.memory_space<vmem>>, %arg17: memref<2x32x64xf32, #tpu.memory_space<vmem>>, %arg18: memref<2x1x64xf32, #tpu.memory_space<vmem>>, %arg19: memref<2x64x32xf32, #tpu.memory_space<vmem>>, %arg20: memref<2x1x32xf32, #tpu.memory_space<vmem>>, %arg21: memref<2x8x16xf32, #tpu.memory_space<vmem>>) attributes {dimension_semantics = [], scalar_prefetch = 0 : i64, scratch_operands = 0 : i64, tpu.core_type = #tpu.core_type<tc>} {
    %0 = tpu.iota {dimensions = array<i32: 0>} : vector<13x13xi32>
    %1 = tpu.iota {dimensions = array<i32: 1>} : vector<13x13xi32>
    %c5_i32 = arith.constant 5 : i32
    %2 = vector.broadcast %c5_i32 : i32 to vector<13x13xi32>
    %3 = arith.cmpi slt, %0, %2 : vector<13x13xi32>
    %c5_i32_0 = arith.constant 5 : i32
    %4 = vector.broadcast %c5_i32_0 : i32 to vector<13x13xi32>
    %5 = arith.cmpi slt, %1, %4 : vector<13x13xi32>
    %6 = arith.andi %3, %5 : vector<13x13xi1>
    %c5_i32_1 = arith.constant 5 : i32
    %7 = vector.broadcast %c5_i32_1 : i32 to vector<13x13xi32>
    %8 = arith.cmpi sge, %0, %7 : vector<13x13xi32>
    %9 = arith.cmpi sle, %1, %0 : vector<13x13xi32>
    %10 = arith.andi %8, %9 : vector<13x13xi1>
    %11 = arith.ori %6, %10 : vector<13x13xi1>
    %cst = arith.constant 0.000000e+00 : f32
    %cst_2 = arith.constant -1.000000e+30 : f32
    %12 = vector.broadcast %cst : f32 to vector<13x13xf32>
    %13 = vector.broadcast %cst_2 : f32 to vector<13x13xf32>
    %14 = arith.select %11, %12, %13 : vector<13x13xi1>, vector<13x13xf32>
    %c0 = arith.constant 0 : index
    %c0_3 = arith.constant 0 : index
    %c0_4 = arith.constant 0 : index
    %15 = vector.load %arg1[%c0, %c0_3, %c0_4] : memref<2x4x16xf32, #tpu.memory_space<vmem>>, vector<1x4x16xf32>
    %16 = vector.shape_cast %15 : vector<1x4x16xf32> to vector<4x16xf32>
    %c0_5 = arith.constant 0 : index
    %c0_6 = arith.constant 0 : index
    %17 = vector.load %arg3[%c0_5, %c0_6] : memref<16x32xf32, #tpu.memory_space<vmem>>, vector<16x32xf32>
    %cst_7 = arith.constant dense<0.000000e+00> : vector<4x32xf32>
    %18 = tpu.matmul %16, %17, %cst_7 {dimension_numbers = #tpu.dot_dimension_numbers<[1], [0], [0], [1], [0, 0, 1, 1], [], []>} : vector<4x16xf32>, vector<16x32xf32>, vector<4x32xf32> -> vector<4x32xf32>
    %c0_8 = arith.constant 0 : index
    %c0_9 = arith.constant 0 : index
    %19 = vector.load %arg4[%c0_8, %c0_9] : memref<1x32xf32, #tpu.memory_space<vmem>>, vector<1x32xf32>
    %20 = vector.broadcast %19 : vector<1x32xf32> to vector<4x32xf32>
    %21 = arith.addf %18, %20 : vector<4x32xf32>
    %22 = vector.extract_strided_slice %21 {offsets = [3, 0], sizes = [1, 32], strides = [1, 1]} : vector<4x32xf32> to vector<1x32xf32>
    %23 = vector.shape_cast %22 : vector<1x32xf32> to vector<1x32xf32>
    %24 = vector.broadcast %23 : vector<1x32xf32> to vector<8x32xf32>
    %25 = tpu.concatenate %21, %24 in 0 : vector<4x32xf32>, vector<8x32xf32> -> vector<12x32xf32>
    %c0_10 = arith.constant 0 : index
    %c0_11 = arith.constant 0 : index
    %26 = vector.load %arg2[%c0_10, %c0_11] : memref<12x32xf32, #tpu.memory_space<vmem>>, vector<12x32xf32>
    %27 = arith.addf %25, %26 : vector<12x32xf32>
    %c0_12 = arith.constant 0 : index
    %c0_13 = arith.constant 0 : index
    %28 = vector.load %arg0[%c0_12, %c0_13] : memref<2x32xf32, #tpu.memory_space<vmem>>, vector<1x32xf32>
    %c0_14 = arith.constant 0 : index
    %c0_15 = arith.constant 0 : index
    %c0_16 = arith.constant 0 : index
    %29 = vector.load %arg7[%c0_14, %c0_15, %c0_16] : memref<2x32x32xf32, #tpu.memory_space<vmem>>, vector<1x32x32xf32>
    %30 = vector.shape_cast %29 : vector<1x32x32xf32> to vector<32x32xf32>
    %cst_17 = arith.constant dense<0.000000e+00> : vector<1x32xf32>
    %31 = tpu.matmul %28, %30, %cst_17 {dimension_numbers = #tpu.dot_dimension_numbers<[1], [0], [0], [1], [0, 0, 1, 1], [], []>} : vector<1x32xf32>, vector<32x32xf32>, vector<1x32xf32> -> vector<1x32xf32>
    %c0_18 = arith.constant 0 : index
    %c0_19 = arith.constant 0 : index
    %c0_20 = arith.constant 0 : index
    %32 = vector.load %arg8[%c0_18, %c0_19, %c0_20] : memref<2x1x32xf32, #tpu.memory_space<vmem>>, vector<1x1x32xf32>
    %33 = vector.shape_cast %32 : vector<1x1x32xf32> to vector<1x32xf32>
    %34 = arith.addf %31, %33 : vector<1x32xf32>
    %35 = tpu.concatenate %34, %27 in 0 : vector<1x32xf32>, vector<12x32xf32> -> vector<13x32xf32>
    %c0_21 = arith.constant 0 : index
    %c0_22 = arith.constant 0 : index
    %c0_23 = arith.constant 0 : index
    %36 = vector.load %arg9[%c0_21, %c0_22, %c0_23] : memref<2x32x96xf32, #tpu.memory_space<vmem>>, vector<1x32x96xf32>
    %37 = vector.shape_cast %36 : vector<1x32x96xf32> to vector<32x96xf32>
    %c0_24 = arith.constant 0 : index
    %c0_25 = arith.constant 0 : index
    %c0_26 = arith.constant 0 : index
    %38 = vector.load %arg10[%c0_24, %c0_25, %c0_26] : memref<2x1x96xf32, #tpu.memory_space<vmem>>, vector<1x1x96xf32>
    %39 = vector.shape_cast %38 : vector<1x1x96xf32> to vector<1x96xf32>
    %c0_27 = arith.constant 0 : index
    %c0_28 = arith.constant 0 : index
    %c0_29 = arith.constant 0 : index
    %40 = vector.load %arg11[%c0_27, %c0_28, %c0_29] : memref<2x32x32xf32, #tpu.memory_space<vmem>>, vector<1x32x32xf32>
    %41 = vector.shape_cast %40 : vector<1x32x32xf32> to vector<32x32xf32>
    %c0_30 = arith.constant 0 : index
    %c0_31 = arith.constant 0 : index
    %c0_32 = arith.constant 0 : index
    %42 = vector.load %arg12[%c0_30, %c0_31, %c0_32] : memref<2x1x32xf32, #tpu.memory_space<vmem>>, vector<1x1x32xf32>
    %43 = vector.shape_cast %42 : vector<1x1x32xf32> to vector<1x32xf32>
    %c0_33 = arith.constant 0 : index
    %c0_34 = arith.constant 0 : index
    %c0_35 = arith.constant 0 : index
    %44 = vector.load %arg13[%c0_33, %c0_34, %c0_35] : memref<2x1x32xf32, #tpu.memory_space<vmem>>, vector<1x1x32xf32>
    %45 = vector.shape_cast %44 : vector<1x1x32xf32> to vector<1x32xf32>
    %c0_36 = arith.constant 0 : index
    %c0_37 = arith.constant 0 : index
    %c0_38 = arith.constant 0 : index
    %46 = vector.load %arg14[%c0_36, %c0_37, %c0_38] : memref<2x1x32xf32, #tpu.memory_space<vmem>>, vector<1x1x32xf32>
    %47 = vector.shape_cast %46 : vector<1x1x32xf32> to vector<1x32xf32>
    %c0_39 = arith.constant 0 : index
    %c0_40 = arith.constant 0 : index
    %c0_41 = arith.constant 0 : index
    %48 = vector.load %arg15[%c0_39, %c0_40, %c0_41] : memref<2x1x32xf32, #tpu.memory_space<vmem>>, vector<1x1x32xf32>
    %49 = vector.shape_cast %48 : vector<1x1x32xf32> to vector<1x32xf32>
    %c0_42 = arith.constant 0 : index
    %c0_43 = arith.constant 0 : index
    %c0_44 = arith.constant 0 : index
    %50 = vector.load %arg16[%c0_42, %c0_43, %c0_44] : memref<2x1x32xf32, #tpu.memory_space<vmem>>, vector<1x1x32xf32>
    %51 = vector.shape_cast %50 : vector<1x1x32xf32> to vector<1x32xf32>
    %c0_45 = arith.constant 0 : index
    %c0_46 = arith.constant 0 : index
    %c0_47 = arith.constant 0 : index
    %52 = vector.load %arg17[%c0_45, %c0_46, %c0_47] : memref<2x32x64xf32, #tpu.memory_space<vmem>>, vector<1x32x64xf32>
    %53 = vector.shape_cast %52 : vector<1x32x64xf32> to vector<32x64xf32>
    %c0_48 = arith.constant 0 : index
    %c0_49 = arith.constant 0 : index
    %c0_50 = arith.constant 0 : index
    %54 = vector.load %arg18[%c0_48, %c0_49, %c0_50] : memref<2x1x64xf32, #tpu.memory_space<vmem>>, vector<1x1x64xf32>
    %55 = vector.shape_cast %54 : vector<1x1x64xf32> to vector<1x64xf32>
    %c0_51 = arith.constant 0 : index
    %c0_52 = arith.constant 0 : index
    %c0_53 = arith.constant 0 : index
    %56 = vector.load %arg19[%c0_51, %c0_52, %c0_53] : memref<2x64x32xf32, #tpu.memory_space<vmem>>, vector<1x64x32xf32>
    %57 = vector.shape_cast %56 : vector<1x64x32xf32> to vector<64x32xf32>
    %c0_54 = arith.constant 0 : index
    %c0_55 = arith.constant 0 : index
    %c0_56 = arith.constant 0 : index
    %58 = vector.load %arg20[%c0_54, %c0_55, %c0_56] : memref<2x1x32xf32, #tpu.memory_space<vmem>>, vector<1x1x32xf32>
    %59 = vector.shape_cast %58 : vector<1x1x32xf32> to vector<1x32xf32>
    %cst_57 = arith.constant dense<0.000000e+00> : vector<13x96xf32>
    %60 = tpu.matmul %35, %37, %cst_57 {dimension_numbers = #tpu.dot_dimension_numbers<[1], [0], [0], [1], [0, 0, 1, 1], [], []>} : vector<13x32xf32>, vector<32x96xf32>, vector<13x96xf32> -> vector<13x96xf32>
    %61 = vector.broadcast %39 : vector<1x96xf32> to vector<13x96xf32>
    %62 = arith.addf %60, %61 : vector<13x96xf32>
    %63 = vector.extract_strided_slice %62 {offsets = [0, 0], sizes = [13, 32], strides = [1, 1]} : vector<13x96xf32> to vector<13x32xf32>
    %64 = vector.extract_strided_slice %62 {offsets = [0, 32], sizes = [13, 32], strides = [1, 1]} : vector<13x96xf32> to vector<13x32xf32>
    %65 = vector.extract_strided_slice %62 {offsets = [0, 64], sizes = [13, 32], strides = [1, 1]} : vector<13x96xf32> to vector<13x32xf32>
    %66 = vector.extract_strided_slice %63 {offsets = [0, 0], sizes = [13, 16], strides = [1, 1]} : vector<13x32xf32> to vector<13x16xf32>
    %67 = vector.extract_strided_slice %64 {offsets = [0, 0], sizes = [13, 16], strides = [1, 1]} : vector<13x32xf32> to vector<13x16xf32>
    %68 = vector.extract_strided_slice %65 {offsets = [0, 0], sizes = [13, 16], strides = [1, 1]} : vector<13x32xf32> to vector<13x16xf32>
    %cst_58 = arith.constant dense<0.000000e+00> : vector<13x13xf32>
    %69 = tpu.matmul %66, %67, %cst_58 {dimension_numbers = #tpu.dot_dimension_numbers<[1], [1], [0], [0], [0, 0, 1, 0], [], []>} : vector<13x16xf32>, vector<13x16xf32>, vector<13x13xf32> -> vector<13x13xf32>
    %cst_59 = arith.constant 2.500000e-01 : f32
    %70 = vector.broadcast %cst_59 : f32 to vector<13x13xf32>
    %71 = arith.mulf %69, %70 : vector<13x13xf32>
    %72 = arith.addf %71, %14 : vector<13x13xf32>
    %cst_60 = arith.constant dense<0xFF800000> : vector<13xf32>
    %73 = vector.multi_reduction <maximumf>, %72, %cst_60 [1] : vector<13x13xf32> to vector<13xf32>
    %74 = vector.shape_cast %73 : vector<13xf32> to vector<13x1xf32>
    %75 = vector.broadcast %74 : vector<13x1xf32> to vector<13x13xf32>
    %76 = arith.subf %72, %75 : vector<13x13xf32>
    %77 = math.exp %76 : vector<13x13xf32>
    %cst_61 = arith.constant dense<0.000000e+00> : vector<13xf32>
    %78 = vector.multi_reduction <add>, %77, %cst_61 [1] : vector<13x13xf32> to vector<13xf32>
    %79 = vector.shape_cast %78 : vector<13xf32> to vector<13x1xf32>
    %80 = tpu.reciprocal %79 {approx = true} : vector<13x1xf32> -> vector<13x1xf32>
    %81 = vector.broadcast %80 : vector<13x1xf32> to vector<13x13xf32>
    %82 = arith.mulf %77, %81 : vector<13x13xf32>
    %cst_62 = arith.constant dense<0.000000e+00> : vector<13x16xf32>
    %83 = tpu.matmul %82, %68, %cst_62 {dimension_numbers = #tpu.dot_dimension_numbers<[1], [0], [0], [1], [0, 0, 1, 1], [], []>} : vector<13x13xf32>, vector<13x16xf32>, vector<13x16xf32> -> vector<13x16xf32>
    %84 = vector.extract_strided_slice %63 {offsets = [0, 16], sizes = [13, 16], strides = [1, 1]} : vector<13x32xf32> to vector<13x16xf32>
    %85 = vector.extract_strided_slice %64 {offsets = [0, 16], sizes = [13, 16], strides = [1, 1]} : vector<13x32xf32> to vector<13x16xf32>
    %86 = vector.extract_strided_slice %65 {offsets = [0, 16], sizes = [13, 16], strides = [1, 1]} : vector<13x32xf32> to vector<13x16xf32>
    %cst_63 = arith.constant dense<0.000000e+00> : vector<13x13xf32>
    %87 = tpu.matmul %84, %85, %cst_63 {dimension_numbers = #tpu.dot_dimension_numbers<[1], [1], [0], [0], [0, 0, 1, 0], [], []>} : vector<13x16xf32>, vector<13x16xf32>, vector<13x13xf32> -> vector<13x13xf32>
    %cst_64 = arith.constant 2.500000e-01 : f32
    %88 = vector.broadcast %cst_64 : f32 to vector<13x13xf32>
    %89 = arith.mulf %87, %88 : vector<13x13xf32>
    %90 = arith.addf %89, %14 : vector<13x13xf32>
    %cst_65 = arith.constant dense<0xFF800000> : vector<13xf32>
    %91 = vector.multi_reduction <maximumf>, %90, %cst_65 [1] : vector<13x13xf32> to vector<13xf32>
    %92 = vector.shape_cast %91 : vector<13xf32> to vector<13x1xf32>
    %93 = vector.broadcast %92 : vector<13x1xf32> to vector<13x13xf32>
    %94 = arith.subf %90, %93 : vector<13x13xf32>
    %95 = math.exp %94 : vector<13x13xf32>
    %cst_66 = arith.constant dense<0.000000e+00> : vector<13xf32>
    %96 = vector.multi_reduction <add>, %95, %cst_66 [1] : vector<13x13xf32> to vector<13xf32>
    %97 = vector.shape_cast %96 : vector<13xf32> to vector<13x1xf32>
    %98 = tpu.reciprocal %97 {approx = true} : vector<13x1xf32> -> vector<13x1xf32>
    %99 = vector.broadcast %98 : vector<13x1xf32> to vector<13x13xf32>
    %100 = arith.mulf %95, %99 : vector<13x13xf32>
    %cst_67 = arith.constant dense<0.000000e+00> : vector<13x16xf32>
    %101 = tpu.matmul %100, %86, %cst_67 {dimension_numbers = #tpu.dot_dimension_numbers<[1], [0], [0], [1], [0, 0, 1, 1], [], []>} : vector<13x13xf32>, vector<13x16xf32>, vector<13x16xf32> -> vector<13x16xf32>
    %102 = tpu.concatenate %83, %101 in 1 : vector<13x16xf32>, vector<13x16xf32> -> vector<13x32xf32>
    %cst_68 = arith.constant dense<0.000000e+00> : vector<13x32xf32>
    %103 = tpu.matmul %102, %41, %cst_68 {dimension_numbers = #tpu.dot_dimension_numbers<[1], [0], [0], [1], [0, 0, 1, 1], [], []>} : vector<13x32xf32>, vector<32x32xf32>, vector<13x32xf32> -> vector<13x32xf32>
    %104 = vector.broadcast %43 : vector<1x32xf32> to vector<13x32xf32>
    %105 = arith.addf %103, %104 : vector<13x32xf32>
    %106 = arith.addf %35, %105 : vector<13x32xf32>
    %cst_69 = arith.constant dense<0.000000e+00> : vector<13xf32>
    %107 = vector.multi_reduction <add>, %106, %cst_69 [1] : vector<13x32xf32> to vector<13xf32>
    %108 = vector.shape_cast %107 : vector<13xf32> to vector<13x1xf32>
    %cst_70 = arith.constant 3.200000e+01 : f32
    %109 = vector.broadcast %cst_70 : f32 to vector<13x1xf32>
    %110 = arith.divf %108, %109 : vector<13x1xf32>
    %111 = vector.broadcast %110 : vector<13x1xf32> to vector<13x32xf32>
    %112 = arith.subf %106, %111 : vector<13x32xf32>
    %113 = arith.mulf %112, %112 : vector<13x32xf32>
    %cst_71 = arith.constant dense<0.000000e+00> : vector<13xf32>
    %114 = vector.multi_reduction <add>, %113, %cst_71 [1] : vector<13x32xf32> to vector<13xf32>
    %115 = vector.shape_cast %114 : vector<13xf32> to vector<13x1xf32>
    %cst_72 = arith.constant 3.200000e+01 : f32
    %116 = vector.broadcast %cst_72 : f32 to vector<13x1xf32>
    %117 = arith.divf %115, %116 : vector<13x1xf32>
    %118 = vector.broadcast %110 : vector<13x1xf32> to vector<13x32xf32>
    %119 = arith.subf %106, %118 : vector<13x32xf32>
    %cst_73 = arith.constant 9.99999974E-6 : f32
    %120 = vector.broadcast %cst_73 : f32 to vector<13x1xf32>
    %121 = arith.addf %117, %120 : vector<13x1xf32>
    %122 = math.rsqrt %121 : vector<13x1xf32>
    %123 = vector.broadcast %122 : vector<13x1xf32> to vector<13x32xf32>
    %124 = arith.mulf %119, %123 : vector<13x32xf32>
    %125 = vector.broadcast %45 : vector<1x32xf32> to vector<13x32xf32>
    %126 = arith.mulf %124, %125 : vector<13x32xf32>
    %127 = vector.broadcast %47 : vector<1x32xf32> to vector<13x32xf32>
    %128 = arith.addf %126, %127 : vector<13x32xf32>
    %cst_74 = arith.constant dense<0.000000e+00> : vector<13x64xf32>
    %129 = tpu.matmul %128, %53, %cst_74 {dimension_numbers = #tpu.dot_dimension_numbers<[1], [0], [0], [1], [0, 0, 1, 1], [], []>} : vector<13x32xf32>, vector<32x64xf32>, vector<13x64xf32> -> vector<13x64xf32>
    %130 = vector.broadcast %55 : vector<1x64xf32> to vector<13x64xf32>
    %131 = arith.addf %129, %130 : vector<13x64xf32>
    %132 = arith.mulf %131, %131 : vector<13x64xf32>
    %133 = arith.mulf %131, %132 : vector<13x64xf32>
    %cst_75 = arith.constant 4.471500e-02 : f32
    %134 = vector.broadcast %cst_75 : f32 to vector<13x64xf32>
    %135 = arith.mulf %134, %133 : vector<13x64xf32>
    %136 = arith.addf %131, %135 : vector<13x64xf32>
    %cst_76 = arith.constant 0.797884583 : f32
    %137 = vector.broadcast %cst_76 : f32 to vector<13x64xf32>
    %138 = arith.mulf %137, %136 : vector<13x64xf32>
    %139 = math.tanh %138 : vector<13x64xf32>
    %cst_77 = arith.constant 1.000000e+00 : f32
    %140 = vector.broadcast %cst_77 : f32 to vector<13x64xf32>
    %141 = arith.addf %140, %139 : vector<13x64xf32>
    %cst_78 = arith.constant 5.000000e-01 : f32
    %142 = vector.broadcast %cst_78 : f32 to vector<13x64xf32>
    %143 = arith.mulf %142, %141 : vector<13x64xf32>
    %144 = arith.mulf %131, %143 : vector<13x64xf32>
    %cst_79 = arith.constant dense<0.000000e+00> : vector<13x32xf32>
    %145 = tpu.matmul %144, %57, %cst_79 {dimension_numbers = #tpu.dot_dimension_numbers<[1], [0], [0], [1], [0, 0, 1, 1], [], []>} : vector<13x64xf32>, vector<64x32xf32>, vector<13x32xf32> -> vector<13x32xf32>
    %146 = vector.broadcast %59 : vector<1x32xf32> to vector<13x32xf32>
    %147 = arith.addf %145, %146 : vector<13x32xf32>
    %148 = arith.addf %128, %147 : vector<13x32xf32>
    %cst_80 = arith.constant dense<0.000000e+00> : vector<13xf32>
    %149 = vector.multi_reduction <add>, %148, %cst_80 [1] : vector<13x32xf32> to vector<13xf32>
    %150 = vector.shape_cast %149 : vector<13xf32> to vector<13x1xf32>
    %cst_81 = arith.constant 3.200000e+01 : f32
    %151 = vector.broadcast %cst_81 : f32 to vector<13x1xf32>
    %152 = arith.divf %150, %151 : vector<13x1xf32>
    %153 = vector.broadcast %152 : vector<13x1xf32> to vector<13x32xf32>
    %154 = arith.subf %148, %153 : vector<13x32xf32>
    %155 = arith.mulf %154, %154 : vector<13x32xf32>
    %cst_82 = arith.constant dense<0.000000e+00> : vector<13xf32>
    %156 = vector.multi_reduction <add>, %155, %cst_82 [1] : vector<13x32xf32> to vector<13xf32>
    %157 = vector.shape_cast %156 : vector<13xf32> to vector<13x1xf32>
    %cst_83 = arith.constant 3.200000e+01 : f32
    %158 = vector.broadcast %cst_83 : f32 to vector<13x1xf32>
    %159 = arith.divf %157, %158 : vector<13x1xf32>
    %160 = vector.broadcast %152 : vector<13x1xf32> to vector<13x32xf32>
    %161 = arith.subf %148, %160 : vector<13x32xf32>
    %cst_84 = arith.constant 9.99999974E-6 : f32
    %162 = vector.broadcast %cst_84 : f32 to vector<13x1xf32>
    %163 = arith.addf %159, %162 : vector<13x1xf32>
    %164 = math.rsqrt %163 : vector<13x1xf32>
    %165 = vector.broadcast %164 : vector<13x1xf32> to vector<13x32xf32>
    %166 = arith.mulf %161, %165 : vector<13x32xf32>
    %167 = vector.broadcast %49 : vector<1x32xf32> to vector<13x32xf32>
    %168 = arith.mulf %166, %167 : vector<13x32xf32>
    %169 = vector.broadcast %51 : vector<1x32xf32> to vector<13x32xf32>
    %170 = arith.addf %168, %169 : vector<13x32xf32>
    %171 = vector.extract_strided_slice %170 {offsets = [1, 0], sizes = [12, 32], strides = [1, 1]} : vector<13x32xf32> to vector<12x32xf32>
    %c1 = arith.constant 1 : index
    %c0_85 = arith.constant 0 : index
    %c0_86 = arith.constant 0 : index
    %172 = vector.load %arg7[%c1, %c0_85, %c0_86] : memref<2x32x32xf32, #tpu.memory_space<vmem>>, vector<1x32x32xf32>
    %173 = vector.shape_cast %172 : vector<1x32x32xf32> to vector<32x32xf32>
    %cst_87 = arith.constant dense<0.000000e+00> : vector<1x32xf32>
    %174 = tpu.matmul %28, %173, %cst_87 {dimension_numbers = #tpu.dot_dimension_numbers<[1], [0], [0], [1], [0, 0, 1, 1], [], []>} : vector<1x32xf32>, vector<32x32xf32>, vector<1x32xf32> -> vector<1x32xf32>
    %c1_88 = arith.constant 1 : index
    %c0_89 = arith.constant 0 : index
    %c0_90 = arith.constant 0 : index
    %175 = vector.load %arg8[%c1_88, %c0_89, %c0_90] : memref<2x1x32xf32, #tpu.memory_space<vmem>>, vector<1x1x32xf32>
    %176 = vector.shape_cast %175 : vector<1x1x32xf32> to vector<1x32xf32>
    %177 = arith.addf %174, %176 : vector<1x32xf32>
    %178 = tpu.concatenate %177, %171 in 0 : vector<1x32xf32>, vector<12x32xf32> -> vector<13x32xf32>
    %c1_91 = arith.constant 1 : index
    %c0_92 = arith.constant 0 : index
    %c0_93 = arith.constant 0 : index
    %179 = vector.load %arg9[%c1_91, %c0_92, %c0_93] : memref<2x32x96xf32, #tpu.memory_space<vmem>>, vector<1x32x96xf32>
    %180 = vector.shape_cast %179 : vector<1x32x96xf32> to vector<32x96xf32>
    %c1_94 = arith.constant 1 : index
    %c0_95 = arith.constant 0 : index
    %c0_96 = arith.constant 0 : index
    %181 = vector.load %arg10[%c1_94, %c0_95, %c0_96] : memref<2x1x96xf32, #tpu.memory_space<vmem>>, vector<1x1x96xf32>
    %182 = vector.shape_cast %181 : vector<1x1x96xf32> to vector<1x96xf32>
    %c1_97 = arith.constant 1 : index
    %c0_98 = arith.constant 0 : index
    %c0_99 = arith.constant 0 : index
    %183 = vector.load %arg11[%c1_97, %c0_98, %c0_99] : memref<2x32x32xf32, #tpu.memory_space<vmem>>, vector<1x32x32xf32>
    %184 = vector.shape_cast %183 : vector<1x32x32xf32> to vector<32x32xf32>
    %c1_100 = arith.constant 1 : index
    %c0_101 = arith.constant 0 : index
    %c0_102 = arith.constant 0 : index
    %185 = vector.load %arg12[%c1_100, %c0_101, %c0_102] : memref<2x1x32xf32, #tpu.memory_space<vmem>>, vector<1x1x32xf32>
    %186 = vector.shape_cast %185 : vector<1x1x32xf32> to vector<1x32xf32>
    %c1_103 = arith.constant 1 : index
    %c0_104 = arith.constant 0 : index
    %c0_105 = arith.constant 0 : index
    %187 = vector.load %arg13[%c1_103, %c0_104, %c0_105] : memref<2x1x32xf32, #tpu.memory_space<vmem>>, vector<1x1x32xf32>
    %188 = vector.shape_cast %187 : vector<1x1x32xf32> to vector<1x32xf32>
    %c1_106 = arith.constant 1 : index
    %c0_107 = arith.constant 0 : index
    %c0_108 = arith.constant 0 : index
    %189 = vector.load %arg14[%c1_106, %c0_107, %c0_108] : memref<2x1x32xf32, #tpu.memory_space<vmem>>, vector<1x1x32xf32>
    %190 = vector.shape_cast %189 : vector<1x1x32xf32> to vector<1x32xf32>
    %c1_109 = arith.constant 1 : index
    %c0_110 = arith.constant 0 : index
    %c0_111 = arith.constant 0 : index
    %191 = vector.load %arg15[%c1_109, %c0_110, %c0_111] : memref<2x1x32xf32, #tpu.memory_space<vmem>>, vector<1x1x32xf32>
    %192 = vector.shape_cast %191 : vector<1x1x32xf32> to vector<1x32xf32>
    %c1_112 = arith.constant 1 : index
    %c0_113 = arith.constant 0 : index
    %c0_114 = arith.constant 0 : index
    %193 = vector.load %arg16[%c1_112, %c0_113, %c0_114] : memref<2x1x32xf32, #tpu.memory_space<vmem>>, vector<1x1x32xf32>
    %194 = vector.shape_cast %193 : vector<1x1x32xf32> to vector<1x32xf32>
    %c1_115 = arith.constant 1 : index
    %c0_116 = arith.constant 0 : index
    %c0_117 = arith.constant 0 : index
    %195 = vector.load %arg17[%c1_115, %c0_116, %c0_117] : memref<2x32x64xf32, #tpu.memory_space<vmem>>, vector<1x32x64xf32>
    %196 = vector.shape_cast %195 : vector<1x32x64xf32> to vector<32x64xf32>
    %c1_118 = arith.constant 1 : index
    %c0_119 = arith.constant 0 : index
    %c0_120 = arith.constant 0 : index
    %197 = vector.load %arg18[%c1_118, %c0_119, %c0_120] : memref<2x1x64xf32, #tpu.memory_space<vmem>>, vector<1x1x64xf32>
    %198 = vector.shape_cast %197 : vector<1x1x64xf32> to vector<1x64xf32>
    %c1_121 = arith.constant 1 : index
    %c0_122 = arith.constant 0 : index
    %c0_123 = arith.constant 0 : index
    %199 = vector.load %arg19[%c1_121, %c0_122, %c0_123] : memref<2x64x32xf32, #tpu.memory_space<vmem>>, vector<1x64x32xf32>
    %200 = vector.shape_cast %199 : vector<1x64x32xf32> to vector<64x32xf32>
    %c1_124 = arith.constant 1 : index
    %c0_125 = arith.constant 0 : index
    %c0_126 = arith.constant 0 : index
    %201 = vector.load %arg20[%c1_124, %c0_125, %c0_126] : memref<2x1x32xf32, #tpu.memory_space<vmem>>, vector<1x1x32xf32>
    %202 = vector.shape_cast %201 : vector<1x1x32xf32> to vector<1x32xf32>
    %cst_127 = arith.constant dense<0.000000e+00> : vector<13x96xf32>
    %203 = tpu.matmul %178, %180, %cst_127 {dimension_numbers = #tpu.dot_dimension_numbers<[1], [0], [0], [1], [0, 0, 1, 1], [], []>} : vector<13x32xf32>, vector<32x96xf32>, vector<13x96xf32> -> vector<13x96xf32>
    %204 = vector.broadcast %182 : vector<1x96xf32> to vector<13x96xf32>
    %205 = arith.addf %203, %204 : vector<13x96xf32>
    %206 = vector.extract_strided_slice %205 {offsets = [0, 0], sizes = [13, 32], strides = [1, 1]} : vector<13x96xf32> to vector<13x32xf32>
    %207 = vector.extract_strided_slice %205 {offsets = [0, 32], sizes = [13, 32], strides = [1, 1]} : vector<13x96xf32> to vector<13x32xf32>
    %208 = vector.extract_strided_slice %205 {offsets = [0, 64], sizes = [13, 32], strides = [1, 1]} : vector<13x96xf32> to vector<13x32xf32>
    %209 = vector.extract_strided_slice %206 {offsets = [0, 0], sizes = [13, 16], strides = [1, 1]} : vector<13x32xf32> to vector<13x16xf32>
    %210 = vector.extract_strided_slice %207 {offsets = [0, 0], sizes = [13, 16], strides = [1, 1]} : vector<13x32xf32> to vector<13x16xf32>
    %211 = vector.extract_strided_slice %208 {offsets = [0, 0], sizes = [13, 16], strides = [1, 1]} : vector<13x32xf32> to vector<13x16xf32>
    %cst_128 = arith.constant dense<0.000000e+00> : vector<13x13xf32>
    %212 = tpu.matmul %209, %210, %cst_128 {dimension_numbers = #tpu.dot_dimension_numbers<[1], [1], [0], [0], [0, 0, 1, 0], [], []>} : vector<13x16xf32>, vector<13x16xf32>, vector<13x13xf32> -> vector<13x13xf32>
    %cst_129 = arith.constant 2.500000e-01 : f32
    %213 = vector.broadcast %cst_129 : f32 to vector<13x13xf32>
    %214 = arith.mulf %212, %213 : vector<13x13xf32>
    %215 = arith.addf %214, %14 : vector<13x13xf32>
    %cst_130 = arith.constant dense<0xFF800000> : vector<13xf32>
    %216 = vector.multi_reduction <maximumf>, %215, %cst_130 [1] : vector<13x13xf32> to vector<13xf32>
    %217 = vector.shape_cast %216 : vector<13xf32> to vector<13x1xf32>
    %218 = vector.broadcast %217 : vector<13x1xf32> to vector<13x13xf32>
    %219 = arith.subf %215, %218 : vector<13x13xf32>
    %220 = math.exp %219 : vector<13x13xf32>
    %cst_131 = arith.constant dense<0.000000e+00> : vector<13xf32>
    %221 = vector.multi_reduction <add>, %220, %cst_131 [1] : vector<13x13xf32> to vector<13xf32>
    %222 = vector.shape_cast %221 : vector<13xf32> to vector<13x1xf32>
    %223 = tpu.reciprocal %222 {approx = true} : vector<13x1xf32> -> vector<13x1xf32>
    %224 = vector.broadcast %223 : vector<13x1xf32> to vector<13x13xf32>
    %225 = arith.mulf %220, %224 : vector<13x13xf32>
    %cst_132 = arith.constant dense<0.000000e+00> : vector<13x16xf32>
    %226 = tpu.matmul %225, %211, %cst_132 {dimension_numbers = #tpu.dot_dimension_numbers<[1], [0], [0], [1], [0, 0, 1, 1], [], []>} : vector<13x13xf32>, vector<13x16xf32>, vector<13x16xf32> -> vector<13x16xf32>
    %227 = vector.extract_strided_slice %206 {offsets = [0, 16], sizes = [13, 16], strides = [1, 1]} : vector<13x32xf32> to vector<13x16xf32>
    %228 = vector.extract_strided_slice %207 {offsets = [0, 16], sizes = [13, 16], strides = [1, 1]} : vector<13x32xf32> to vector<13x16xf32>
    %229 = vector.extract_strided_slice %208 {offsets = [0, 16], sizes = [13, 16], strides = [1, 1]} : vector<13x32xf32> to vector<13x16xf32>
    %cst_133 = arith.constant dense<0.000000e+00> : vector<13x13xf32>
    %230 = tpu.matmul %227, %228, %cst_133 {dimension_numbers = #tpu.dot_dimension_numbers<[1], [1], [0], [0], [0, 0, 1, 0], [], []>} : vector<13x16xf32>, vector<13x16xf32>, vector<13x13xf32> -> vector<13x13xf32>
    %cst_134 = arith.constant 2.500000e-01 : f32
    %231 = vector.broadcast %cst_134 : f32 to vector<13x13xf32>
    %232 = arith.mulf %230, %231 : vector<13x13xf32>
    %233 = arith.addf %232, %14 : vector<13x13xf32>
    %cst_135 = arith.constant dense<0xFF800000> : vector<13xf32>
    %234 = vector.multi_reduction <maximumf>, %233, %cst_135 [1] : vector<13x13xf32> to vector<13xf32>
    %235 = vector.shape_cast %234 : vector<13xf32> to vector<13x1xf32>
    %236 = vector.broadcast %235 : vector<13x1xf32> to vector<13x13xf32>
    %237 = arith.subf %233, %236 : vector<13x13xf32>
    %238 = math.exp %237 : vector<13x13xf32>
    %cst_136 = arith.constant dense<0.000000e+00> : vector<13xf32>
    %239 = vector.multi_reduction <add>, %238, %cst_136 [1] : vector<13x13xf32> to vector<13xf32>
    %240 = vector.shape_cast %239 : vector<13xf32> to vector<13x1xf32>
    %241 = tpu.reciprocal %240 {approx = true} : vector<13x1xf32> -> vector<13x1xf32>
    %242 = vector.broadcast %241 : vector<13x1xf32> to vector<13x13xf32>
    %243 = arith.mulf %238, %242 : vector<13x13xf32>
    %cst_137 = arith.constant dense<0.000000e+00> : vector<13x16xf32>
    %244 = tpu.matmul %243, %229, %cst_137 {dimension_numbers = #tpu.dot_dimension_numbers<[1], [0], [0], [1], [0, 0, 1, 1], [], []>} : vector<13x13xf32>, vector<13x16xf32>, vector<13x16xf32> -> vector<13x16xf32>
    %245 = tpu.concatenate %226, %244 in 1 : vector<13x16xf32>, vector<13x16xf32> -> vector<13x32xf32>
    %cst_138 = arith.constant dense<0.000000e+00> : vector<13x32xf32>
    %246 = tpu.matmul %245, %184, %cst_138 {dimension_numbers = #tpu.dot_dimension_numbers<[1], [0], [0], [1], [0, 0, 1, 1], [], []>} : vector<13x32xf32>, vector<32x32xf32>, vector<13x32xf32> -> vector<13x32xf32>
    %247 = vector.broadcast %186 : vector<1x32xf32> to vector<13x32xf32>
    %248 = arith.addf %246, %247 : vector<13x32xf32>
    %249 = arith.addf %178, %248 : vector<13x32xf32>
    %cst_139 = arith.constant dense<0.000000e+00> : vector<13xf32>
    %250 = vector.multi_reduction <add>, %249, %cst_139 [1] : vector<13x32xf32> to vector<13xf32>
    %251 = vector.shape_cast %250 : vector<13xf32> to vector<13x1xf32>
    %cst_140 = arith.constant 3.200000e+01 : f32
    %252 = vector.broadcast %cst_140 : f32 to vector<13x1xf32>
    %253 = arith.divf %251, %252 : vector<13x1xf32>
    %254 = vector.broadcast %253 : vector<13x1xf32> to vector<13x32xf32>
    %255 = arith.subf %249, %254 : vector<13x32xf32>
    %256 = arith.mulf %255, %255 : vector<13x32xf32>
    %cst_141 = arith.constant dense<0.000000e+00> : vector<13xf32>
    %257 = vector.multi_reduction <add>, %256, %cst_141 [1] : vector<13x32xf32> to vector<13xf32>
    %258 = vector.shape_cast %257 : vector<13xf32> to vector<13x1xf32>
    %cst_142 = arith.constant 3.200000e+01 : f32
    %259 = vector.broadcast %cst_142 : f32 to vector<13x1xf32>
    %260 = arith.divf %258, %259 : vector<13x1xf32>
    %261 = vector.broadcast %253 : vector<13x1xf32> to vector<13x32xf32>
    %262 = arith.subf %249, %261 : vector<13x32xf32>
    %cst_143 = arith.constant 9.99999974E-6 : f32
    %263 = vector.broadcast %cst_143 : f32 to vector<13x1xf32>
    %264 = arith.addf %260, %263 : vector<13x1xf32>
    %265 = math.rsqrt %264 : vector<13x1xf32>
    %266 = vector.broadcast %265 : vector<13x1xf32> to vector<13x32xf32>
    %267 = arith.mulf %262, %266 : vector<13x32xf32>
    %268 = vector.broadcast %188 : vector<1x32xf32> to vector<13x32xf32>
    %269 = arith.mulf %267, %268 : vector<13x32xf32>
    %270 = vector.broadcast %190 : vector<1x32xf32> to vector<13x32xf32>
    %271 = arith.addf %269, %270 : vector<13x32xf32>
    %cst_144 = arith.constant dense<0.000000e+00> : vector<13x64xf32>
    %272 = tpu.matmul %271, %196, %cst_144 {dimension_numbers = #tpu.dot_dimension_numbers<[1], [0], [0], [1], [0, 0, 1, 1], [], []>} : vector<13x32xf32>, vector<32x64xf32>, vector<13x64xf32> -> vector<13x64xf32>
    %273 = vector.broadcast %198 : vector<1x64xf32> to vector<13x64xf32>
    %274 = arith.addf %272, %273 : vector<13x64xf32>
    %275 = arith.mulf %274, %274 : vector<13x64xf32>
    %276 = arith.mulf %274, %275 : vector<13x64xf32>
    %cst_145 = arith.constant 4.471500e-02 : f32
    %277 = vector.broadcast %cst_145 : f32 to vector<13x64xf32>
    %278 = arith.mulf %277, %276 : vector<13x64xf32>
    %279 = arith.addf %274, %278 : vector<13x64xf32>
    %cst_146 = arith.constant 0.797884583 : f32
    %280 = vector.broadcast %cst_146 : f32 to vector<13x64xf32>
    %281 = arith.mulf %280, %279 : vector<13x64xf32>
    %282 = math.tanh %281 : vector<13x64xf32>
    %cst_147 = arith.constant 1.000000e+00 : f32
    %283 = vector.broadcast %cst_147 : f32 to vector<13x64xf32>
    %284 = arith.addf %283, %282 : vector<13x64xf32>
    %cst_148 = arith.constant 5.000000e-01 : f32
    %285 = vector.broadcast %cst_148 : f32 to vector<13x64xf32>
    %286 = arith.mulf %285, %284 : vector<13x64xf32>
    %287 = arith.mulf %274, %286 : vector<13x64xf32>
    %cst_149 = arith.constant dense<0.000000e+00> : vector<13x32xf32>
    %288 = tpu.matmul %287, %200, %cst_149 {dimension_numbers = #tpu.dot_dimension_numbers<[1], [0], [0], [1], [0, 0, 1, 1], [], []>} : vector<13x64xf32>, vector<64x32xf32>, vector<13x32xf32> -> vector<13x32xf32>
    %289 = vector.broadcast %202 : vector<1x32xf32> to vector<13x32xf32>
    %290 = arith.addf %288, %289 : vector<13x32xf32>
    %291 = arith.addf %271, %290 : vector<13x32xf32>
    %cst_150 = arith.constant dense<0.000000e+00> : vector<13xf32>
    %292 = vector.multi_reduction <add>, %291, %cst_150 [1] : vector<13x32xf32> to vector<13xf32>
    %293 = vector.shape_cast %292 : vector<13xf32> to vector<13x1xf32>
    %cst_151 = arith.constant 3.200000e+01 : f32
    %294 = vector.broadcast %cst_151 : f32 to vector<13x1xf32>
    %295 = arith.divf %293, %294 : vector<13x1xf32>
    %296 = vector.broadcast %295 : vector<13x1xf32> to vector<13x32xf32>
    %297 = arith.subf %291, %296 : vector<13x32xf32>
    %298 = arith.mulf %297, %297 : vector<13x32xf32>
    %cst_152 = arith.constant dense<0.000000e+00> : vector<13xf32>
    %299 = vector.multi_reduction <add>, %298, %cst_152 [1] : vector<13x32xf32> to vector<13xf32>
    %300 = vector.shape_cast %299 : vector<13xf32> to vector<13x1xf32>
    %cst_153 = arith.constant 3.200000e+01 : f32
    %301 = vector.broadcast %cst_153 : f32 to vector<13x1xf32>
    %302 = arith.divf %300, %301 : vector<13x1xf32>
    %303 = vector.broadcast %295 : vector<13x1xf32> to vector<13x32xf32>
    %304 = arith.subf %291, %303 : vector<13x32xf32>
    %cst_154 = arith.constant 9.99999974E-6 : f32
    %305 = vector.broadcast %cst_154 : f32 to vector<13x1xf32>
    %306 = arith.addf %302, %305 : vector<13x1xf32>
    %307 = math.rsqrt %306 : vector<13x1xf32>
    %308 = vector.broadcast %307 : vector<13x1xf32> to vector<13x32xf32>
    %309 = arith.mulf %304, %308 : vector<13x32xf32>
    %310 = vector.broadcast %192 : vector<1x32xf32> to vector<13x32xf32>
    %311 = arith.mulf %309, %310 : vector<13x32xf32>
    %312 = vector.broadcast %194 : vector<1x32xf32> to vector<13x32xf32>
    %313 = arith.addf %311, %312 : vector<13x32xf32>
    %314 = vector.extract_strided_slice %313 {offsets = [1, 0], sizes = [12, 32], strides = [1, 1]} : vector<13x32xf32> to vector<12x32xf32>
    %315 = vector.extract_strided_slice %314 {offsets = [4, 0], sizes = [8, 32], strides = [1, 1]} : vector<12x32xf32> to vector<8x32xf32>
    %c0_155 = arith.constant 0 : index
    %c0_156 = arith.constant 0 : index
    %316 = vector.load %arg5[%c0_155, %c0_156] : memref<32x16xf32, #tpu.memory_space<vmem>>, vector<32x16xf32>
    %cst_157 = arith.constant dense<0.000000e+00> : vector<8x16xf32>
    %317 = tpu.matmul %315, %316, %cst_157 {dimension_numbers = #tpu.dot_dimension_numbers<[1], [0], [0], [1], [0, 0, 1, 1], [], []>} : vector<8x32xf32>, vector<32x16xf32>, vector<8x16xf32> -> vector<8x16xf32>
    %c0_158 = arith.constant 0 : index
    %c0_159 = arith.constant 0 : index
    %318 = vector.load %arg6[%c0_158, %c0_159] : memref<1x16xf32, #tpu.memory_space<vmem>>, vector<1x16xf32>
    %319 = vector.broadcast %318 : vector<1x16xf32> to vector<8x16xf32>
    %320 = arith.addf %317, %319 : vector<8x16xf32>
    %321 = vector.extract_strided_slice %16 {offsets = [3, 0], sizes = [1, 16], strides = [1, 1]} : vector<4x16xf32> to vector<1x16xf32>
    %322 = vector.broadcast %321 : vector<1x16xf32> to vector<8x16xf32>
    %323 = arith.addf %320, %322 : vector<8x16xf32>
    %c0_160 = arith.constant 0 : index
    %c0_161 = arith.constant 0 : index
    %c0_162 = arith.constant 0 : index
    %324 = vector.load %arg21[%c0_160, %c0_161, %c0_162] : memref<2x8x16xf32, #tpu.memory_space<vmem>>, vector<1x8x16xf32>
    %325 = vector.shape_cast %324 : vector<1x8x16xf32> to vector<8x16xf32>
    %326 = vector.shape_cast %323 : vector<8x16xf32> to vector<1x8x16xf32>
    tpu.vector_store %arg21[%c0_160, %c0_161, %c0_162], %326 {strides = array<i32>} : memref<2x8x16xf32, #tpu.memory_space<vmem>>, vector<1x8x16xf32>,
    %c1_163 = arith.constant 1 : index
    %c0_164 = arith.constant 0 : index
    %c0_165 = arith.constant 0 : index
    %327 = vector.load %arg1[%c1_163, %c0_164, %c0_165] : memref<2x4x16xf32, #tpu.memory_space<vmem>>, vector<1x4x16xf32>
    %328 = vector.shape_cast %327 : vector<1x4x16xf32> to vector<4x16xf32>
    %c0_166 = arith.constant 0 : index
    %c0_167 = arith.constant 0 : index
    %329 = vector.load %arg3[%c0_166, %c0_167] : memref<16x32xf32, #tpu.memory_space<vmem>>, vector<16x32xf32>
    %cst_168 = arith.constant dense<0.000000e+00> : vector<4x32xf32>
    %330 = tpu.matmul %328, %329, %cst_168 {dimension_numbers = #tpu.dot_dimension_numbers<[1], [0], [0], [1], [0, 0, 1, 1], [], []>} : vector<4x16xf32>, vector<16x32xf32>, vector<4x32xf32> -> vector<4x32xf32>
    %c0_169 = arith.constant 0 : index
    %c0_170 = arith.constant 0 : index
    %331 = vector.load %arg4[%c0_169, %c0_170] : memref<1x32xf32, #tpu.memory_space<vmem>>, vector<1x32xf32>
    %332 = vector.broadcast %331 : vector<1x32xf32> to vector<4x32xf32>
    %333 = arith.addf %330, %332 : vector<4x32xf32>
    %334 = vector.extract_strided_slice %333 {offsets = [3, 0], sizes = [1, 32], strides = [1, 1]} : vector<4x32xf32> to vector<1x32xf32>
    %335 = vector.shape_cast %334 : vector<1x32xf32> to vector<1x32xf32>
    %336 = vector.broadcast %335 : vector<1x32xf32> to vector<8x32xf32>
    %337 = tpu.concatenate %333, %336 in 0 : vector<4x32xf32>, vector<8x32xf32> -> vector<12x32xf32>
    %c0_171 = arith.constant 0 : index
    %c0_172 = arith.constant 0 : index
    %338 = vector.load %arg2[%c0_171, %c0_172] : memref<12x32xf32, #tpu.memory_space<vmem>>, vector<12x32xf32>
    %339 = arith.addf %337, %338 : vector<12x32xf32>
    %c1_173 = arith.constant 1 : index
    %c0_174 = arith.constant 0 : index
    %340 = vector.load %arg0[%c1_173, %c0_174] : memref<2x32xf32, #tpu.memory_space<vmem>>, vector<1x32xf32>
    %c0_175 = arith.constant 0 : index
    %c0_176 = arith.constant 0 : index
    %c0_177 = arith.constant 0 : index
    %341 = vector.load %arg7[%c0_175, %c0_176, %c0_177] : memref<2x32x32xf32, #tpu.memory_space<vmem>>, vector<1x32x32xf32>
    %342 = vector.shape_cast %341 : vector<1x32x32xf32> to vector<32x32xf32>
    %cst_178 = arith.constant dense<0.000000e+00> : vector<1x32xf32>
    %343 = tpu.matmul %340, %342, %cst_178 {dimension_numbers = #tpu.dot_dimension_numbers<[1], [0], [0], [1], [0, 0, 1, 1], [], []>} : vector<1x32xf32>, vector<32x32xf32>, vector<1x32xf32> -> vector<1x32xf32>
    %c0_179 = arith.constant 0 : index
    %c0_180 = arith.constant 0 : index
    %c0_181 = arith.constant 0 : index
    %344 = vector.load %arg8[%c0_179, %c0_180, %c0_181] : memref<2x1x32xf32, #tpu.memory_space<vmem>>, vector<1x1x32xf32>
    %345 = vector.shape_cast %344 : vector<1x1x32xf32> to vector<1x32xf32>
    %346 = arith.addf %343, %345 : vector<1x32xf32>
    %347 = tpu.concatenate %346, %339 in 0 : vector<1x32xf32>, vector<12x32xf32> -> vector<13x32xf32>
    %c0_182 = arith.constant 0 : index
    %c0_183 = arith.constant 0 : index
    %c0_184 = arith.constant 0 : index
    %348 = vector.load %arg9[%c0_182, %c0_183, %c0_184] : memref<2x32x96xf32, #tpu.memory_space<vmem>>, vector<1x32x96xf32>
    %349 = vector.shape_cast %348 : vector<1x32x96xf32> to vector<32x96xf32>
    %c0_185 = arith.constant 0 : index
    %c0_186 = arith.constant 0 : index
    %c0_187 = arith.constant 0 : index
    %350 = vector.load %arg10[%c0_185, %c0_186, %c0_187] : memref<2x1x96xf32, #tpu.memory_space<vmem>>, vector<1x1x96xf32>
    %351 = vector.shape_cast %350 : vector<1x1x96xf32> to vector<1x96xf32>
    %c0_188 = arith.constant 0 : index
    %c0_189 = arith.constant 0 : index
    %c0_190 = arith.constant 0 : index
    %352 = vector.load %arg11[%c0_188, %c0_189, %c0_190] : memref<2x32x32xf32, #tpu.memory_space<vmem>>, vector<1x32x32xf32>
    %353 = vector.shape_cast %352 : vector<1x32x32xf32> to vector<32x32xf32>
    %c0_191 = arith.constant 0 : index
    %c0_192 = arith.constant 0 : index
    %c0_193 = arith.constant 0 : index
    %354 = vector.load %arg12[%c0_191, %c0_192, %c0_193] : memref<2x1x32xf32, #tpu.memory_space<vmem>>, vector<1x1x32xf32>
    %355 = vector.shape_cast %354 : vector<1x1x32xf32> to vector<1x32xf32>
    %c0_194 = arith.constant 0 : index
    %c0_195 = arith.constant 0 : index
    %c0_196 = arith.constant 0 : index
    %356 = vector.load %arg13[%c0_194, %c0_195, %c0_196] : memref<2x1x32xf32, #tpu.memory_space<vmem>>, vector<1x1x32xf32>
    %357 = vector.shape_cast %356 : vector<1x1x32xf32> to vector<1x32xf32>
    %c0_197 = arith.constant 0 : index
    %c0_198 = arith.constant 0 : index
    %c0_199 = arith.constant 0 : index
    %358 = vector.load %arg14[%c0_197, %c0_198, %c0_199] : memref<2x1x32xf32, #tpu.memory_space<vmem>>, vector<1x1x32xf32>
    %359 = vector.shape_cast %358 : vector<1x1x32xf32> to vector<1x32xf32>
    %c0_200 = arith.constant 0 : index
    %c0_201 = arith.constant 0 : index
    %c0_202 = arith.constant 0 : index
    %360 = vector.load %arg15[%c0_200, %c0_201, %c0_202] : memref<2x1x32xf32, #tpu.memory_space<vmem>>, vector<1x1x32xf32>
    %361 = vector.shape_cast %360 : vector<1x1x32xf32> to vector<1x32xf32>
    %c0_203 = arith.constant 0 : index
    %c0_204 = arith.constant 0 : index
    %c0_205 = arith.constant 0 : index
    %362 = vector.load %arg16[%c0_203, %c0_204, %c0_205] : memref<2x1x32xf32, #tpu.memory_space<vmem>>, vector<1x1x32xf32>
    %363 = vector.shape_cast %362 : vector<1x1x32xf32> to vector<1x32xf32>
    %c0_206 = arith.constant 0 : index
    %c0_207 = arith.constant 0 : index
    %c0_208 = arith.constant 0 : index
    %364 = vector.load %arg17[%c0_206, %c0_207, %c0_208] : memref<2x32x64xf32, #tpu.memory_space<vmem>>, vector<1x32x64xf32>
    %365 = vector.shape_cast %364 : vector<1x32x64xf32> to vector<32x64xf32>
    %c0_209 = arith.constant 0 : index
    %c0_210 = arith.constant 0 : index
    %c0_211 = arith.constant 0 : index
    %366 = vector.load %arg18[%c0_209, %c0_210, %c0_211] : memref<2x1x64xf32, #tpu.memory_space<vmem>>, vector<1x1x64xf32>
    %367 = vector.shape_cast %366 : vector<1x1x64xf32> to vector<1x64xf32>
    %c0_212 = arith.constant 0 : index
    %c0_213 = arith.constant 0 : index
    %c0_214 = arith.constant 0 : index
    %368 = vector.load %arg19[%c0_212, %c0_213, %c0_214] : memref<2x64x32xf32, #tpu.memory_space<vmem>>, vector<1x64x32xf32>
    %369 = vector.shape_cast %368 : vector<1x64x32xf32> to vector<64x32xf32>
    %c0_215 = arith.constant 0 : index
    %c0_216 = arith.constant 0 : index
    %c0_217 = arith.constant 0 : index
    %370 = vector.load %arg20[%c0_215, %c0_216, %c0_217] : memref<2x1x32xf32, #tpu.memory_space<vmem>>, vector<1x1x32xf32>
    %371 = vector.shape_cast %370 : vector<1x1x32xf32> to vector<1x32xf32>
    %cst_218 = arith.constant dense<0.000000e+00> : vector<13x96xf32>
    %372 = tpu.matmul %347, %349, %cst_218 {dimension_numbers = #tpu.dot_dimension_numbers<[1], [0], [0], [1], [0, 0, 1, 1], [], []>} : vector<13x32xf32>, vector<32x96xf32>, vector<13x96xf32> -> vector<13x96xf32>
    %373 = vector.broadcast %351 : vector<1x96xf32> to vector<13x96xf32>
    %374 = arith.addf %372, %373 : vector<13x96xf32>
    %375 = vector.extract_strided_slice %374 {offsets = [0, 0], sizes = [13, 32], strides = [1, 1]} : vector<13x96xf32> to vector<13x32xf32>
    %376 = vector.extract_strided_slice %374 {offsets = [0, 32], sizes = [13, 32], strides = [1, 1]} : vector<13x96xf32> to vector<13x32xf32>
    %377 = vector.extract_strided_slice %374 {offsets = [0, 64], sizes = [13, 32], strides = [1, 1]} : vector<13x96xf32> to vector<13x32xf32>
    %378 = vector.extract_strided_slice %375 {offsets = [0, 0], sizes = [13, 16], strides = [1, 1]} : vector<13x32xf32> to vector<13x16xf32>
    %379 = vector.extract_strided_slice %376 {offsets = [0, 0], sizes = [13, 16], strides = [1, 1]} : vector<13x32xf32> to vector<13x16xf32>
    %380 = vector.extract_strided_slice %377 {offsets = [0, 0], sizes = [13, 16], strides = [1, 1]} : vector<13x32xf32> to vector<13x16xf32>
    %cst_219 = arith.constant dense<0.000000e+00> : vector<13x13xf32>
    %381 = tpu.matmul %378, %379, %cst_219 {dimension_numbers = #tpu.dot_dimension_numbers<[1], [1], [0], [0], [0, 0, 1, 0], [], []>} : vector<13x16xf32>, vector<13x16xf32>, vector<13x13xf32> -> vector<13x13xf32>
    %cst_220 = arith.constant 2.500000e-01 : f32
    %382 = vector.broadcast %cst_220 : f32 to vector<13x13xf32>
    %383 = arith.mulf %381, %382 : vector<13x13xf32>
    %384 = arith.addf %383, %14 : vector<13x13xf32>
    %cst_221 = arith.constant dense<0xFF800000> : vector<13xf32>
    %385 = vector.multi_reduction <maximumf>, %384, %cst_221 [1] : vector<13x13xf32> to vector<13xf32>
    %386 = vector.shape_cast %385 : vector<13xf32> to vector<13x1xf32>
    %387 = vector.broadcast %386 : vector<13x1xf32> to vector<13x13xf32>
    %388 = arith.subf %384, %387 : vector<13x13xf32>
    %389 = math.exp %388 : vector<13x13xf32>
    %cst_222 = arith.constant dense<0.000000e+00> : vector<13xf32>
    %390 = vector.multi_reduction <add>, %389, %cst_222 [1] : vector<13x13xf32> to vector<13xf32>
    %391 = vector.shape_cast %390 : vector<13xf32> to vector<13x1xf32>
    %392 = tpu.reciprocal %391 {approx = true} : vector<13x1xf32> -> vector<13x1xf32>
    %393 = vector.broadcast %392 : vector<13x1xf32> to vector<13x13xf32>
    %394 = arith.mulf %389, %393 : vector<13x13xf32>
    %cst_223 = arith.constant dense<0.000000e+00> : vector<13x16xf32>
    %395 = tpu.matmul %394, %380, %cst_223 {dimension_numbers = #tpu.dot_dimension_numbers<[1], [0], [0], [1], [0, 0, 1, 1], [], []>} : vector<13x13xf32>, vector<13x16xf32>, vector<13x16xf32> -> vector<13x16xf32>
    %396 = vector.extract_strided_slice %375 {offsets = [0, 16], sizes = [13, 16], strides = [1, 1]} : vector<13x32xf32> to vector<13x16xf32>
    %397 = vector.extract_strided_slice %376 {offsets = [0, 16], sizes = [13, 16], strides = [1, 1]} : vector<13x32xf32> to vector<13x16xf32>
    %398 = vector.extract_strided_slice %377 {offsets = [0, 16], sizes = [13, 16], strides = [1, 1]} : vector<13x32xf32> to vector<13x16xf32>
    %cst_224 = arith.constant dense<0.000000e+00> : vector<13x13xf32>
    %399 = tpu.matmul %396, %397, %cst_224 {dimension_numbers = #tpu.dot_dimension_numbers<[1], [1], [0], [0], [0, 0, 1, 0], [], []>} : vector<13x16xf32>, vector<13x16xf32>, vector<13x13xf32> -> vector<13x13xf32>
    %cst_225 = arith.constant 2.500000e-01 : f32
    %400 = vector.broadcast %cst_225 : f32 to vector<13x13xf32>
    %401 = arith.mulf %399, %400 : vector<13x13xf32>
    %402 = arith.addf %401, %14 : vector<13x13xf32>
    %cst_226 = arith.constant dense<0xFF800000> : vector<13xf32>
    %403 = vector.multi_reduction <maximumf>, %402, %cst_226 [1] : vector<13x13xf32> to vector<13xf32>
    %404 = vector.shape_cast %403 : vector<13xf32> to vector<13x1xf32>
    %405 = vector.broadcast %404 : vector<13x1xf32> to vector<13x13xf32>
    %406 = arith.subf %402, %405 : vector<13x13xf32>
    %407 = math.exp %406 : vector<13x13xf32>
    %cst_227 = arith.constant dense<0.000000e+00> : vector<13xf32>
    %408 = vector.multi_reduction <add>, %407, %cst_227 [1] : vector<13x13xf32> to vector<13xf32>
    %409 = vector.shape_cast %408 : vector<13xf32> to vector<13x1xf32>
    %410 = tpu.reciprocal %409 {approx = true} : vector<13x1xf32> -> vector<13x1xf32>
    %411 = vector.broadcast %410 : vector<13x1xf32> to vector<13x13xf32>
    %412 = arith.mulf %407, %411 : vector<13x13xf32>
    %cst_228 = arith.constant dense<0.000000e+00> : vector<13x16xf32>
    %413 = tpu.matmul %412, %398, %cst_228 {dimension_numbers = #tpu.dot_dimension_numbers<[1], [0], [0], [1], [0, 0, 1, 1], [], []>} : vector<13x13xf32>, vector<13x16xf32>, vector<13x16xf32> -> vector<13x16xf32>
    %414 = tpu.concatenate %395, %413 in 1 : vector<13x16xf32>, vector<13x16xf32> -> vector<13x32xf32>
    %cst_229 = arith.constant dense<0.000000e+00> : vector<13x32xf32>
    %415 = tpu.matmul %414, %353, %cst_229 {dimension_numbers = #tpu.dot_dimension_numbers<[1], [0], [0], [1], [0, 0, 1, 1], [], []>} : vector<13x32xf32>, vector<32x32xf32>, vector<13x32xf32> -> vector<13x32xf32>
    %416 = vector.broadcast %355 : vector<1x32xf32> to vector<13x32xf32>
    %417 = arith.addf %415, %416 : vector<13x32xf32>
    %418 = arith.addf %347, %417 : vector<13x32xf32>
    %cst_230 = arith.constant dense<0.000000e+00> : vector<13xf32>
    %419 = vector.multi_reduction <add>, %418, %cst_230 [1] : vector<13x32xf32> to vector<13xf32>
    %420 = vector.shape_cast %419 : vector<13xf32> to vector<13x1xf32>
    %cst_231 = arith.constant 3.200000e+01 : f32
    %421 = vector.broadcast %cst_231 : f32 to vector<13x1xf32>
    %422 = arith.divf %420, %421 : vector<13x1xf32>
    %423 = vector.broadcast %422 : vector<13x1xf32> to vector<13x32xf32>
    %424 = arith.subf %418, %423 : vector<13x32xf32>
    %425 = arith.mulf %424, %424 : vector<13x32xf32>
    %cst_232 = arith.constant dense<0.000000e+00> : vector<13xf32>
    %426 = vector.multi_reduction <add>, %425, %cst_232 [1] : vector<13x32xf32> to vector<13xf32>
    %427 = vector.shape_cast %426 : vector<13xf32> to vector<13x1xf32>
    %cst_233 = arith.constant 3.200000e+01 : f32
    %428 = vector.broadcast %cst_233 : f32 to vector<13x1xf32>
    %429 = arith.divf %427, %428 : vector<13x1xf32>
    %430 = vector.broadcast %422 : vector<13x1xf32> to vector<13x32xf32>
    %431 = arith.subf %418, %430 : vector<13x32xf32>
    %cst_234 = arith.constant 9.99999974E-6 : f32
    %432 = vector.broadcast %cst_234 : f32 to vector<13x1xf32>
    %433 = arith.addf %429, %432 : vector<13x1xf32>
    %434 = math.rsqrt %433 : vector<13x1xf32>
    %435 = vector.broadcast %434 : vector<13x1xf32> to vector<13x32xf32>
    %436 = arith.mulf %431, %435 : vector<13x32xf32>
    %437 = vector.broadcast %357 : vector<1x32xf32> to vector<13x32xf32>
    %438 = arith.mulf %436, %437 : vector<13x32xf32>
    %439 = vector.broadcast %359 : vector<1x32xf32> to vector<13x32xf32>
    %440 = arith.addf %438, %439 : vector<13x32xf32>
    %cst_235 = arith.constant dense<0.000000e+00> : vector<13x64xf32>
    %441 = tpu.matmul %440, %365, %cst_235 {dimension_numbers = #tpu.dot_dimension_numbers<[1], [0], [0], [1], [0, 0, 1, 1], [], []>} : vector<13x32xf32>, vector<32x64xf32>, vector<13x64xf32> -> vector<13x64xf32>
    %442 = vector.broadcast %367 : vector<1x64xf32> to vector<13x64xf32>
    %443 = arith.addf %441, %442 : vector<13x64xf32>
    %444 = arith.mulf %443, %443 : vector<13x64xf32>
    %445 = arith.mulf %443, %444 : vector<13x64xf32>
    %cst_236 = arith.constant 4.471500e-02 : f32
    %446 = vector.broadcast %cst_236 : f32 to vector<13x64xf32>
    %447 = arith.mulf %446, %445 : vector<13x64xf32>
    %448 = arith.addf %443, %447 : vector<13x64xf32>
    %cst_237 = arith.constant 0.797884583 : f32
    %449 = vector.broadcast %cst_237 : f32 to vector<13x64xf32>
    %450 = arith.mulf %449, %448 : vector<13x64xf32>
    %451 = math.tanh %450 : vector<13x64xf32>
    %cst_238 = arith.constant 1.000000e+00 : f32
    %452 = vector.broadcast %cst_238 : f32 to vector<13x64xf32>
    %453 = arith.addf %452, %451 : vector<13x64xf32>
    %cst_239 = arith.constant 5.000000e-01 : f32
    %454 = vector.broadcast %cst_239 : f32 to vector<13x64xf32>
    %455 = arith.mulf %454, %453 : vector<13x64xf32>
    %456 = arith.mulf %443, %455 : vector<13x64xf32>
    %cst_240 = arith.constant dense<0.000000e+00> : vector<13x32xf32>
    %457 = tpu.matmul %456, %369, %cst_240 {dimension_numbers = #tpu.dot_dimension_numbers<[1], [0], [0], [1], [0, 0, 1, 1], [], []>} : vector<13x64xf32>, vector<64x32xf32>, vector<13x32xf32> -> vector<13x32xf32>
    %458 = vector.broadcast %371 : vector<1x32xf32> to vector<13x32xf32>
    %459 = arith.addf %457, %458 : vector<13x32xf32>
    %460 = arith.addf %440, %459 : vector<13x32xf32>
    %cst_241 = arith.constant dense<0.000000e+00> : vector<13xf32>
    %461 = vector.multi_reduction <add>, %460, %cst_241 [1] : vector<13x32xf32> to vector<13xf32>
    %462 = vector.shape_cast %461 : vector<13xf32> to vector<13x1xf32>
    %cst_242 = arith.constant 3.200000e+01 : f32
    %463 = vector.broadcast %cst_242 : f32 to vector<13x1xf32>
    %464 = arith.divf %462, %463 : vector<13x1xf32>
    %465 = vector.broadcast %464 : vector<13x1xf32> to vector<13x32xf32>
    %466 = arith.subf %460, %465 : vector<13x32xf32>
    %467 = arith.mulf %466, %466 : vector<13x32xf32>
    %cst_243 = arith.constant dense<0.000000e+00> : vector<13xf32>
    %468 = vector.multi_reduction <add>, %467, %cst_243 [1] : vector<13x32xf32> to vector<13xf32>
    %469 = vector.shape_cast %468 : vector<13xf32> to vector<13x1xf32>
    %cst_244 = arith.constant 3.200000e+01 : f32
    %470 = vector.broadcast %cst_244 : f32 to vector<13x1xf32>
    %471 = arith.divf %469, %470 : vector<13x1xf32>
    %472 = vector.broadcast %464 : vector<13x1xf32> to vector<13x32xf32>
    %473 = arith.subf %460, %472 : vector<13x32xf32>
    %cst_245 = arith.constant 9.99999974E-6 : f32
    %474 = vector.broadcast %cst_245 : f32 to vector<13x1xf32>
    %475 = arith.addf %471, %474 : vector<13x1xf32>
    %476 = math.rsqrt %475 : vector<13x1xf32>
    %477 = vector.broadcast %476 : vector<13x1xf32> to vector<13x32xf32>
    %478 = arith.mulf %473, %477 : vector<13x32xf32>
    %479 = vector.broadcast %361 : vector<1x32xf32> to vector<13x32xf32>
    %480 = arith.mulf %478, %479 : vector<13x32xf32>
    %481 = vector.broadcast %363 : vector<1x32xf32> to vector<13x32xf32>
    %482 = arith.addf %480, %481 : vector<13x32xf32>
    %483 = vector.extract_strided_slice %482 {offsets = [1, 0], sizes = [12, 32], strides = [1, 1]} : vector<13x32xf32> to vector<12x32xf32>
    %c1_246 = arith.constant 1 : index
    %c0_247 = arith.constant 0 : index
    %c0_248 = arith.constant 0 : index
    %484 = vector.load %arg7[%c1_246, %c0_247, %c0_248] : memref<2x32x32xf32, #tpu.memory_space<vmem>>, vector<1x32x32xf32>
    %485 = vector.shape_cast %484 : vector<1x32x32xf32> to vector<32x32xf32>
    %cst_249 = arith.constant dense<0.000000e+00> : vector<1x32xf32>
    %486 = tpu.matmul %340, %485, %cst_249 {dimension_numbers = #tpu.dot_dimension_numbers<[1], [0], [0], [1], [0, 0, 1, 1], [], []>} : vector<1x32xf32>, vector<32x32xf32>, vector<1x32xf32> -> vector<1x32xf32>
    %c1_250 = arith.constant 1 : index
    %c0_251 = arith.constant 0 : index
    %c0_252 = arith.constant 0 : index
    %487 = vector.load %arg8[%c1_250, %c0_251, %c0_252] : memref<2x1x32xf32, #tpu.memory_space<vmem>>, vector<1x1x32xf32>
    %488 = vector.shape_cast %487 : vector<1x1x32xf32> to vector<1x32xf32>
    %489 = arith.addf %486, %488 : vector<1x32xf32>
    %490 = tpu.concatenate %489, %483 in 0 : vector<1x32xf32>, vector<12x32xf32> -> vector<13x32xf32>
    %c1_253 = arith.constant 1 : index
    %c0_254 = arith.constant 0 : index
    %c0_255 = arith.constant 0 : index
    %491 = vector.load %arg9[%c1_253, %c0_254, %c0_255] : memref<2x32x96xf32, #tpu.memory_space<vmem>>, vector<1x32x96xf32>
    %492 = vector.shape_cast %491 : vector<1x32x96xf32> to vector<32x96xf32>
    %c1_256 = arith.constant 1 : index
    %c0_257 = arith.constant 0 : index
    %c0_258 = arith.constant 0 : index
    %493 = vector.load %arg10[%c1_256, %c0_257, %c0_258] : memref<2x1x96xf32, #tpu.memory_space<vmem>>, vector<1x1x96xf32>
    %494 = vector.shape_cast %493 : vector<1x1x96xf32> to vector<1x96xf32>
    %c1_259 = arith.constant 1 : index
    %c0_260 = arith.constant 0 : index
    %c0_261 = arith.constant 0 : index
    %495 = vector.load %arg11[%c1_259, %c0_260, %c0_261] : memref<2x32x32xf32, #tpu.memory_space<vmem>>, vector<1x32x32xf32>
    %496 = vector.shape_cast %495 : vector<1x32x32xf32> to vector<32x32xf32>
    %c1_262 = arith.constant 1 : index
    %c0_263 = arith.constant 0 : index
    %c0_264 = arith.constant 0 : index
    %497 = vector.load %arg12[%c1_262, %c0_263, %c0_264] : memref<2x1x32xf32, #tpu.memory_space<vmem>>, vector<1x1x32xf32>
    %498 = vector.shape_cast %497 : vector<1x1x32xf32> to vector<1x32xf32>
    %c1_265 = arith.constant 1 : index
    %c0_266 = arith.constant 0 : index
    %c0_267 = arith.constant 0 : index
    %499 = vector.load %arg13[%c1_265, %c0_266, %c0_267] : memref<2x1x32xf32, #tpu.memory_space<vmem>>, vector<1x1x32xf32>
    %500 = vector.shape_cast %499 : vector<1x1x32xf32> to vector<1x32xf32>
    %c1_268 = arith.constant 1 : index
    %c0_269 = arith.constant 0 : index
    %c0_270 = arith.constant 0 : index
    %501 = vector.load %arg14[%c1_268, %c0_269, %c0_270] : memref<2x1x32xf32, #tpu.memory_space<vmem>>, vector<1x1x32xf32>
    %502 = vector.shape_cast %501 : vector<1x1x32xf32> to vector<1x32xf32>
    %c1_271 = arith.constant 1 : index
    %c0_272 = arith.constant 0 : index
    %c0_273 = arith.constant 0 : index
    %503 = vector.load %arg15[%c1_271, %c0_272, %c0_273] : memref<2x1x32xf32, #tpu.memory_space<vmem>>, vector<1x1x32xf32>
    %504 = vector.shape_cast %503 : vector<1x1x32xf32> to vector<1x32xf32>
    %c1_274 = arith.constant 1 : index
    %c0_275 = arith.constant 0 : index
    %c0_276 = arith.constant 0 : index
    %505 = vector.load %arg16[%c1_274, %c0_275, %c0_276] : memref<2x1x32xf32, #tpu.memory_space<vmem>>, vector<1x1x32xf32>
    %506 = vector.shape_cast %505 : vector<1x1x32xf32> to vector<1x32xf32>
    %c1_277 = arith.constant 1 : index
    %c0_278 = arith.constant 0 : index
    %c0_279 = arith.constant 0 : index
    %507 = vector.load %arg17[%c1_277, %c0_278, %c0_279] : memref<2x32x64xf32, #tpu.memory_space<vmem>>, vector<1x32x64xf32>
    %508 = vector.shape_cast %507 : vector<1x32x64xf32> to vector<32x64xf32>
    %c1_280 = arith.constant 1 : index
    %c0_281 = arith.constant 0 : index
    %c0_282 = arith.constant 0 : index
    %509 = vector.load %arg18[%c1_280, %c0_281, %c0_282] : memref<2x1x64xf32, #tpu.memory_space<vmem>>, vector<1x1x64xf32>
    %510 = vector.shape_cast %509 : vector<1x1x64xf32> to vector<1x64xf32>
    %c1_283 = arith.constant 1 : index
    %c0_284 = arith.constant 0 : index
    %c0_285 = arith.constant 0 : index
    %511 = vector.load %arg19[%c1_283, %c0_284, %c0_285] : memref<2x64x32xf32, #tpu.memory_space<vmem>>, vector<1x64x32xf32>
    %512 = vector.shape_cast %511 : vector<1x64x32xf32> to vector<64x32xf32>
    %c1_286 = arith.constant 1 : index
    %c0_287 = arith.constant 0 : index
    %c0_288 = arith.constant 0 : index
    %513 = vector.load %arg20[%c1_286, %c0_287, %c0_288] : memref<2x1x32xf32, #tpu.memory_space<vmem>>, vector<1x1x32xf32>
    %514 = vector.shape_cast %513 : vector<1x1x32xf32> to vector<1x32xf32>
    %cst_289 = arith.constant dense<0.000000e+00> : vector<13x96xf32>
    %515 = tpu.matmul %490, %492, %cst_289 {dimension_numbers = #tpu.dot_dimension_numbers<[1], [0], [0], [1], [0, 0, 1, 1], [], []>} : vector<13x32xf32>, vector<32x96xf32>, vector<13x96xf32> -> vector<13x96xf32>
    %516 = vector.broadcast %494 : vector<1x96xf32> to vector<13x96xf32>
    %517 = arith.addf %515, %516 : vector<13x96xf32>
    %518 = vector.extract_strided_slice %517 {offsets = [0, 0], sizes = [13, 32], strides = [1, 1]} : vector<13x96xf32> to vector<13x32xf32>
    %519 = vector.extract_strided_slice %517 {offsets = [0, 32], sizes = [13, 32], strides = [1, 1]} : vector<13x96xf32> to vector<13x32xf32>
    %520 = vector.extract_strided_slice %517 {offsets = [0, 64], sizes = [13, 32], strides = [1, 1]} : vector<13x96xf32> to vector<13x32xf32>
    %521 = vector.extract_strided_slice %518 {offsets = [0, 0], sizes = [13, 16], strides = [1, 1]} : vector<13x32xf32> to vector<13x16xf32>
    %522 = vector.extract_strided_slice %519 {offsets = [0, 0], sizes = [13, 16], strides = [1, 1]} : vector<13x32xf32> to vector<13x16xf32>
    %523 = vector.extract_strided_slice %520 {offsets = [0, 0], sizes = [13, 16], strides = [1, 1]} : vector<13x32xf32> to vector<13x16xf32>
    %cst_290 = arith.constant dense<0.000000e+00> : vector<13x13xf32>
    %524 = tpu.matmul %521, %522, %cst_290 {dimension_numbers = #tpu.dot_dimension_numbers<[1], [1], [0], [0], [0, 0, 1, 0], [], []>} : vector<13x16xf32>, vector<13x16xf32>, vector<13x13xf32> -> vector<13x13xf32>
    %cst_291 = arith.constant 2.500000e-01 : f32
    %525 = vector.broadcast %cst_291 : f32 to vector<13x13xf32>
    %526 = arith.mulf %524, %525 : vector<13x13xf32>
    %527 = arith.addf %526, %14 : vector<13x13xf32>
    %cst_292 = arith.constant dense<0xFF800000> : vector<13xf32>
    %528 = vector.multi_reduction <maximumf>, %527, %cst_292 [1] : vector<13x13xf32> to vector<13xf32>
    %529 = vector.shape_cast %528 : vector<13xf32> to vector<13x1xf32>
    %530 = vector.broadcast %529 : vector<13x1xf32> to vector<13x13xf32>
    %531 = arith.subf %527, %530 : vector<13x13xf32>
    %532 = math.exp %531 : vector<13x13xf32>
    %cst_293 = arith.constant dense<0.000000e+00> : vector<13xf32>
    %533 = vector.multi_reduction <add>, %532, %cst_293 [1] : vector<13x13xf32> to vector<13xf32>
    %534 = vector.shape_cast %533 : vector<13xf32> to vector<13x1xf32>
    %535 = tpu.reciprocal %534 {approx = true} : vector<13x1xf32> -> vector<13x1xf32>
    %536 = vector.broadcast %535 : vector<13x1xf32> to vector<13x13xf32>
    %537 = arith.mulf %532, %536 : vector<13x13xf32>
    %cst_294 = arith.constant dense<0.000000e+00> : vector<13x16xf32>
    %538 = tpu.matmul %537, %523, %cst_294 {dimension_numbers = #tpu.dot_dimension_numbers<[1], [0], [0], [1], [0, 0, 1, 1], [], []>} : vector<13x13xf32>, vector<13x16xf32>, vector<13x16xf32> -> vector<13x16xf32>
    %539 = vector.extract_strided_slice %518 {offsets = [0, 16], sizes = [13, 16], strides = [1, 1]} : vector<13x32xf32> to vector<13x16xf32>
    %540 = vector.extract_strided_slice %519 {offsets = [0, 16], sizes = [13, 16], strides = [1, 1]} : vector<13x32xf32> to vector<13x16xf32>
    %541 = vector.extract_strided_slice %520 {offsets = [0, 16], sizes = [13, 16], strides = [1, 1]} : vector<13x32xf32> to vector<13x16xf32>
    %cst_295 = arith.constant dense<0.000000e+00> : vector<13x13xf32>
    %542 = tpu.matmul %539, %540, %cst_295 {dimension_numbers = #tpu.dot_dimension_numbers<[1], [1], [0], [0], [0, 0, 1, 0], [], []>} : vector<13x16xf32>, vector<13x16xf32>, vector<13x13xf32> -> vector<13x13xf32>
    %cst_296 = arith.constant 2.500000e-01 : f32
    %543 = vector.broadcast %cst_296 : f32 to vector<13x13xf32>
    %544 = arith.mulf %542, %543 : vector<13x13xf32>
    %545 = arith.addf %544, %14 : vector<13x13xf32>
    %cst_297 = arith.constant dense<0xFF800000> : vector<13xf32>
    %546 = vector.multi_reduction <maximumf>, %545, %cst_297 [1] : vector<13x13xf32> to vector<13xf32>
    %547 = vector.shape_cast %546 : vector<13xf32> to vector<13x1xf32>
    %548 = vector.broadcast %547 : vector<13x1xf32> to vector<13x13xf32>
    %549 = arith.subf %545, %548 : vector<13x13xf32>
    %550 = math.exp %549 : vector<13x13xf32>
    %cst_298 = arith.constant dense<0.000000e+00> : vector<13xf32>
    %551 = vector.multi_reduction <add>, %550, %cst_298 [1] : vector<13x13xf32> to vector<13xf32>
    %552 = vector.shape_cast %551 : vector<13xf32> to vector<13x1xf32>
    %553 = tpu.reciprocal %552 {approx = true} : vector<13x1xf32> -> vector<13x1xf32>
    %554 = vector.broadcast %553 : vector<13x1xf32> to vector<13x13xf32>
    %555 = arith.mulf %550, %554 : vector<13x13xf32>
    %cst_299 = arith.constant dense<0.000000e+00> : vector<13x16xf32>
    %556 = tpu.matmul %555, %541, %cst_299 {dimension_numbers = #tpu.dot_dimension_numbers<[1], [0], [0], [1], [0, 0, 1, 1], [], []>} : vector<13x13xf32>, vector<13x16xf32>, vector<13x16xf32> -> vector<13x16xf32>
    %557 = tpu.concatenate %538, %556 in 1 : vector<13x16xf32>, vector<13x16xf32> -> vector<13x32xf32>
    %cst_300 = arith.constant dense<0.000000e+00> : vector<13x32xf32>
    %558 = tpu.matmul %557, %496, %cst_300 {dimension_numbers = #tpu.dot_dimension_numbers<[1], [0], [0], [1], [0, 0, 1, 1], [], []>} : vector<13x32xf32>, vector<32x32xf32>, vector<13x32xf32> -> vector<13x32xf32>
    %559 = vector.broadcast %498 : vector<1x32xf32> to vector<13x32xf32>
    %560 = arith.addf %558, %559 : vector<13x32xf32>
    %561 = arith.addf %490, %560 : vector<13x32xf32>
    %cst_301 = arith.constant dense<0.000000e+00> : vector<13xf32>
    %562 = vector.multi_reduction <add>, %561, %cst_301 [1] : vector<13x32xf32> to vector<13xf32>
    %563 = vector.shape_cast %562 : vector<13xf32> to vector<13x1xf32>
    %cst_302 = arith.constant 3.200000e+01 : f32
    %564 = vector.broadcast %cst_302 : f32 to vector<13x1xf32>
    %565 = arith.divf %563, %564 : vector<13x1xf32>
    %566 = vector.broadcast %565 : vector<13x1xf32> to vector<13x32xf32>
    %567 = arith.subf %561, %566 : vector<13x32xf32>
    %568 = arith.mulf %567, %567 : vector<13x32xf32>
    %cst_303 = arith.constant dense<0.000000e+00> : vector<13xf32>
    %569 = vector.multi_reduction <add>, %568, %cst_303 [1] : vector<13x32xf32> to vector<13xf32>
    %570 = vector.shape_cast %569 : vector<13xf32> to vector<13x1xf32>
    %cst_304 = arith.constant 3.200000e+01 : f32
    %571 = vector.broadcast %cst_304 : f32 to vector<13x1xf32>
    %572 = arith.divf %570, %571 : vector<13x1xf32>
    %573 = vector.broadcast %565 : vector<13x1xf32> to vector<13x32xf32>
    %574 = arith.subf %561, %573 : vector<13x32xf32>
    %cst_305 = arith.constant 9.99999974E-6 : f32
    %575 = vector.broadcast %cst_305 : f32 to vector<13x1xf32>
    %576 = arith.addf %572, %575 : vector<13x1xf32>
    %577 = math.rsqrt %576 : vector<13x1xf32>
    %578 = vector.broadcast %577 : vector<13x1xf32> to vector<13x32xf32>
    %579 = arith.mulf %574, %578 : vector<13x32xf32>
    %580 = vector.broadcast %500 : vector<1x32xf32> to vector<13x32xf32>
    %581 = arith.mulf %579, %580 : vector<13x32xf32>
    %582 = vector.broadcast %502 : vector<1x32xf32> to vector<13x32xf32>
    %583 = arith.addf %581, %582 : vector<13x32xf32>
    %cst_306 = arith.constant dense<0.000000e+00> : vector<13x64xf32>
    %584 = tpu.matmul %583, %508, %cst_306 {dimension_numbers = #tpu.dot_dimension_numbers<[1], [0], [0], [1], [0, 0, 1, 1], [], []>} : vector<13x32xf32>, vector<32x64xf32>, vector<13x64xf32> -> vector<13x64xf32>
    %585 = vector.broadcast %510 : vector<1x64xf32> to vector<13x64xf32>
    %586 = arith.addf %584, %585 : vector<13x64xf32>
    %587 = arith.mulf %586, %586 : vector<13x64xf32>
    %588 = arith.mulf %586, %587 : vector<13x64xf32>
    %cst_307 = arith.constant 4.471500e-02 : f32
    %589 = vector.broadcast %cst_307 : f32 to vector<13x64xf32>
    %590 = arith.mulf %589, %588 : vector<13x64xf32>
    %591 = arith.addf %586, %590 : vector<13x64xf32>
    %cst_308 = arith.constant 0.797884583 : f32
    %592 = vector.broadcast %cst_308 : f32 to vector<13x64xf32>
    %593 = arith.mulf %592, %591 : vector<13x64xf32>
    %594 = math.tanh %593 : vector<13x64xf32>
    %cst_309 = arith.constant 1.000000e+00 : f32
    %595 = vector.broadcast %cst_309 : f32 to vector<13x64xf32>
    %596 = arith.addf %595, %594 : vector<13x64xf32>
    %cst_310 = arith.constant 5.000000e-01 : f32
    %597 = vector.broadcast %cst_310 : f32 to vector<13x64xf32>
    %598 = arith.mulf %597, %596 : vector<13x64xf32>
    %599 = arith.mulf %586, %598 : vector<13x64xf32>
    %cst_311 = arith.constant dense<0.000000e+00> : vector<13x32xf32>
    %600 = tpu.matmul %599, %512, %cst_311 {dimension_numbers = #tpu.dot_dimension_numbers<[1], [0], [0], [1], [0, 0, 1, 1], [], []>} : vector<13x64xf32>, vector<64x32xf32>, vector<13x32xf32> -> vector<13x32xf32>
    %601 = vector.broadcast %514 : vector<1x32xf32> to vector<13x32xf32>
    %602 = arith.addf %600, %601 : vector<13x32xf32>
    %603 = arith.addf %583, %602 : vector<13x32xf32>
    %cst_312 = arith.constant dense<0.000000e+00> : vector<13xf32>
    %604 = vector.multi_reduction <add>, %603, %cst_312 [1] : vector<13x32xf32> to vector<13xf32>
    %605 = vector.shape_cast %604 : vector<13xf32> to vector<13x1xf32>
    %cst_313 = arith.constant 3.200000e+01 : f32
    %606 = vector.broadcast %cst_313 : f32 to vector<13x1xf32>
    %607 = arith.divf %605, %606 : vector<13x1xf32>
    %608 = vector.broadcast %607 : vector<13x1xf32> to vector<13x32xf32>
    %609 = arith.subf %603, %608 : vector<13x32xf32>
    %610 = arith.mulf %609, %609 : vector<13x32xf32>
    %cst_314 = arith.constant dense<0.000000e+00> : vector<13xf32>
    %611 = vector.multi_reduction <add>, %610, %cst_314 [1] : vector<13x32xf32> to vector<13xf32>
    %612 = vector.shape_cast %611 : vector<13xf32> to vector<13x1xf32>
    %cst_315 = arith.constant 3.200000e+01 : f32
    %613 = vector.broadcast %cst_315 : f32 to vector<13x1xf32>
    %614 = arith.divf %612, %613 : vector<13x1xf32>
    %615 = vector.broadcast %607 : vector<13x1xf32> to vector<13x32xf32>
    %616 = arith.subf %603, %615 : vector<13x32xf32>
    %cst_316 = arith.constant 9.99999974E-6 : f32
    %617 = vector.broadcast %cst_316 : f32 to vector<13x1xf32>
    %618 = arith.addf %614, %617 : vector<13x1xf32>
    %619 = math.rsqrt %618 : vector<13x1xf32>
    %620 = vector.broadcast %619 : vector<13x1xf32> to vector<13x32xf32>
    %621 = arith.mulf %616, %620 : vector<13x32xf32>
    %622 = vector.broadcast %504 : vector<1x32xf32> to vector<13x32xf32>
    %623 = arith.mulf %621, %622 : vector<13x32xf32>
    %624 = vector.broadcast %506 : vector<1x32xf32> to vector<13x32xf32>
    %625 = arith.addf %623, %624 : vector<13x32xf32>
    %626 = vector.extract_strided_slice %625 {offsets = [1, 0], sizes = [12, 32], strides = [1, 1]} : vector<13x32xf32> to vector<12x32xf32>
    %627 = vector.extract_strided_slice %626 {offsets = [4, 0], sizes = [8, 32], strides = [1, 1]} : vector<12x32xf32> to vector<8x32xf32>
    %c0_317 = arith.constant 0 : index
    %c0_318 = arith.constant 0 : index
    %628 = vector.load %arg5[%c0_317, %c0_318] : memref<32x16xf32, #tpu.memory_space<vmem>>, vector<32x16xf32>
    %cst_319 = arith.constant dense<0.000000e+00> : vector<8x16xf32>
    %629 = tpu.matmul %627, %628, %cst_319 {dimension_numbers = #tpu.dot_dimension_numbers<[1], [0], [0], [1], [0, 0, 1, 1], [], []>} : vector<8x32xf32>, vector<32x16xf32>, vector<8x16xf32> -> vector<8x16xf32>
    %c0_320 = arith.constant 0 : index
    %c0_321 = arith.constant 0 : index
    %630 = vector.load %arg6[%c0_320, %c0_321] : memref<1x16xf32, #tpu.memory_space<vmem>>, vector<1x16xf32>
    %631 = vector.broadcast %630 : vector<1x16xf32> to vector<8x16xf32>
    %632 = arith.addf %629, %631 : vector<8x16xf32>
    %633 = vector.extract_strided_slice %328 {offsets = [3, 0], sizes = [1, 16], strides = [1, 1]} : vector<4x16xf32> to vector<1x16xf32>
    %634 = vector.broadcast %633 : vector<1x16xf32> to vector<8x16xf32>
    %635 = arith.addf %632, %634 : vector<8x16xf32>
    %c1_322 = arith.constant 1 : index
    %c0_323 = arith.constant 0 : index
    %c0_324 = arith.constant 0 : index
    %636 = vector.load %arg21[%c1_322, %c0_323, %c0_324] : memref<2x8x16xf32, #tpu.memory_space<vmem>>, vector<1x8x16xf32>
    %637 = vector.shape_cast %636 : vector<1x8x16xf32> to vector<8x16xf32>
    %638 = vector.shape_cast %635 : vector<8x16xf32> to vector<1x8x16xf32>
    tpu.vector_store %arg21[%c1_322, %c0_323, %c0_324], %638 {strides = array<i32>} : memref<2x8x16xf32, #tpu.memory_space<vmem>>, vector<1x8x16xf32>,
    return
  }
}

module attributes {stable_mosaic.version = 11 : i64} {
  func.func @_encoder_stack_kernel(%arg0: memref<2x6xf32, #tpu.memory_space<vmem>>, %arg1: memref<2x12x16xf32, #tpu.memory_space<vmem>>, %arg2: memref<2x14xf32, #tpu.memory_space<vmem>>, %arg3: memref<14x32xf32, #tpu.memory_space<vmem>>, %arg4: memref<6x64xf32, #tpu.memory_space<vmem>>, %arg5: memref<16x32xf32, #tpu.memory_space<vmem>>, %arg6: memref<1x32xf32, #tpu.memory_space<vmem>>, %arg7: memref<2x32x96xf32, #tpu.memory_space<vmem>>, %arg8: memref<2x1x96xf32, #tpu.memory_space<vmem>>, %arg9: memref<2x32x32xf32, #tpu.memory_space<vmem>>, %arg10: memref<2x1x32xf32, #tpu.memory_space<vmem>>, %arg11: memref<2x1x32xf32, #tpu.memory_space<vmem>>, %arg12: memref<2x1x32xf32, #tpu.memory_space<vmem>>, %arg13: memref<2x1x32xf32, #tpu.memory_space<vmem>>, %arg14: memref<2x1x32xf32, #tpu.memory_space<vmem>>, %arg15: memref<2x32x64xf32, #tpu.memory_space<vmem>>, %arg16: memref<2x1x64xf32, #tpu.memory_space<vmem>>, %arg17: memref<2x64x32xf32, #tpu.memory_space<vmem>>, %arg18: memref<2x1x32xf32, #tpu.memory_space<vmem>>, %arg19: memref<2x2x32xf32, #tpu.memory_space<vmem>>) attributes {dimension_semantics = [], scalar_prefetch = 0 : i64, scratch_operands = 0 : i64, tpu.core_type = #tpu.core_type<tc>} {
    %c0 = arith.constant 0 : index
    %c0_0 = arith.constant 0 : index
    %0 = vector.load %arg0[%c0, %c0_0] : memref<2x6xf32, #tpu.memory_space<vmem>>, vector<1x6xf32>
    %c0_1 = arith.constant 0 : index
    %c0_2 = arith.constant 0 : index
    %1 = vector.load %arg4[%c0_1, %c0_2] : memref<6x64xf32, #tpu.memory_space<vmem>>, vector<6x64xf32>
    %cst = arith.constant dense<0.000000e+00> : vector<1x64xf32>
    %2 = tpu.matmul %0, %1, %cst {dimension_numbers = #tpu.dot_dimension_numbers<[1], [0], [0], [1], [0, 0, 1, 1], [], []>} : vector<1x6xf32>, vector<6x64xf32>, vector<1x64xf32> -> vector<1x64xf32>
    %3 = vector.extract_strided_slice %2 {offsets = [0, 0], sizes = [1, 32], strides = [1, 1]} : vector<1x64xf32> to vector<1x32xf32>
    %4 = vector.extract_strided_slice %2 {offsets = [0, 32], sizes = [1, 32], strides = [1, 1]} : vector<1x64xf32> to vector<1x32xf32>
    %5 = tpu.concatenate %3, %4 in 0 : vector<1x32xf32>, vector<1x32xf32> -> vector<2x32xf32>
    %c0_3 = arith.constant 0 : index
    %c0_4 = arith.constant 0 : index
    %c0_5 = arith.constant 0 : index
    %6 = vector.load %arg1[%c0_3, %c0_4, %c0_5] : memref<2x12x16xf32, #tpu.memory_space<vmem>>, vector<1x12x16xf32>
    %7 = vector.shape_cast %6 : vector<1x12x16xf32> to vector<12x16xf32>
    %c0_6 = arith.constant 0 : index
    %c0_7 = arith.constant 0 : index
    %8 = vector.load %arg5[%c0_6, %c0_7] : memref<16x32xf32, #tpu.memory_space<vmem>>, vector<16x32xf32>
    %cst_8 = arith.constant dense<0.000000e+00> : vector<12x32xf32>
    %9 = tpu.matmul %7, %8, %cst_8 {dimension_numbers = #tpu.dot_dimension_numbers<[1], [0], [0], [1], [0, 0, 1, 1], [], []>} : vector<12x16xf32>, vector<16x32xf32>, vector<12x32xf32> -> vector<12x32xf32>
    %c0_9 = arith.constant 0 : index
    %c0_10 = arith.constant 0 : index
    %10 = vector.load %arg6[%c0_9, %c0_10] : memref<1x32xf32, #tpu.memory_space<vmem>>, vector<1x32xf32>
    %11 = vector.broadcast %10 : vector<1x32xf32> to vector<12x32xf32>
    %12 = arith.addf %9, %11 : vector<12x32xf32>
    %13 = tpu.concatenate %5, %12 in 0 : vector<2x32xf32>, vector<12x32xf32> -> vector<14x32xf32>
    %c0_11 = arith.constant 0 : index
    %c0_12 = arith.constant 0 : index
    %14 = vector.load %arg3[%c0_11, %c0_12] : memref<14x32xf32, #tpu.memory_space<vmem>>, vector<14x32xf32>
    %15 = arith.addf %13, %14 : vector<14x32xf32>
    %c0_13 = arith.constant 0 : index
    %c0_14 = arith.constant 0 : index
    %16 = vector.load %arg2[%c0_13, %c0_14] : memref<2x14xf32, #tpu.memory_space<vmem>>, vector<1x14xf32>
    %cst_15 = arith.constant 5.000000e-01 : f32
    %17 = vector.broadcast %cst_15 : f32 to vector<1x14xf32>
    %18 = arith.cmpf ogt, %16, %17 : vector<1x14xf32>
    %cst_16 = arith.constant -1.000000e+30 : f32
    %cst_17 = arith.constant 0.000000e+00 : f32
    %19 = vector.broadcast %cst_16 : f32 to vector<1x14xf32>
    %20 = vector.broadcast %cst_17 : f32 to vector<1x14xf32>
    %21 = arith.select %18, %19, %20 : vector<1x14xi1>, vector<1x14xf32>
    %c0_18 = arith.constant 0 : index
    %c0_19 = arith.constant 0 : index
    %c0_20 = arith.constant 0 : index
    %22 = vector.load %arg7[%c0_18, %c0_19, %c0_20] : memref<2x32x96xf32, #tpu.memory_space<vmem>>, vector<1x32x96xf32>
    %23 = vector.shape_cast %22 : vector<1x32x96xf32> to vector<32x96xf32>
    %c0_21 = arith.constant 0 : index
    %c0_22 = arith.constant 0 : index
    %c0_23 = arith.constant 0 : index
    %24 = vector.load %arg8[%c0_21, %c0_22, %c0_23] : memref<2x1x96xf32, #tpu.memory_space<vmem>>, vector<1x1x96xf32>
    %25 = vector.shape_cast %24 : vector<1x1x96xf32> to vector<1x96xf32>
    %c0_24 = arith.constant 0 : index
    %c0_25 = arith.constant 0 : index
    %c0_26 = arith.constant 0 : index
    %26 = vector.load %arg9[%c0_24, %c0_25, %c0_26] : memref<2x32x32xf32, #tpu.memory_space<vmem>>, vector<1x32x32xf32>
    %27 = vector.shape_cast %26 : vector<1x32x32xf32> to vector<32x32xf32>
    %c0_27 = arith.constant 0 : index
    %c0_28 = arith.constant 0 : index
    %c0_29 = arith.constant 0 : index
    %28 = vector.load %arg10[%c0_27, %c0_28, %c0_29] : memref<2x1x32xf32, #tpu.memory_space<vmem>>, vector<1x1x32xf32>
    %29 = vector.shape_cast %28 : vector<1x1x32xf32> to vector<1x32xf32>
    %c0_30 = arith.constant 0 : index
    %c0_31 = arith.constant 0 : index
    %c0_32 = arith.constant 0 : index
    %30 = vector.load %arg11[%c0_30, %c0_31, %c0_32] : memref<2x1x32xf32, #tpu.memory_space<vmem>>, vector<1x1x32xf32>
    %31 = vector.shape_cast %30 : vector<1x1x32xf32> to vector<1x32xf32>
    %c0_33 = arith.constant 0 : index
    %c0_34 = arith.constant 0 : index
    %c0_35 = arith.constant 0 : index
    %32 = vector.load %arg12[%c0_33, %c0_34, %c0_35] : memref<2x1x32xf32, #tpu.memory_space<vmem>>, vector<1x1x32xf32>
    %33 = vector.shape_cast %32 : vector<1x1x32xf32> to vector<1x32xf32>
    %c0_36 = arith.constant 0 : index
    %c0_37 = arith.constant 0 : index
    %c0_38 = arith.constant 0 : index
    %34 = vector.load %arg13[%c0_36, %c0_37, %c0_38] : memref<2x1x32xf32, #tpu.memory_space<vmem>>, vector<1x1x32xf32>
    %35 = vector.shape_cast %34 : vector<1x1x32xf32> to vector<1x32xf32>
    %c0_39 = arith.constant 0 : index
    %c0_40 = arith.constant 0 : index
    %c0_41 = arith.constant 0 : index
    %36 = vector.load %arg14[%c0_39, %c0_40, %c0_41] : memref<2x1x32xf32, #tpu.memory_space<vmem>>, vector<1x1x32xf32>
    %37 = vector.shape_cast %36 : vector<1x1x32xf32> to vector<1x32xf32>
    %c0_42 = arith.constant 0 : index
    %c0_43 = arith.constant 0 : index
    %c0_44 = arith.constant 0 : index
    %38 = vector.load %arg15[%c0_42, %c0_43, %c0_44] : memref<2x32x64xf32, #tpu.memory_space<vmem>>, vector<1x32x64xf32>
    %39 = vector.shape_cast %38 : vector<1x32x64xf32> to vector<32x64xf32>
    %c0_45 = arith.constant 0 : index
    %c0_46 = arith.constant 0 : index
    %c0_47 = arith.constant 0 : index
    %40 = vector.load %arg16[%c0_45, %c0_46, %c0_47] : memref<2x1x64xf32, #tpu.memory_space<vmem>>, vector<1x1x64xf32>
    %41 = vector.shape_cast %40 : vector<1x1x64xf32> to vector<1x64xf32>
    %c0_48 = arith.constant 0 : index
    %c0_49 = arith.constant 0 : index
    %c0_50 = arith.constant 0 : index
    %42 = vector.load %arg17[%c0_48, %c0_49, %c0_50] : memref<2x64x32xf32, #tpu.memory_space<vmem>>, vector<1x64x32xf32>
    %43 = vector.shape_cast %42 : vector<1x64x32xf32> to vector<64x32xf32>
    %c0_51 = arith.constant 0 : index
    %c0_52 = arith.constant 0 : index
    %c0_53 = arith.constant 0 : index
    %44 = vector.load %arg18[%c0_51, %c0_52, %c0_53] : memref<2x1x32xf32, #tpu.memory_space<vmem>>, vector<1x1x32xf32>
    %45 = vector.shape_cast %44 : vector<1x1x32xf32> to vector<1x32xf32>
    %cst_54 = arith.constant dense<0.000000e+00> : vector<14x96xf32>
    %46 = tpu.matmul %15, %23, %cst_54 {dimension_numbers = #tpu.dot_dimension_numbers<[1], [0], [0], [1], [0, 0, 1, 1], [], []>} : vector<14x32xf32>, vector<32x96xf32>, vector<14x96xf32> -> vector<14x96xf32>
    %47 = vector.broadcast %25 : vector<1x96xf32> to vector<14x96xf32>
    %48 = arith.addf %46, %47 : vector<14x96xf32>
    %49 = vector.extract_strided_slice %48 {offsets = [0, 0], sizes = [14, 32], strides = [1, 1]} : vector<14x96xf32> to vector<14x32xf32>
    %50 = vector.extract_strided_slice %48 {offsets = [0, 32], sizes = [14, 32], strides = [1, 1]} : vector<14x96xf32> to vector<14x32xf32>
    %51 = vector.extract_strided_slice %48 {offsets = [0, 64], sizes = [14, 32], strides = [1, 1]} : vector<14x96xf32> to vector<14x32xf32>
    %52 = vector.extract_strided_slice %49 {offsets = [0, 0], sizes = [14, 16], strides = [1, 1]} : vector<14x32xf32> to vector<14x16xf32>
    %53 = vector.extract_strided_slice %50 {offsets = [0, 0], sizes = [14, 16], strides = [1, 1]} : vector<14x32xf32> to vector<14x16xf32>
    %54 = vector.extract_strided_slice %51 {offsets = [0, 0], sizes = [14, 16], strides = [1, 1]} : vector<14x32xf32> to vector<14x16xf32>
    %cst_55 = arith.constant dense<0.000000e+00> : vector<14x14xf32>
    %55 = tpu.matmul %52, %53, %cst_55 {dimension_numbers = #tpu.dot_dimension_numbers<[1], [1], [0], [0], [0, 0, 1, 0], [], []>} : vector<14x16xf32>, vector<14x16xf32>, vector<14x14xf32> -> vector<14x14xf32>
    %cst_56 = arith.constant 2.500000e-01 : f32
    %56 = vector.broadcast %cst_56 : f32 to vector<14x14xf32>
    %57 = arith.mulf %55, %56 : vector<14x14xf32>
    %58 = vector.broadcast %21 : vector<1x14xf32> to vector<14x14xf32>
    %59 = arith.addf %57, %58 : vector<14x14xf32>
    %cst_57 = arith.constant dense<0xFF800000> : vector<14xf32>
    %60 = vector.multi_reduction <maximumf>, %59, %cst_57 [1] : vector<14x14xf32> to vector<14xf32>
    %61 = vector.shape_cast %60 : vector<14xf32> to vector<14x1xf32>
    %62 = vector.broadcast %61 : vector<14x1xf32> to vector<14x14xf32>
    %63 = arith.subf %59, %62 : vector<14x14xf32>
    %64 = math.exp %63 : vector<14x14xf32>
    %cst_58 = arith.constant dense<0.000000e+00> : vector<14xf32>
    %65 = vector.multi_reduction <add>, %64, %cst_58 [1] : vector<14x14xf32> to vector<14xf32>
    %66 = vector.shape_cast %65 : vector<14xf32> to vector<14x1xf32>
    %67 = tpu.reciprocal %66 {approx = true} : vector<14x1xf32> -> vector<14x1xf32>
    %68 = vector.broadcast %67 : vector<14x1xf32> to vector<14x14xf32>
    %69 = arith.mulf %64, %68 : vector<14x14xf32>
    %cst_59 = arith.constant dense<0.000000e+00> : vector<14x16xf32>
    %70 = tpu.matmul %69, %54, %cst_59 {dimension_numbers = #tpu.dot_dimension_numbers<[1], [0], [0], [1], [0, 0, 1, 1], [], []>} : vector<14x14xf32>, vector<14x16xf32>, vector<14x16xf32> -> vector<14x16xf32>
    %71 = vector.extract_strided_slice %49 {offsets = [0, 16], sizes = [14, 16], strides = [1, 1]} : vector<14x32xf32> to vector<14x16xf32>
    %72 = vector.extract_strided_slice %50 {offsets = [0, 16], sizes = [14, 16], strides = [1, 1]} : vector<14x32xf32> to vector<14x16xf32>
    %73 = vector.extract_strided_slice %51 {offsets = [0, 16], sizes = [14, 16], strides = [1, 1]} : vector<14x32xf32> to vector<14x16xf32>
    %cst_60 = arith.constant dense<0.000000e+00> : vector<14x14xf32>
    %74 = tpu.matmul %71, %72, %cst_60 {dimension_numbers = #tpu.dot_dimension_numbers<[1], [1], [0], [0], [0, 0, 1, 0], [], []>} : vector<14x16xf32>, vector<14x16xf32>, vector<14x14xf32> -> vector<14x14xf32>
    %cst_61 = arith.constant 2.500000e-01 : f32
    %75 = vector.broadcast %cst_61 : f32 to vector<14x14xf32>
    %76 = arith.mulf %74, %75 : vector<14x14xf32>
    %77 = vector.broadcast %21 : vector<1x14xf32> to vector<14x14xf32>
    %78 = arith.addf %76, %77 : vector<14x14xf32>
    %cst_62 = arith.constant dense<0xFF800000> : vector<14xf32>
    %79 = vector.multi_reduction <maximumf>, %78, %cst_62 [1] : vector<14x14xf32> to vector<14xf32>
    %80 = vector.shape_cast %79 : vector<14xf32> to vector<14x1xf32>
    %81 = vector.broadcast %80 : vector<14x1xf32> to vector<14x14xf32>
    %82 = arith.subf %78, %81 : vector<14x14xf32>
    %83 = math.exp %82 : vector<14x14xf32>
    %cst_63 = arith.constant dense<0.000000e+00> : vector<14xf32>
    %84 = vector.multi_reduction <add>, %83, %cst_63 [1] : vector<14x14xf32> to vector<14xf32>
    %85 = vector.shape_cast %84 : vector<14xf32> to vector<14x1xf32>
    %86 = tpu.reciprocal %85 {approx = true} : vector<14x1xf32> -> vector<14x1xf32>
    %87 = vector.broadcast %86 : vector<14x1xf32> to vector<14x14xf32>
    %88 = arith.mulf %83, %87 : vector<14x14xf32>
    %cst_64 = arith.constant dense<0.000000e+00> : vector<14x16xf32>
    %89 = tpu.matmul %88, %73, %cst_64 {dimension_numbers = #tpu.dot_dimension_numbers<[1], [0], [0], [1], [0, 0, 1, 1], [], []>} : vector<14x14xf32>, vector<14x16xf32>, vector<14x16xf32> -> vector<14x16xf32>
    %90 = tpu.concatenate %70, %89 in 1 : vector<14x16xf32>, vector<14x16xf32> -> vector<14x32xf32>
    %cst_65 = arith.constant dense<0.000000e+00> : vector<14x32xf32>
    %91 = tpu.matmul %90, %27, %cst_65 {dimension_numbers = #tpu.dot_dimension_numbers<[1], [0], [0], [1], [0, 0, 1, 1], [], []>} : vector<14x32xf32>, vector<32x32xf32>, vector<14x32xf32> -> vector<14x32xf32>
    %92 = vector.broadcast %29 : vector<1x32xf32> to vector<14x32xf32>
    %93 = arith.addf %91, %92 : vector<14x32xf32>
    %94 = arith.addf %15, %93 : vector<14x32xf32>
    %cst_66 = arith.constant dense<0.000000e+00> : vector<14xf32>
    %95 = vector.multi_reduction <add>, %94, %cst_66 [1] : vector<14x32xf32> to vector<14xf32>
    %96 = vector.shape_cast %95 : vector<14xf32> to vector<14x1xf32>
    %cst_67 = arith.constant 3.200000e+01 : f32
    %97 = vector.broadcast %cst_67 : f32 to vector<14x1xf32>
    %98 = arith.divf %96, %97 : vector<14x1xf32>
    %99 = vector.broadcast %98 : vector<14x1xf32> to vector<14x32xf32>
    %100 = arith.subf %94, %99 : vector<14x32xf32>
    %101 = arith.mulf %100, %100 : vector<14x32xf32>
    %cst_68 = arith.constant dense<0.000000e+00> : vector<14xf32>
    %102 = vector.multi_reduction <add>, %101, %cst_68 [1] : vector<14x32xf32> to vector<14xf32>
    %103 = vector.shape_cast %102 : vector<14xf32> to vector<14x1xf32>
    %cst_69 = arith.constant 3.200000e+01 : f32
    %104 = vector.broadcast %cst_69 : f32 to vector<14x1xf32>
    %105 = arith.divf %103, %104 : vector<14x1xf32>
    %106 = vector.broadcast %98 : vector<14x1xf32> to vector<14x32xf32>
    %107 = arith.subf %94, %106 : vector<14x32xf32>
    %cst_70 = arith.constant 9.99999974E-6 : f32
    %108 = vector.broadcast %cst_70 : f32 to vector<14x1xf32>
    %109 = arith.addf %105, %108 : vector<14x1xf32>
    %110 = math.rsqrt %109 : vector<14x1xf32>
    %111 = vector.broadcast %110 : vector<14x1xf32> to vector<14x32xf32>
    %112 = arith.mulf %107, %111 : vector<14x32xf32>
    %113 = vector.broadcast %31 : vector<1x32xf32> to vector<14x32xf32>
    %114 = arith.mulf %112, %113 : vector<14x32xf32>
    %115 = vector.broadcast %33 : vector<1x32xf32> to vector<14x32xf32>
    %116 = arith.addf %114, %115 : vector<14x32xf32>
    %cst_71 = arith.constant dense<0.000000e+00> : vector<14x64xf32>
    %117 = tpu.matmul %116, %39, %cst_71 {dimension_numbers = #tpu.dot_dimension_numbers<[1], [0], [0], [1], [0, 0, 1, 1], [], []>} : vector<14x32xf32>, vector<32x64xf32>, vector<14x64xf32> -> vector<14x64xf32>
    %118 = vector.broadcast %41 : vector<1x64xf32> to vector<14x64xf32>
    %119 = arith.addf %117, %118 : vector<14x64xf32>
    %120 = arith.mulf %119, %119 : vector<14x64xf32>
    %121 = arith.mulf %119, %120 : vector<14x64xf32>
    %cst_72 = arith.constant 4.471500e-02 : f32
    %122 = vector.broadcast %cst_72 : f32 to vector<14x64xf32>
    %123 = arith.mulf %122, %121 : vector<14x64xf32>
    %124 = arith.addf %119, %123 : vector<14x64xf32>
    %cst_73 = arith.constant 0.797884583 : f32
    %125 = vector.broadcast %cst_73 : f32 to vector<14x64xf32>
    %126 = arith.mulf %125, %124 : vector<14x64xf32>
    %127 = math.tanh %126 : vector<14x64xf32>
    %cst_74 = arith.constant 1.000000e+00 : f32
    %128 = vector.broadcast %cst_74 : f32 to vector<14x64xf32>
    %129 = arith.addf %128, %127 : vector<14x64xf32>
    %cst_75 = arith.constant 5.000000e-01 : f32
    %130 = vector.broadcast %cst_75 : f32 to vector<14x64xf32>
    %131 = arith.mulf %130, %129 : vector<14x64xf32>
    %132 = arith.mulf %119, %131 : vector<14x64xf32>
    %cst_76 = arith.constant dense<0.000000e+00> : vector<14x32xf32>
    %133 = tpu.matmul %132, %43, %cst_76 {dimension_numbers = #tpu.dot_dimension_numbers<[1], [0], [0], [1], [0, 0, 1, 1], [], []>} : vector<14x64xf32>, vector<64x32xf32>, vector<14x32xf32> -> vector<14x32xf32>
    %134 = vector.broadcast %45 : vector<1x32xf32> to vector<14x32xf32>
    %135 = arith.addf %133, %134 : vector<14x32xf32>
    %136 = arith.addf %116, %135 : vector<14x32xf32>
    %cst_77 = arith.constant dense<0.000000e+00> : vector<14xf32>
    %137 = vector.multi_reduction <add>, %136, %cst_77 [1] : vector<14x32xf32> to vector<14xf32>
    %138 = vector.shape_cast %137 : vector<14xf32> to vector<14x1xf32>
    %cst_78 = arith.constant 3.200000e+01 : f32
    %139 = vector.broadcast %cst_78 : f32 to vector<14x1xf32>
    %140 = arith.divf %138, %139 : vector<14x1xf32>
    %141 = vector.broadcast %140 : vector<14x1xf32> to vector<14x32xf32>
    %142 = arith.subf %136, %141 : vector<14x32xf32>
    %143 = arith.mulf %142, %142 : vector<14x32xf32>
    %cst_79 = arith.constant dense<0.000000e+00> : vector<14xf32>
    %144 = vector.multi_reduction <add>, %143, %cst_79 [1] : vector<14x32xf32> to vector<14xf32>
    %145 = vector.shape_cast %144 : vector<14xf32> to vector<14x1xf32>
    %cst_80 = arith.constant 3.200000e+01 : f32
    %146 = vector.broadcast %cst_80 : f32 to vector<14x1xf32>
    %147 = arith.divf %145, %146 : vector<14x1xf32>
    %148 = vector.broadcast %140 : vector<14x1xf32> to vector<14x32xf32>
    %149 = arith.subf %136, %148 : vector<14x32xf32>
    %cst_81 = arith.constant 9.99999974E-6 : f32
    %150 = vector.broadcast %cst_81 : f32 to vector<14x1xf32>
    %151 = arith.addf %147, %150 : vector<14x1xf32>
    %152 = math.rsqrt %151 : vector<14x1xf32>
    %153 = vector.broadcast %152 : vector<14x1xf32> to vector<14x32xf32>
    %154 = arith.mulf %149, %153 : vector<14x32xf32>
    %155 = vector.broadcast %35 : vector<1x32xf32> to vector<14x32xf32>
    %156 = arith.mulf %154, %155 : vector<14x32xf32>
    %157 = vector.broadcast %37 : vector<1x32xf32> to vector<14x32xf32>
    %158 = arith.addf %156, %157 : vector<14x32xf32>
    %c1 = arith.constant 1 : index
    %c0_82 = arith.constant 0 : index
    %c0_83 = arith.constant 0 : index
    %159 = vector.load %arg7[%c1, %c0_82, %c0_83] : memref<2x32x96xf32, #tpu.memory_space<vmem>>, vector<1x32x96xf32>
    %160 = vector.shape_cast %159 : vector<1x32x96xf32> to vector<32x96xf32>
    %c1_84 = arith.constant 1 : index
    %c0_85 = arith.constant 0 : index
    %c0_86 = arith.constant 0 : index
    %161 = vector.load %arg8[%c1_84, %c0_85, %c0_86] : memref<2x1x96xf32, #tpu.memory_space<vmem>>, vector<1x1x96xf32>
    %162 = vector.shape_cast %161 : vector<1x1x96xf32> to vector<1x96xf32>
    %c1_87 = arith.constant 1 : index
    %c0_88 = arith.constant 0 : index
    %c0_89 = arith.constant 0 : index
    %163 = vector.load %arg9[%c1_87, %c0_88, %c0_89] : memref<2x32x32xf32, #tpu.memory_space<vmem>>, vector<1x32x32xf32>
    %164 = vector.shape_cast %163 : vector<1x32x32xf32> to vector<32x32xf32>
    %c1_90 = arith.constant 1 : index
    %c0_91 = arith.constant 0 : index
    %c0_92 = arith.constant 0 : index
    %165 = vector.load %arg10[%c1_90, %c0_91, %c0_92] : memref<2x1x32xf32, #tpu.memory_space<vmem>>, vector<1x1x32xf32>
    %166 = vector.shape_cast %165 : vector<1x1x32xf32> to vector<1x32xf32>
    %c1_93 = arith.constant 1 : index
    %c0_94 = arith.constant 0 : index
    %c0_95 = arith.constant 0 : index
    %167 = vector.load %arg11[%c1_93, %c0_94, %c0_95] : memref<2x1x32xf32, #tpu.memory_space<vmem>>, vector<1x1x32xf32>
    %168 = vector.shape_cast %167 : vector<1x1x32xf32> to vector<1x32xf32>
    %c1_96 = arith.constant 1 : index
    %c0_97 = arith.constant 0 : index
    %c0_98 = arith.constant 0 : index
    %169 = vector.load %arg12[%c1_96, %c0_97, %c0_98] : memref<2x1x32xf32, #tpu.memory_space<vmem>>, vector<1x1x32xf32>
    %170 = vector.shape_cast %169 : vector<1x1x32xf32> to vector<1x32xf32>
    %c1_99 = arith.constant 1 : index
    %c0_100 = arith.constant 0 : index
    %c0_101 = arith.constant 0 : index
    %171 = vector.load %arg13[%c1_99, %c0_100, %c0_101] : memref<2x1x32xf32, #tpu.memory_space<vmem>>, vector<1x1x32xf32>
    %172 = vector.shape_cast %171 : vector<1x1x32xf32> to vector<1x32xf32>
    %c1_102 = arith.constant 1 : index
    %c0_103 = arith.constant 0 : index
    %c0_104 = arith.constant 0 : index
    %173 = vector.load %arg14[%c1_102, %c0_103, %c0_104] : memref<2x1x32xf32, #tpu.memory_space<vmem>>, vector<1x1x32xf32>
    %174 = vector.shape_cast %173 : vector<1x1x32xf32> to vector<1x32xf32>
    %c1_105 = arith.constant 1 : index
    %c0_106 = arith.constant 0 : index
    %c0_107 = arith.constant 0 : index
    %175 = vector.load %arg15[%c1_105, %c0_106, %c0_107] : memref<2x32x64xf32, #tpu.memory_space<vmem>>, vector<1x32x64xf32>
    %176 = vector.shape_cast %175 : vector<1x32x64xf32> to vector<32x64xf32>
    %c1_108 = arith.constant 1 : index
    %c0_109 = arith.constant 0 : index
    %c0_110 = arith.constant 0 : index
    %177 = vector.load %arg16[%c1_108, %c0_109, %c0_110] : memref<2x1x64xf32, #tpu.memory_space<vmem>>, vector<1x1x64xf32>
    %178 = vector.shape_cast %177 : vector<1x1x64xf32> to vector<1x64xf32>
    %c1_111 = arith.constant 1 : index
    %c0_112 = arith.constant 0 : index
    %c0_113 = arith.constant 0 : index
    %179 = vector.load %arg17[%c1_111, %c0_112, %c0_113] : memref<2x64x32xf32, #tpu.memory_space<vmem>>, vector<1x64x32xf32>
    %180 = vector.shape_cast %179 : vector<1x64x32xf32> to vector<64x32xf32>
    %c1_114 = arith.constant 1 : index
    %c0_115 = arith.constant 0 : index
    %c0_116 = arith.constant 0 : index
    %181 = vector.load %arg18[%c1_114, %c0_115, %c0_116] : memref<2x1x32xf32, #tpu.memory_space<vmem>>, vector<1x1x32xf32>
    %182 = vector.shape_cast %181 : vector<1x1x32xf32> to vector<1x32xf32>
    %cst_117 = arith.constant dense<0.000000e+00> : vector<14x96xf32>
    %183 = tpu.matmul %158, %160, %cst_117 {dimension_numbers = #tpu.dot_dimension_numbers<[1], [0], [0], [1], [0, 0, 1, 1], [], []>} : vector<14x32xf32>, vector<32x96xf32>, vector<14x96xf32> -> vector<14x96xf32>
    %184 = vector.broadcast %162 : vector<1x96xf32> to vector<14x96xf32>
    %185 = arith.addf %183, %184 : vector<14x96xf32>
    %186 = vector.extract_strided_slice %185 {offsets = [0, 0], sizes = [14, 32], strides = [1, 1]} : vector<14x96xf32> to vector<14x32xf32>
    %187 = vector.extract_strided_slice %185 {offsets = [0, 32], sizes = [14, 32], strides = [1, 1]} : vector<14x96xf32> to vector<14x32xf32>
    %188 = vector.extract_strided_slice %185 {offsets = [0, 64], sizes = [14, 32], strides = [1, 1]} : vector<14x96xf32> to vector<14x32xf32>
    %189 = vector.extract_strided_slice %186 {offsets = [0, 0], sizes = [14, 16], strides = [1, 1]} : vector<14x32xf32> to vector<14x16xf32>
    %190 = vector.extract_strided_slice %187 {offsets = [0, 0], sizes = [14, 16], strides = [1, 1]} : vector<14x32xf32> to vector<14x16xf32>
    %191 = vector.extract_strided_slice %188 {offsets = [0, 0], sizes = [14, 16], strides = [1, 1]} : vector<14x32xf32> to vector<14x16xf32>
    %cst_118 = arith.constant dense<0.000000e+00> : vector<14x14xf32>
    %192 = tpu.matmul %189, %190, %cst_118 {dimension_numbers = #tpu.dot_dimension_numbers<[1], [1], [0], [0], [0, 0, 1, 0], [], []>} : vector<14x16xf32>, vector<14x16xf32>, vector<14x14xf32> -> vector<14x14xf32>
    %cst_119 = arith.constant 2.500000e-01 : f32
    %193 = vector.broadcast %cst_119 : f32 to vector<14x14xf32>
    %194 = arith.mulf %192, %193 : vector<14x14xf32>
    %195 = vector.broadcast %21 : vector<1x14xf32> to vector<14x14xf32>
    %196 = arith.addf %194, %195 : vector<14x14xf32>
    %cst_120 = arith.constant dense<0xFF800000> : vector<14xf32>
    %197 = vector.multi_reduction <maximumf>, %196, %cst_120 [1] : vector<14x14xf32> to vector<14xf32>
    %198 = vector.shape_cast %197 : vector<14xf32> to vector<14x1xf32>
    %199 = vector.broadcast %198 : vector<14x1xf32> to vector<14x14xf32>
    %200 = arith.subf %196, %199 : vector<14x14xf32>
    %201 = math.exp %200 : vector<14x14xf32>
    %cst_121 = arith.constant dense<0.000000e+00> : vector<14xf32>
    %202 = vector.multi_reduction <add>, %201, %cst_121 [1] : vector<14x14xf32> to vector<14xf32>
    %203 = vector.shape_cast %202 : vector<14xf32> to vector<14x1xf32>
    %204 = tpu.reciprocal %203 {approx = true} : vector<14x1xf32> -> vector<14x1xf32>
    %205 = vector.broadcast %204 : vector<14x1xf32> to vector<14x14xf32>
    %206 = arith.mulf %201, %205 : vector<14x14xf32>
    %cst_122 = arith.constant dense<0.000000e+00> : vector<14x16xf32>
    %207 = tpu.matmul %206, %191, %cst_122 {dimension_numbers = #tpu.dot_dimension_numbers<[1], [0], [0], [1], [0, 0, 1, 1], [], []>} : vector<14x14xf32>, vector<14x16xf32>, vector<14x16xf32> -> vector<14x16xf32>
    %208 = vector.extract_strided_slice %186 {offsets = [0, 16], sizes = [14, 16], strides = [1, 1]} : vector<14x32xf32> to vector<14x16xf32>
    %209 = vector.extract_strided_slice %187 {offsets = [0, 16], sizes = [14, 16], strides = [1, 1]} : vector<14x32xf32> to vector<14x16xf32>
    %210 = vector.extract_strided_slice %188 {offsets = [0, 16], sizes = [14, 16], strides = [1, 1]} : vector<14x32xf32> to vector<14x16xf32>
    %cst_123 = arith.constant dense<0.000000e+00> : vector<14x14xf32>
    %211 = tpu.matmul %208, %209, %cst_123 {dimension_numbers = #tpu.dot_dimension_numbers<[1], [1], [0], [0], [0, 0, 1, 0], [], []>} : vector<14x16xf32>, vector<14x16xf32>, vector<14x14xf32> -> vector<14x14xf32>
    %cst_124 = arith.constant 2.500000e-01 : f32
    %212 = vector.broadcast %cst_124 : f32 to vector<14x14xf32>
    %213 = arith.mulf %211, %212 : vector<14x14xf32>
    %214 = vector.broadcast %21 : vector<1x14xf32> to vector<14x14xf32>
    %215 = arith.addf %213, %214 : vector<14x14xf32>
    %cst_125 = arith.constant dense<0xFF800000> : vector<14xf32>
    %216 = vector.multi_reduction <maximumf>, %215, %cst_125 [1] : vector<14x14xf32> to vector<14xf32>
    %217 = vector.shape_cast %216 : vector<14xf32> to vector<14x1xf32>
    %218 = vector.broadcast %217 : vector<14x1xf32> to vector<14x14xf32>
    %219 = arith.subf %215, %218 : vector<14x14xf32>
    %220 = math.exp %219 : vector<14x14xf32>
    %cst_126 = arith.constant dense<0.000000e+00> : vector<14xf32>
    %221 = vector.multi_reduction <add>, %220, %cst_126 [1] : vector<14x14xf32> to vector<14xf32>
    %222 = vector.shape_cast %221 : vector<14xf32> to vector<14x1xf32>
    %223 = tpu.reciprocal %222 {approx = true} : vector<14x1xf32> -> vector<14x1xf32>
    %224 = vector.broadcast %223 : vector<14x1xf32> to vector<14x14xf32>
    %225 = arith.mulf %220, %224 : vector<14x14xf32>
    %cst_127 = arith.constant dense<0.000000e+00> : vector<14x16xf32>
    %226 = tpu.matmul %225, %210, %cst_127 {dimension_numbers = #tpu.dot_dimension_numbers<[1], [0], [0], [1], [0, 0, 1, 1], [], []>} : vector<14x14xf32>, vector<14x16xf32>, vector<14x16xf32> -> vector<14x16xf32>
    %227 = tpu.concatenate %207, %226 in 1 : vector<14x16xf32>, vector<14x16xf32> -> vector<14x32xf32>
    %cst_128 = arith.constant dense<0.000000e+00> : vector<14x32xf32>
    %228 = tpu.matmul %227, %164, %cst_128 {dimension_numbers = #tpu.dot_dimension_numbers<[1], [0], [0], [1], [0, 0, 1, 1], [], []>} : vector<14x32xf32>, vector<32x32xf32>, vector<14x32xf32> -> vector<14x32xf32>
    %229 = vector.broadcast %166 : vector<1x32xf32> to vector<14x32xf32>
    %230 = arith.addf %228, %229 : vector<14x32xf32>
    %231 = arith.addf %158, %230 : vector<14x32xf32>
    %cst_129 = arith.constant dense<0.000000e+00> : vector<14xf32>
    %232 = vector.multi_reduction <add>, %231, %cst_129 [1] : vector<14x32xf32> to vector<14xf32>
    %233 = vector.shape_cast %232 : vector<14xf32> to vector<14x1xf32>
    %cst_130 = arith.constant 3.200000e+01 : f32
    %234 = vector.broadcast %cst_130 : f32 to vector<14x1xf32>
    %235 = arith.divf %233, %234 : vector<14x1xf32>
    %236 = vector.broadcast %235 : vector<14x1xf32> to vector<14x32xf32>
    %237 = arith.subf %231, %236 : vector<14x32xf32>
    %238 = arith.mulf %237, %237 : vector<14x32xf32>
    %cst_131 = arith.constant dense<0.000000e+00> : vector<14xf32>
    %239 = vector.multi_reduction <add>, %238, %cst_131 [1] : vector<14x32xf32> to vector<14xf32>
    %240 = vector.shape_cast %239 : vector<14xf32> to vector<14x1xf32>
    %cst_132 = arith.constant 3.200000e+01 : f32
    %241 = vector.broadcast %cst_132 : f32 to vector<14x1xf32>
    %242 = arith.divf %240, %241 : vector<14x1xf32>
    %243 = vector.broadcast %235 : vector<14x1xf32> to vector<14x32xf32>
    %244 = arith.subf %231, %243 : vector<14x32xf32>
    %cst_133 = arith.constant 9.99999974E-6 : f32
    %245 = vector.broadcast %cst_133 : f32 to vector<14x1xf32>
    %246 = arith.addf %242, %245 : vector<14x1xf32>
    %247 = math.rsqrt %246 : vector<14x1xf32>
    %248 = vector.broadcast %247 : vector<14x1xf32> to vector<14x32xf32>
    %249 = arith.mulf %244, %248 : vector<14x32xf32>
    %250 = vector.broadcast %168 : vector<1x32xf32> to vector<14x32xf32>
    %251 = arith.mulf %249, %250 : vector<14x32xf32>
    %252 = vector.broadcast %170 : vector<1x32xf32> to vector<14x32xf32>
    %253 = arith.addf %251, %252 : vector<14x32xf32>
    %cst_134 = arith.constant dense<0.000000e+00> : vector<14x64xf32>
    %254 = tpu.matmul %253, %176, %cst_134 {dimension_numbers = #tpu.dot_dimension_numbers<[1], [0], [0], [1], [0, 0, 1, 1], [], []>} : vector<14x32xf32>, vector<32x64xf32>, vector<14x64xf32> -> vector<14x64xf32>
    %255 = vector.broadcast %178 : vector<1x64xf32> to vector<14x64xf32>
    %256 = arith.addf %254, %255 : vector<14x64xf32>
    %257 = arith.mulf %256, %256 : vector<14x64xf32>
    %258 = arith.mulf %256, %257 : vector<14x64xf32>
    %cst_135 = arith.constant 4.471500e-02 : f32
    %259 = vector.broadcast %cst_135 : f32 to vector<14x64xf32>
    %260 = arith.mulf %259, %258 : vector<14x64xf32>
    %261 = arith.addf %256, %260 : vector<14x64xf32>
    %cst_136 = arith.constant 0.797884583 : f32
    %262 = vector.broadcast %cst_136 : f32 to vector<14x64xf32>
    %263 = arith.mulf %262, %261 : vector<14x64xf32>
    %264 = math.tanh %263 : vector<14x64xf32>
    %cst_137 = arith.constant 1.000000e+00 : f32
    %265 = vector.broadcast %cst_137 : f32 to vector<14x64xf32>
    %266 = arith.addf %265, %264 : vector<14x64xf32>
    %cst_138 = arith.constant 5.000000e-01 : f32
    %267 = vector.broadcast %cst_138 : f32 to vector<14x64xf32>
    %268 = arith.mulf %267, %266 : vector<14x64xf32>
    %269 = arith.mulf %256, %268 : vector<14x64xf32>
    %cst_139 = arith.constant dense<0.000000e+00> : vector<14x32xf32>
    %270 = tpu.matmul %269, %180, %cst_139 {dimension_numbers = #tpu.dot_dimension_numbers<[1], [0], [0], [1], [0, 0, 1, 1], [], []>} : vector<14x64xf32>, vector<64x32xf32>, vector<14x32xf32> -> vector<14x32xf32>
    %271 = vector.broadcast %182 : vector<1x32xf32> to vector<14x32xf32>
    %272 = arith.addf %270, %271 : vector<14x32xf32>
    %273 = arith.addf %253, %272 : vector<14x32xf32>
    %cst_140 = arith.constant dense<0.000000e+00> : vector<14xf32>
    %274 = vector.multi_reduction <add>, %273, %cst_140 [1] : vector<14x32xf32> to vector<14xf32>
    %275 = vector.shape_cast %274 : vector<14xf32> to vector<14x1xf32>
    %cst_141 = arith.constant 3.200000e+01 : f32
    %276 = vector.broadcast %cst_141 : f32 to vector<14x1xf32>
    %277 = arith.divf %275, %276 : vector<14x1xf32>
    %278 = vector.broadcast %277 : vector<14x1xf32> to vector<14x32xf32>
    %279 = arith.subf %273, %278 : vector<14x32xf32>
    %280 = arith.mulf %279, %279 : vector<14x32xf32>
    %cst_142 = arith.constant dense<0.000000e+00> : vector<14xf32>
    %281 = vector.multi_reduction <add>, %280, %cst_142 [1] : vector<14x32xf32> to vector<14xf32>
    %282 = vector.shape_cast %281 : vector<14xf32> to vector<14x1xf32>
    %cst_143 = arith.constant 3.200000e+01 : f32
    %283 = vector.broadcast %cst_143 : f32 to vector<14x1xf32>
    %284 = arith.divf %282, %283 : vector<14x1xf32>
    %285 = vector.broadcast %277 : vector<14x1xf32> to vector<14x32xf32>
    %286 = arith.subf %273, %285 : vector<14x32xf32>
    %cst_144 = arith.constant 9.99999974E-6 : f32
    %287 = vector.broadcast %cst_144 : f32 to vector<14x1xf32>
    %288 = arith.addf %284, %287 : vector<14x1xf32>
    %289 = math.rsqrt %288 : vector<14x1xf32>
    %290 = vector.broadcast %289 : vector<14x1xf32> to vector<14x32xf32>
    %291 = arith.mulf %286, %290 : vector<14x32xf32>
    %292 = vector.broadcast %172 : vector<1x32xf32> to vector<14x32xf32>
    %293 = arith.mulf %291, %292 : vector<14x32xf32>
    %294 = vector.broadcast %174 : vector<1x32xf32> to vector<14x32xf32>
    %295 = arith.addf %293, %294 : vector<14x32xf32>
    %296 = vector.extract_strided_slice %295 {offsets = [0, 0], sizes = [2, 32], strides = [1, 1]} : vector<14x32xf32> to vector<2x32xf32>
    %c0_145 = arith.constant 0 : index
    %c0_146 = arith.constant 0 : index
    %c0_147 = arith.constant 0 : index
    %297 = vector.load %arg19[%c0_145, %c0_146, %c0_147] : memref<2x2x32xf32, #tpu.memory_space<vmem>>, vector<1x2x32xf32>
    %298 = vector.shape_cast %297 : vector<1x2x32xf32> to vector<2x32xf32>
    %299 = vector.shape_cast %296 : vector<2x32xf32> to vector<1x2x32xf32>
    tpu.vector_store %arg19[%c0_145, %c0_146, %c0_147], %299 {strides = array<i32>} : memref<2x2x32xf32, #tpu.memory_space<vmem>>, vector<1x2x32xf32>,
    %c1_148 = arith.constant 1 : index
    %c0_149 = arith.constant 0 : index
    %300 = vector.load %arg0[%c1_148, %c0_149] : memref<2x6xf32, #tpu.memory_space<vmem>>, vector<1x6xf32>
    %c0_150 = arith.constant 0 : index
    %c0_151 = arith.constant 0 : index
    %301 = vector.load %arg4[%c0_150, %c0_151] : memref<6x64xf32, #tpu.memory_space<vmem>>, vector<6x64xf32>
    %cst_152 = arith.constant dense<0.000000e+00> : vector<1x64xf32>
    %302 = tpu.matmul %300, %301, %cst_152 {dimension_numbers = #tpu.dot_dimension_numbers<[1], [0], [0], [1], [0, 0, 1, 1], [], []>} : vector<1x6xf32>, vector<6x64xf32>, vector<1x64xf32> -> vector<1x64xf32>
    %303 = vector.extract_strided_slice %302 {offsets = [0, 0], sizes = [1, 32], strides = [1, 1]} : vector<1x64xf32> to vector<1x32xf32>
    %304 = vector.extract_strided_slice %302 {offsets = [0, 32], sizes = [1, 32], strides = [1, 1]} : vector<1x64xf32> to vector<1x32xf32>
    %305 = tpu.concatenate %303, %304 in 0 : vector<1x32xf32>, vector<1x32xf32> -> vector<2x32xf32>
    %c1_153 = arith.constant 1 : index
    %c0_154 = arith.constant 0 : index
    %c0_155 = arith.constant 0 : index
    %306 = vector.load %arg1[%c1_153, %c0_154, %c0_155] : memref<2x12x16xf32, #tpu.memory_space<vmem>>, vector<1x12x16xf32>
    %307 = vector.shape_cast %306 : vector<1x12x16xf32> to vector<12x16xf32>
    %c0_156 = arith.constant 0 : index
    %c0_157 = arith.constant 0 : index
    %308 = vector.load %arg5[%c0_156, %c0_157] : memref<16x32xf32, #tpu.memory_space<vmem>>, vector<16x32xf32>
    %cst_158 = arith.constant dense<0.000000e+00> : vector<12x32xf32>
    %309 = tpu.matmul %307, %308, %cst_158 {dimension_numbers = #tpu.dot_dimension_numbers<[1], [0], [0], [1], [0, 0, 1, 1], [], []>} : vector<12x16xf32>, vector<16x32xf32>, vector<12x32xf32> -> vector<12x32xf32>
    %c0_159 = arith.constant 0 : index
    %c0_160 = arith.constant 0 : index
    %310 = vector.load %arg6[%c0_159, %c0_160] : memref<1x32xf32, #tpu.memory_space<vmem>>, vector<1x32xf32>
    %311 = vector.broadcast %310 : vector<1x32xf32> to vector<12x32xf32>
    %312 = arith.addf %309, %311 : vector<12x32xf32>
    %313 = tpu.concatenate %305, %312 in 0 : vector<2x32xf32>, vector<12x32xf32> -> vector<14x32xf32>
    %c0_161 = arith.constant 0 : index
    %c0_162 = arith.constant 0 : index
    %314 = vector.load %arg3[%c0_161, %c0_162] : memref<14x32xf32, #tpu.memory_space<vmem>>, vector<14x32xf32>
    %315 = arith.addf %313, %314 : vector<14x32xf32>
    %c1_163 = arith.constant 1 : index
    %c0_164 = arith.constant 0 : index
    %316 = vector.load %arg2[%c1_163, %c0_164] : memref<2x14xf32, #tpu.memory_space<vmem>>, vector<1x14xf32>
    %cst_165 = arith.constant 5.000000e-01 : f32
    %317 = vector.broadcast %cst_165 : f32 to vector<1x14xf32>
    %318 = arith.cmpf ogt, %316, %317 : vector<1x14xf32>
    %cst_166 = arith.constant -1.000000e+30 : f32
    %cst_167 = arith.constant 0.000000e+00 : f32
    %319 = vector.broadcast %cst_166 : f32 to vector<1x14xf32>
    %320 = vector.broadcast %cst_167 : f32 to vector<1x14xf32>
    %321 = arith.select %318, %319, %320 : vector<1x14xi1>, vector<1x14xf32>
    %c0_168 = arith.constant 0 : index
    %c0_169 = arith.constant 0 : index
    %c0_170 = arith.constant 0 : index
    %322 = vector.load %arg7[%c0_168, %c0_169, %c0_170] : memref<2x32x96xf32, #tpu.memory_space<vmem>>, vector<1x32x96xf32>
    %323 = vector.shape_cast %322 : vector<1x32x96xf32> to vector<32x96xf32>
    %c0_171 = arith.constant 0 : index
    %c0_172 = arith.constant 0 : index
    %c0_173 = arith.constant 0 : index
    %324 = vector.load %arg8[%c0_171, %c0_172, %c0_173] : memref<2x1x96xf32, #tpu.memory_space<vmem>>, vector<1x1x96xf32>
    %325 = vector.shape_cast %324 : vector<1x1x96xf32> to vector<1x96xf32>
    %c0_174 = arith.constant 0 : index
    %c0_175 = arith.constant 0 : index
    %c0_176 = arith.constant 0 : index
    %326 = vector.load %arg9[%c0_174, %c0_175, %c0_176] : memref<2x32x32xf32, #tpu.memory_space<vmem>>, vector<1x32x32xf32>
    %327 = vector.shape_cast %326 : vector<1x32x32xf32> to vector<32x32xf32>
    %c0_177 = arith.constant 0 : index
    %c0_178 = arith.constant 0 : index
    %c0_179 = arith.constant 0 : index
    %328 = vector.load %arg10[%c0_177, %c0_178, %c0_179] : memref<2x1x32xf32, #tpu.memory_space<vmem>>, vector<1x1x32xf32>
    %329 = vector.shape_cast %328 : vector<1x1x32xf32> to vector<1x32xf32>
    %c0_180 = arith.constant 0 : index
    %c0_181 = arith.constant 0 : index
    %c0_182 = arith.constant 0 : index
    %330 = vector.load %arg11[%c0_180, %c0_181, %c0_182] : memref<2x1x32xf32, #tpu.memory_space<vmem>>, vector<1x1x32xf32>
    %331 = vector.shape_cast %330 : vector<1x1x32xf32> to vector<1x32xf32>
    %c0_183 = arith.constant 0 : index
    %c0_184 = arith.constant 0 : index
    %c0_185 = arith.constant 0 : index
    %332 = vector.load %arg12[%c0_183, %c0_184, %c0_185] : memref<2x1x32xf32, #tpu.memory_space<vmem>>, vector<1x1x32xf32>
    %333 = vector.shape_cast %332 : vector<1x1x32xf32> to vector<1x32xf32>
    %c0_186 = arith.constant 0 : index
    %c0_187 = arith.constant 0 : index
    %c0_188 = arith.constant 0 : index
    %334 = vector.load %arg13[%c0_186, %c0_187, %c0_188] : memref<2x1x32xf32, #tpu.memory_space<vmem>>, vector<1x1x32xf32>
    %335 = vector.shape_cast %334 : vector<1x1x32xf32> to vector<1x32xf32>
    %c0_189 = arith.constant 0 : index
    %c0_190 = arith.constant 0 : index
    %c0_191 = arith.constant 0 : index
    %336 = vector.load %arg14[%c0_189, %c0_190, %c0_191] : memref<2x1x32xf32, #tpu.memory_space<vmem>>, vector<1x1x32xf32>
    %337 = vector.shape_cast %336 : vector<1x1x32xf32> to vector<1x32xf32>
    %c0_192 = arith.constant 0 : index
    %c0_193 = arith.constant 0 : index
    %c0_194 = arith.constant 0 : index
    %338 = vector.load %arg15[%c0_192, %c0_193, %c0_194] : memref<2x32x64xf32, #tpu.memory_space<vmem>>, vector<1x32x64xf32>
    %339 = vector.shape_cast %338 : vector<1x32x64xf32> to vector<32x64xf32>
    %c0_195 = arith.constant 0 : index
    %c0_196 = arith.constant 0 : index
    %c0_197 = arith.constant 0 : index
    %340 = vector.load %arg16[%c0_195, %c0_196, %c0_197] : memref<2x1x64xf32, #tpu.memory_space<vmem>>, vector<1x1x64xf32>
    %341 = vector.shape_cast %340 : vector<1x1x64xf32> to vector<1x64xf32>
    %c0_198 = arith.constant 0 : index
    %c0_199 = arith.constant 0 : index
    %c0_200 = arith.constant 0 : index
    %342 = vector.load %arg17[%c0_198, %c0_199, %c0_200] : memref<2x64x32xf32, #tpu.memory_space<vmem>>, vector<1x64x32xf32>
    %343 = vector.shape_cast %342 : vector<1x64x32xf32> to vector<64x32xf32>
    %c0_201 = arith.constant 0 : index
    %c0_202 = arith.constant 0 : index
    %c0_203 = arith.constant 0 : index
    %344 = vector.load %arg18[%c0_201, %c0_202, %c0_203] : memref<2x1x32xf32, #tpu.memory_space<vmem>>, vector<1x1x32xf32>
    %345 = vector.shape_cast %344 : vector<1x1x32xf32> to vector<1x32xf32>
    %cst_204 = arith.constant dense<0.000000e+00> : vector<14x96xf32>
    %346 = tpu.matmul %315, %323, %cst_204 {dimension_numbers = #tpu.dot_dimension_numbers<[1], [0], [0], [1], [0, 0, 1, 1], [], []>} : vector<14x32xf32>, vector<32x96xf32>, vector<14x96xf32> -> vector<14x96xf32>
    %347 = vector.broadcast %325 : vector<1x96xf32> to vector<14x96xf32>
    %348 = arith.addf %346, %347 : vector<14x96xf32>
    %349 = vector.extract_strided_slice %348 {offsets = [0, 0], sizes = [14, 32], strides = [1, 1]} : vector<14x96xf32> to vector<14x32xf32>
    %350 = vector.extract_strided_slice %348 {offsets = [0, 32], sizes = [14, 32], strides = [1, 1]} : vector<14x96xf32> to vector<14x32xf32>
    %351 = vector.extract_strided_slice %348 {offsets = [0, 64], sizes = [14, 32], strides = [1, 1]} : vector<14x96xf32> to vector<14x32xf32>
    %352 = vector.extract_strided_slice %349 {offsets = [0, 0], sizes = [14, 16], strides = [1, 1]} : vector<14x32xf32> to vector<14x16xf32>
    %353 = vector.extract_strided_slice %350 {offsets = [0, 0], sizes = [14, 16], strides = [1, 1]} : vector<14x32xf32> to vector<14x16xf32>
    %354 = vector.extract_strided_slice %351 {offsets = [0, 0], sizes = [14, 16], strides = [1, 1]} : vector<14x32xf32> to vector<14x16xf32>
    %cst_205 = arith.constant dense<0.000000e+00> : vector<14x14xf32>
    %355 = tpu.matmul %352, %353, %cst_205 {dimension_numbers = #tpu.dot_dimension_numbers<[1], [1], [0], [0], [0, 0, 1, 0], [], []>} : vector<14x16xf32>, vector<14x16xf32>, vector<14x14xf32> -> vector<14x14xf32>
    %cst_206 = arith.constant 2.500000e-01 : f32
    %356 = vector.broadcast %cst_206 : f32 to vector<14x14xf32>
    %357 = arith.mulf %355, %356 : vector<14x14xf32>
    %358 = vector.broadcast %321 : vector<1x14xf32> to vector<14x14xf32>
    %359 = arith.addf %357, %358 : vector<14x14xf32>
    %cst_207 = arith.constant dense<0xFF800000> : vector<14xf32>
    %360 = vector.multi_reduction <maximumf>, %359, %cst_207 [1] : vector<14x14xf32> to vector<14xf32>
    %361 = vector.shape_cast %360 : vector<14xf32> to vector<14x1xf32>
    %362 = vector.broadcast %361 : vector<14x1xf32> to vector<14x14xf32>
    %363 = arith.subf %359, %362 : vector<14x14xf32>
    %364 = math.exp %363 : vector<14x14xf32>
    %cst_208 = arith.constant dense<0.000000e+00> : vector<14xf32>
    %365 = vector.multi_reduction <add>, %364, %cst_208 [1] : vector<14x14xf32> to vector<14xf32>
    %366 = vector.shape_cast %365 : vector<14xf32> to vector<14x1xf32>
    %367 = tpu.reciprocal %366 {approx = true} : vector<14x1xf32> -> vector<14x1xf32>
    %368 = vector.broadcast %367 : vector<14x1xf32> to vector<14x14xf32>
    %369 = arith.mulf %364, %368 : vector<14x14xf32>
    %cst_209 = arith.constant dense<0.000000e+00> : vector<14x16xf32>
    %370 = tpu.matmul %369, %354, %cst_209 {dimension_numbers = #tpu.dot_dimension_numbers<[1], [0], [0], [1], [0, 0, 1, 1], [], []>} : vector<14x14xf32>, vector<14x16xf32>, vector<14x16xf32> -> vector<14x16xf32>
    %371 = vector.extract_strided_slice %349 {offsets = [0, 16], sizes = [14, 16], strides = [1, 1]} : vector<14x32xf32> to vector<14x16xf32>
    %372 = vector.extract_strided_slice %350 {offsets = [0, 16], sizes = [14, 16], strides = [1, 1]} : vector<14x32xf32> to vector<14x16xf32>
    %373 = vector.extract_strided_slice %351 {offsets = [0, 16], sizes = [14, 16], strides = [1, 1]} : vector<14x32xf32> to vector<14x16xf32>
    %cst_210 = arith.constant dense<0.000000e+00> : vector<14x14xf32>
    %374 = tpu.matmul %371, %372, %cst_210 {dimension_numbers = #tpu.dot_dimension_numbers<[1], [1], [0], [0], [0, 0, 1, 0], [], []>} : vector<14x16xf32>, vector<14x16xf32>, vector<14x14xf32> -> vector<14x14xf32>
    %cst_211 = arith.constant 2.500000e-01 : f32
    %375 = vector.broadcast %cst_211 : f32 to vector<14x14xf32>
    %376 = arith.mulf %374, %375 : vector<14x14xf32>
    %377 = vector.broadcast %321 : vector<1x14xf32> to vector<14x14xf32>
    %378 = arith.addf %376, %377 : vector<14x14xf32>
    %cst_212 = arith.constant dense<0xFF800000> : vector<14xf32>
    %379 = vector.multi_reduction <maximumf>, %378, %cst_212 [1] : vector<14x14xf32> to vector<14xf32>
    %380 = vector.shape_cast %379 : vector<14xf32> to vector<14x1xf32>
    %381 = vector.broadcast %380 : vector<14x1xf32> to vector<14x14xf32>
    %382 = arith.subf %378, %381 : vector<14x14xf32>
    %383 = math.exp %382 : vector<14x14xf32>
    %cst_213 = arith.constant dense<0.000000e+00> : vector<14xf32>
    %384 = vector.multi_reduction <add>, %383, %cst_213 [1] : vector<14x14xf32> to vector<14xf32>
    %385 = vector.shape_cast %384 : vector<14xf32> to vector<14x1xf32>
    %386 = tpu.reciprocal %385 {approx = true} : vector<14x1xf32> -> vector<14x1xf32>
    %387 = vector.broadcast %386 : vector<14x1xf32> to vector<14x14xf32>
    %388 = arith.mulf %383, %387 : vector<14x14xf32>
    %cst_214 = arith.constant dense<0.000000e+00> : vector<14x16xf32>
    %389 = tpu.matmul %388, %373, %cst_214 {dimension_numbers = #tpu.dot_dimension_numbers<[1], [0], [0], [1], [0, 0, 1, 1], [], []>} : vector<14x14xf32>, vector<14x16xf32>, vector<14x16xf32> -> vector<14x16xf32>
    %390 = tpu.concatenate %370, %389 in 1 : vector<14x16xf32>, vector<14x16xf32> -> vector<14x32xf32>
    %cst_215 = arith.constant dense<0.000000e+00> : vector<14x32xf32>
    %391 = tpu.matmul %390, %327, %cst_215 {dimension_numbers = #tpu.dot_dimension_numbers<[1], [0], [0], [1], [0, 0, 1, 1], [], []>} : vector<14x32xf32>, vector<32x32xf32>, vector<14x32xf32> -> vector<14x32xf32>
    %392 = vector.broadcast %329 : vector<1x32xf32> to vector<14x32xf32>
    %393 = arith.addf %391, %392 : vector<14x32xf32>
    %394 = arith.addf %315, %393 : vector<14x32xf32>
    %cst_216 = arith.constant dense<0.000000e+00> : vector<14xf32>
    %395 = vector.multi_reduction <add>, %394, %cst_216 [1] : vector<14x32xf32> to vector<14xf32>
    %396 = vector.shape_cast %395 : vector<14xf32> to vector<14x1xf32>
    %cst_217 = arith.constant 3.200000e+01 : f32
    %397 = vector.broadcast %cst_217 : f32 to vector<14x1xf32>
    %398 = arith.divf %396, %397 : vector<14x1xf32>
    %399 = vector.broadcast %398 : vector<14x1xf32> to vector<14x32xf32>
    %400 = arith.subf %394, %399 : vector<14x32xf32>
    %401 = arith.mulf %400, %400 : vector<14x32xf32>
    %cst_218 = arith.constant dense<0.000000e+00> : vector<14xf32>
    %402 = vector.multi_reduction <add>, %401, %cst_218 [1] : vector<14x32xf32> to vector<14xf32>
    %403 = vector.shape_cast %402 : vector<14xf32> to vector<14x1xf32>
    %cst_219 = arith.constant 3.200000e+01 : f32
    %404 = vector.broadcast %cst_219 : f32 to vector<14x1xf32>
    %405 = arith.divf %403, %404 : vector<14x1xf32>
    %406 = vector.broadcast %398 : vector<14x1xf32> to vector<14x32xf32>
    %407 = arith.subf %394, %406 : vector<14x32xf32>
    %cst_220 = arith.constant 9.99999974E-6 : f32
    %408 = vector.broadcast %cst_220 : f32 to vector<14x1xf32>
    %409 = arith.addf %405, %408 : vector<14x1xf32>
    %410 = math.rsqrt %409 : vector<14x1xf32>
    %411 = vector.broadcast %410 : vector<14x1xf32> to vector<14x32xf32>
    %412 = arith.mulf %407, %411 : vector<14x32xf32>
    %413 = vector.broadcast %331 : vector<1x32xf32> to vector<14x32xf32>
    %414 = arith.mulf %412, %413 : vector<14x32xf32>
    %415 = vector.broadcast %333 : vector<1x32xf32> to vector<14x32xf32>
    %416 = arith.addf %414, %415 : vector<14x32xf32>
    %cst_221 = arith.constant dense<0.000000e+00> : vector<14x64xf32>
    %417 = tpu.matmul %416, %339, %cst_221 {dimension_numbers = #tpu.dot_dimension_numbers<[1], [0], [0], [1], [0, 0, 1, 1], [], []>} : vector<14x32xf32>, vector<32x64xf32>, vector<14x64xf32> -> vector<14x64xf32>
    %418 = vector.broadcast %341 : vector<1x64xf32> to vector<14x64xf32>
    %419 = arith.addf %417, %418 : vector<14x64xf32>
    %420 = arith.mulf %419, %419 : vector<14x64xf32>
    %421 = arith.mulf %419, %420 : vector<14x64xf32>
    %cst_222 = arith.constant 4.471500e-02 : f32
    %422 = vector.broadcast %cst_222 : f32 to vector<14x64xf32>
    %423 = arith.mulf %422, %421 : vector<14x64xf32>
    %424 = arith.addf %419, %423 : vector<14x64xf32>
    %cst_223 = arith.constant 0.797884583 : f32
    %425 = vector.broadcast %cst_223 : f32 to vector<14x64xf32>
    %426 = arith.mulf %425, %424 : vector<14x64xf32>
    %427 = math.tanh %426 : vector<14x64xf32>
    %cst_224 = arith.constant 1.000000e+00 : f32
    %428 = vector.broadcast %cst_224 : f32 to vector<14x64xf32>
    %429 = arith.addf %428, %427 : vector<14x64xf32>
    %cst_225 = arith.constant 5.000000e-01 : f32
    %430 = vector.broadcast %cst_225 : f32 to vector<14x64xf32>
    %431 = arith.mulf %430, %429 : vector<14x64xf32>
    %432 = arith.mulf %419, %431 : vector<14x64xf32>
    %cst_226 = arith.constant dense<0.000000e+00> : vector<14x32xf32>
    %433 = tpu.matmul %432, %343, %cst_226 {dimension_numbers = #tpu.dot_dimension_numbers<[1], [0], [0], [1], [0, 0, 1, 1], [], []>} : vector<14x64xf32>, vector<64x32xf32>, vector<14x32xf32> -> vector<14x32xf32>
    %434 = vector.broadcast %345 : vector<1x32xf32> to vector<14x32xf32>
    %435 = arith.addf %433, %434 : vector<14x32xf32>
    %436 = arith.addf %416, %435 : vector<14x32xf32>
    %cst_227 = arith.constant dense<0.000000e+00> : vector<14xf32>
    %437 = vector.multi_reduction <add>, %436, %cst_227 [1] : vector<14x32xf32> to vector<14xf32>
    %438 = vector.shape_cast %437 : vector<14xf32> to vector<14x1xf32>
    %cst_228 = arith.constant 3.200000e+01 : f32
    %439 = vector.broadcast %cst_228 : f32 to vector<14x1xf32>
    %440 = arith.divf %438, %439 : vector<14x1xf32>
    %441 = vector.broadcast %440 : vector<14x1xf32> to vector<14x32xf32>
    %442 = arith.subf %436, %441 : vector<14x32xf32>
    %443 = arith.mulf %442, %442 : vector<14x32xf32>
    %cst_229 = arith.constant dense<0.000000e+00> : vector<14xf32>
    %444 = vector.multi_reduction <add>, %443, %cst_229 [1] : vector<14x32xf32> to vector<14xf32>
    %445 = vector.shape_cast %444 : vector<14xf32> to vector<14x1xf32>
    %cst_230 = arith.constant 3.200000e+01 : f32
    %446 = vector.broadcast %cst_230 : f32 to vector<14x1xf32>
    %447 = arith.divf %445, %446 : vector<14x1xf32>
    %448 = vector.broadcast %440 : vector<14x1xf32> to vector<14x32xf32>
    %449 = arith.subf %436, %448 : vector<14x32xf32>
    %cst_231 = arith.constant 9.99999974E-6 : f32
    %450 = vector.broadcast %cst_231 : f32 to vector<14x1xf32>
    %451 = arith.addf %447, %450 : vector<14x1xf32>
    %452 = math.rsqrt %451 : vector<14x1xf32>
    %453 = vector.broadcast %452 : vector<14x1xf32> to vector<14x32xf32>
    %454 = arith.mulf %449, %453 : vector<14x32xf32>
    %455 = vector.broadcast %335 : vector<1x32xf32> to vector<14x32xf32>
    %456 = arith.mulf %454, %455 : vector<14x32xf32>
    %457 = vector.broadcast %337 : vector<1x32xf32> to vector<14x32xf32>
    %458 = arith.addf %456, %457 : vector<14x32xf32>
    %c1_232 = arith.constant 1 : index
    %c0_233 = arith.constant 0 : index
    %c0_234 = arith.constant 0 : index
    %459 = vector.load %arg7[%c1_232, %c0_233, %c0_234] : memref<2x32x96xf32, #tpu.memory_space<vmem>>, vector<1x32x96xf32>
    %460 = vector.shape_cast %459 : vector<1x32x96xf32> to vector<32x96xf32>
    %c1_235 = arith.constant 1 : index
    %c0_236 = arith.constant 0 : index
    %c0_237 = arith.constant 0 : index
    %461 = vector.load %arg8[%c1_235, %c0_236, %c0_237] : memref<2x1x96xf32, #tpu.memory_space<vmem>>, vector<1x1x96xf32>
    %462 = vector.shape_cast %461 : vector<1x1x96xf32> to vector<1x96xf32>
    %c1_238 = arith.constant 1 : index
    %c0_239 = arith.constant 0 : index
    %c0_240 = arith.constant 0 : index
    %463 = vector.load %arg9[%c1_238, %c0_239, %c0_240] : memref<2x32x32xf32, #tpu.memory_space<vmem>>, vector<1x32x32xf32>
    %464 = vector.shape_cast %463 : vector<1x32x32xf32> to vector<32x32xf32>
    %c1_241 = arith.constant 1 : index
    %c0_242 = arith.constant 0 : index
    %c0_243 = arith.constant 0 : index
    %465 = vector.load %arg10[%c1_241, %c0_242, %c0_243] : memref<2x1x32xf32, #tpu.memory_space<vmem>>, vector<1x1x32xf32>
    %466 = vector.shape_cast %465 : vector<1x1x32xf32> to vector<1x32xf32>
    %c1_244 = arith.constant 1 : index
    %c0_245 = arith.constant 0 : index
    %c0_246 = arith.constant 0 : index
    %467 = vector.load %arg11[%c1_244, %c0_245, %c0_246] : memref<2x1x32xf32, #tpu.memory_space<vmem>>, vector<1x1x32xf32>
    %468 = vector.shape_cast %467 : vector<1x1x32xf32> to vector<1x32xf32>
    %c1_247 = arith.constant 1 : index
    %c0_248 = arith.constant 0 : index
    %c0_249 = arith.constant 0 : index
    %469 = vector.load %arg12[%c1_247, %c0_248, %c0_249] : memref<2x1x32xf32, #tpu.memory_space<vmem>>, vector<1x1x32xf32>
    %470 = vector.shape_cast %469 : vector<1x1x32xf32> to vector<1x32xf32>
    %c1_250 = arith.constant 1 : index
    %c0_251 = arith.constant 0 : index
    %c0_252 = arith.constant 0 : index
    %471 = vector.load %arg13[%c1_250, %c0_251, %c0_252] : memref<2x1x32xf32, #tpu.memory_space<vmem>>, vector<1x1x32xf32>
    %472 = vector.shape_cast %471 : vector<1x1x32xf32> to vector<1x32xf32>
    %c1_253 = arith.constant 1 : index
    %c0_254 = arith.constant 0 : index
    %c0_255 = arith.constant 0 : index
    %473 = vector.load %arg14[%c1_253, %c0_254, %c0_255] : memref<2x1x32xf32, #tpu.memory_space<vmem>>, vector<1x1x32xf32>
    %474 = vector.shape_cast %473 : vector<1x1x32xf32> to vector<1x32xf32>
    %c1_256 = arith.constant 1 : index
    %c0_257 = arith.constant 0 : index
    %c0_258 = arith.constant 0 : index
    %475 = vector.load %arg15[%c1_256, %c0_257, %c0_258] : memref<2x32x64xf32, #tpu.memory_space<vmem>>, vector<1x32x64xf32>
    %476 = vector.shape_cast %475 : vector<1x32x64xf32> to vector<32x64xf32>
    %c1_259 = arith.constant 1 : index
    %c0_260 = arith.constant 0 : index
    %c0_261 = arith.constant 0 : index
    %477 = vector.load %arg16[%c1_259, %c0_260, %c0_261] : memref<2x1x64xf32, #tpu.memory_space<vmem>>, vector<1x1x64xf32>
    %478 = vector.shape_cast %477 : vector<1x1x64xf32> to vector<1x64xf32>
    %c1_262 = arith.constant 1 : index
    %c0_263 = arith.constant 0 : index
    %c0_264 = arith.constant 0 : index
    %479 = vector.load %arg17[%c1_262, %c0_263, %c0_264] : memref<2x64x32xf32, #tpu.memory_space<vmem>>, vector<1x64x32xf32>
    %480 = vector.shape_cast %479 : vector<1x64x32xf32> to vector<64x32xf32>
    %c1_265 = arith.constant 1 : index
    %c0_266 = arith.constant 0 : index
    %c0_267 = arith.constant 0 : index
    %481 = vector.load %arg18[%c1_265, %c0_266, %c0_267] : memref<2x1x32xf32, #tpu.memory_space<vmem>>, vector<1x1x32xf32>
    %482 = vector.shape_cast %481 : vector<1x1x32xf32> to vector<1x32xf32>
    %cst_268 = arith.constant dense<0.000000e+00> : vector<14x96xf32>
    %483 = tpu.matmul %458, %460, %cst_268 {dimension_numbers = #tpu.dot_dimension_numbers<[1], [0], [0], [1], [0, 0, 1, 1], [], []>} : vector<14x32xf32>, vector<32x96xf32>, vector<14x96xf32> -> vector<14x96xf32>
    %484 = vector.broadcast %462 : vector<1x96xf32> to vector<14x96xf32>
    %485 = arith.addf %483, %484 : vector<14x96xf32>
    %486 = vector.extract_strided_slice %485 {offsets = [0, 0], sizes = [14, 32], strides = [1, 1]} : vector<14x96xf32> to vector<14x32xf32>
    %487 = vector.extract_strided_slice %485 {offsets = [0, 32], sizes = [14, 32], strides = [1, 1]} : vector<14x96xf32> to vector<14x32xf32>
    %488 = vector.extract_strided_slice %485 {offsets = [0, 64], sizes = [14, 32], strides = [1, 1]} : vector<14x96xf32> to vector<14x32xf32>
    %489 = vector.extract_strided_slice %486 {offsets = [0, 0], sizes = [14, 16], strides = [1, 1]} : vector<14x32xf32> to vector<14x16xf32>
    %490 = vector.extract_strided_slice %487 {offsets = [0, 0], sizes = [14, 16], strides = [1, 1]} : vector<14x32xf32> to vector<14x16xf32>
    %491 = vector.extract_strided_slice %488 {offsets = [0, 0], sizes = [14, 16], strides = [1, 1]} : vector<14x32xf32> to vector<14x16xf32>
    %cst_269 = arith.constant dense<0.000000e+00> : vector<14x14xf32>
    %492 = tpu.matmul %489, %490, %cst_269 {dimension_numbers = #tpu.dot_dimension_numbers<[1], [1], [0], [0], [0, 0, 1, 0], [], []>} : vector<14x16xf32>, vector<14x16xf32>, vector<14x14xf32> -> vector<14x14xf32>
    %cst_270 = arith.constant 2.500000e-01 : f32
    %493 = vector.broadcast %cst_270 : f32 to vector<14x14xf32>
    %494 = arith.mulf %492, %493 : vector<14x14xf32>
    %495 = vector.broadcast %321 : vector<1x14xf32> to vector<14x14xf32>
    %496 = arith.addf %494, %495 : vector<14x14xf32>
    %cst_271 = arith.constant dense<0xFF800000> : vector<14xf32>
    %497 = vector.multi_reduction <maximumf>, %496, %cst_271 [1] : vector<14x14xf32> to vector<14xf32>
    %498 = vector.shape_cast %497 : vector<14xf32> to vector<14x1xf32>
    %499 = vector.broadcast %498 : vector<14x1xf32> to vector<14x14xf32>
    %500 = arith.subf %496, %499 : vector<14x14xf32>
    %501 = math.exp %500 : vector<14x14xf32>
    %cst_272 = arith.constant dense<0.000000e+00> : vector<14xf32>
    %502 = vector.multi_reduction <add>, %501, %cst_272 [1] : vector<14x14xf32> to vector<14xf32>
    %503 = vector.shape_cast %502 : vector<14xf32> to vector<14x1xf32>
    %504 = tpu.reciprocal %503 {approx = true} : vector<14x1xf32> -> vector<14x1xf32>
    %505 = vector.broadcast %504 : vector<14x1xf32> to vector<14x14xf32>
    %506 = arith.mulf %501, %505 : vector<14x14xf32>
    %cst_273 = arith.constant dense<0.000000e+00> : vector<14x16xf32>
    %507 = tpu.matmul %506, %491, %cst_273 {dimension_numbers = #tpu.dot_dimension_numbers<[1], [0], [0], [1], [0, 0, 1, 1], [], []>} : vector<14x14xf32>, vector<14x16xf32>, vector<14x16xf32> -> vector<14x16xf32>
    %508 = vector.extract_strided_slice %486 {offsets = [0, 16], sizes = [14, 16], strides = [1, 1]} : vector<14x32xf32> to vector<14x16xf32>
    %509 = vector.extract_strided_slice %487 {offsets = [0, 16], sizes = [14, 16], strides = [1, 1]} : vector<14x32xf32> to vector<14x16xf32>
    %510 = vector.extract_strided_slice %488 {offsets = [0, 16], sizes = [14, 16], strides = [1, 1]} : vector<14x32xf32> to vector<14x16xf32>
    %cst_274 = arith.constant dense<0.000000e+00> : vector<14x14xf32>
    %511 = tpu.matmul %508, %509, %cst_274 {dimension_numbers = #tpu.dot_dimension_numbers<[1], [1], [0], [0], [0, 0, 1, 0], [], []>} : vector<14x16xf32>, vector<14x16xf32>, vector<14x14xf32> -> vector<14x14xf32>
    %cst_275 = arith.constant 2.500000e-01 : f32
    %512 = vector.broadcast %cst_275 : f32 to vector<14x14xf32>
    %513 = arith.mulf %511, %512 : vector<14x14xf32>
    %514 = vector.broadcast %321 : vector<1x14xf32> to vector<14x14xf32>
    %515 = arith.addf %513, %514 : vector<14x14xf32>
    %cst_276 = arith.constant dense<0xFF800000> : vector<14xf32>
    %516 = vector.multi_reduction <maximumf>, %515, %cst_276 [1] : vector<14x14xf32> to vector<14xf32>
    %517 = vector.shape_cast %516 : vector<14xf32> to vector<14x1xf32>
    %518 = vector.broadcast %517 : vector<14x1xf32> to vector<14x14xf32>
    %519 = arith.subf %515, %518 : vector<14x14xf32>
    %520 = math.exp %519 : vector<14x14xf32>
    %cst_277 = arith.constant dense<0.000000e+00> : vector<14xf32>
    %521 = vector.multi_reduction <add>, %520, %cst_277 [1] : vector<14x14xf32> to vector<14xf32>
    %522 = vector.shape_cast %521 : vector<14xf32> to vector<14x1xf32>
    %523 = tpu.reciprocal %522 {approx = true} : vector<14x1xf32> -> vector<14x1xf32>
    %524 = vector.broadcast %523 : vector<14x1xf32> to vector<14x14xf32>
    %525 = arith.mulf %520, %524 : vector<14x14xf32>
    %cst_278 = arith.constant dense<0.000000e+00> : vector<14x16xf32>
    %526 = tpu.matmul %525, %510, %cst_278 {dimension_numbers = #tpu.dot_dimension_numbers<[1], [0], [0], [1], [0, 0, 1, 1], [], []>} : vector<14x14xf32>, vector<14x16xf32>, vector<14x16xf32> -> vector<14x16xf32>
    %527 = tpu.concatenate %507, %526 in 1 : vector<14x16xf32>, vector<14x16xf32> -> vector<14x32xf32>
    %cst_279 = arith.constant dense<0.000000e+00> : vector<14x32xf32>
    %528 = tpu.matmul %527, %464, %cst_279 {dimension_numbers = #tpu.dot_dimension_numbers<[1], [0], [0], [1], [0, 0, 1, 1], [], []>} : vector<14x32xf32>, vector<32x32xf32>, vector<14x32xf32> -> vector<14x32xf32>
    %529 = vector.broadcast %466 : vector<1x32xf32> to vector<14x32xf32>
    %530 = arith.addf %528, %529 : vector<14x32xf32>
    %531 = arith.addf %458, %530 : vector<14x32xf32>
    %cst_280 = arith.constant dense<0.000000e+00> : vector<14xf32>
    %532 = vector.multi_reduction <add>, %531, %cst_280 [1] : vector<14x32xf32> to vector<14xf32>
    %533 = vector.shape_cast %532 : vector<14xf32> to vector<14x1xf32>
    %cst_281 = arith.constant 3.200000e+01 : f32
    %534 = vector.broadcast %cst_281 : f32 to vector<14x1xf32>
    %535 = arith.divf %533, %534 : vector<14x1xf32>
    %536 = vector.broadcast %535 : vector<14x1xf32> to vector<14x32xf32>
    %537 = arith.subf %531, %536 : vector<14x32xf32>
    %538 = arith.mulf %537, %537 : vector<14x32xf32>
    %cst_282 = arith.constant dense<0.000000e+00> : vector<14xf32>
    %539 = vector.multi_reduction <add>, %538, %cst_282 [1] : vector<14x32xf32> to vector<14xf32>
    %540 = vector.shape_cast %539 : vector<14xf32> to vector<14x1xf32>
    %cst_283 = arith.constant 3.200000e+01 : f32
    %541 = vector.broadcast %cst_283 : f32 to vector<14x1xf32>
    %542 = arith.divf %540, %541 : vector<14x1xf32>
    %543 = vector.broadcast %535 : vector<14x1xf32> to vector<14x32xf32>
    %544 = arith.subf %531, %543 : vector<14x32xf32>
    %cst_284 = arith.constant 9.99999974E-6 : f32
    %545 = vector.broadcast %cst_284 : f32 to vector<14x1xf32>
    %546 = arith.addf %542, %545 : vector<14x1xf32>
    %547 = math.rsqrt %546 : vector<14x1xf32>
    %548 = vector.broadcast %547 : vector<14x1xf32> to vector<14x32xf32>
    %549 = arith.mulf %544, %548 : vector<14x32xf32>
    %550 = vector.broadcast %468 : vector<1x32xf32> to vector<14x32xf32>
    %551 = arith.mulf %549, %550 : vector<14x32xf32>
    %552 = vector.broadcast %470 : vector<1x32xf32> to vector<14x32xf32>
    %553 = arith.addf %551, %552 : vector<14x32xf32>
    %cst_285 = arith.constant dense<0.000000e+00> : vector<14x64xf32>
    %554 = tpu.matmul %553, %476, %cst_285 {dimension_numbers = #tpu.dot_dimension_numbers<[1], [0], [0], [1], [0, 0, 1, 1], [], []>} : vector<14x32xf32>, vector<32x64xf32>, vector<14x64xf32> -> vector<14x64xf32>
    %555 = vector.broadcast %478 : vector<1x64xf32> to vector<14x64xf32>
    %556 = arith.addf %554, %555 : vector<14x64xf32>
    %557 = arith.mulf %556, %556 : vector<14x64xf32>
    %558 = arith.mulf %556, %557 : vector<14x64xf32>
    %cst_286 = arith.constant 4.471500e-02 : f32
    %559 = vector.broadcast %cst_286 : f32 to vector<14x64xf32>
    %560 = arith.mulf %559, %558 : vector<14x64xf32>
    %561 = arith.addf %556, %560 : vector<14x64xf32>
    %cst_287 = arith.constant 0.797884583 : f32
    %562 = vector.broadcast %cst_287 : f32 to vector<14x64xf32>
    %563 = arith.mulf %562, %561 : vector<14x64xf32>
    %564 = math.tanh %563 : vector<14x64xf32>
    %cst_288 = arith.constant 1.000000e+00 : f32
    %565 = vector.broadcast %cst_288 : f32 to vector<14x64xf32>
    %566 = arith.addf %565, %564 : vector<14x64xf32>
    %cst_289 = arith.constant 5.000000e-01 : f32
    %567 = vector.broadcast %cst_289 : f32 to vector<14x64xf32>
    %568 = arith.mulf %567, %566 : vector<14x64xf32>
    %569 = arith.mulf %556, %568 : vector<14x64xf32>
    %cst_290 = arith.constant dense<0.000000e+00> : vector<14x32xf32>
    %570 = tpu.matmul %569, %480, %cst_290 {dimension_numbers = #tpu.dot_dimension_numbers<[1], [0], [0], [1], [0, 0, 1, 1], [], []>} : vector<14x64xf32>, vector<64x32xf32>, vector<14x32xf32> -> vector<14x32xf32>
    %571 = vector.broadcast %482 : vector<1x32xf32> to vector<14x32xf32>
    %572 = arith.addf %570, %571 : vector<14x32xf32>
    %573 = arith.addf %553, %572 : vector<14x32xf32>
    %cst_291 = arith.constant dense<0.000000e+00> : vector<14xf32>
    %574 = vector.multi_reduction <add>, %573, %cst_291 [1] : vector<14x32xf32> to vector<14xf32>
    %575 = vector.shape_cast %574 : vector<14xf32> to vector<14x1xf32>
    %cst_292 = arith.constant 3.200000e+01 : f32
    %576 = vector.broadcast %cst_292 : f32 to vector<14x1xf32>
    %577 = arith.divf %575, %576 : vector<14x1xf32>
    %578 = vector.broadcast %577 : vector<14x1xf32> to vector<14x32xf32>
    %579 = arith.subf %573, %578 : vector<14x32xf32>
    %580 = arith.mulf %579, %579 : vector<14x32xf32>
    %cst_293 = arith.constant dense<0.000000e+00> : vector<14xf32>
    %581 = vector.multi_reduction <add>, %580, %cst_293 [1] : vector<14x32xf32> to vector<14xf32>
    %582 = vector.shape_cast %581 : vector<14xf32> to vector<14x1xf32>
    %cst_294 = arith.constant 3.200000e+01 : f32
    %583 = vector.broadcast %cst_294 : f32 to vector<14x1xf32>
    %584 = arith.divf %582, %583 : vector<14x1xf32>
    %585 = vector.broadcast %577 : vector<14x1xf32> to vector<14x32xf32>
    %586 = arith.subf %573, %585 : vector<14x32xf32>
    %cst_295 = arith.constant 9.99999974E-6 : f32
    %587 = vector.broadcast %cst_295 : f32 to vector<14x1xf32>
    %588 = arith.addf %584, %587 : vector<14x1xf32>
    %589 = math.rsqrt %588 : vector<14x1xf32>
    %590 = vector.broadcast %589 : vector<14x1xf32> to vector<14x32xf32>
    %591 = arith.mulf %586, %590 : vector<14x32xf32>
    %592 = vector.broadcast %472 : vector<1x32xf32> to vector<14x32xf32>
    %593 = arith.mulf %591, %592 : vector<14x32xf32>
    %594 = vector.broadcast %474 : vector<1x32xf32> to vector<14x32xf32>
    %595 = arith.addf %593, %594 : vector<14x32xf32>
    %596 = vector.extract_strided_slice %595 {offsets = [0, 0], sizes = [2, 32], strides = [1, 1]} : vector<14x32xf32> to vector<2x32xf32>
    %c1_296 = arith.constant 1 : index
    %c0_297 = arith.constant 0 : index
    %c0_298 = arith.constant 0 : index
    %597 = vector.load %arg19[%c1_296, %c0_297, %c0_298] : memref<2x2x32xf32, #tpu.memory_space<vmem>>, vector<1x2x32xf32>
    %598 = vector.shape_cast %597 : vector<1x2x32xf32> to vector<2x32xf32>
    %599 = vector.shape_cast %596 : vector<2x32xf32> to vector<1x2x32xf32>
    tpu.vector_store %arg19[%c1_296, %c0_297, %c0_298], %599 {strides = array<i32>} : memref<2x2x32xf32, #tpu.memory_space<vmem>>, vector<1x2x32xf32>,
    return
  }
}

module attributes {stable_mosaic.version = 11 : i64} {
  func.func @_encoder_stack_kernel(%arg0: memref<2x6xf32, #tpu.memory_space<vmem>>, %arg1: memref<2x4x16xf32, #tpu.memory_space<vmem>>, %arg2: memref<2x6xf32, #tpu.memory_space<vmem>>, %arg3: memref<6x32xf32, #tpu.memory_space<vmem>>, %arg4: memref<6x64xf32, #tpu.memory_space<vmem>>, %arg5: memref<16x32xf32, #tpu.memory_space<vmem>>, %arg6: memref<1x32xf32, #tpu.memory_space<vmem>>, %arg7: memref<2x32x96xf32, #tpu.memory_space<vmem>>, %arg8: memref<2x1x96xf32, #tpu.memory_space<vmem>>, %arg9: memref<2x32x32xf32, #tpu.memory_space<vmem>>, %arg10: memref<2x1x32xf32, #tpu.memory_space<vmem>>, %arg11: memref<2x1x32xf32, #tpu.memory_space<vmem>>, %arg12: memref<2x1x32xf32, #tpu.memory_space<vmem>>, %arg13: memref<2x1x32xf32, #tpu.memory_space<vmem>>, %arg14: memref<2x1x32xf32, #tpu.memory_space<vmem>>, %arg15: memref<2x32x64xf32, #tpu.memory_space<vmem>>, %arg16: memref<2x1x64xf32, #tpu.memory_space<vmem>>, %arg17: memref<2x64x32xf32, #tpu.memory_space<vmem>>, %arg18: memref<2x1x32xf32, #tpu.memory_space<vmem>>, %arg19: memref<2x2x32xf32, #tpu.memory_space<vmem>>) attributes {dimension_semantics = [], scalar_prefetch = 0 : i64, scratch_operands = 0 : i64, tpu.core_type = #tpu.core_type<tc>} {
    %c0 = arith.constant 0 : index
    %c0_0 = arith.constant 0 : index
    %0 = vector.load %arg0[%c0, %c0_0] : memref<2x6xf32, #tpu.memory_space<vmem>>, vector<1x6xf32>
    %c0_1 = arith.constant 0 : index
    %c0_2 = arith.constant 0 : index
    %1 = vector.load %arg4[%c0_1, %c0_2] : memref<6x64xf32, #tpu.memory_space<vmem>>, vector<6x64xf32>
    %cst = arith.constant dense<0.000000e+00> : vector<1x64xf32>
    %2 = tpu.matmul %0, %1, %cst {dimension_numbers = #tpu.dot_dimension_numbers<[1], [0], [0], [1], [0, 0, 1, 1], [], []>} : vector<1x6xf32>, vector<6x64xf32>, vector<1x64xf32> -> vector<1x64xf32>
    %3 = vector.extract_strided_slice %2 {offsets = [0, 0], sizes = [1, 32], strides = [1, 1]} : vector<1x64xf32> to vector<1x32xf32>
    %4 = vector.extract_strided_slice %2 {offsets = [0, 32], sizes = [1, 32], strides = [1, 1]} : vector<1x64xf32> to vector<1x32xf32>
    %5 = tpu.concatenate %3, %4 in 0 : vector<1x32xf32>, vector<1x32xf32> -> vector<2x32xf32>
    %c0_3 = arith.constant 0 : index
    %c0_4 = arith.constant 0 : index
    %c0_5 = arith.constant 0 : index
    %6 = vector.load %arg1[%c0_3, %c0_4, %c0_5] : memref<2x4x16xf32, #tpu.memory_space<vmem>>, vector<1x4x16xf32>
    %7 = vector.shape_cast %6 : vector<1x4x16xf32> to vector<4x16xf32>
    %c0_6 = arith.constant 0 : index
    %c0_7 = arith.constant 0 : index
    %8 = vector.load %arg5[%c0_6, %c0_7] : memref<16x32xf32, #tpu.memory_space<vmem>>, vector<16x32xf32>
    %cst_8 = arith.constant dense<0.000000e+00> : vector<4x32xf32>
    %9 = tpu.matmul %7, %8, %cst_8 {dimension_numbers = #tpu.dot_dimension_numbers<[1], [0], [0], [1], [0, 0, 1, 1], [], []>} : vector<4x16xf32>, vector<16x32xf32>, vector<4x32xf32> -> vector<4x32xf32>
    %c0_9 = arith.constant 0 : index
    %c0_10 = arith.constant 0 : index
    %10 = vector.load %arg6[%c0_9, %c0_10] : memref<1x32xf32, #tpu.memory_space<vmem>>, vector<1x32xf32>
    %11 = vector.broadcast %10 : vector<1x32xf32> to vector<4x32xf32>
    %12 = arith.addf %9, %11 : vector<4x32xf32>
    %13 = tpu.concatenate %5, %12 in 0 : vector<2x32xf32>, vector<4x32xf32> -> vector<6x32xf32>
    %c0_11 = arith.constant 0 : index
    %c0_12 = arith.constant 0 : index
    %14 = vector.load %arg3[%c0_11, %c0_12] : memref<6x32xf32, #tpu.memory_space<vmem>>, vector<6x32xf32>
    %15 = arith.addf %13, %14 : vector<6x32xf32>
    %c0_13 = arith.constant 0 : index
    %c0_14 = arith.constant 0 : index
    %16 = vector.load %arg2[%c0_13, %c0_14] : memref<2x6xf32, #tpu.memory_space<vmem>>, vector<1x6xf32>
    %cst_15 = arith.constant 5.000000e-01 : f32
    %17 = vector.broadcast %cst_15 : f32 to vector<1x6xf32>
    %18 = arith.cmpf ogt, %16, %17 : vector<1x6xf32>
    %cst_16 = arith.constant -1.000000e+30 : f32
    %cst_17 = arith.constant 0.000000e+00 : f32
    %19 = vector.broadcast %cst_16 : f32 to vector<1x6xf32>
    %20 = vector.broadcast %cst_17 : f32 to vector<1x6xf32>
    %21 = arith.select %18, %19, %20 : vector<1x6xi1>, vector<1x6xf32>
    %c0_18 = arith.constant 0 : index
    %c0_19 = arith.constant 0 : index
    %c0_20 = arith.constant 0 : index
    %22 = vector.load %arg7[%c0_18, %c0_19, %c0_20] : memref<2x32x96xf32, #tpu.memory_space<vmem>>, vector<1x32x96xf32>
    %23 = vector.shape_cast %22 : vector<1x32x96xf32> to vector<32x96xf32>
    %c0_21 = arith.constant 0 : index
    %c0_22 = arith.constant 0 : index
    %c0_23 = arith.constant 0 : index
    %24 = vector.load %arg8[%c0_21, %c0_22, %c0_23] : memref<2x1x96xf32, #tpu.memory_space<vmem>>, vector<1x1x96xf32>
    %25 = vector.shape_cast %24 : vector<1x1x96xf32> to vector<1x96xf32>
    %c0_24 = arith.constant 0 : index
    %c0_25 = arith.constant 0 : index
    %c0_26 = arith.constant 0 : index
    %26 = vector.load %arg9[%c0_24, %c0_25, %c0_26] : memref<2x32x32xf32, #tpu.memory_space<vmem>>, vector<1x32x32xf32>
    %27 = vector.shape_cast %26 : vector<1x32x32xf32> to vector<32x32xf32>
    %c0_27 = arith.constant 0 : index
    %c0_28 = arith.constant 0 : index
    %c0_29 = arith.constant 0 : index
    %28 = vector.load %arg10[%c0_27, %c0_28, %c0_29] : memref<2x1x32xf32, #tpu.memory_space<vmem>>, vector<1x1x32xf32>
    %29 = vector.shape_cast %28 : vector<1x1x32xf32> to vector<1x32xf32>
    %c0_30 = arith.constant 0 : index
    %c0_31 = arith.constant 0 : index
    %c0_32 = arith.constant 0 : index
    %30 = vector.load %arg11[%c0_30, %c0_31, %c0_32] : memref<2x1x32xf32, #tpu.memory_space<vmem>>, vector<1x1x32xf32>
    %31 = vector.shape_cast %30 : vector<1x1x32xf32> to vector<1x32xf32>
    %c0_33 = arith.constant 0 : index
    %c0_34 = arith.constant 0 : index
    %c0_35 = arith.constant 0 : index
    %32 = vector.load %arg12[%c0_33, %c0_34, %c0_35] : memref<2x1x32xf32, #tpu.memory_space<vmem>>, vector<1x1x32xf32>
    %33 = vector.shape_cast %32 : vector<1x1x32xf32> to vector<1x32xf32>
    %c0_36 = arith.constant 0 : index
    %c0_37 = arith.constant 0 : index
    %c0_38 = arith.constant 0 : index
    %34 = vector.load %arg13[%c0_36, %c0_37, %c0_38] : memref<2x1x32xf32, #tpu.memory_space<vmem>>, vector<1x1x32xf32>
    %35 = vector.shape_cast %34 : vector<1x1x32xf32> to vector<1x32xf32>
    %c0_39 = arith.constant 0 : index
    %c0_40 = arith.constant 0 : index
    %c0_41 = arith.constant 0 : index
    %36 = vector.load %arg14[%c0_39, %c0_40, %c0_41] : memref<2x1x32xf32, #tpu.memory_space<vmem>>, vector<1x1x32xf32>
    %37 = vector.shape_cast %36 : vector<1x1x32xf32> to vector<1x32xf32>
    %c0_42 = arith.constant 0 : index
    %c0_43 = arith.constant 0 : index
    %c0_44 = arith.constant 0 : index
    %38 = vector.load %arg15[%c0_42, %c0_43, %c0_44] : memref<2x32x64xf32, #tpu.memory_space<vmem>>, vector<1x32x64xf32>
    %39 = vector.shape_cast %38 : vector<1x32x64xf32> to vector<32x64xf32>
    %c0_45 = arith.constant 0 : index
    %c0_46 = arith.constant 0 : index
    %c0_47 = arith.constant 0 : index
    %40 = vector.load %arg16[%c0_45, %c0_46, %c0_47] : memref<2x1x64xf32, #tpu.memory_space<vmem>>, vector<1x1x64xf32>
    %41 = vector.shape_cast %40 : vector<1x1x64xf32> to vector<1x64xf32>
    %c0_48 = arith.constant 0 : index
    %c0_49 = arith.constant 0 : index
    %c0_50 = arith.constant 0 : index
    %42 = vector.load %arg17[%c0_48, %c0_49, %c0_50] : memref<2x64x32xf32, #tpu.memory_space<vmem>>, vector<1x64x32xf32>
    %43 = vector.shape_cast %42 : vector<1x64x32xf32> to vector<64x32xf32>
    %c0_51 = arith.constant 0 : index
    %c0_52 = arith.constant 0 : index
    %c0_53 = arith.constant 0 : index
    %44 = vector.load %arg18[%c0_51, %c0_52, %c0_53] : memref<2x1x32xf32, #tpu.memory_space<vmem>>, vector<1x1x32xf32>
    %45 = vector.shape_cast %44 : vector<1x1x32xf32> to vector<1x32xf32>
    %cst_54 = arith.constant dense<0.000000e+00> : vector<6x96xf32>
    %46 = tpu.matmul %15, %23, %cst_54 {dimension_numbers = #tpu.dot_dimension_numbers<[1], [0], [0], [1], [0, 0, 1, 1], [], []>} : vector<6x32xf32>, vector<32x96xf32>, vector<6x96xf32> -> vector<6x96xf32>
    %47 = vector.broadcast %25 : vector<1x96xf32> to vector<6x96xf32>
    %48 = arith.addf %46, %47 : vector<6x96xf32>
    %49 = vector.extract_strided_slice %48 {offsets = [0, 0], sizes = [6, 32], strides = [1, 1]} : vector<6x96xf32> to vector<6x32xf32>
    %50 = vector.extract_strided_slice %48 {offsets = [0, 32], sizes = [6, 32], strides = [1, 1]} : vector<6x96xf32> to vector<6x32xf32>
    %51 = vector.extract_strided_slice %48 {offsets = [0, 64], sizes = [6, 32], strides = [1, 1]} : vector<6x96xf32> to vector<6x32xf32>
    %52 = vector.extract_strided_slice %49 {offsets = [0, 0], sizes = [6, 16], strides = [1, 1]} : vector<6x32xf32> to vector<6x16xf32>
    %53 = vector.extract_strided_slice %50 {offsets = [0, 0], sizes = [6, 16], strides = [1, 1]} : vector<6x32xf32> to vector<6x16xf32>
    %54 = vector.extract_strided_slice %51 {offsets = [0, 0], sizes = [6, 16], strides = [1, 1]} : vector<6x32xf32> to vector<6x16xf32>
    %cst_55 = arith.constant dense<0.000000e+00> : vector<6x6xf32>
    %55 = tpu.matmul %52, %53, %cst_55 {dimension_numbers = #tpu.dot_dimension_numbers<[1], [1], [0], [0], [0, 0, 1, 0], [], []>} : vector<6x16xf32>, vector<6x16xf32>, vector<6x6xf32> -> vector<6x6xf32>
    %cst_56 = arith.constant 2.500000e-01 : f32
    %56 = vector.broadcast %cst_56 : f32 to vector<6x6xf32>
    %57 = arith.mulf %55, %56 : vector<6x6xf32>
    %58 = vector.broadcast %21 : vector<1x6xf32> to vector<6x6xf32>
    %59 = arith.addf %57, %58 : vector<6x6xf32>
    %cst_57 = arith.constant dense<0xFF800000> : vector<6xf32>
    %60 = vector.multi_reduction <maximumf>, %59, %cst_57 [1] : vector<6x6xf32> to vector<6xf32>
    %61 = vector.shape_cast %60 : vector<6xf32> to vector<6x1xf32>
    %62 = vector.broadcast %61 : vector<6x1xf32> to vector<6x6xf32>
    %63 = arith.subf %59, %62 : vector<6x6xf32>
    %64 = math.exp %63 : vector<6x6xf32>
    %cst_58 = arith.constant dense<0.000000e+00> : vector<6xf32>
    %65 = vector.multi_reduction <add>, %64, %cst_58 [1] : vector<6x6xf32> to vector<6xf32>
    %66 = vector.shape_cast %65 : vector<6xf32> to vector<6x1xf32>
    %67 = tpu.reciprocal %66 {approx = true} : vector<6x1xf32> -> vector<6x1xf32>
    %68 = vector.broadcast %67 : vector<6x1xf32> to vector<6x6xf32>
    %69 = arith.mulf %64, %68 : vector<6x6xf32>
    %cst_59 = arith.constant dense<0.000000e+00> : vector<6x16xf32>
    %70 = tpu.matmul %69, %54, %cst_59 {dimension_numbers = #tpu.dot_dimension_numbers<[1], [0], [0], [1], [0, 0, 1, 1], [], []>} : vector<6x6xf32>, vector<6x16xf32>, vector<6x16xf32> -> vector<6x16xf32>
    %71 = vector.extract_strided_slice %49 {offsets = [0, 16], sizes = [6, 16], strides = [1, 1]} : vector<6x32xf32> to vector<6x16xf32>
    %72 = vector.extract_strided_slice %50 {offsets = [0, 16], sizes = [6, 16], strides = [1, 1]} : vector<6x32xf32> to vector<6x16xf32>
    %73 = vector.extract_strided_slice %51 {offsets = [0, 16], sizes = [6, 16], strides = [1, 1]} : vector<6x32xf32> to vector<6x16xf32>
    %cst_60 = arith.constant dense<0.000000e+00> : vector<6x6xf32>
    %74 = tpu.matmul %71, %72, %cst_60 {dimension_numbers = #tpu.dot_dimension_numbers<[1], [1], [0], [0], [0, 0, 1, 0], [], []>} : vector<6x16xf32>, vector<6x16xf32>, vector<6x6xf32> -> vector<6x6xf32>
    %cst_61 = arith.constant 2.500000e-01 : f32
    %75 = vector.broadcast %cst_61 : f32 to vector<6x6xf32>
    %76 = arith.mulf %74, %75 : vector<6x6xf32>
    %77 = vector.broadcast %21 : vector<1x6xf32> to vector<6x6xf32>
    %78 = arith.addf %76, %77 : vector<6x6xf32>
    %cst_62 = arith.constant dense<0xFF800000> : vector<6xf32>
    %79 = vector.multi_reduction <maximumf>, %78, %cst_62 [1] : vector<6x6xf32> to vector<6xf32>
    %80 = vector.shape_cast %79 : vector<6xf32> to vector<6x1xf32>
    %81 = vector.broadcast %80 : vector<6x1xf32> to vector<6x6xf32>
    %82 = arith.subf %78, %81 : vector<6x6xf32>
    %83 = math.exp %82 : vector<6x6xf32>
    %cst_63 = arith.constant dense<0.000000e+00> : vector<6xf32>
    %84 = vector.multi_reduction <add>, %83, %cst_63 [1] : vector<6x6xf32> to vector<6xf32>
    %85 = vector.shape_cast %84 : vector<6xf32> to vector<6x1xf32>
    %86 = tpu.reciprocal %85 {approx = true} : vector<6x1xf32> -> vector<6x1xf32>
    %87 = vector.broadcast %86 : vector<6x1xf32> to vector<6x6xf32>
    %88 = arith.mulf %83, %87 : vector<6x6xf32>
    %cst_64 = arith.constant dense<0.000000e+00> : vector<6x16xf32>
    %89 = tpu.matmul %88, %73, %cst_64 {dimension_numbers = #tpu.dot_dimension_numbers<[1], [0], [0], [1], [0, 0, 1, 1], [], []>} : vector<6x6xf32>, vector<6x16xf32>, vector<6x16xf32> -> vector<6x16xf32>
    %90 = tpu.concatenate %70, %89 in 1 : vector<6x16xf32>, vector<6x16xf32> -> vector<6x32xf32>
    %cst_65 = arith.constant dense<0.000000e+00> : vector<6x32xf32>
    %91 = tpu.matmul %90, %27, %cst_65 {dimension_numbers = #tpu.dot_dimension_numbers<[1], [0], [0], [1], [0, 0, 1, 1], [], []>} : vector<6x32xf32>, vector<32x32xf32>, vector<6x32xf32> -> vector<6x32xf32>
    %92 = vector.broadcast %29 : vector<1x32xf32> to vector<6x32xf32>
    %93 = arith.addf %91, %92 : vector<6x32xf32>
    %94 = arith.addf %15, %93 : vector<6x32xf32>
    %cst_66 = arith.constant dense<0.000000e+00> : vector<6xf32>
    %95 = vector.multi_reduction <add>, %94, %cst_66 [1] : vector<6x32xf32> to vector<6xf32>
    %96 = vector.shape_cast %95 : vector<6xf32> to vector<6x1xf32>
    %cst_67 = arith.constant 3.200000e+01 : f32
    %97 = vector.broadcast %cst_67 : f32 to vector<6x1xf32>
    %98 = arith.divf %96, %97 : vector<6x1xf32>
    %99 = vector.broadcast %98 : vector<6x1xf32> to vector<6x32xf32>
    %100 = arith.subf %94, %99 : vector<6x32xf32>
    %101 = arith.mulf %100, %100 : vector<6x32xf32>
    %cst_68 = arith.constant dense<0.000000e+00> : vector<6xf32>
    %102 = vector.multi_reduction <add>, %101, %cst_68 [1] : vector<6x32xf32> to vector<6xf32>
    %103 = vector.shape_cast %102 : vector<6xf32> to vector<6x1xf32>
    %cst_69 = arith.constant 3.200000e+01 : f32
    %104 = vector.broadcast %cst_69 : f32 to vector<6x1xf32>
    %105 = arith.divf %103, %104 : vector<6x1xf32>
    %106 = vector.broadcast %98 : vector<6x1xf32> to vector<6x32xf32>
    %107 = arith.subf %94, %106 : vector<6x32xf32>
    %cst_70 = arith.constant 9.99999974E-6 : f32
    %108 = vector.broadcast %cst_70 : f32 to vector<6x1xf32>
    %109 = arith.addf %105, %108 : vector<6x1xf32>
    %110 = math.rsqrt %109 : vector<6x1xf32>
    %111 = vector.broadcast %110 : vector<6x1xf32> to vector<6x32xf32>
    %112 = arith.mulf %107, %111 : vector<6x32xf32>
    %113 = vector.broadcast %31 : vector<1x32xf32> to vector<6x32xf32>
    %114 = arith.mulf %112, %113 : vector<6x32xf32>
    %115 = vector.broadcast %33 : vector<1x32xf32> to vector<6x32xf32>
    %116 = arith.addf %114, %115 : vector<6x32xf32>
    %cst_71 = arith.constant dense<0.000000e+00> : vector<6x64xf32>
    %117 = tpu.matmul %116, %39, %cst_71 {dimension_numbers = #tpu.dot_dimension_numbers<[1], [0], [0], [1], [0, 0, 1, 1], [], []>} : vector<6x32xf32>, vector<32x64xf32>, vector<6x64xf32> -> vector<6x64xf32>
    %118 = vector.broadcast %41 : vector<1x64xf32> to vector<6x64xf32>
    %119 = arith.addf %117, %118 : vector<6x64xf32>
    %120 = arith.mulf %119, %119 : vector<6x64xf32>
    %121 = arith.mulf %119, %120 : vector<6x64xf32>
    %cst_72 = arith.constant 4.471500e-02 : f32
    %122 = vector.broadcast %cst_72 : f32 to vector<6x64xf32>
    %123 = arith.mulf %122, %121 : vector<6x64xf32>
    %124 = arith.addf %119, %123 : vector<6x64xf32>
    %cst_73 = arith.constant 0.797884583 : f32
    %125 = vector.broadcast %cst_73 : f32 to vector<6x64xf32>
    %126 = arith.mulf %125, %124 : vector<6x64xf32>
    %127 = math.tanh %126 : vector<6x64xf32>
    %cst_74 = arith.constant 1.000000e+00 : f32
    %128 = vector.broadcast %cst_74 : f32 to vector<6x64xf32>
    %129 = arith.addf %128, %127 : vector<6x64xf32>
    %cst_75 = arith.constant 5.000000e-01 : f32
    %130 = vector.broadcast %cst_75 : f32 to vector<6x64xf32>
    %131 = arith.mulf %130, %129 : vector<6x64xf32>
    %132 = arith.mulf %119, %131 : vector<6x64xf32>
    %cst_76 = arith.constant dense<0.000000e+00> : vector<6x32xf32>
    %133 = tpu.matmul %132, %43, %cst_76 {dimension_numbers = #tpu.dot_dimension_numbers<[1], [0], [0], [1], [0, 0, 1, 1], [], []>} : vector<6x64xf32>, vector<64x32xf32>, vector<6x32xf32> -> vector<6x32xf32>
    %134 = vector.broadcast %45 : vector<1x32xf32> to vector<6x32xf32>
    %135 = arith.addf %133, %134 : vector<6x32xf32>
    %136 = arith.addf %116, %135 : vector<6x32xf32>
    %cst_77 = arith.constant dense<0.000000e+00> : vector<6xf32>
    %137 = vector.multi_reduction <add>, %136, %cst_77 [1] : vector<6x32xf32> to vector<6xf32>
    %138 = vector.shape_cast %137 : vector<6xf32> to vector<6x1xf32>
    %cst_78 = arith.constant 3.200000e+01 : f32
    %139 = vector.broadcast %cst_78 : f32 to vector<6x1xf32>
    %140 = arith.divf %138, %139 : vector<6x1xf32>
    %141 = vector.broadcast %140 : vector<6x1xf32> to vector<6x32xf32>
    %142 = arith.subf %136, %141 : vector<6x32xf32>
    %143 = arith.mulf %142, %142 : vector<6x32xf32>
    %cst_79 = arith.constant dense<0.000000e+00> : vector<6xf32>
    %144 = vector.multi_reduction <add>, %143, %cst_79 [1] : vector<6x32xf32> to vector<6xf32>
    %145 = vector.shape_cast %144 : vector<6xf32> to vector<6x1xf32>
    %cst_80 = arith.constant 3.200000e+01 : f32
    %146 = vector.broadcast %cst_80 : f32 to vector<6x1xf32>
    %147 = arith.divf %145, %146 : vector<6x1xf32>
    %148 = vector.broadcast %140 : vector<6x1xf32> to vector<6x32xf32>
    %149 = arith.subf %136, %148 : vector<6x32xf32>
    %cst_81 = arith.constant 9.99999974E-6 : f32
    %150 = vector.broadcast %cst_81 : f32 to vector<6x1xf32>
    %151 = arith.addf %147, %150 : vector<6x1xf32>
    %152 = math.rsqrt %151 : vector<6x1xf32>
    %153 = vector.broadcast %152 : vector<6x1xf32> to vector<6x32xf32>
    %154 = arith.mulf %149, %153 : vector<6x32xf32>
    %155 = vector.broadcast %35 : vector<1x32xf32> to vector<6x32xf32>
    %156 = arith.mulf %154, %155 : vector<6x32xf32>
    %157 = vector.broadcast %37 : vector<1x32xf32> to vector<6x32xf32>
    %158 = arith.addf %156, %157 : vector<6x32xf32>
    %c1 = arith.constant 1 : index
    %c0_82 = arith.constant 0 : index
    %c0_83 = arith.constant 0 : index
    %159 = vector.load %arg7[%c1, %c0_82, %c0_83] : memref<2x32x96xf32, #tpu.memory_space<vmem>>, vector<1x32x96xf32>
    %160 = vector.shape_cast %159 : vector<1x32x96xf32> to vector<32x96xf32>
    %c1_84 = arith.constant 1 : index
    %c0_85 = arith.constant 0 : index
    %c0_86 = arith.constant 0 : index
    %161 = vector.load %arg8[%c1_84, %c0_85, %c0_86] : memref<2x1x96xf32, #tpu.memory_space<vmem>>, vector<1x1x96xf32>
    %162 = vector.shape_cast %161 : vector<1x1x96xf32> to vector<1x96xf32>
    %c1_87 = arith.constant 1 : index
    %c0_88 = arith.constant 0 : index
    %c0_89 = arith.constant 0 : index
    %163 = vector.load %arg9[%c1_87, %c0_88, %c0_89] : memref<2x32x32xf32, #tpu.memory_space<vmem>>, vector<1x32x32xf32>
    %164 = vector.shape_cast %163 : vector<1x32x32xf32> to vector<32x32xf32>
    %c1_90 = arith.constant 1 : index
    %c0_91 = arith.constant 0 : index
    %c0_92 = arith.constant 0 : index
    %165 = vector.load %arg10[%c1_90, %c0_91, %c0_92] : memref<2x1x32xf32, #tpu.memory_space<vmem>>, vector<1x1x32xf32>
    %166 = vector.shape_cast %165 : vector<1x1x32xf32> to vector<1x32xf32>
    %c1_93 = arith.constant 1 : index
    %c0_94 = arith.constant 0 : index
    %c0_95 = arith.constant 0 : index
    %167 = vector.load %arg11[%c1_93, %c0_94, %c0_95] : memref<2x1x32xf32, #tpu.memory_space<vmem>>, vector<1x1x32xf32>
    %168 = vector.shape_cast %167 : vector<1x1x32xf32> to vector<1x32xf32>
    %c1_96 = arith.constant 1 : index
    %c0_97 = arith.constant 0 : index
    %c0_98 = arith.constant 0 : index
    %169 = vector.load %arg12[%c1_96, %c0_97, %c0_98] : memref<2x1x32xf32, #tpu.memory_space<vmem>>, vector<1x1x32xf32>
    %170 = vector.shape_cast %169 : vector<1x1x32xf32> to vector<1x32xf32>
    %c1_99 = arith.constant 1 : index
    %c0_100 = arith.constant 0 : index
    %c0_101 = arith.constant 0 : index
    %171 = vector.load %arg13[%c1_99, %c0_100, %c0_101] : memref<2x1x32xf32, #tpu.memory_space<vmem>>, vector<1x1x32xf32>
    %172 = vector.shape_cast %171 : vector<1x1x32xf32> to vector<1x32xf32>
    %c1_102 = arith.constant 1 : index
    %c0_103 = arith.constant 0 : index
    %c0_104 = arith.constant 0 : index
    %173 = vector.load %arg14[%c1_102, %c0_103, %c0_104] : memref<2x1x32xf32, #tpu.memory_space<vmem>>, vector<1x1x32xf32>
    %174 = vector.shape_cast %173 : vector<1x1x32xf32> to vector<1x32xf32>
    %c1_105 = arith.constant 1 : index
    %c0_106 = arith.constant 0 : index
    %c0_107 = arith.constant 0 : index
    %175 = vector.load %arg15[%c1_105, %c0_106, %c0_107] : memref<2x32x64xf32, #tpu.memory_space<vmem>>, vector<1x32x64xf32>
    %176 = vector.shape_cast %175 : vector<1x32x64xf32> to vector<32x64xf32>
    %c1_108 = arith.constant 1 : index
    %c0_109 = arith.constant 0 : index
    %c0_110 = arith.constant 0 : index
    %177 = vector.load %arg16[%c1_108, %c0_109, %c0_110] : memref<2x1x64xf32, #tpu.memory_space<vmem>>, vector<1x1x64xf32>
    %178 = vector.shape_cast %177 : vector<1x1x64xf32> to vector<1x64xf32>
    %c1_111 = arith.constant 1 : index
    %c0_112 = arith.constant 0 : index
    %c0_113 = arith.constant 0 : index
    %179 = vector.load %arg17[%c1_111, %c0_112, %c0_113] : memref<2x64x32xf32, #tpu.memory_space<vmem>>, vector<1x64x32xf32>
    %180 = vector.shape_cast %179 : vector<1x64x32xf32> to vector<64x32xf32>
    %c1_114 = arith.constant 1 : index
    %c0_115 = arith.constant 0 : index
    %c0_116 = arith.constant 0 : index
    %181 = vector.load %arg18[%c1_114, %c0_115, %c0_116] : memref<2x1x32xf32, #tpu.memory_space<vmem>>, vector<1x1x32xf32>
    %182 = vector.shape_cast %181 : vector<1x1x32xf32> to vector<1x32xf32>
    %cst_117 = arith.constant dense<0.000000e+00> : vector<6x96xf32>
    %183 = tpu.matmul %158, %160, %cst_117 {dimension_numbers = #tpu.dot_dimension_numbers<[1], [0], [0], [1], [0, 0, 1, 1], [], []>} : vector<6x32xf32>, vector<32x96xf32>, vector<6x96xf32> -> vector<6x96xf32>
    %184 = vector.broadcast %162 : vector<1x96xf32> to vector<6x96xf32>
    %185 = arith.addf %183, %184 : vector<6x96xf32>
    %186 = vector.extract_strided_slice %185 {offsets = [0, 0], sizes = [6, 32], strides = [1, 1]} : vector<6x96xf32> to vector<6x32xf32>
    %187 = vector.extract_strided_slice %185 {offsets = [0, 32], sizes = [6, 32], strides = [1, 1]} : vector<6x96xf32> to vector<6x32xf32>
    %188 = vector.extract_strided_slice %185 {offsets = [0, 64], sizes = [6, 32], strides = [1, 1]} : vector<6x96xf32> to vector<6x32xf32>
    %189 = vector.extract_strided_slice %186 {offsets = [0, 0], sizes = [6, 16], strides = [1, 1]} : vector<6x32xf32> to vector<6x16xf32>
    %190 = vector.extract_strided_slice %187 {offsets = [0, 0], sizes = [6, 16], strides = [1, 1]} : vector<6x32xf32> to vector<6x16xf32>
    %191 = vector.extract_strided_slice %188 {offsets = [0, 0], sizes = [6, 16], strides = [1, 1]} : vector<6x32xf32> to vector<6x16xf32>
    %cst_118 = arith.constant dense<0.000000e+00> : vector<6x6xf32>
    %192 = tpu.matmul %189, %190, %cst_118 {dimension_numbers = #tpu.dot_dimension_numbers<[1], [1], [0], [0], [0, 0, 1, 0], [], []>} : vector<6x16xf32>, vector<6x16xf32>, vector<6x6xf32> -> vector<6x6xf32>
    %cst_119 = arith.constant 2.500000e-01 : f32
    %193 = vector.broadcast %cst_119 : f32 to vector<6x6xf32>
    %194 = arith.mulf %192, %193 : vector<6x6xf32>
    %195 = vector.broadcast %21 : vector<1x6xf32> to vector<6x6xf32>
    %196 = arith.addf %194, %195 : vector<6x6xf32>
    %cst_120 = arith.constant dense<0xFF800000> : vector<6xf32>
    %197 = vector.multi_reduction <maximumf>, %196, %cst_120 [1] : vector<6x6xf32> to vector<6xf32>
    %198 = vector.shape_cast %197 : vector<6xf32> to vector<6x1xf32>
    %199 = vector.broadcast %198 : vector<6x1xf32> to vector<6x6xf32>
    %200 = arith.subf %196, %199 : vector<6x6xf32>
    %201 = math.exp %200 : vector<6x6xf32>
    %cst_121 = arith.constant dense<0.000000e+00> : vector<6xf32>
    %202 = vector.multi_reduction <add>, %201, %cst_121 [1] : vector<6x6xf32> to vector<6xf32>
    %203 = vector.shape_cast %202 : vector<6xf32> to vector<6x1xf32>
    %204 = tpu.reciprocal %203 {approx = true} : vector<6x1xf32> -> vector<6x1xf32>
    %205 = vector.broadcast %204 : vector<6x1xf32> to vector<6x6xf32>
    %206 = arith.mulf %201, %205 : vector<6x6xf32>
    %cst_122 = arith.constant dense<0.000000e+00> : vector<6x16xf32>
    %207 = tpu.matmul %206, %191, %cst_122 {dimension_numbers = #tpu.dot_dimension_numbers<[1], [0], [0], [1], [0, 0, 1, 1], [], []>} : vector<6x6xf32>, vector<6x16xf32>, vector<6x16xf32> -> vector<6x16xf32>
    %208 = vector.extract_strided_slice %186 {offsets = [0, 16], sizes = [6, 16], strides = [1, 1]} : vector<6x32xf32> to vector<6x16xf32>
    %209 = vector.extract_strided_slice %187 {offsets = [0, 16], sizes = [6, 16], strides = [1, 1]} : vector<6x32xf32> to vector<6x16xf32>
    %210 = vector.extract_strided_slice %188 {offsets = [0, 16], sizes = [6, 16], strides = [1, 1]} : vector<6x32xf32> to vector<6x16xf32>
    %cst_123 = arith.constant dense<0.000000e+00> : vector<6x6xf32>
    %211 = tpu.matmul %208, %209, %cst_123 {dimension_numbers = #tpu.dot_dimension_numbers<[1], [1], [0], [0], [0, 0, 1, 0], [], []>} : vector<6x16xf32>, vector<6x16xf32>, vector<6x6xf32> -> vector<6x6xf32>
    %cst_124 = arith.constant 2.500000e-01 : f32
    %212 = vector.broadcast %cst_124 : f32 to vector<6x6xf32>
    %213 = arith.mulf %211, %212 : vector<6x6xf32>
    %214 = vector.broadcast %21 : vector<1x6xf32> to vector<6x6xf32>
    %215 = arith.addf %213, %214 : vector<6x6xf32>
    %cst_125 = arith.constant dense<0xFF800000> : vector<6xf32>
    %216 = vector.multi_reduction <maximumf>, %215, %cst_125 [1] : vector<6x6xf32> to vector<6xf32>
    %217 = vector.shape_cast %216 : vector<6xf32> to vector<6x1xf32>
    %218 = vector.broadcast %217 : vector<6x1xf32> to vector<6x6xf32>
    %219 = arith.subf %215, %218 : vector<6x6xf32>
    %220 = math.exp %219 : vector<6x6xf32>
    %cst_126 = arith.constant dense<0.000000e+00> : vector<6xf32>
    %221 = vector.multi_reduction <add>, %220, %cst_126 [1] : vector<6x6xf32> to vector<6xf32>
    %222 = vector.shape_cast %221 : vector<6xf32> to vector<6x1xf32>
    %223 = tpu.reciprocal %222 {approx = true} : vector<6x1xf32> -> vector<6x1xf32>
    %224 = vector.broadcast %223 : vector<6x1xf32> to vector<6x6xf32>
    %225 = arith.mulf %220, %224 : vector<6x6xf32>
    %cst_127 = arith.constant dense<0.000000e+00> : vector<6x16xf32>
    %226 = tpu.matmul %225, %210, %cst_127 {dimension_numbers = #tpu.dot_dimension_numbers<[1], [0], [0], [1], [0, 0, 1, 1], [], []>} : vector<6x6xf32>, vector<6x16xf32>, vector<6x16xf32> -> vector<6x16xf32>
    %227 = tpu.concatenate %207, %226 in 1 : vector<6x16xf32>, vector<6x16xf32> -> vector<6x32xf32>
    %cst_128 = arith.constant dense<0.000000e+00> : vector<6x32xf32>
    %228 = tpu.matmul %227, %164, %cst_128 {dimension_numbers = #tpu.dot_dimension_numbers<[1], [0], [0], [1], [0, 0, 1, 1], [], []>} : vector<6x32xf32>, vector<32x32xf32>, vector<6x32xf32> -> vector<6x32xf32>
    %229 = vector.broadcast %166 : vector<1x32xf32> to vector<6x32xf32>
    %230 = arith.addf %228, %229 : vector<6x32xf32>
    %231 = arith.addf %158, %230 : vector<6x32xf32>
    %cst_129 = arith.constant dense<0.000000e+00> : vector<6xf32>
    %232 = vector.multi_reduction <add>, %231, %cst_129 [1] : vector<6x32xf32> to vector<6xf32>
    %233 = vector.shape_cast %232 : vector<6xf32> to vector<6x1xf32>
    %cst_130 = arith.constant 3.200000e+01 : f32
    %234 = vector.broadcast %cst_130 : f32 to vector<6x1xf32>
    %235 = arith.divf %233, %234 : vector<6x1xf32>
    %236 = vector.broadcast %235 : vector<6x1xf32> to vector<6x32xf32>
    %237 = arith.subf %231, %236 : vector<6x32xf32>
    %238 = arith.mulf %237, %237 : vector<6x32xf32>
    %cst_131 = arith.constant dense<0.000000e+00> : vector<6xf32>
    %239 = vector.multi_reduction <add>, %238, %cst_131 [1] : vector<6x32xf32> to vector<6xf32>
    %240 = vector.shape_cast %239 : vector<6xf32> to vector<6x1xf32>
    %cst_132 = arith.constant 3.200000e+01 : f32
    %241 = vector.broadcast %cst_132 : f32 to vector<6x1xf32>
    %242 = arith.divf %240, %241 : vector<6x1xf32>
    %243 = vector.broadcast %235 : vector<6x1xf32> to vector<6x32xf32>
    %244 = arith.subf %231, %243 : vector<6x32xf32>
    %cst_133 = arith.constant 9.99999974E-6 : f32
    %245 = vector.broadcast %cst_133 : f32 to vector<6x1xf32>
    %246 = arith.addf %242, %245 : vector<6x1xf32>
    %247 = math.rsqrt %246 : vector<6x1xf32>
    %248 = vector.broadcast %247 : vector<6x1xf32> to vector<6x32xf32>
    %249 = arith.mulf %244, %248 : vector<6x32xf32>
    %250 = vector.broadcast %168 : vector<1x32xf32> to vector<6x32xf32>
    %251 = arith.mulf %249, %250 : vector<6x32xf32>
    %252 = vector.broadcast %170 : vector<1x32xf32> to vector<6x32xf32>
    %253 = arith.addf %251, %252 : vector<6x32xf32>
    %cst_134 = arith.constant dense<0.000000e+00> : vector<6x64xf32>
    %254 = tpu.matmul %253, %176, %cst_134 {dimension_numbers = #tpu.dot_dimension_numbers<[1], [0], [0], [1], [0, 0, 1, 1], [], []>} : vector<6x32xf32>, vector<32x64xf32>, vector<6x64xf32> -> vector<6x64xf32>
    %255 = vector.broadcast %178 : vector<1x64xf32> to vector<6x64xf32>
    %256 = arith.addf %254, %255 : vector<6x64xf32>
    %257 = arith.mulf %256, %256 : vector<6x64xf32>
    %258 = arith.mulf %256, %257 : vector<6x64xf32>
    %cst_135 = arith.constant 4.471500e-02 : f32
    %259 = vector.broadcast %cst_135 : f32 to vector<6x64xf32>
    %260 = arith.mulf %259, %258 : vector<6x64xf32>
    %261 = arith.addf %256, %260 : vector<6x64xf32>
    %cst_136 = arith.constant 0.797884583 : f32
    %262 = vector.broadcast %cst_136 : f32 to vector<6x64xf32>
    %263 = arith.mulf %262, %261 : vector<6x64xf32>
    %264 = math.tanh %263 : vector<6x64xf32>
    %cst_137 = arith.constant 1.000000e+00 : f32
    %265 = vector.broadcast %cst_137 : f32 to vector<6x64xf32>
    %266 = arith.addf %265, %264 : vector<6x64xf32>
    %cst_138 = arith.constant 5.000000e-01 : f32
    %267 = vector.broadcast %cst_138 : f32 to vector<6x64xf32>
    %268 = arith.mulf %267, %266 : vector<6x64xf32>
    %269 = arith.mulf %256, %268 : vector<6x64xf32>
    %cst_139 = arith.constant dense<0.000000e+00> : vector<6x32xf32>
    %270 = tpu.matmul %269, %180, %cst_139 {dimension_numbers = #tpu.dot_dimension_numbers<[1], [0], [0], [1], [0, 0, 1, 1], [], []>} : vector<6x64xf32>, vector<64x32xf32>, vector<6x32xf32> -> vector<6x32xf32>
    %271 = vector.broadcast %182 : vector<1x32xf32> to vector<6x32xf32>
    %272 = arith.addf %270, %271 : vector<6x32xf32>
    %273 = arith.addf %253, %272 : vector<6x32xf32>
    %cst_140 = arith.constant dense<0.000000e+00> : vector<6xf32>
    %274 = vector.multi_reduction <add>, %273, %cst_140 [1] : vector<6x32xf32> to vector<6xf32>
    %275 = vector.shape_cast %274 : vector<6xf32> to vector<6x1xf32>
    %cst_141 = arith.constant 3.200000e+01 : f32
    %276 = vector.broadcast %cst_141 : f32 to vector<6x1xf32>
    %277 = arith.divf %275, %276 : vector<6x1xf32>
    %278 = vector.broadcast %277 : vector<6x1xf32> to vector<6x32xf32>
    %279 = arith.subf %273, %278 : vector<6x32xf32>
    %280 = arith.mulf %279, %279 : vector<6x32xf32>
    %cst_142 = arith.constant dense<0.000000e+00> : vector<6xf32>
    %281 = vector.multi_reduction <add>, %280, %cst_142 [1] : vector<6x32xf32> to vector<6xf32>
    %282 = vector.shape_cast %281 : vector<6xf32> to vector<6x1xf32>
    %cst_143 = arith.constant 3.200000e+01 : f32
    %283 = vector.broadcast %cst_143 : f32 to vector<6x1xf32>
    %284 = arith.divf %282, %283 : vector<6x1xf32>
    %285 = vector.broadcast %277 : vector<6x1xf32> to vector<6x32xf32>
    %286 = arith.subf %273, %285 : vector<6x32xf32>
    %cst_144 = arith.constant 9.99999974E-6 : f32
    %287 = vector.broadcast %cst_144 : f32 to vector<6x1xf32>
    %288 = arith.addf %284, %287 : vector<6x1xf32>
    %289 = math.rsqrt %288 : vector<6x1xf32>
    %290 = vector.broadcast %289 : vector<6x1xf32> to vector<6x32xf32>
    %291 = arith.mulf %286, %290 : vector<6x32xf32>
    %292 = vector.broadcast %172 : vector<1x32xf32> to vector<6x32xf32>
    %293 = arith.mulf %291, %292 : vector<6x32xf32>
    %294 = vector.broadcast %174 : vector<1x32xf32> to vector<6x32xf32>
    %295 = arith.addf %293, %294 : vector<6x32xf32>
    %296 = vector.extract_strided_slice %295 {offsets = [0, 0], sizes = [2, 32], strides = [1, 1]} : vector<6x32xf32> to vector<2x32xf32>
    %c0_145 = arith.constant 0 : index
    %c0_146 = arith.constant 0 : index
    %c0_147 = arith.constant 0 : index
    %297 = vector.load %arg19[%c0_145, %c0_146, %c0_147] : memref<2x2x32xf32, #tpu.memory_space<vmem>>, vector<1x2x32xf32>
    %298 = vector.shape_cast %297 : vector<1x2x32xf32> to vector<2x32xf32>
    %299 = vector.shape_cast %296 : vector<2x32xf32> to vector<1x2x32xf32>
    tpu.vector_store %arg19[%c0_145, %c0_146, %c0_147], %299 {strides = array<i32>} : memref<2x2x32xf32, #tpu.memory_space<vmem>>, vector<1x2x32xf32>,
    %c1_148 = arith.constant 1 : index
    %c0_149 = arith.constant 0 : index
    %300 = vector.load %arg0[%c1_148, %c0_149] : memref<2x6xf32, #tpu.memory_space<vmem>>, vector<1x6xf32>
    %c0_150 = arith.constant 0 : index
    %c0_151 = arith.constant 0 : index
    %301 = vector.load %arg4[%c0_150, %c0_151] : memref<6x64xf32, #tpu.memory_space<vmem>>, vector<6x64xf32>
    %cst_152 = arith.constant dense<0.000000e+00> : vector<1x64xf32>
    %302 = tpu.matmul %300, %301, %cst_152 {dimension_numbers = #tpu.dot_dimension_numbers<[1], [0], [0], [1], [0, 0, 1, 1], [], []>} : vector<1x6xf32>, vector<6x64xf32>, vector<1x64xf32> -> vector<1x64xf32>
    %303 = vector.extract_strided_slice %302 {offsets = [0, 0], sizes = [1, 32], strides = [1, 1]} : vector<1x64xf32> to vector<1x32xf32>
    %304 = vector.extract_strided_slice %302 {offsets = [0, 32], sizes = [1, 32], strides = [1, 1]} : vector<1x64xf32> to vector<1x32xf32>
    %305 = tpu.concatenate %303, %304 in 0 : vector<1x32xf32>, vector<1x32xf32> -> vector<2x32xf32>
    %c1_153 = arith.constant 1 : index
    %c0_154 = arith.constant 0 : index
    %c0_155 = arith.constant 0 : index
    %306 = vector.load %arg1[%c1_153, %c0_154, %c0_155] : memref<2x4x16xf32, #tpu.memory_space<vmem>>, vector<1x4x16xf32>
    %307 = vector.shape_cast %306 : vector<1x4x16xf32> to vector<4x16xf32>
    %c0_156 = arith.constant 0 : index
    %c0_157 = arith.constant 0 : index
    %308 = vector.load %arg5[%c0_156, %c0_157] : memref<16x32xf32, #tpu.memory_space<vmem>>, vector<16x32xf32>
    %cst_158 = arith.constant dense<0.000000e+00> : vector<4x32xf32>
    %309 = tpu.matmul %307, %308, %cst_158 {dimension_numbers = #tpu.dot_dimension_numbers<[1], [0], [0], [1], [0, 0, 1, 1], [], []>} : vector<4x16xf32>, vector<16x32xf32>, vector<4x32xf32> -> vector<4x32xf32>
    %c0_159 = arith.constant 0 : index
    %c0_160 = arith.constant 0 : index
    %310 = vector.load %arg6[%c0_159, %c0_160] : memref<1x32xf32, #tpu.memory_space<vmem>>, vector<1x32xf32>
    %311 = vector.broadcast %310 : vector<1x32xf32> to vector<4x32xf32>
    %312 = arith.addf %309, %311 : vector<4x32xf32>
    %313 = tpu.concatenate %305, %312 in 0 : vector<2x32xf32>, vector<4x32xf32> -> vector<6x32xf32>
    %c0_161 = arith.constant 0 : index
    %c0_162 = arith.constant 0 : index
    %314 = vector.load %arg3[%c0_161, %c0_162] : memref<6x32xf32, #tpu.memory_space<vmem>>, vector<6x32xf32>
    %315 = arith.addf %313, %314 : vector<6x32xf32>
    %c1_163 = arith.constant 1 : index
    %c0_164 = arith.constant 0 : index
    %316 = vector.load %arg2[%c1_163, %c0_164] : memref<2x6xf32, #tpu.memory_space<vmem>>, vector<1x6xf32>
    %cst_165 = arith.constant 5.000000e-01 : f32
    %317 = vector.broadcast %cst_165 : f32 to vector<1x6xf32>
    %318 = arith.cmpf ogt, %316, %317 : vector<1x6xf32>
    %cst_166 = arith.constant -1.000000e+30 : f32
    %cst_167 = arith.constant 0.000000e+00 : f32
    %319 = vector.broadcast %cst_166 : f32 to vector<1x6xf32>
    %320 = vector.broadcast %cst_167 : f32 to vector<1x6xf32>
    %321 = arith.select %318, %319, %320 : vector<1x6xi1>, vector<1x6xf32>
    %c0_168 = arith.constant 0 : index
    %c0_169 = arith.constant 0 : index
    %c0_170 = arith.constant 0 : index
    %322 = vector.load %arg7[%c0_168, %c0_169, %c0_170] : memref<2x32x96xf32, #tpu.memory_space<vmem>>, vector<1x32x96xf32>
    %323 = vector.shape_cast %322 : vector<1x32x96xf32> to vector<32x96xf32>
    %c0_171 = arith.constant 0 : index
    %c0_172 = arith.constant 0 : index
    %c0_173 = arith.constant 0 : index
    %324 = vector.load %arg8[%c0_171, %c0_172, %c0_173] : memref<2x1x96xf32, #tpu.memory_space<vmem>>, vector<1x1x96xf32>
    %325 = vector.shape_cast %324 : vector<1x1x96xf32> to vector<1x96xf32>
    %c0_174 = arith.constant 0 : index
    %c0_175 = arith.constant 0 : index
    %c0_176 = arith.constant 0 : index
    %326 = vector.load %arg9[%c0_174, %c0_175, %c0_176] : memref<2x32x32xf32, #tpu.memory_space<vmem>>, vector<1x32x32xf32>
    %327 = vector.shape_cast %326 : vector<1x32x32xf32> to vector<32x32xf32>
    %c0_177 = arith.constant 0 : index
    %c0_178 = arith.constant 0 : index
    %c0_179 = arith.constant 0 : index
    %328 = vector.load %arg10[%c0_177, %c0_178, %c0_179] : memref<2x1x32xf32, #tpu.memory_space<vmem>>, vector<1x1x32xf32>
    %329 = vector.shape_cast %328 : vector<1x1x32xf32> to vector<1x32xf32>
    %c0_180 = arith.constant 0 : index
    %c0_181 = arith.constant 0 : index
    %c0_182 = arith.constant 0 : index
    %330 = vector.load %arg11[%c0_180, %c0_181, %c0_182] : memref<2x1x32xf32, #tpu.memory_space<vmem>>, vector<1x1x32xf32>
    %331 = vector.shape_cast %330 : vector<1x1x32xf32> to vector<1x32xf32>
    %c0_183 = arith.constant 0 : index
    %c0_184 = arith.constant 0 : index
    %c0_185 = arith.constant 0 : index
    %332 = vector.load %arg12[%c0_183, %c0_184, %c0_185] : memref<2x1x32xf32, #tpu.memory_space<vmem>>, vector<1x1x32xf32>
    %333 = vector.shape_cast %332 : vector<1x1x32xf32> to vector<1x32xf32>
    %c0_186 = arith.constant 0 : index
    %c0_187 = arith.constant 0 : index
    %c0_188 = arith.constant 0 : index
    %334 = vector.load %arg13[%c0_186, %c0_187, %c0_188] : memref<2x1x32xf32, #tpu.memory_space<vmem>>, vector<1x1x32xf32>
    %335 = vector.shape_cast %334 : vector<1x1x32xf32> to vector<1x32xf32>
    %c0_189 = arith.constant 0 : index
    %c0_190 = arith.constant 0 : index
    %c0_191 = arith.constant 0 : index
    %336 = vector.load %arg14[%c0_189, %c0_190, %c0_191] : memref<2x1x32xf32, #tpu.memory_space<vmem>>, vector<1x1x32xf32>
    %337 = vector.shape_cast %336 : vector<1x1x32xf32> to vector<1x32xf32>
    %c0_192 = arith.constant 0 : index
    %c0_193 = arith.constant 0 : index
    %c0_194 = arith.constant 0 : index
    %338 = vector.load %arg15[%c0_192, %c0_193, %c0_194] : memref<2x32x64xf32, #tpu.memory_space<vmem>>, vector<1x32x64xf32>
    %339 = vector.shape_cast %338 : vector<1x32x64xf32> to vector<32x64xf32>
    %c0_195 = arith.constant 0 : index
    %c0_196 = arith.constant 0 : index
    %c0_197 = arith.constant 0 : index
    %340 = vector.load %arg16[%c0_195, %c0_196, %c0_197] : memref<2x1x64xf32, #tpu.memory_space<vmem>>, vector<1x1x64xf32>
    %341 = vector.shape_cast %340 : vector<1x1x64xf32> to vector<1x64xf32>
    %c0_198 = arith.constant 0 : index
    %c0_199 = arith.constant 0 : index
    %c0_200 = arith.constant 0 : index
    %342 = vector.load %arg17[%c0_198, %c0_199, %c0_200] : memref<2x64x32xf32, #tpu.memory_space<vmem>>, vector<1x64x32xf32>
    %343 = vector.shape_cast %342 : vector<1x64x32xf32> to vector<64x32xf32>
    %c0_201 = arith.constant 0 : index
    %c0_202 = arith.constant 0 : index
    %c0_203 = arith.constant 0 : index
    %344 = vector.load %arg18[%c0_201, %c0_202, %c0_203] : memref<2x1x32xf32, #tpu.memory_space<vmem>>, vector<1x1x32xf32>
    %345 = vector.shape_cast %344 : vector<1x1x32xf32> to vector<1x32xf32>
    %cst_204 = arith.constant dense<0.000000e+00> : vector<6x96xf32>
    %346 = tpu.matmul %315, %323, %cst_204 {dimension_numbers = #tpu.dot_dimension_numbers<[1], [0], [0], [1], [0, 0, 1, 1], [], []>} : vector<6x32xf32>, vector<32x96xf32>, vector<6x96xf32> -> vector<6x96xf32>
    %347 = vector.broadcast %325 : vector<1x96xf32> to vector<6x96xf32>
    %348 = arith.addf %346, %347 : vector<6x96xf32>
    %349 = vector.extract_strided_slice %348 {offsets = [0, 0], sizes = [6, 32], strides = [1, 1]} : vector<6x96xf32> to vector<6x32xf32>
    %350 = vector.extract_strided_slice %348 {offsets = [0, 32], sizes = [6, 32], strides = [1, 1]} : vector<6x96xf32> to vector<6x32xf32>
    %351 = vector.extract_strided_slice %348 {offsets = [0, 64], sizes = [6, 32], strides = [1, 1]} : vector<6x96xf32> to vector<6x32xf32>
    %352 = vector.extract_strided_slice %349 {offsets = [0, 0], sizes = [6, 16], strides = [1, 1]} : vector<6x32xf32> to vector<6x16xf32>
    %353 = vector.extract_strided_slice %350 {offsets = [0, 0], sizes = [6, 16], strides = [1, 1]} : vector<6x32xf32> to vector<6x16xf32>
    %354 = vector.extract_strided_slice %351 {offsets = [0, 0], sizes = [6, 16], strides = [1, 1]} : vector<6x32xf32> to vector<6x16xf32>
    %cst_205 = arith.constant dense<0.000000e+00> : vector<6x6xf32>
    %355 = tpu.matmul %352, %353, %cst_205 {dimension_numbers = #tpu.dot_dimension_numbers<[1], [1], [0], [0], [0, 0, 1, 0], [], []>} : vector<6x16xf32>, vector<6x16xf32>, vector<6x6xf32> -> vector<6x6xf32>
    %cst_206 = arith.constant 2.500000e-01 : f32
    %356 = vector.broadcast %cst_206 : f32 to vector<6x6xf32>
    %357 = arith.mulf %355, %356 : vector<6x6xf32>
    %358 = vector.broadcast %321 : vector<1x6xf32> to vector<6x6xf32>
    %359 = arith.addf %357, %358 : vector<6x6xf32>
    %cst_207 = arith.constant dense<0xFF800000> : vector<6xf32>
    %360 = vector.multi_reduction <maximumf>, %359, %cst_207 [1] : vector<6x6xf32> to vector<6xf32>
    %361 = vector.shape_cast %360 : vector<6xf32> to vector<6x1xf32>
    %362 = vector.broadcast %361 : vector<6x1xf32> to vector<6x6xf32>
    %363 = arith.subf %359, %362 : vector<6x6xf32>
    %364 = math.exp %363 : vector<6x6xf32>
    %cst_208 = arith.constant dense<0.000000e+00> : vector<6xf32>
    %365 = vector.multi_reduction <add>, %364, %cst_208 [1] : vector<6x6xf32> to vector<6xf32>
    %366 = vector.shape_cast %365 : vector<6xf32> to vector<6x1xf32>
    %367 = tpu.reciprocal %366 {approx = true} : vector<6x1xf32> -> vector<6x1xf32>
    %368 = vector.broadcast %367 : vector<6x1xf32> to vector<6x6xf32>
    %369 = arith.mulf %364, %368 : vector<6x6xf32>
    %cst_209 = arith.constant dense<0.000000e+00> : vector<6x16xf32>
    %370 = tpu.matmul %369, %354, %cst_209 {dimension_numbers = #tpu.dot_dimension_numbers<[1], [0], [0], [1], [0, 0, 1, 1], [], []>} : vector<6x6xf32>, vector<6x16xf32>, vector<6x16xf32> -> vector<6x16xf32>
    %371 = vector.extract_strided_slice %349 {offsets = [0, 16], sizes = [6, 16], strides = [1, 1]} : vector<6x32xf32> to vector<6x16xf32>
    %372 = vector.extract_strided_slice %350 {offsets = [0, 16], sizes = [6, 16], strides = [1, 1]} : vector<6x32xf32> to vector<6x16xf32>
    %373 = vector.extract_strided_slice %351 {offsets = [0, 16], sizes = [6, 16], strides = [1, 1]} : vector<6x32xf32> to vector<6x16xf32>
    %cst_210 = arith.constant dense<0.000000e+00> : vector<6x6xf32>
    %374 = tpu.matmul %371, %372, %cst_210 {dimension_numbers = #tpu.dot_dimension_numbers<[1], [1], [0], [0], [0, 0, 1, 0], [], []>} : vector<6x16xf32>, vector<6x16xf32>, vector<6x6xf32> -> vector<6x6xf32>
    %cst_211 = arith.constant 2.500000e-01 : f32
    %375 = vector.broadcast %cst_211 : f32 to vector<6x6xf32>
    %376 = arith.mulf %374, %375 : vector<6x6xf32>
    %377 = vector.broadcast %321 : vector<1x6xf32> to vector<6x6xf32>
    %378 = arith.addf %376, %377 : vector<6x6xf32>
    %cst_212 = arith.constant dense<0xFF800000> : vector<6xf32>
    %379 = vector.multi_reduction <maximumf>, %378, %cst_212 [1] : vector<6x6xf32> to vector<6xf32>
    %380 = vector.shape_cast %379 : vector<6xf32> to vector<6x1xf32>
    %381 = vector.broadcast %380 : vector<6x1xf32> to vector<6x6xf32>
    %382 = arith.subf %378, %381 : vector<6x6xf32>
    %383 = math.exp %382 : vector<6x6xf32>
    %cst_213 = arith.constant dense<0.000000e+00> : vector<6xf32>
    %384 = vector.multi_reduction <add>, %383, %cst_213 [1] : vector<6x6xf32> to vector<6xf32>
    %385 = vector.shape_cast %384 : vector<6xf32> to vector<6x1xf32>
    %386 = tpu.reciprocal %385 {approx = true} : vector<6x1xf32> -> vector<6x1xf32>
    %387 = vector.broadcast %386 : vector<6x1xf32> to vector<6x6xf32>
    %388 = arith.mulf %383, %387 : vector<6x6xf32>
    %cst_214 = arith.constant dense<0.000000e+00> : vector<6x16xf32>
    %389 = tpu.matmul %388, %373, %cst_214 {dimension_numbers = #tpu.dot_dimension_numbers<[1], [0], [0], [1], [0, 0, 1, 1], [], []>} : vector<6x6xf32>, vector<6x16xf32>, vector<6x16xf32> -> vector<6x16xf32>
    %390 = tpu.concatenate %370, %389 in 1 : vector<6x16xf32>, vector<6x16xf32> -> vector<6x32xf32>
    %cst_215 = arith.constant dense<0.000000e+00> : vector<6x32xf32>
    %391 = tpu.matmul %390, %327, %cst_215 {dimension_numbers = #tpu.dot_dimension_numbers<[1], [0], [0], [1], [0, 0, 1, 1], [], []>} : vector<6x32xf32>, vector<32x32xf32>, vector<6x32xf32> -> vector<6x32xf32>
    %392 = vector.broadcast %329 : vector<1x32xf32> to vector<6x32xf32>
    %393 = arith.addf %391, %392 : vector<6x32xf32>
    %394 = arith.addf %315, %393 : vector<6x32xf32>
    %cst_216 = arith.constant dense<0.000000e+00> : vector<6xf32>
    %395 = vector.multi_reduction <add>, %394, %cst_216 [1] : vector<6x32xf32> to vector<6xf32>
    %396 = vector.shape_cast %395 : vector<6xf32> to vector<6x1xf32>
    %cst_217 = arith.constant 3.200000e+01 : f32
    %397 = vector.broadcast %cst_217 : f32 to vector<6x1xf32>
    %398 = arith.divf %396, %397 : vector<6x1xf32>
    %399 = vector.broadcast %398 : vector<6x1xf32> to vector<6x32xf32>
    %400 = arith.subf %394, %399 : vector<6x32xf32>
    %401 = arith.mulf %400, %400 : vector<6x32xf32>
    %cst_218 = arith.constant dense<0.000000e+00> : vector<6xf32>
    %402 = vector.multi_reduction <add>, %401, %cst_218 [1] : vector<6x32xf32> to vector<6xf32>
    %403 = vector.shape_cast %402 : vector<6xf32> to vector<6x1xf32>
    %cst_219 = arith.constant 3.200000e+01 : f32
    %404 = vector.broadcast %cst_219 : f32 to vector<6x1xf32>
    %405 = arith.divf %403, %404 : vector<6x1xf32>
    %406 = vector.broadcast %398 : vector<6x1xf32> to vector<6x32xf32>
    %407 = arith.subf %394, %406 : vector<6x32xf32>
    %cst_220 = arith.constant 9.99999974E-6 : f32
    %408 = vector.broadcast %cst_220 : f32 to vector<6x1xf32>
    %409 = arith.addf %405, %408 : vector<6x1xf32>
    %410 = math.rsqrt %409 : vector<6x1xf32>
    %411 = vector.broadcast %410 : vector<6x1xf32> to vector<6x32xf32>
    %412 = arith.mulf %407, %411 : vector<6x32xf32>
    %413 = vector.broadcast %331 : vector<1x32xf32> to vector<6x32xf32>
    %414 = arith.mulf %412, %413 : vector<6x32xf32>
    %415 = vector.broadcast %333 : vector<1x32xf32> to vector<6x32xf32>
    %416 = arith.addf %414, %415 : vector<6x32xf32>
    %cst_221 = arith.constant dense<0.000000e+00> : vector<6x64xf32>
    %417 = tpu.matmul %416, %339, %cst_221 {dimension_numbers = #tpu.dot_dimension_numbers<[1], [0], [0], [1], [0, 0, 1, 1], [], []>} : vector<6x32xf32>, vector<32x64xf32>, vector<6x64xf32> -> vector<6x64xf32>
    %418 = vector.broadcast %341 : vector<1x64xf32> to vector<6x64xf32>
    %419 = arith.addf %417, %418 : vector<6x64xf32>
    %420 = arith.mulf %419, %419 : vector<6x64xf32>
    %421 = arith.mulf %419, %420 : vector<6x64xf32>
    %cst_222 = arith.constant 4.471500e-02 : f32
    %422 = vector.broadcast %cst_222 : f32 to vector<6x64xf32>
    %423 = arith.mulf %422, %421 : vector<6x64xf32>
    %424 = arith.addf %419, %423 : vector<6x64xf32>
    %cst_223 = arith.constant 0.797884583 : f32
    %425 = vector.broadcast %cst_223 : f32 to vector<6x64xf32>
    %426 = arith.mulf %425, %424 : vector<6x64xf32>
    %427 = math.tanh %426 : vector<6x64xf32>
    %cst_224 = arith.constant 1.000000e+00 : f32
    %428 = vector.broadcast %cst_224 : f32 to vector<6x64xf32>
    %429 = arith.addf %428, %427 : vector<6x64xf32>
    %cst_225 = arith.constant 5.000000e-01 : f32
    %430 = vector.broadcast %cst_225 : f32 to vector<6x64xf32>
    %431 = arith.mulf %430, %429 : vector<6x64xf32>
    %432 = arith.mulf %419, %431 : vector<6x64xf32>
    %cst_226 = arith.constant dense<0.000000e+00> : vector<6x32xf32>
    %433 = tpu.matmul %432, %343, %cst_226 {dimension_numbers = #tpu.dot_dimension_numbers<[1], [0], [0], [1], [0, 0, 1, 1], [], []>} : vector<6x64xf32>, vector<64x32xf32>, vector<6x32xf32> -> vector<6x32xf32>
    %434 = vector.broadcast %345 : vector<1x32xf32> to vector<6x32xf32>
    %435 = arith.addf %433, %434 : vector<6x32xf32>
    %436 = arith.addf %416, %435 : vector<6x32xf32>
    %cst_227 = arith.constant dense<0.000000e+00> : vector<6xf32>
    %437 = vector.multi_reduction <add>, %436, %cst_227 [1] : vector<6x32xf32> to vector<6xf32>
    %438 = vector.shape_cast %437 : vector<6xf32> to vector<6x1xf32>
    %cst_228 = arith.constant 3.200000e+01 : f32
    %439 = vector.broadcast %cst_228 : f32 to vector<6x1xf32>
    %440 = arith.divf %438, %439 : vector<6x1xf32>
    %441 = vector.broadcast %440 : vector<6x1xf32> to vector<6x32xf32>
    %442 = arith.subf %436, %441 : vector<6x32xf32>
    %443 = arith.mulf %442, %442 : vector<6x32xf32>
    %cst_229 = arith.constant dense<0.000000e+00> : vector<6xf32>
    %444 = vector.multi_reduction <add>, %443, %cst_229 [1] : vector<6x32xf32> to vector<6xf32>
    %445 = vector.shape_cast %444 : vector<6xf32> to vector<6x1xf32>
    %cst_230 = arith.constant 3.200000e+01 : f32
    %446 = vector.broadcast %cst_230 : f32 to vector<6x1xf32>
    %447 = arith.divf %445, %446 : vector<6x1xf32>
    %448 = vector.broadcast %440 : vector<6x1xf32> to vector<6x32xf32>
    %449 = arith.subf %436, %448 : vector<6x32xf32>
    %cst_231 = arith.constant 9.99999974E-6 : f32
    %450 = vector.broadcast %cst_231 : f32 to vector<6x1xf32>
    %451 = arith.addf %447, %450 : vector<6x1xf32>
    %452 = math.rsqrt %451 : vector<6x1xf32>
    %453 = vector.broadcast %452 : vector<6x1xf32> to vector<6x32xf32>
    %454 = arith.mulf %449, %453 : vector<6x32xf32>
    %455 = vector.broadcast %335 : vector<1x32xf32> to vector<6x32xf32>
    %456 = arith.mulf %454, %455 : vector<6x32xf32>
    %457 = vector.broadcast %337 : vector<1x32xf32> to vector<6x32xf32>
    %458 = arith.addf %456, %457 : vector<6x32xf32>
    %c1_232 = arith.constant 1 : index
    %c0_233 = arith.constant 0 : index
    %c0_234 = arith.constant 0 : index
    %459 = vector.load %arg7[%c1_232, %c0_233, %c0_234] : memref<2x32x96xf32, #tpu.memory_space<vmem>>, vector<1x32x96xf32>
    %460 = vector.shape_cast %459 : vector<1x32x96xf32> to vector<32x96xf32>
    %c1_235 = arith.constant 1 : index
    %c0_236 = arith.constant 0 : index
    %c0_237 = arith.constant 0 : index
    %461 = vector.load %arg8[%c1_235, %c0_236, %c0_237] : memref<2x1x96xf32, #tpu.memory_space<vmem>>, vector<1x1x96xf32>
    %462 = vector.shape_cast %461 : vector<1x1x96xf32> to vector<1x96xf32>
    %c1_238 = arith.constant 1 : index
    %c0_239 = arith.constant 0 : index
    %c0_240 = arith.constant 0 : index
    %463 = vector.load %arg9[%c1_238, %c0_239, %c0_240] : memref<2x32x32xf32, #tpu.memory_space<vmem>>, vector<1x32x32xf32>
    %464 = vector.shape_cast %463 : vector<1x32x32xf32> to vector<32x32xf32>
    %c1_241 = arith.constant 1 : index
    %c0_242 = arith.constant 0 : index
    %c0_243 = arith.constant 0 : index
    %465 = vector.load %arg10[%c1_241, %c0_242, %c0_243] : memref<2x1x32xf32, #tpu.memory_space<vmem>>, vector<1x1x32xf32>
    %466 = vector.shape_cast %465 : vector<1x1x32xf32> to vector<1x32xf32>
    %c1_244 = arith.constant 1 : index
    %c0_245 = arith.constant 0 : index
    %c0_246 = arith.constant 0 : index
    %467 = vector.load %arg11[%c1_244, %c0_245, %c0_246] : memref<2x1x32xf32, #tpu.memory_space<vmem>>, vector<1x1x32xf32>
    %468 = vector.shape_cast %467 : vector<1x1x32xf32> to vector<1x32xf32>
    %c1_247 = arith.constant 1 : index
    %c0_248 = arith.constant 0 : index
    %c0_249 = arith.constant 0 : index
    %469 = vector.load %arg12[%c1_247, %c0_248, %c0_249] : memref<2x1x32xf32, #tpu.memory_space<vmem>>, vector<1x1x32xf32>
    %470 = vector.shape_cast %469 : vector<1x1x32xf32> to vector<1x32xf32>
    %c1_250 = arith.constant 1 : index
    %c0_251 = arith.constant 0 : index
    %c0_252 = arith.constant 0 : index
    %471 = vector.load %arg13[%c1_250, %c0_251, %c0_252] : memref<2x1x32xf32, #tpu.memory_space<vmem>>, vector<1x1x32xf32>
    %472 = vector.shape_cast %471 : vector<1x1x32xf32> to vector<1x32xf32>
    %c1_253 = arith.constant 1 : index
    %c0_254 = arith.constant 0 : index
    %c0_255 = arith.constant 0 : index
    %473 = vector.load %arg14[%c1_253, %c0_254, %c0_255] : memref<2x1x32xf32, #tpu.memory_space<vmem>>, vector<1x1x32xf32>
    %474 = vector.shape_cast %473 : vector<1x1x32xf32> to vector<1x32xf32>
    %c1_256 = arith.constant 1 : index
    %c0_257 = arith.constant 0 : index
    %c0_258 = arith.constant 0 : index
    %475 = vector.load %arg15[%c1_256, %c0_257, %c0_258] : memref<2x32x64xf32, #tpu.memory_space<vmem>>, vector<1x32x64xf32>
    %476 = vector.shape_cast %475 : vector<1x32x64xf32> to vector<32x64xf32>
    %c1_259 = arith.constant 1 : index
    %c0_260 = arith.constant 0 : index
    %c0_261 = arith.constant 0 : index
    %477 = vector.load %arg16[%c1_259, %c0_260, %c0_261] : memref<2x1x64xf32, #tpu.memory_space<vmem>>, vector<1x1x64xf32>
    %478 = vector.shape_cast %477 : vector<1x1x64xf32> to vector<1x64xf32>
    %c1_262 = arith.constant 1 : index
    %c0_263 = arith.constant 0 : index
    %c0_264 = arith.constant 0 : index
    %479 = vector.load %arg17[%c1_262, %c0_263, %c0_264] : memref<2x64x32xf32, #tpu.memory_space<vmem>>, vector<1x64x32xf32>
    %480 = vector.shape_cast %479 : vector<1x64x32xf32> to vector<64x32xf32>
    %c1_265 = arith.constant 1 : index
    %c0_266 = arith.constant 0 : index
    %c0_267 = arith.constant 0 : index
    %481 = vector.load %arg18[%c1_265, %c0_266, %c0_267] : memref<2x1x32xf32, #tpu.memory_space<vmem>>, vector<1x1x32xf32>
    %482 = vector.shape_cast %481 : vector<1x1x32xf32> to vector<1x32xf32>
    %cst_268 = arith.constant dense<0.000000e+00> : vector<6x96xf32>
    %483 = tpu.matmul %458, %460, %cst_268 {dimension_numbers = #tpu.dot_dimension_numbers<[1], [0], [0], [1], [0, 0, 1, 1], [], []>} : vector<6x32xf32>, vector<32x96xf32>, vector<6x96xf32> -> vector<6x96xf32>
    %484 = vector.broadcast %462 : vector<1x96xf32> to vector<6x96xf32>
    %485 = arith.addf %483, %484 : vector<6x96xf32>
    %486 = vector.extract_strided_slice %485 {offsets = [0, 0], sizes = [6, 32], strides = [1, 1]} : vector<6x96xf32> to vector<6x32xf32>
    %487 = vector.extract_strided_slice %485 {offsets = [0, 32], sizes = [6, 32], strides = [1, 1]} : vector<6x96xf32> to vector<6x32xf32>
    %488 = vector.extract_strided_slice %485 {offsets = [0, 64], sizes = [6, 32], strides = [1, 1]} : vector<6x96xf32> to vector<6x32xf32>
    %489 = vector.extract_strided_slice %486 {offsets = [0, 0], sizes = [6, 16], strides = [1, 1]} : vector<6x32xf32> to vector<6x16xf32>
    %490 = vector.extract_strided_slice %487 {offsets = [0, 0], sizes = [6, 16], strides = [1, 1]} : vector<6x32xf32> to vector<6x16xf32>
    %491 = vector.extract_strided_slice %488 {offsets = [0, 0], sizes = [6, 16], strides = [1, 1]} : vector<6x32xf32> to vector<6x16xf32>
    %cst_269 = arith.constant dense<0.000000e+00> : vector<6x6xf32>
    %492 = tpu.matmul %489, %490, %cst_269 {dimension_numbers = #tpu.dot_dimension_numbers<[1], [1], [0], [0], [0, 0, 1, 0], [], []>} : vector<6x16xf32>, vector<6x16xf32>, vector<6x6xf32> -> vector<6x6xf32>
    %cst_270 = arith.constant 2.500000e-01 : f32
    %493 = vector.broadcast %cst_270 : f32 to vector<6x6xf32>
    %494 = arith.mulf %492, %493 : vector<6x6xf32>
    %495 = vector.broadcast %321 : vector<1x6xf32> to vector<6x6xf32>
    %496 = arith.addf %494, %495 : vector<6x6xf32>
    %cst_271 = arith.constant dense<0xFF800000> : vector<6xf32>
    %497 = vector.multi_reduction <maximumf>, %496, %cst_271 [1] : vector<6x6xf32> to vector<6xf32>
    %498 = vector.shape_cast %497 : vector<6xf32> to vector<6x1xf32>
    %499 = vector.broadcast %498 : vector<6x1xf32> to vector<6x6xf32>
    %500 = arith.subf %496, %499 : vector<6x6xf32>
    %501 = math.exp %500 : vector<6x6xf32>
    %cst_272 = arith.constant dense<0.000000e+00> : vector<6xf32>
    %502 = vector.multi_reduction <add>, %501, %cst_272 [1] : vector<6x6xf32> to vector<6xf32>
    %503 = vector.shape_cast %502 : vector<6xf32> to vector<6x1xf32>
    %504 = tpu.reciprocal %503 {approx = true} : vector<6x1xf32> -> vector<6x1xf32>
    %505 = vector.broadcast %504 : vector<6x1xf32> to vector<6x6xf32>
    %506 = arith.mulf %501, %505 : vector<6x6xf32>
    %cst_273 = arith.constant dense<0.000000e+00> : vector<6x16xf32>
    %507 = tpu.matmul %506, %491, %cst_273 {dimension_numbers = #tpu.dot_dimension_numbers<[1], [0], [0], [1], [0, 0, 1, 1], [], []>} : vector<6x6xf32>, vector<6x16xf32>, vector<6x16xf32> -> vector<6x16xf32>
    %508 = vector.extract_strided_slice %486 {offsets = [0, 16], sizes = [6, 16], strides = [1, 1]} : vector<6x32xf32> to vector<6x16xf32>
    %509 = vector.extract_strided_slice %487 {offsets = [0, 16], sizes = [6, 16], strides = [1, 1]} : vector<6x32xf32> to vector<6x16xf32>
    %510 = vector.extract_strided_slice %488 {offsets = [0, 16], sizes = [6, 16], strides = [1, 1]} : vector<6x32xf32> to vector<6x16xf32>
    %cst_274 = arith.constant dense<0.000000e+00> : vector<6x6xf32>
    %511 = tpu.matmul %508, %509, %cst_274 {dimension_numbers = #tpu.dot_dimension_numbers<[1], [1], [0], [0], [0, 0, 1, 0], [], []>} : vector<6x16xf32>, vector<6x16xf32>, vector<6x6xf32> -> vector<6x6xf32>
    %cst_275 = arith.constant 2.500000e-01 : f32
    %512 = vector.broadcast %cst_275 : f32 to vector<6x6xf32>
    %513 = arith.mulf %511, %512 : vector<6x6xf32>
    %514 = vector.broadcast %321 : vector<1x6xf32> to vector<6x6xf32>
    %515 = arith.addf %513, %514 : vector<6x6xf32>
    %cst_276 = arith.constant dense<0xFF800000> : vector<6xf32>
    %516 = vector.multi_reduction <maximumf>, %515, %cst_276 [1] : vector<6x6xf32> to vector<6xf32>
    %517 = vector.shape_cast %516 : vector<6xf32> to vector<6x1xf32>
    %518 = vector.broadcast %517 : vector<6x1xf32> to vector<6x6xf32>
    %519 = arith.subf %515, %518 : vector<6x6xf32>
    %520 = math.exp %519 : vector<6x6xf32>
    %cst_277 = arith.constant dense<0.000000e+00> : vector<6xf32>
    %521 = vector.multi_reduction <add>, %520, %cst_277 [1] : vector<6x6xf32> to vector<6xf32>
    %522 = vector.shape_cast %521 : vector<6xf32> to vector<6x1xf32>
    %523 = tpu.reciprocal %522 {approx = true} : vector<6x1xf32> -> vector<6x1xf32>
    %524 = vector.broadcast %523 : vector<6x1xf32> to vector<6x6xf32>
    %525 = arith.mulf %520, %524 : vector<6x6xf32>
    %cst_278 = arith.constant dense<0.000000e+00> : vector<6x16xf32>
    %526 = tpu.matmul %525, %510, %cst_278 {dimension_numbers = #tpu.dot_dimension_numbers<[1], [0], [0], [1], [0, 0, 1, 1], [], []>} : vector<6x6xf32>, vector<6x16xf32>, vector<6x16xf32> -> vector<6x16xf32>
    %527 = tpu.concatenate %507, %526 in 1 : vector<6x16xf32>, vector<6x16xf32> -> vector<6x32xf32>
    %cst_279 = arith.constant dense<0.000000e+00> : vector<6x32xf32>
    %528 = tpu.matmul %527, %464, %cst_279 {dimension_numbers = #tpu.dot_dimension_numbers<[1], [0], [0], [1], [0, 0, 1, 1], [], []>} : vector<6x32xf32>, vector<32x32xf32>, vector<6x32xf32> -> vector<6x32xf32>
    %529 = vector.broadcast %466 : vector<1x32xf32> to vector<6x32xf32>
    %530 = arith.addf %528, %529 : vector<6x32xf32>
    %531 = arith.addf %458, %530 : vector<6x32xf32>
    %cst_280 = arith.constant dense<0.000000e+00> : vector<6xf32>
    %532 = vector.multi_reduction <add>, %531, %cst_280 [1] : vector<6x32xf32> to vector<6xf32>
    %533 = vector.shape_cast %532 : vector<6xf32> to vector<6x1xf32>
    %cst_281 = arith.constant 3.200000e+01 : f32
    %534 = vector.broadcast %cst_281 : f32 to vector<6x1xf32>
    %535 = arith.divf %533, %534 : vector<6x1xf32>
    %536 = vector.broadcast %535 : vector<6x1xf32> to vector<6x32xf32>
    %537 = arith.subf %531, %536 : vector<6x32xf32>
    %538 = arith.mulf %537, %537 : vector<6x32xf32>
    %cst_282 = arith.constant dense<0.000000e+00> : vector<6xf32>
    %539 = vector.multi_reduction <add>, %538, %cst_282 [1] : vector<6x32xf32> to vector<6xf32>
    %540 = vector.shape_cast %539 : vector<6xf32> to vector<6x1xf32>
    %cst_283 = arith.constant 3.200000e+01 : f32
    %541 = vector.broadcast %cst_283 : f32 to vector<6x1xf32>
    %542 = arith.divf %540, %541 : vector<6x1xf32>
    %543 = vector.broadcast %535 : vector<6x1xf32> to vector<6x32xf32>
    %544 = arith.subf %531, %543 : vector<6x32xf32>
    %cst_284 = arith.constant 9.99999974E-6 : f32
    %545 = vector.broadcast %cst_284 : f32 to vector<6x1xf32>
    %546 = arith.addf %542, %545 : vector<6x1xf32>
    %547 = math.rsqrt %546 : vector<6x1xf32>
    %548 = vector.broadcast %547 : vector<6x1xf32> to vector<6x32xf32>
    %549 = arith.mulf %544, %548 : vector<6x32xf32>
    %550 = vector.broadcast %468 : vector<1x32xf32> to vector<6x32xf32>
    %551 = arith.mulf %549, %550 : vector<6x32xf32>
    %552 = vector.broadcast %470 : vector<1x32xf32> to vector<6x32xf32>
    %553 = arith.addf %551, %552 : vector<6x32xf32>
    %cst_285 = arith.constant dense<0.000000e+00> : vector<6x64xf32>
    %554 = tpu.matmul %553, %476, %cst_285 {dimension_numbers = #tpu.dot_dimension_numbers<[1], [0], [0], [1], [0, 0, 1, 1], [], []>} : vector<6x32xf32>, vector<32x64xf32>, vector<6x64xf32> -> vector<6x64xf32>
    %555 = vector.broadcast %478 : vector<1x64xf32> to vector<6x64xf32>
    %556 = arith.addf %554, %555 : vector<6x64xf32>
    %557 = arith.mulf %556, %556 : vector<6x64xf32>
    %558 = arith.mulf %556, %557 : vector<6x64xf32>
    %cst_286 = arith.constant 4.471500e-02 : f32
    %559 = vector.broadcast %cst_286 : f32 to vector<6x64xf32>
    %560 = arith.mulf %559, %558 : vector<6x64xf32>
    %561 = arith.addf %556, %560 : vector<6x64xf32>
    %cst_287 = arith.constant 0.797884583 : f32
    %562 = vector.broadcast %cst_287 : f32 to vector<6x64xf32>
    %563 = arith.mulf %562, %561 : vector<6x64xf32>
    %564 = math.tanh %563 : vector<6x64xf32>
    %cst_288 = arith.constant 1.000000e+00 : f32
    %565 = vector.broadcast %cst_288 : f32 to vector<6x64xf32>
    %566 = arith.addf %565, %564 : vector<6x64xf32>
    %cst_289 = arith.constant 5.000000e-01 : f32
    %567 = vector.broadcast %cst_289 : f32 to vector<6x64xf32>
    %568 = arith.mulf %567, %566 : vector<6x64xf32>
    %569 = arith.mulf %556, %568 : vector<6x64xf32>
    %cst_290 = arith.constant dense<0.000000e+00> : vector<6x32xf32>
    %570 = tpu.matmul %569, %480, %cst_290 {dimension_numbers = #tpu.dot_dimension_numbers<[1], [0], [0], [1], [0, 0, 1, 1], [], []>} : vector<6x64xf32>, vector<64x32xf32>, vector<6x32xf32> -> vector<6x32xf32>
    %571 = vector.broadcast %482 : vector<1x32xf32> to vector<6x32xf32>
    %572 = arith.addf %570, %571 : vector<6x32xf32>
    %573 = arith.addf %553, %572 : vector<6x32xf32>
    %cst_291 = arith.constant dense<0.000000e+00> : vector<6xf32>
    %574 = vector.multi_reduction <add>, %573, %cst_291 [1] : vector<6x32xf32> to vector<6xf32>
    %575 = vector.shape_cast %574 : vector<6xf32> to vector<6x1xf32>
    %cst_292 = arith.constant 3.200000e+01 : f32
    %576 = vector.broadcast %cst_292 : f32 to vector<6x1xf32>
    %577 = arith.divf %575, %576 : vector<6x1xf32>
    %578 = vector.broadcast %577 : vector<6x1xf32> to vector<6x32xf32>
    %579 = arith.subf %573, %578 : vector<6x32xf32>
    %580 = arith.mulf %579, %579 : vector<6x32xf32>
    %cst_293 = arith.constant dense<0.000000e+00> : vector<6xf32>
    %581 = vector.multi_reduction <add>, %580, %cst_293 [1] : vector<6x32xf32> to vector<6xf32>
    %582 = vector.shape_cast %581 : vector<6xf32> to vector<6x1xf32>
    %cst_294 = arith.constant 3.200000e+01 : f32
    %583 = vector.broadcast %cst_294 : f32 to vector<6x1xf32>
    %584 = arith.divf %582, %583 : vector<6x1xf32>
    %585 = vector.broadcast %577 : vector<6x1xf32> to vector<6x32xf32>
    %586 = arith.subf %573, %585 : vector<6x32xf32>
    %cst_295 = arith.constant 9.99999974E-6 : f32
    %587 = vector.broadcast %cst_295 : f32 to vector<6x1xf32>
    %588 = arith.addf %584, %587 : vector<6x1xf32>
    %589 = math.rsqrt %588 : vector<6x1xf32>
    %590 = vector.broadcast %589 : vector<6x1xf32> to vector<6x32xf32>
    %591 = arith.mulf %586, %590 : vector<6x32xf32>
    %592 = vector.broadcast %472 : vector<1x32xf32> to vector<6x32xf32>
    %593 = arith.mulf %591, %592 : vector<6x32xf32>
    %594 = vector.broadcast %474 : vector<1x32xf32> to vector<6x32xf32>
    %595 = arith.addf %593, %594 : vector<6x32xf32>
    %596 = vector.extract_strided_slice %595 {offsets = [0, 0], sizes = [2, 32], strides = [1, 1]} : vector<6x32xf32> to vector<2x32xf32>
    %c1_296 = arith.constant 1 : index
    %c0_297 = arith.constant 0 : index
    %c0_298 = arith.constant 0 : index
    %597 = vector.load %arg19[%c1_296, %c0_297, %c0_298] : memref<2x2x32xf32, #tpu.memory_space<vmem>>, vector<1x2x32xf32>
    %598 = vector.shape_cast %597 : vector<1x2x32xf32> to vector<2x32xf32>
    %599 = vector.shape_cast %596 : vector<2x32xf32> to vector<1x2x32xf32>
    tpu.vector_store %arg19[%c1_296, %c0_297, %c0_298], %599 {strides = array<i32>} : memref<2x2x32xf32, #tpu.memory_space<vmem>>, vector<1x2x32xf32>,
    return
  }
}

</mosaic_0001>

<llo_original>
// kernel: transformer_vae_forward.4
$region0: #{transformer_vae_forward.4}
  #allocation0 [shape = 'u32[]', space=smem, size = 0x4, offset = 0x4, fixed_abs, tag = 'smem constant byte address 0x4 - core index']
  #allocation1 [shape = 'u32[72,128]{1,0:T(1,128)}', space=vmem, size = 0x9000, scoped, tag = 'internal scratch']
  %s0 = inlined_call_operand.vmem [shape: f32[2,6], index: 0, kind: input, shape index: {}]
  %s1 = inlined_call_operand.vmem [shape: f32[2,4,16], index: 1, kind: input, shape index: {}]
  %s2 = inlined_call_operand.vmem [shape: f32[2,6], index: 2, kind: input, shape index: {}]
  %s3 = inlined_call_operand.hbm [shape: f32[6,32], index: 3, kind: input, shape index: {}]
  %s4 = inlined_call_operand.hbm [shape: f32[6,64], index: 4, kind: input, shape index: {}]
  %s5 = inlined_call_operand.vmem [shape: f32[16,32], index: 5, kind: input, shape index: {}]
  %s6 = inlined_call_operand.vmem [shape: f32[1,32], index: 6, kind: input, shape index: {}]
  %s7 = inlined_call_operand.vmem [shape: f32[2,32,96], index: 7, kind: input, shape index: {}]
  %s8 = inlined_call_operand.hbm [shape: f32[2,1,96], index: 8, kind: input, shape index: {}]
  %s9 = inlined_call_operand.vmem [shape: f32[2,32,32], index: 9, kind: input, shape index: {}]
  %s10 = inlined_call_operand.hbm [shape: f32[2,1,32], index: 10, kind: input, shape index: {}]
  %s11 = inlined_call_operand.hbm [shape: f32[2,1,32], index: 11, kind: input, shape index: {}]
  %s12 = inlined_call_operand.hbm [shape: f32[2,1,32], index: 12, kind: input, shape index: {}]
  %s13 = inlined_call_operand.hbm [shape: f32[2,1,32], index: 13, kind: input, shape index: {}]
  %s14 = inlined_call_operand.hbm [shape: f32[2,1,32], index: 14, kind: input, shape index: {}]
  %s15 = inlined_call_operand.vmem [shape: f32[2,32,64], index: 15, kind: input, shape index: {}]
  %s16 = inlined_call_operand.hbm [shape: f32[2,1,64], index: 16, kind: input, shape index: {}]
  %s17 = inlined_call_operand.vmem [shape: f32[2,64,32], index: 17, kind: input, shape index: {}]
  %s18 = inlined_call_operand.hbm [shape: f32[2,1,32], index: 18, kind: input, shape index: {}]
  %s19 = inlined_call_operand.vmem [shape: f32[2,2,32], index: 19, kind: output, shape index: {}]
  %s20 = sld [smem:[#allocation0]]
  $region126: #{transformer_vae_forward.4} parent=0
    _
  %s22 = ssub.s32 1, %s20
  %s23 = scalar_select 0, %s22, %s20
  $region1: #{transformer_vae_forward.4} parent=0
    #allocation2 [shape = 'u8[4096]{0}', space=vmem, size = 0x1000, scoped, tag = 'input window, operand 3, single buffered']
    #allocation3 [shape = 's32[1]{0}', space=sflag, size = 0x4, scoped, tag = 'scoped memory for transformer_vae_forward.4']
    #allocation4 [shape = 'u8[4096]{0}', space=vmem, size = 0x1000, scoped, tag = 'input window, operand 4, single buffered']
    #allocation5 [shape = 's32[1]{0}', space=sflag, size = 0x4, scoped, tag = 'scoped memory for transformer_vae_forward.4']
    #allocation6 [shape = 'u8[1024]{0}', space=vmem, size = 0x400, scoped, tag = 'input window, operand 8, single buffered']
    #allocation7 [shape = 'u8[1024]{0}', space=vmem, size = 0x400, scoped, tag = 'input window, operand 10, single buffered']
    #allocation8 [shape = 's32[1]{0}', space=sflag, size = 0x4, scoped, tag = 'scoped memory for transformer_vae_forward.4']
    #allocation9 [shape = 'u8[1024]{0}', space=vmem, size = 0x400, scoped, tag = 'input window, operand 11, single buffered']
    #allocation10 [shape = 'u8[1024]{0}', space=vmem, size = 0x400, scoped, tag = 'input window, operand 12, single buffered']
    #allocation11 [shape = 's32[1]{0}', space=sflag, size = 0x4, scoped, tag = 'scoped memory for transformer_vae_forward.4']
    #allocation12 [shape = 'u8[1024]{0}', space=vmem, size = 0x400, scoped, tag = 'input window, operand 13, single buffered']
    #allocation13 [shape = 'u8[1024]{0}', space=vmem, size = 0x400, scoped, tag = 'input window, operand 14, single buffered']
    #allocation14 [shape = 's32[1]{0}', space=sflag, size = 0x4, scoped, tag = 'scoped memory for transformer_vae_forward.4']
    #allocation15 [shape = 'u8[1024]{0}', space=vmem, size = 0x400, scoped, tag = 'input window, operand 16, single buffered']
    #allocation16 [shape = 'u8[1024]{0}', space=vmem, size = 0x400, scoped, tag = 'input window, operand 18, single buffered']
    #allocation17 [shape = 's32[1]{0}', space=sflag, size = 0x4, scoped, tag = 'scoped memory for transformer_vae_forward.4']
    %24 = vsyncpa [#allocation3], 0
    %25 = vsyncpa [#allocation5], 0
    %26 = vsyncpa [#allocation8], 0
    %27 = vsyncpa [#allocation11], 0
    %28 = vsyncpa [#allocation14], 0
    %29 = vsyncpa [#allocation17], 0
    // Predicated region
    $region2: #{transformer_vae_forward.4} parent=1 // pred_check
      _
    $region3: #{transformer_vae_forward.4} parent=1 // pred_check_branch
      %31 = sbr.rel (0) target = $region5
    $region4: #{transformer_vae_forward.4} parent=1 // pred_region
      _
    $region5: #{transformer_vae_forward.4} parent=1 // pred_fallthru
      _
    // Predicated region
    $region6: #{transformer_vae_forward.4} parent=1 // pred_check
      _
    $region7: #{transformer_vae_forward.4} parent=1 // pred_check_branch
      %33 = sbr.rel (0) target = $region9
    $region8: #{transformer_vae_forward.4} parent=1 // pred_region
      _
    $region9: #{transformer_vae_forward.4} parent=1 // pred_fallthru
      _
    // Predicated region
    $region10: #{transformer_vae_forward.4} parent=1 // pred_check
      _
    $region11: #{transformer_vae_forward.4} parent=1 // pred_check_branch
      %35 = sbr.rel (0) target = $region13
    $region12: #{transformer_vae_forward.4} parent=1 // pred_region
      _
    $region13: #{transformer_vae_forward.4} parent=1 // pred_fallthru
      _
    // Predicated region
    $region14: #{transformer_vae_forward.4} parent=1 // pred_check
      _
    $region15: #{transformer_vae_forward.4} parent=1 // pred_check_branch
      %37 = sbr.rel (0) target = $region17
    $region16: #{transformer_vae_forward.4} parent=1 // pred_region
      %39 = vsyncadd [#allocation3], 0
      %s41 = sshll.u32 %s3, 4
      %s42 = int_to_ptr.hbm [resolvable:$true] %s41
      %s43 = sshll.u32 [#allocation2], 4
      %s44 = int_to_ptr.vmem [resolvable:$true] %s43
      %46 = dma.hbm_to_vmem [thread:$0]  %s42, 128, %s44, [#allocation3]
    $region17: #{transformer_vae_forward.4} parent=1 // pred_fallthru
      _
    // Predicated region
    $region18: #{transformer_vae_forward.4} parent=1 // pred_check
      _
    $region19: #{transformer_vae_forward.4} parent=1 // pred_check_branch
      %48 = sbr.rel (0) target = $region21
    $region20: #{transformer_vae_forward.4} parent=1 // pred_region
      %50 = vsyncadd [#allocation5], 0
      %s52 = sshll.u32 %s4, 4
      %s53 = int_to_ptr.hbm [resolvable:$true] %s52
      %s54 = sshll.u32 [#allocation4], 4
      %s55 = int_to_ptr.vmem [resolvable:$true] %s54
      %57 = dma.hbm_to_vmem [thread:$0]  %s53, 128, %s55, [#allocation5]
    $region21: #{transformer_vae_forward.4} parent=1 // pred_fallthru
      _
    // Predicated region
    $region22: #{transformer_vae_forward.4} parent=1 // pred_check
      _
    $region23: #{transformer_vae_forward.4} parent=1 // pred_check_branch
      %59 = sbr.rel (0) target = $region25
    $region24: #{transformer_vae_forward.4} parent=1 // pred_region
      _
    $region25: #{transformer_vae_forward.4} parent=1 // pred_fallthru
      _
    // Predicated region
    $region26: #{transformer_vae_forward.4} parent=1 // pred_check
      _
    $region27: #{transformer_vae_forward.4} parent=1 // pred_check_branch
      %61 = sbr.rel (0) target = $region29
    $region28: #{transformer_vae_forward.4} parent=1 // pred_region
      _
    $region29: #{transformer_vae_forward.4} parent=1 // pred_fallthru
      _
    // Predicated region
    $region30: #{transformer_vae_forward.4} parent=1 // pred_check
      _
    $region31: #{transformer_vae_forward.4} parent=1 // pred_check_branch
      %63 = sbr.rel (0) target = $region33
    $region32: #{transformer_vae_forward.4} parent=1 // pred_region
      _
    $region33: #{transformer_vae_forward.4} parent=1 // pred_fallthru
      _
    // Predicated region
    $region34: #{transformer_vae_forward.4} parent=1 // pred_check
      _
    $region35: #{transformer_vae_forward.4} parent=1 // pred_check_branch
      %65 = sbr.rel (0) target = $region37
    $region36: #{transformer_vae_forward.4} parent=1 // pred_region
      %67 = vsyncadd [#allocation5], 0
      %s68 = sshll.u32 %s8, 4
      %s69 = int_to_ptr.hbm [resolvable:$true] %s68
      %s70 = sshll.u32 [#allocation6], 4
      %s71 = int_to_ptr.vmem [resolvable:$true] %s70
      %76 = dma.hbm_to_vmem [thread:$0]  %s69, 32, %s71, [#allocation5], 16, 16, 1
    $region37: #{transformer_vae_forward.4} parent=1 // pred_fallthru
      _
    // Predicated region
    $region38: #{transformer_vae_forward.4} parent=1 // pred_check
      _
    $region39: #{transformer_vae_forward.4} parent=1 // pred_check_branch
      %78 = sbr.rel (0) target = $region41
    $region40: #{transformer_vae_forward.4} parent=1 // pred_region
      _
    $region41: #{transformer_vae_forward.4} parent=1 // pred_fallthru
      _
    // Predicated region
    $region42: #{transformer_vae_forward.4} parent=1 // pred_check
      _
    $region43: #{transformer_vae_forward.4} parent=1 // pred_check_branch
      %80 = sbr.rel (0) target = $region45
    $region44: #{transformer_vae_forward.4} parent=1 // pred_region
      %82 = vsyncadd [#allocation8], 0
      %s83 = sshll.u32 %s10, 4
      %s84 = int_to_ptr.hbm [resolvable:$true] %s83
      %s85 = sshll.u32 [#allocation7], 4
      %s86 = int_to_ptr.vmem [resolvable:$true] %s85
      %91 = dma.hbm_to_vmem [thread:$0]  %s84, 32, %s86, [#allocation8], 16, 16, 1
    $region45: #{transformer_vae_forward.4} parent=1 // pred_fallthru
      _
    // Predicated region
    $region46: #{transformer_vae_forward.4} parent=1 // pred_check
      _
    $region47: #{transformer_vae_forward.4} parent=1 // pred_check_branch
      %93 = sbr.rel (0) target = $region49
    $region48: #{transformer_vae_forward.4} parent=1 // pred_region
      %95 = vsyncadd [#allocation8], 0
      %s96 = sshll.u32 %s11, 4
      %s97 = int_to_ptr.hbm [resolvable:$true] %s96
      %s98 = sshll.u32 [#allocation9], 4
      %s99 = int_to_ptr.vmem [resolvable:$true] %s98
      %104 = dma.hbm_to_vmem [thread:$0]  %s97, 32, %s99, [#allocation8], 16, 16, 1
    $region49: #{transformer_vae_forward.4} parent=1 // pred_fallthru
      _
    // Predicated region
    $region50: #{transformer_vae_forward.4} parent=1 // pred_check
      _
    $region51: #{transformer_vae_forward.4} parent=1 // pred_check_branch
      %106 = sbr.rel (0) target = $region53
    $region52: #{transformer_vae_forward.4} parent=1 // pred_region
      %108 = vsyncadd [#allocation11], 0
      %s109 = sshll.u32 %s12, 4
      %s110 = int_to_ptr.hbm [resolvable:$true] %s109
      %s111 = sshll.u32 [#allocation10], 4
      %s112 = int_to_ptr.vmem [resolvable:$true] %s111
      %117 = dma.hbm_to_vmem [thread:$0]  %s110, 32, %s112, [#allocation11], 16, 16, 1
    $region53: #{transformer_vae_forward.4} parent=1 // pred_fallthru
      _
    // Predicated region
    $region54: #{transformer_vae_forward.4} parent=1 // pred_check
      _
    $region55: #{transformer_vae_forward.4} parent=1 // pred_check_branch
      %119 = sbr.rel (0) target = $region57
    $region56: #{transformer_vae_forward.4} parent=1 // pred_region
      %121 = vsyncadd [#allocation11], 0
      %s122 = sshll.u32 %s13, 4
      %s123 = int_to_ptr.hbm [resolvable:$true] %s122
      %s124 = sshll.u32 [#allocation12], 4
      %s125 = int_to_ptr.vmem [resolvable:$true] %s124
      %130 = dma.hbm_to_vmem [thread:$0]  %s123, 32, %s125, [#allocation11], 16, 16, 1
    $region57: #{transformer_vae_forward.4} parent=1 // pred_fallthru
      _
    // Predicated region
    $region58: #{transformer_vae_forward.4} parent=1 // pred_check
      _
    $region59: #{transformer_vae_forward.4} parent=1 // pred_check_branch
      %132 = sbr.rel (0) target = $region61
    $region60: #{transformer_vae_forward.4} parent=1 // pred_region
      %134 = vsyncadd [#allocation14], 0
      %s135 = sshll.u32 %s14, 4
      %s136 = int_to_ptr.hbm [resolvable:$true] %s135
      %s137 = sshll.u32 [#allocation13], 4
      %s138 = int_to_ptr.vmem [resolvable:$true] %s137
      %143 = dma.hbm_to_vmem [thread:$0]  %s136, 32, %s138, [#allocation14], 16, 16, 1
    $region61: #{transformer_vae_forward.4} parent=1 // pred_fallthru
      _
    // Predicated region
    $region62: #{transformer_vae_forward.4} parent=1 // pred_check
      _
    $region63: #{transformer_vae_forward.4} parent=1 // pred_check_branch
      %145 = sbr.rel (0) target = $region65
    $region64: #{transformer_vae_forward.4} parent=1 // pred_region
      _
    $region65: #{transformer_vae_forward.4} parent=1 // pred_fallthru
      _
    // Predicated region
    $region66: #{transformer_vae_forward.4} parent=1 // pred_check
      _
    $region67: #{transformer_vae_forward.4} parent=1 // pred_check_branch
      %147 = sbr.rel (0) target = $region69
    $region68: #{transformer_vae_forward.4} parent=1 // pred_region
      %149 = vsyncadd [#allocation14], 0
      %s150 = sshll.u32 %s16, 4
      %s151 = int_to_ptr.hbm [resolvable:$true] %s150
      %s152 = sshll.u32 [#allocation15], 4
      %s153 = int_to_ptr.vmem [resolvable:$true] %s152
      %158 = dma.hbm_to_vmem [thread:$0]  %s151, 32, %s153, [#allocation14], 16, 16, 1
    $region69: #{transformer_vae_forward.4} parent=1 // pred_fallthru
      _
    // Predicated region
    $region70: #{transformer_vae_forward.4} parent=1 // pred_check
      _
    $region71: #{transformer_vae_forward.4} parent=1 // pred_check_branch
      %160 = sbr.rel (0) target = $region73
    $region72: #{transformer_vae_forward.4} parent=1 // pred_region
      _
    $region73: #{transformer_vae_forward.4} parent=1 // pred_fallthru
      _
    // Predicated region
    $region74: #{transformer_vae_forward.4} parent=1 // pred_check
      _
    $region75: #{transformer_vae_forward.4} parent=1 // pred_check_branch
      %162 = sbr.rel (0) target = $region77
    $region76: #{transformer_vae_forward.4} parent=1 // pred_region
      %164 = vsyncadd [#allocation17], 0
      %s165 = sshll.u32 %s18, 4
      %s166 = int_to_ptr.hbm [resolvable:$true] %s165
      %s167 = sshll.u32 [#allocation16], 4
      %s168 = int_to_ptr.vmem [resolvable:$true] %s167
      %173 = dma.hbm_to_vmem [thread:$0]  %s166, 32, %s168, [#allocation17], 16, 16, 1
    $region77: #{transformer_vae_forward.4} parent=1 // pred_fallthru
      _
    // Predicated region
    $region78: #{transformer_vae_forward.4} parent=1 // pred_check
      _
    $region79: #{transformer_vae_forward.4} parent=1 // pred_check_branch
      %175 = sbr.rel (0) target = $region81
    $region80: #{transformer_vae_forward.4} parent=1 // pred_region
      %177 = dma.done [#allocation3], 128
    $region81: #{transformer_vae_forward.4} parent=1 // pred_fallthru
      _
    // Predicated region
    $region82: #{transformer_vae_forward.4} parent=1 // pred_check
      _
    $region83: #{transformer_vae_forward.4} parent=1 // pred_check_branch
      %179 = sbr.rel (0) target = $region85
    $region84: #{transformer_vae_forward.4} parent=1 // pred_region
      %181 = dma.done [#allocation5], 128
    $region85: #{transformer_vae_forward.4} parent=1 // pred_fallthru
      _
    // Predicated region
    $region86: #{transformer_vae_forward.4} parent=1 // pred_check
      _
    $region87: #{transformer_vae_forward.4} parent=1 // pred_check_branch
      %183 = sbr.rel (0) target = $region89
    $region88: #{transformer_vae_forward.4} parent=1 // pred_region
      %185 = dma.done [#allocation5], 32
    $region89: #{transformer_vae_forward.4} parent=1 // pred_fallthru
      _
    // Predicated region
    $region90: #{transformer_vae_forward.4} parent=1 // pred_check
      _
    $region91: #{transformer_vae_forward.4} parent=1 // pred_check_branch
      %187 = sbr.rel (0) target = $region93
    $region92: #{transformer_vae_forward.4} parent=1 // pred_region
      %189 = dma.done [#allocation8], 32
    $region93: #{transformer_vae_forward.4} parent=1 // pred_fallthru
      _
    // Predicated region
    $region94: #{transformer_vae_forward.4} parent=1 // pred_check
      _
    $region95: #{transformer_vae_forward.4} parent=1 // pred_check_branch
      %191 = sbr.rel (0) target = $region97
    $region96: #{transformer_vae_forward.4} parent=1 // pred_region
      %193 = dma.done [#allocation8], 32
    $region97: #{transformer_vae_forward.4} parent=1 // pred_fallthru
      _
    // Predicated region
    $region98: #{transformer_vae_forward.4} parent=1 // pred_check
      _
    $region99: #{transformer_vae_forward.4} parent=1 // pred_check_branch
      %195 = sbr.rel (0) target = $region101
    $region100: #{transformer_vae_forward.4} parent=1 // pred_region
      %197 = dma.done [#allocation11], 32
    $region101: #{transformer_vae_forward.4} parent=1 // pred_fallthru
      _
    // Predicated region
    $region102: #{transformer_vae_forward.4} parent=1 // pred_check
      _
    $region103: #{transformer_vae_forward.4} parent=1 // pred_check_branch
      %199 = sbr.rel (0) target = $region105
    $region104: #{transformer_vae_forward.4} parent=1 // pred_region
      %201 = dma.done [#allocation11], 32
    $region105: #{transformer_vae_forward.4} parent=1 // pred_fallthru
      _
    // Predicated region
    $region106: #{transformer_vae_forward.4} parent=1 // pred_check
      _
    $region107: #{transformer_vae_forward.4} parent=1 // pred_check_branch
      %203 = sbr.rel (0) target = $region109
    $region108: #{transformer_vae_forward.4} parent=1 // pred_region
      %205 = dma.done [#allocation14], 32
    $region109: #{transformer_vae_forward.4} parent=1 // pred_fallthru
      _
    // Predicated region
    $region110: #{transformer_vae_forward.4} parent=1 // pred_check
      _
    $region111: #{transformer_vae_forward.4} parent=1 // pred_check_branch
      %207 = sbr.rel (0) target = $region113
    $region112: #{transformer_vae_forward.4} parent=1 // pred_region
      %209 = dma.done [#allocation14], 32
    $region113: #{transformer_vae_forward.4} parent=1 // pred_fallthru
      _
    // Predicated region
    $region114: #{transformer_vae_forward.4} parent=1 // pred_check
      _
    $region115: #{transformer_vae_forward.4} parent=1 // pred_check_branch
      %211 = sbr.rel (0) target = $region117
    $region116: #{transformer_vae_forward.4} parent=1 // pred_region
      %213 = dma.done [#allocation17], 32
    $region117: #{transformer_vae_forward.4} parent=1 // pred_fallthru
      _
    %v214 = vld [vmem:[%s0] sm:$0x1]
    %v215 = vld [vmem:[#allocation4] sm:$0x3f]
    %vm216 = vcmask 48128
    %v218 = vsel %vm216, %v214, 0
    %vm220 = vcmask 1045504
    %v222 = vsel %vm220, %v215, 0
    %224 = vmatpush.msra.mxu0 0.0
    %225 = vmatpush.msra.mxu0 0.0
    %226 = vmatpush.msra.mxu0 0.0
    %227 = vmatpush.msra.mxu0 0.0
    %228 = vmatpush.msra.mxu0 0.0
    %229 = vmatpush.msra.mxu0 0.0
    %230 = vmatpush.msra.mxu0 0.0
    %231 = vmatpush.msra.mxu0 0.0
    %232 = vmatpush.msra.mxu0 0.0
    %233 = vmatpush.msra.mxu0 0.0
    %234 = vmatpush.msra.mxu0 0.0
    %235 = vmatpush.msra.mxu0 0.0
    %236 = vmatpush.msra.mxu0 0.0
    %237 = vmatpush.msra.mxu0 0.0
    %238 = vmatpush.msra.mxu0 0.0
    %239 = vmatpush.msra.mxu0 %v222
    %240 = vmatmul.f32.gmra.mxu0 %v218
    %v241 = vpop.f32.mrf.mxu0
    %v242 = vadd.f32 0.0, %v241
    %243 = vdwg.mxu0
    %v245 = vrot.slane %v242, 7
    %246 = vrot.lane.b32.xlu0 %v245, 96
    %v247 = vpop.permute.xlu0 %246
    %vm249 = vcmask 1040384
    %v250 = vsel %vm249, %v242, %v247
    %v251 = vld [vmem:[%s1] sm:$0xf]
    %v252 = vld [vmem:[%s5] sm:$0xff]
    %v253 = vld [vmem:[%s5 + $0x8] sm:$0xff]
    %v254 = vld [vmem:[%s6] sm:$0x1]
    %v256 = vperm.slane %v254, 0
    %vm258 = vcmask 130048
    %v260 = vsel %vm258, %v251, 0
    %262 = vmatpush.msra.mxu0 0.0
    %263 = vmatpush.msra.mxu0 0.0
    %264 = vmatpush.msra.mxu0 0.0
    %265 = vmatpush.msra.mxu0 0.0
    %266 = vmatpush.msra.mxu0 0.0
    %267 = vmatpush.msra.mxu0 0.0
    %268 = vmatpush.msra.mxu0 0.0
    %269 = vmatpush.msra.mxu0 0.0
    %270 = vmatpush.msra.mxu0 0.0
    %271 = vmatpush.msra.mxu0 0.0
    %272 = vmatpush.msra.mxu0 0.0
    %273 = vmatpush.msra.mxu0 0.0
    %274 = vmatpush.msra.mxu0 0.0
    %275 = vmatpush.msra.mxu0 0.0
    %276 = vmatpush.msra.mxu0 %v253
    %277 = vmatpush.msra.mxu0 %v252
    %278 = vmatmul.f32.gmra.mxu0 %v260
    %v279 = vpop.f32.mrf.mxu0
    %v280 = vadd.f32 %v256, %v279
    %281 = vdwg.mxu0
    %v283 = vrot.slane %v280, 6
    %vm285 = vcmask 1041408
    %v286 = vsel %vm285, %v250, %v283
    %v287 = vld [vmem:[#allocation2] sm:$0x3f]
    %v288 = vadd.f32 %v286, %v287
    %v289 = vld [vmem:[%s2] sm:$0x1]
    %vm290 = vcmp.gt.f32.partialorder %v289, 0.5
    %v291 = vsel %vm290, -1e+30, 0.0
    %v292 = vld [vmem:[%s7] sm:$0xff]
    %v293 = vld [vmem:[%s7 + $0x8] sm:$0xff]
    %v294 = vld [vmem:[%s7 + $0x10] sm:$0xff]
    %v295 = vld [vmem:[%s7 + $0x18] sm:$0xff]
    %v296 = vld [vmem:[#allocation6] sm:$0x1]
    %v297 = vld [vmem:[%s9] sm:$0xff]
    %v298 = vld [vmem:[%s9 + $0x8] sm:$0xff]
    %v299 = vld [vmem:[%s9 + $0x10] sm:$0xff]
    %v300 = vld [vmem:[%s9 + $0x18] sm:$0xff]
    %v301 = vld [vmem:[#allocation7] sm:$0x1]
    %v302 = vld [vmem:[#allocation9] sm:$0x1]
    %v303 = vld [vmem:[#allocation10] sm:$0x1]
    %v304 = vld [vmem:[#allocation12] sm:$0x1]
    %v305 = vld [vmem:[#allocation13] sm:$0x1]
    %v306 = vld [vmem:[%s15] sm:$0xff]
    %v307 = vld [vmem:[%s15 + $0x8] sm:$0xff]
    %v308 = vld [vmem:[%s15 + $0x10] sm:$0xff]
    %v309 = vld [vmem:[%s15 + $0x18] sm:$0xff]
    %v310 = vld [vmem:[#allocation15] sm:$0x1]
    %v311 = vld [vmem:[%s17] sm:$0xff]
    %v312 = vld [vmem:[%s17 + $0x8] sm:$0xff]
    %v313 = vld [vmem:[%s17 + $0x10] sm:$0xff]
    %v314 = vld [vmem:[%s17 + $0x18] sm:$0xff]
    %v315 = vld [vmem:[%s17 + $0x20] sm:$0xff]
    %v316 = vld [vmem:[%s17 + $0x28] sm:$0xff]
    %v317 = vld [vmem:[%s17 + $0x30] sm:$0xff]
    %v318 = vld [vmem:[%s17 + $0x38] sm:$0xff]
    %v319 = vld [vmem:[#allocation16] sm:$0x1]
    %v321 = vperm.slane %v296, 0
    %vm323 = vcmask 261120
    %v325 = vsel %vm323, %v288, 0
    %327 = vmatpush.msra.mxu0 0.0
    %328 = vmatpush.msra.mxu0 0.0
    %329 = vmatpush.msra.mxu0 0.0
    %330 = vmatpush.msra.mxu0 0.0
    %331 = vmatpush.msra.mxu0 0.0
    %332 = vmatpush.msra.mxu0 0.0
    %333 = vmatpush.msra.mxu0 0.0
    %334 = vmatpush.msra.mxu0 0.0
    %335 = vmatpush.msra.mxu0 0.0
    %336 = vmatpush.msra.mxu0 0.0
    %337 = vmatpush.msra.mxu0 0.0
    %338 = vmatpush.msra.mxu0 0.0
    %339 = vmatpush.msra.mxu0 %v295
    %340 = vmatpush.msra.mxu0 %v294
    %341 = vmatpush.msra.mxu0 %v293
    %342 = vmatpush.msra.mxu0 %v292
    %343 = vmatmul.f32.gmra.mxu0 %v325
    %v344 = vpop.f32.mrf.mxu0
    %v345 = vadd.f32 %v321, %v344
    %346 = vdwg.mxu0
    %348 = vrot.lane.b32.xlu0 %v345, 96
    %v349 = vpop.permute.xlu0 %348
    %v350 = vsel %vm258, %v345, 0
    %v352 = vsel %vm258, %v349, 0
    %354 = vmatpush.xpose.msra.mxu0 0.0
    %355 = vmatpush.xpose.msra.mxu0 0.0
    %356 = vmatpush.xpose.msra.mxu0 0.0
    %357 = vmatpush.xpose.msra.mxu0 0.0
    %358 = vmatpush.xpose.msra.mxu0 0.0
    %359 = vmatpush.xpose.msra.mxu0 0.0
    %360 = vmatpush.xpose.msra.mxu0 0.0
    %361 = vmatpush.xpose.msra.mxu0 0.0
    %362 = vmatpush.xpose.msra.mxu0 0.0
    %363 = vmatpush.xpose.msra.mxu0 0.0
    %364 = vmatpush.xpose.msra.mxu0 0.0
    %365 = vmatpush.xpose.msra.mxu0 0.0
    %366 = vmatpush.xpose.msra.mxu0 0.0
    %367 = vmatpush.xpose.msra.mxu0 0.0
    %368 = vmatpush.xpose.msra.mxu0 0.0
    %369 = vmatpush.xpose.msra.mxu0 %v352
    %370 = vmatmul.f32.gmra.mxu0 %v350
    %v371 = vpop.f32.mrf.mxu0
    %v372 = vadd.f32 0.0, %v371
    %373 = vdwg.mxu0
    %v374 = vmul.f32 %v372, 0.25
    %v375 = vperm.slane %v291, 0
    %v376 = vadd.f32 %v374, %v375
    %vm377 = vcmask 46080
    %v378 = vsel %vm377, %v376, -inf
    %379 = vmax.xlane.f32.xlu0 %v378
    %v380 = vpop.xlane.xlu0 %379
    %v381 = vsub.f32 %v376, %v380
    %v382 = vmul.f32 %v381, 1.442695
    %v383 = vpow.pop %v382
    %v384 = vsel %vm377, %v383, 0.0
    %385 = vadd.xlane.f32.xlu0 %v384
    %v386 = vpop.xlane.xlu0 %385
    %v387 = vrcp.pop %v386
    %v388 = vmul.f32 %v383, %v387
    %389 = vrot.lane.b32.xlu0 %v345, 64
    %v390 = vpop.permute.xlu0 %389
    %v392 = vsel %vm216, %v388, 0
    %v394 = vsel %vm220, %v390, 0
    %396 = vmatpush.msra.mxu0 0.0
    %397 = vmatpush.msra.mxu0 0.0
    %398 = vmatpush.msra.mxu0 0.0
    %399 = vmatpush.msra.mxu0 0.0
    %400 = vmatpush.msra.mxu0 0.0
    %401 = vmatpush.msra.mxu0 0.0
    %402 = vmatpush.msra.mxu0 0.0
    %403 = vmatpush.msra.mxu0 0.0
    %404 = vmatpush.msra.mxu0 0.0
    %405 = vmatpush.msra.mxu0 0.0
    %406 = vmatpush.msra.mxu0 0.0
    %407 = vmatpush.msra.mxu0 0.0
    %408 = vmatpush.msra.mxu0 0.0
    %409 = vmatpush.msra.mxu0 0.0
    %410 = vmatpush.msra.mxu0 0.0
    %411 = vmatpush.msra.mxu0 %v394
    %412 = vmatmul.f32.gmra.mxu0 %v392
    %v413 = vpop.f32.mrf.mxu0
    %v414 = vadd.f32 0.0, %v413
    %415 = vdwg.mxu0
    %416 = vrot.lane.b32.xlu0 %v345, 112
    %v417 = vpop.permute.xlu0 %416
    %418 = vrot.lane.b32.xlu0 %v345, 80
    %v419 = vpop.permute.xlu0 %418
    %v420 = vsel %vm258, %v417, 0
    %v422 = vsel %vm258, %v419, 0
    %424 = vmatpush.xpose.msra.mxu0 0.0
    %425 = vmatpush.xpose.msra.mxu0 0.0
    %426 = vmatpush.xpose.msra.mxu0 0.0
    %427 = vmatpush.xpose.msra.mxu0 0.0
    %428 = vmatpush.xpose.msra.mxu0 0.0
    %429 = vmatpush.xpose.msra.mxu0 0.0
    %430 = vmatpush.xpose.msra.mxu0 0.0
    %431 = vmatpush.xpose.msra.mxu0 0.0
    %432 = vmatpush.xpose.msra.mxu0 0.0
    %433 = vmatpush.xpose.msra.mxu0 0.0
    %434 = vmatpush.xpose.msra.mxu0 0.0
    %435 = vmatpush.xpose.msra.mxu0 0.0
    %436 = vmatpush.xpose.msra.mxu0 0.0
    %437 = vmatpush.xpose.msra.mxu0 0.0
    %438 = vmatpush.xpose.msra.mxu0 0.0
    %439 = vmatpush.xpose.msra.mxu0 %v422
    %440 = vmatmul.f32.gmra.mxu0 %v420
    %v441 = vpop.f32.mrf.mxu0
    %v442 = vadd.f32 0.0, %v441
    %443 = vdwg.mxu0
    %v444 = vmul.f32 %v442, 0.25
    %v445 = vadd.f32 %v444, %v375
    %v446 = vsel %vm377, %v445, -inf
    %447 = vmax.xlane.f32.xlu0 %v446
    %v448 = vpop.xlane.xlu0 %447
    %v449 = vsub.f32 %v445, %v448
    %v450 = vmul.f32 %v449, 1.442695
    %v451 = vpow.pop %v450
    %v452 = vsel %vm377, %v451, 0.0
    %453 = vadd.xlane.f32.xlu0 %v452
    %v454 = vpop.xlane.xlu0 %453
    %v455 = vrcp.pop %v454
    %v456 = vmul.f32 %v451, %v455
    %457 = vrot.lane.b32.xlu0 %v345, 48
    %v458 = vpop.permute.xlu0 %457
    %v460 = vsel %vm216, %v456, 0
    %v462 = vsel %vm220, %v458, 0
    %464 = vmatpush.msra.mxu0 0.0
    %465 = vmatpush.msra.mxu0 0.0
    %466 = vmatpush.msra.mxu0 0.0
    %467 = vmatpush.msra.mxu0 0.0
    %468 = vmatpush.msra.mxu0 0.0
    %469 = vmatpush.msra.mxu0 0.0
    %470 = vmatpush.msra.mxu0 0.0
    %471 = vmatpush.msra.mxu0 0.0
    %472 = vmatpush.msra.mxu0 0.0
    %473 = vmatpush.msra.mxu0 0.0
    %474 = vmatpush.msra.mxu0 0.0
    %475 = vmatpush.msra.mxu0 0.0
    %476 = vmatpush.msra.mxu0 0.0
    %477 = vmatpush.msra.mxu0 0.0
    %478 = vmatpush.msra.mxu0 0.0
    %479 = vmatpush.msra.mxu0 %v462
    %480 = vmatmul.f32.gmra.mxu0 %v460
    %v481 = vpop.f32.mrf.mxu0
    %v482 = vadd.f32 0.0, %v481
    %483 = vdwg.mxu0
    %485 = vrot.lane.b32.xlu0 %v482, 16
    %v486 = vpop.permute.xlu0 %485
    %v488 = vsel %vm258, %v414, %v486
    %v490 = vperm.slane %v301, 0
    %v493 = vsel %vm323, %v488, 0
    %495 = vmatpush.msra.mxu0 0.0
    %496 = vmatpush.msra.mxu0 0.0
    %497 = vmatpush.msra.mxu0 0.0
    %498 = vmatpush.msra.mxu0 0.0
    %499 = vmatpush.msra.mxu0 0.0
    %500 = vmatpush.msra.mxu0 0.0
    %501 = vmatpush.msra.mxu0 0.0
    %502 = vmatpush.msra.mxu0 0.0
    %503 = vmatpush.msra.mxu0 0.0
    %504 = vmatpush.msra.mxu0 0.0
    %505 = vmatpush.msra.mxu0 0.0
    %506 = vmatpush.msra.mxu0 0.0
    %507 = vmatpush.msra.mxu0 %v300
    %508 = vmatpush.msra.mxu0 %v299
    %509 = vmatpush.msra.mxu0 %v298
    %510 = vmatpush.msra.mxu0 %v297
    %511 = vmatmul.f32.gmra.mxu0 %v493
    %v512 = vpop.f32.mrf.mxu0
    %v513 = vadd.f32 %v490, %v512
    %514 = vdwg.mxu0
    %v515 = vadd.f32 %v288, %v513
    %vm516 = vcmask 259072
    %v517 = vsel %vm516, %v515, 0.0
    %518 = vadd.xlane.f32.xlu0 %v517
    %v519 = vpop.xlane.xlu0 %518
    %v520 = vrcp.pop 32.0
    %v521 = vmul.f32 32.0, %v520
    %v522 = vsub.f32 1.0, %v521
    %v523 = vmul.f32 %v520, %v522
    %v524 = vadd.f32 %v520, %v523
    %vm525 = vweird.f32 %v520
    %v526 = vsel %vm525, %v520, %v524
    %v527 = vmul.f32 %v519, %v526
    %v528 = vsub.f32 %v515, %v527
    %v529 = vmul.f32 %v528, %v528
    %v530 = vsel %vm516, %v529, 0.0
    %531 = vadd.xlane.f32.xlu0 %v530
    %v532 = vpop.xlane.xlu0 %531
    %v533 = vmul.f32 %v532, %v526
    %v534 = vadd.f32 %v533, 1e-05
    %v535 = vrsqrt.pop %v534
    %v536 = vmul.f32 %v535, %v534
    %v537 = vmul.f32 %v536, %v535
    %v538 = vmul.f32 0.5, %v537
    %v539 = vsub.f32 1.5, %v538
    %v540 = vmul.f32 %v535, %v539
    %vm541 = vweird.f32 %v534
    %vm542 = vweird.f32 %v535
    %vm543 = vmor %vm541, %vm542
    %v544 = vsel %vm543, %v535, %v540
    %v545 = vmul.f32 %v528, %v544
    %v547 = vperm.slane %v302, 0
    %v549 = vmul.f32 %v545, %v547
    %v551 = vperm.slane %v303, 0
    %v553 = vadd.f32 %v549, %v551
    %v555 = vperm.slane %v310, 0
    %v558 = vsel %vm323, %v553, 0
    %560 = vmatpush.msra.mxu0 0.0
    %561 = vmatpush.msra.mxu0 0.0
    %562 = vmatpush.msra.mxu0 0.0
    %563 = vmatpush.msra.mxu0 0.0
    %564 = vmatpush.msra.mxu0 0.0
    %565 = vmatpush.msra.mxu0 0.0
    %566 = vmatpush.msra.mxu0 0.0
    %567 = vmatpush.msra.mxu0 0.0
    %568 = vmatpush.msra.mxu0 0.0
    %569 = vmatpush.msra.mxu0 0.0
    %570 = vmatpush.msra.mxu0 0.0
    %571 = vmatpush.msra.mxu0 0.0
    %572 = vmatpush.msra.mxu0 %v309
    %573 = vmatpush.msra.mxu0 %v308
    %574 = vmatpush.msra.mxu0 %v307
    %575 = vmatpush.msra.mxu0 %v306
    %576 = vmatmul.f32.gmra.mxu0 %v558
    %v577 = vpop.f32.mrf.mxu0
    %v578 = vadd.f32 %v555, %v577
    %579 = vdwg.mxu0
    %v580 = vmul.f32 %v578, %v578
    %v581 = vmul.f32 %v578, %v580
    %v582 = vmul.f32 %v581, 0.044715
    %v583 = vadd.f32 %v578, %v582
    %v584 = vmul.f32 %v583, 0.7978846
    %v585 = vtanh.pop %v584
    %v586 = vadd.f32 %v585, 1.0
    %v587 = vmul.f32 %v586, 0.5
    %v588 = vmul.f32 %v578, %v587
    %v590 = vperm.slane %v319, 0
    %vm592 = vcmask 523264
    %v594 = vsel %vm592, %v588, 0
    %596 = vmatpush.msra.mxu0 0.0
    %597 = vmatpush.msra.mxu0 0.0
    %598 = vmatpush.msra.mxu0 0.0
    %599 = vmatpush.msra.mxu0 0.0
    %600 = vmatpush.msra.mxu0 0.0
    %601 = vmatpush.msra.mxu0 0.0
    %602 = vmatpush.msra.mxu0 0.0
    %603 = vmatpush.msra.mxu0 0.0
    %604 = vmatpush.msra.mxu0 %v318
    %605 = vmatpush.msra.mxu0 %v317
    %606 = vmatpush.msra.mxu0 %v316
    %607 = vmatpush.msra.mxu0 %v315
    %608 = vmatpush.msra.mxu0 %v314
    %609 = vmatpush.msra.mxu0 %v313
    %610 = vmatpush.msra.mxu0 %v312
    %611 = vmatpush.msra.mxu0 %v311
    %612 = vmatmul.f32.gmra.mxu0 %v594
    %v613 = vpop.f32.mrf.mxu0
    %v614 = vadd.f32 %v590, %v613
    %615 = vdwg.mxu0
    %v616 = vadd.f32 %v553, %v614
    %v617 = vsel %vm516, %v616, 0.0
    %618 = vadd.xlane.f32.xlu0 %v617
    %v619 = vpop.xlane.xlu0 %618
    %v620 = vmul.f32 %v619, %v526
    %v621 = vsub.f32 %v616, %v620
    %v622 = vmul.f32 %v621, %v621
    %v623 = vsel %vm516, %v622, 0.0
    %624 = vadd.xlane.f32.xlu0 %v623
    %v625 = vpop.xlane.xlu0 %624
    %v626 = vmul.f32 %v625, %v526
    %v627 = vadd.f32 %v626, 1e-05
    %v628 = vrsqrt.pop %v627
    %v629 = vmul.f32 %v628, %v627
    %v630 = vmul.f32 %v629, %v628
    %v631 = vmul.f32 0.5, %v630
    %v632 = vsub.f32 1.5, %v631
    %v633 = vmul.f32 %v628, %v632
    %vm634 = vweird.f32 %v627
    %vm635 = vweird.f32 %v628
    %vm636 = vmor %vm634, %vm635
    %v637 = vsel %vm636, %v628, %v633
    %v638 = vmul.f32 %v621, %v637
    %v640 = vperm.slane %v304, 0
    %v642 = vmul.f32 %v638, %v640
    %v644 = vperm.slane %v305, 0
    %v646 = vadd.f32 %v642, %v644
    %s647 = scalar_lea.vmem %s7, 32
    %v648 = vld [vmem:[%s647] sm:$0xff]
    %v649 = vld [vmem:[%s647 + $0x8] sm:$0xff]
    %v650 = vld [vmem:[%s647 + $0x10] sm:$0xff]
    %v651 = vld [vmem:[%s647 + $0x18] sm:$0xff]
    %s652 = scalar_lea.vmem [#allocation6], 1
    %v653 = vld [vmem:[%s652] sm:$0x1]
    %s654 = scalar_lea.vmem %s9, 32
    %v655 = vld [vmem:[%s654] sm:$0xff]
    %v656 = vld [vmem:[%s654 + $0x8] sm:$0xff]
    %v657 = vld [vmem:[%s654 + $0x10] sm:$0xff]
    %v658 = vld [vmem:[%s654 + $0x18] sm:$0xff]
    %s659 = scalar_lea.vmem [#allocation7], 1
    %v660 = vld [vmem:[%s659] sm:$0x1]
    %s661 = scalar_lea.vmem [#allocation9], 1
    %v662 = vld [vmem:[%s661] sm:$0x1]
    %s663 = scalar_lea.vmem [#allocation10], 1
    %v664 = vld [vmem:[%s663] sm:$0x1]
    %s665 = scalar_lea.vmem [#allocation12], 1
    %v666 = vld [vmem:[%s665] sm:$0x1]
    %s667 = scalar_lea.vmem [#allocation13], 1
    %v668 = vld [vmem:[%s667] sm:$0x1]
    %s669 = scalar_lea.vmem %s15, 32
    %v670 = vld [vmem:[%s669] sm:$0xff]
    %v671 = vld [vmem:[%s669 + $0x8] sm:$0xff]
    %v672 = vld [vmem:[%s669 + $0x10] sm:$0xff]
    %v673 = vld [vmem:[%s669 + $0x18] sm:$0xff]
    %s674 = scalar_lea.vmem [#allocation15], 1
    %v675 = vld [vmem:[%s674] sm:$0x1]
    %s676 = scalar_lea.vmem %s17, 64
    %v677 = vld [vmem:[%s676] sm:$0xff]
    %v678 = vld [vmem:[%s676 + $0x8] sm:$0xff]
    %v679 = vld [vmem:[%s676 + $0x10] sm:$0xff]
    %v680 = vld [vmem:[%s676 + $0x18] sm:$0xff]
    %v681 = vld [vmem:[%s676 + $0x20] sm:$0xff]
    %v682 = vld [vmem:[%s676 + $0x28] sm:$0xff]
    %v683 = vld [vmem:[%s676 + $0x30] sm:$0xff]
    %v684 = vld [vmem:[%s676 + $0x38] sm:$0xff]
    %s685 = scalar_lea.vmem [#allocation16], 1
    %v686 = vld [vmem:[%s685] sm:$0x1]
    %v688 = vperm.slane %v653, 0
    %v691 = vsel %vm323, %v646, 0
    %693 = vmatpush.msra.mxu0 0.0
    %694 = vmatpush.msra.mxu0 0.0
    %695 = vmatpush.msra.mxu0 0.0
    %696 = vmatpush.msra.mxu0 0.0
    %697 = vmatpush.msra.mxu0 0.0
    %698 = vmatpush.msra.mxu0 0.0
    %699 = vmatpush.msra.mxu0 0.0
    %700 = vmatpush.msra.mxu0 0.0
    %701 = vmatpush.msra.mxu0 0.0
    %702 = vmatpush.msra.mxu0 0.0
    %703 = vmatpush.msra.mxu0 0.0
    %704 = vmatpush.msra.mxu0 0.0
    %705 = vmatpush.msra.mxu0 %v651
    %706 = vmatpush.msra.mxu0 %v650
    %707 = vmatpush.msra.mxu0 %v649
    %708 = vmatpush.msra.mxu0 %v648
    %709 = vmatmul.f32.gmra.mxu0 %v691
    %v710 = vpop.f32.mrf.mxu0
    %v711 = vadd.f32 %v688, %v710
    %712 = vdwg.mxu0
    %714 = vrot.lane.b32.xlu0 %v711, 96
    %v715 = vpop.permute.xlu0 %714
    %v716 = vsel %vm258, %v711, 0
    %v718 = vsel %vm258, %v715, 0
    %720 = vmatpush.xpose.msra.mxu0 0.0
    %721 = vmatpush.xpose.msra.mxu0 0.0
    %722 = vmatpush.xpose.msra.mxu0 0.0
    %723 = vmatpush.xpose.msra.mxu0 0.0
    %724 = vmatpush.xpose.msra.mxu0 0.0
    %725 = vmatpush.xpose.msra.mxu0 0.0
    %726 = vmatpush.xpose.msra.mxu0 0.0
    %727 = vmatpush.xpose.msra.mxu0 0.0
    %728 = vmatpush.xpose.msra.mxu0 0.0
    %729 = vmatpush.xpose.msra.mxu0 0.0
    %730 = vmatpush.xpose.msra.mxu0 0.0
    %731 = vmatpush.xpose.msra.mxu0 0.0
    %732 = vmatpush.xpose.msra.mxu0 0.0
    %733 = vmatpush.xpose.msra.mxu0 0.0
    %734 = vmatpush.xpose.msra.mxu0 0.0
    %735 = vmatpush.xpose.msra.mxu0 %v718
    %736 = vmatmul.f32.gmra.mxu0 %v716
    %v737 = vpop.f32.mrf.mxu0
    %v738 = vadd.f32 0.0, %v737
    %739 = vdwg.mxu0
    %v740 = vmul.f32 %v738, 0.25
    %v741 = vadd.f32 %v740, %v375
    %v742 = vsel %vm377, %v741, -inf
    %743 = vmax.xlane.f32.xlu0 %v742
    %v744 = vpop.xlane.xlu0 %743
    %v745 = vsub.f32 %v741, %v744
    %v746 = vmul.f32 %v745, 1.442695
    %v747 = vpow.pop %v746
    %v748 = vsel %vm377, %v747, 0.0
    %749 = vadd.xlane.f32.xlu0 %v748
    %v750 = vpop.xlane.xlu0 %749
    %v751 = vrcp.pop %v750
    %v752 = vmul.f32 %v747, %v751
    %753 = vrot.lane.b32.xlu0 %v711, 64
    %v754 = vpop.permute.xlu0 %753
    %v756 = vsel %vm216, %v752, 0
    %v758 = vsel %vm220, %v754, 0
    %760 = vmatpush.msra.mxu0 0.0
    %761 = vmatpush.msra.mxu0 0.0
    %762 = vmatpush.msra.mxu0 0.0
    %763 = vmatpush.msra.mxu0 0.0
    %764 = vmatpush.msra.mxu0 0.0
    %765 = vmatpush.msra.mxu0 0.0
    %766 = vmatpush.msra.mxu0 0.0
    %767 = vmatpush.msra.mxu0 0.0
    %768 = vmatpush.msra.mxu0 0.0
    %769 = vmatpush.msra.mxu0 0.0
    %770 = vmatpush.msra.mxu0 0.0
    %771 = vmatpush.msra.mxu0 0.0
    %772 = vmatpush.msra.mxu0 0.0
    %773 = vmatpush.msra.mxu0 0.0
    %774 = vmatpush.msra.mxu0 0.0
    %775 = vmatpush.msra.mxu0 %v758
    %776 = vmatmul.f32.gmra.mxu0 %v756
    %v777 = vpop.f32.mrf.mxu0
    %v778 = vadd.f32 0.0, %v777
    %779 = vdwg.mxu0
    %780 = vrot.lane.b32.xlu0 %v711, 112
    %v781 = vpop.permute.xlu0 %780
    %782 = vrot.lane.b32.xlu0 %v711, 80
    %v783 = vpop.permute.xlu0 %782
    %v784 = vsel %vm258, %v781, 0
    %v786 = vsel %vm258, %v783, 0
    %788 = vmatpush.xpose.msra.mxu0 0.0
    %789 = vmatpush.xpose.msra.mxu0 0.0
    %790 = vmatpush.xpose.msra.mxu0 0.0
    %791 = vmatpush.xpose.msra.mxu0 0.0
    %792 = vmatpush.xpose.msra.mxu0 0.0
    %793 = vmatpush.xpose.msra.mxu0 0.0
    %794 = vmatpush.xpose.msra.mxu0 0.0
    %795 = vmatpush.xpose.msra.mxu0 0.0
    %796 = vmatpush.xpose.msra.mxu0 0.0
    %797 = vmatpush.xpose.msra.mxu0 0.0
    %798 = vmatpush.xpose.msra.mxu0 0.0
    %799 = vmatpush.xpose.msra.mxu0 0.0
    %800 = vmatpush.xpose.msra.mxu0 0.0
    %801 = vmatpush.xpose.msra.mxu0 0.0
    %802 = vmatpush.xpose.msra.mxu0 0.0
    %803 = vmatpush.xpose.msra.mxu0 %v786
    %804 = vmatmul.f32.gmra.mxu0 %v784
    %v805 = vpop.f32.mrf.mxu0
    %v806 = vadd.f32 0.0, %v805
    %807 = vdwg.mxu0
    %v808 = vmul.f32 %v806, 0.25
    %v809 = vadd.f32 %v808, %v375
    %v810 = vsel %vm377, %v809, -inf
    %811 = vmax.xlane.f32.xlu0 %v810
    %v812 = vpop.xlane.xlu0 %811
    %v813 = vsub.f32 %v809, %v812
    %v814 = vmul.f32 %v813, 1.442695
    %v815 = vpow.pop %v814
    %v816 = vsel %vm377, %v815, 0.0
    %817 = vadd.xlane.f32.xlu0 %v816
    %v818 = vpop.xlane.xlu0 %817
    %v819 = vrcp.pop %v818
    %v820 = vmul.f32 %v815, %v819
    %821 = vrot.lane.b32.xlu0 %v711, 48
    %v822 = vpop.permute.xlu0 %821
    %v824 = vsel %vm216, %v820, 0
    %v826 = vsel %vm220, %v822, 0
    %828 = vmatpush.msra.mxu0 0.0
    %829 = vmatpush.msra.mxu0 0.0
    %830 = vmatpush.msra.mxu0 0.0
    %831 = vmatpush.msra.mxu0 0.0
    %832 = vmatpush.msra.mxu0 0.0
    %833 = vmatpush.msra.mxu0 0.0
    %834 = vmatpush.msra.mxu0 0.0
    %835 = vmatpush.msra.mxu0 0.0
    %836 = vmatpush.msra.mxu0 0.0
    %837 = vmatpush.msra.mxu0 0.0
    %838 = vmatpush.msra.mxu0 0.0
    %839 = vmatpush.msra.mxu0 0.0
    %840 = vmatpush.msra.mxu0 0.0
    %841 = vmatpush.msra.mxu0 0.0
    %842 = vmatpush.msra.mxu0 0.0
    %843 = vmatpush.msra.mxu0 %v826
    %844 = vmatmul.f32.gmra.mxu0 %v824
    %v845 = vpop.f32.mrf.mxu0
    %v846 = vadd.f32 0.0, %v845
    %847 = vdwg.mxu0
    %849 = vrot.lane.b32.xlu0 %v846, 16
    %v850 = vpop.permute.xlu0 %849
    %v852 = vsel %vm258, %v778, %v850
    %v854 = vperm.slane %v660, 0
    %v857 = vsel %vm323, %v852, 0
    %859 = vmatpush.msra.mxu0 0.0
    %860 = vmatpush.msra.mxu0 0.0
    %861 = vmatpush.msra.mxu0 0.0
    %862 = vmatpush.msra.mxu0 0.0
    %863 = vmatpush.msra.mxu0 0.0
    %864 = vmatpush.msra.mxu0 0.0
    %865 = vmatpush.msra.mxu0 0.0
    %866 = vmatpush.msra.mxu0 0.0
    %867 = vmatpush.msra.mxu0 0.0
    %868 = vmatpush.msra.mxu0 0.0
    %869 = vmatpush.msra.mxu0 0.0
    %870 = vmatpush.msra.mxu0 0.0
    %871 = vmatpush.msra.mxu0 %v658
    %872 = vmatpush.msra.mxu0 %v657
    %873 = vmatpush.msra.mxu0 %v656
    %874 = vmatpush.msra.mxu0 %v655
    %875 = vmatmul.f32.gmra.mxu0 %v857
    %v876 = vpop.f32.mrf.mxu0
    %v877 = vadd.f32 %v854, %v876
    %878 = vdwg.mxu0
    %v879 = vadd.f32 %v646, %v877
    %v880 = vsel %vm516, %v879, 0.0
    %881 = vadd.xlane.f32.xlu0 %v880
    %v882 = vpop.xlane.xlu0 %881
    %v883 = vmul.f32 %v882, %v526
    %v884 = vsub.f32 %v879, %v883
    %v885 = vmul.f32 %v884, %v884
    %v886 = vsel %vm516, %v885, 0.0
    %887 = vadd.xlane.f32.xlu0 %v886
    %v888 = vpop.xlane.xlu0 %887
    %v889 = vmul.f32 %v888, %v526
    %v890 = vadd.f32 %v889, 1e-05
    %v891 = vrsqrt.pop %v890
    %v892 = vmul.f32 %v891, %v890
    %v893 = vmul.f32 %v892, %v891
    %v894 = vmul.f32 0.5, %v893
    %v895 = vsub.f32 1.5, %v894
    %v896 = vmul.f32 %v891, %v895
    %vm897 = vweird.f32 %v890
    %vm898 = vweird.f32 %v891
    %vm899 = vmor %vm897, %vm898
    %v900 = vsel %vm899, %v891, %v896
    %v901 = vmul.f32 %v884, %v900
    %v903 = vperm.slane %v662, 0
    %v905 = vmul.f32 %v901, %v903
    %v907 = vperm.slane %v664, 0
    %v909 = vadd.f32 %v905, %v907
    %v911 = vperm.slane %v675, 0
    %v914 = vsel %vm323, %v909, 0
    %916 = vmatpush.msra.mxu0 0.0
    %917 = vmatpush.msra.mxu0 0.0
    %918 = vmatpush.msra.mxu0 0.0
    %919 = vmatpush.msra.mxu0 0.0
    %920 = vmatpush.msra.mxu0 0.0
    %921 = vmatpush.msra.mxu0 0.0
    %922 = vmatpush.msra.mxu0 0.0
    %923 = vmatpush.msra.mxu0 0.0
    %924 = vmatpush.msra.mxu0 0.0
    %925 = vmatpush.msra.mxu0 0.0
    %926 = vmatpush.msra.mxu0 0.0
    %927 = vmatpush.msra.mxu0 0.0
    %928 = vmatpush.msra.mxu0 %v673
    %929 = vmatpush.msra.mxu0 %v672
    %930 = vmatpush.msra.mxu0 %v671
    %931 = vmatpush.msra.mxu0 %v670
    %932 = vmatmul.f32.gmra.mxu0 %v914
    %v933 = vpop.f32.mrf.mxu0
    %v934 = vadd.f32 %v911, %v933
    %935 = vdwg.mxu0
    %v936 = vmul.f32 %v934, %v934
    %v937 = vmul.f32 %v934, %v936
    %v938 = vmul.f32 %v937, 0.044715
    %v939 = vadd.f32 %v934, %v938
    %v940 = vmul.f32 %v939, 0.7978846
    %v941 = vtanh.pop %v940
    %v942 = vadd.f32 %v941, 1.0
    %v943 = vmul.f32 %v942, 0.5
    %v944 = vmul.f32 %v934, %v943
    %v946 = vperm.slane %v686, 0
    %v949 = vsel %vm592, %v944, 0
    %951 = vmatpush.msra.mxu0 0.0
    %952 = vmatpush.msra.mxu0 0.0
    %953 = vmatpush.msra.mxu0 0.0
    %954 = vmatpush.msra.mxu0 0.0
    %955 = vmatpush.msra.mxu0 0.0
    %956 = vmatpush.msra.mxu0 0.0
    %957 = vmatpush.msra.mxu0 0.0
    %958 = vmatpush.msra.mxu0 0.0
    %959 = vmatpush.msra.mxu0 %v684
    %960 = vmatpush.msra.mxu0 %v683
    %961 = vmatpush.msra.mxu0 %v682
    %962 = vmatpush.msra.mxu0 %v681
    %963 = vmatpush.msra.mxu0 %v680
    %964 = vmatpush.msra.mxu0 %v679
    %965 = vmatpush.msra.mxu0 %v678
    %966 = vmatpush.msra.mxu0 %v677
    %967 = vmatmul.f32.gmra.mxu0 %v949
    %v968 = vpop.f32.mrf.mxu0
    %v969 = vadd.f32 %v946, %v968
    %970 = vdwg.mxu0
    %v971 = vadd.f32 %v909, %v969
    %v972 = vsel %vm516, %v971, 0.0
    %973 = vadd.xlane.f32.xlu0 %v972
    %v974 = vpop.xlane.xlu0 %973
    %v975 = vmul.f32 %v974, %v526
    %v976 = vsub.f32 %v971, %v975
    %v977 = vmul.f32 %v976, %v976
    %v978 = vsel %vm516, %v977, 0.0
    %979 = vadd.xlane.f32.xlu0 %v978
    %v980 = vpop.xlane.xlu0 %979
    %v981 = vmul.f32 %v980, %v526
    %v982 = vadd.f32 %v981, 1e-05
    %v983 = vrsqrt.pop %v982
    %v984 = vmul.f32 %v983, %v982
    %v985 = vmul.f32 %v984, %v983
    %v986 = vmul.f32 0.5, %v985
    %v987 = vsub.f32 1.5, %v986
    %v988 = vmul.f32 %v983, %v987
    %vm989 = vweird.f32 %v982
    %vm990 = vweird.f32 %v983
    %vm991 = vmor %vm989, %vm990
    %v992 = vsel %vm991, %v983, %v988
    %v993 = vmul.f32 %v976, %v992
    %v995 = vperm.slane %v666, 0
    %v997 = vmul.f32 %v993, %v995
    %v999 = vperm.slane %v668, 0
    %v1001 = vadd.f32 %v997, %v999
    %vm1002 = vcmask 254976
    %1003 = vst.msk [vmem:[%s19] sm:$0x3] %vm1002, %v1001
    %v1004 = vld [vmem:[%s0 + $0x1] sm:$0x1]
    %v1005 = vld [vmem:[#allocation4] sm:$0x3f]
    %v1007 = vsel %vm216, %v1004, 0
    %v1010 = vsel %vm220, %v1005, 0
    %1012 = vmatpush.msra.mxu0 0.0
    %1013 = vmatpush.msra.mxu0 0.0
    %1014 = vmatpush.msra.mxu0 0.0
    %1015 = vmatpush.msra.mxu0 0.0
    %1016 = vmatpush.msra.mxu0 0.0
    %1017 = vmatpush.msra.mxu0 0.0
    %1018 = vmatpush.msra.mxu0 0.0
    %1019 = vmatpush.msra.mxu0 0.0
    %1020 = vmatpush.msra.mxu0 0.0
    %1021 = vmatpush.msra.mxu0 0.0
    %1022 = vmatpush.msra.mxu0 0.0
    %1023 = vmatpush.msra.mxu0 0.0
    %1024 = vmatpush.msra.mxu0 0.0
    %1025 = vmatpush.msra.mxu0 0.0
    %1026 = vmatpush.msra.mxu0 0.0
    %1027 = vmatpush.msra.mxu0 %v1010
    %1028 = vmatmul.f32.gmra.mxu0 %v1007
    %v1029 = vpop.f32.mrf.mxu0
    %v1030 = vadd.f32 0.0, %v1029
    %1031 = vdwg.mxu0
    %v1033 = vrot.slane %v1030, 7
    %1034 = vrot.lane.b32.xlu0 %v1033, 96
    %v1035 = vpop.permute.xlu0 %1034
    %v1037 = vsel %vm249, %v1030, %v1035
    %s1038 = scalar_lea.vmem %s1, 4
    %v1039 = vld [vmem:[%s1038] sm:$0xf]
    %v1040 = vld [vmem:[%s5] sm:$0xff]
    %v1041 = vld [vmem:[%s5 + $0x8] sm:$0xff]
    %v1042 = vld [vmem:[%s6] sm:$0x1]
    %v1044 = vperm.slane %v1042, 0
    %v1047 = vsel %vm258, %v1039, 0
    %1049 = vmatpush.msra.mxu0 0.0
    %1050 = vmatpush.msra.mxu0 0.0
    %1051 = vmatpush.msra.mxu0 0.0
    %1052 = vmatpush.msra.mxu0 0.0
    %1053 = vmatpush.msra.mxu0 0.0
    %1054 = vmatpush.msra.mxu0 0.0
    %1055 = vmatpush.msra.mxu0 0.0
    %1056 = vmatpush.msra.mxu0 0.0
    %1057 = vmatpush.msra.mxu0 0.0
    %1058 = vmatpush.msra.mxu0 0.0
    %1059 = vmatpush.msra.mxu0 0.0
    %1060 = vmatpush.msra.mxu0 0.0
    %1061 = vmatpush.msra.mxu0 0.0
    %1062 = vmatpush.msra.mxu0 0.0
    %1063 = vmatpush.msra.mxu0 %v1041
    %1064 = vmatpush.msra.mxu0 %v1040
    %1065 = vmatmul.f32.gmra.mxu0 %v1047
    %v1066 = vpop.f32.mrf.mxu0
    %v1067 = vadd.f32 %v1044, %v1066
    %1068 = vdwg.mxu0
    %v1070 = vrot.slane %v1067, 6
    %v1072 = vsel %vm285, %v1037, %v1070
    %v1073 = vld [vmem:[#allocation2] sm:$0x3f]
    %v1074 = vadd.f32 %v1072, %v1073
    %v1075 = vld [vmem:[%s2 + $0x1] sm:$0x1]
    %vm1076 = vcmp.gt.f32.partialorder %v1075, 0.5
    %v1077 = vsel %vm1076, -1e+30, 0.0
    %v1078 = vld [vmem:[%s7] sm:$0xff]
    %v1079 = vld [vmem:[%s7 + $0x8] sm:$0xff]
    %v1080 = vld [vmem:[%s7 + $0x10] sm:$0xff]
    %v1081 = vld [vmem:[%s7 + $0x18] sm:$0xff]
    %v1082 = vld [vmem:[#allocation6] sm:$0x1]
    %v1083 = vld [vmem:[%s9] sm:$0xff]
    %v1084 = vld [vmem:[%s9 + $0x8] sm:$0xff]
    %v1085 = vld [vmem:[%s9 + $0x10] sm:$0xff]
    %v1086 = vld [vmem:[%s9 + $0x18] sm:$0xff]
    %v1087 = vld [vmem:[#allocation7] sm:$0x1]
    %v1088 = vld [vmem:[#allocation9] sm:$0x1]
    %v1089 = vld [vmem:[#allocation10] sm:$0x1]
    %v1090 = vld [vmem:[#allocation12] sm:$0x1]
    %v1091 = vld [vmem:[#allocation13] sm:$0x1]
    %v1092 = vld [vmem:[%s15] sm:$0xff]
    %v1093 = vld [vmem:[%s15 + $0x8] sm:$0xff]
    %v1094 = vld [vmem:[%s15 + $0x10] sm:$0xff]
    %v1095 = vld [vmem:[%s15 + $0x18] sm:$0xff]
    %v1096 = vld [vmem:[#allocation15] sm:$0x1]
    %v1097 = vld [vmem:[%s17] sm:$0xff]
    %v1098 = vld [vmem:[%s17 + $0x8] sm:$0xff]
    %v1099 = vld [vmem:[%s17 + $0x10] sm:$0xff]
    %v1100 = vld [vmem:[%s17 + $0x18] sm:$0xff]
    %v1101 = vld [vmem:[%s17 + $0x20] sm:$0xff]
    %v1102 = vld [vmem:[%s17 + $0x28] sm:$0xff]
    %v1103 = vld [vmem:[%s17 + $0x30] sm:$0xff]
    %v1104 = vld [vmem:[%s17 + $0x38] sm:$0xff]
    %v1105 = vld [vmem:[#allocation16] sm:$0x1]
    %v1107 = vperm.slane %v1082, 0
    %v1110 = vsel %vm323, %v1074, 0
    %1112 = vmatpush.msra.mxu0 0.0
    %1113 = vmatpush.msra.mxu0 0.0
    %1114 = vmatpush.msra.mxu0 0.0
    %1115 = vmatpush.msra.mxu0 0.0
    %1116 = vmatpush.msra.mxu0 0.0
    %1117 = vmatpush.msra.mxu0 0.0
    %1118 = vmatpush.msra.mxu0 0.0
    %1119 = vmatpush.msra.mxu0 0.0
    %1120 = vmatpush.msra.mxu0 0.0
    %1121 = vmatpush.msra.mxu0 0.0
    %1122 = vmatpush.msra.mxu0 0.0
    %1123 = vmatpush.msra.mxu0 0.0
    %1124 = vmatpush.msra.mxu0 %v1081
    %1125 = vmatpush.msra.mxu0 %v1080
    %1126 = vmatpush.msra.mxu0 %v1079
    %1127 = vmatpush.msra.mxu0 %v1078
    %1128 = vmatmul.f32.gmra.mxu0 %v1110
    %v1129 = vpop.f32.mrf.mxu0
    %v1130 = vadd.f32 %v1107, %v1129
    %1131 = vdwg.mxu0
    %1133 = vrot.lane.b32.xlu0 %v1130, 96
    %v1134 = vpop.permute.xlu0 %1133
    %v1135 = vsel %vm258, %v1130, 0
    %v1137 = vsel %vm258, %v1134, 0
    %1139 = vmatpush.xpose.msra.mxu0 0.0
    %1140 = vmatpush.xpose.msra.mxu0 0.0
    %1141 = vmatpush.xpose.msra.mxu0 0.0
    %1142 = vmatpush.xpose.msra.mxu0 0.0
    %1143 = vmatpush.xpose.msra.mxu0 0.0
    %1144 = vmatpush.xpose.msra.mxu0 0.0
    %1145 = vmatpush.xpose.msra.mxu0 0.0
    %1146 = vmatpush.xpose.msra.mxu0 0.0
    %1147 = vmatpush.xpose.msra.mxu0 0.0
    %1148 = vmatpush.xpose.msra.mxu0 0.0
    %1149 = vmatpush.xpose.msra.mxu0 0.0
    %1150 = vmatpush.xpose.msra.mxu0 0.0
    %1151 = vmatpush.xpose.msra.mxu0 0.0
    %1152 = vmatpush.xpose.msra.mxu0 0.0
    %1153 = vmatpush.xpose.msra.mxu0 0.0
    %1154 = vmatpush.xpose.msra.mxu0 %v1137
    %1155 = vmatmul.f32.gmra.mxu0 %v1135
    %v1156 = vpop.f32.mrf.mxu0
    %v1157 = vadd.f32 0.0, %v1156
    %1158 = vdwg.mxu0
    %v1159 = vmul.f32 %v1157, 0.25
    %v1160 = vperm.slane %v1077, 0
    %v1161 = vadd.f32 %v1159, %v1160
    %v1162 = vsel %vm377, %v1161, -inf
    %1163 = vmax.xlane.f32.xlu0 %v1162
    %v1164 = vpop.xlane.xlu0 %1163
    %v1165 = vsub.f32 %v1161, %v1164
    %v1166 = vmul.f32 %v1165, 1.442695
    %v1167 = vpow.pop %v1166
    %v1168 = vsel %vm377, %v1167, 0.0
    %1169 = vadd.xlane.f32.xlu0 %v1168
    %v1170 = vpop.xlane.xlu0 %1169
    %v1171 = vrcp.pop %v1170
    %v1172 = vmul.f32 %v1167, %v1171
    %1173 = vrot.lane.b32.xlu0 %v1130, 64
    %v1174 = vpop.permute.xlu0 %1173
    %v1176 = vsel %vm216, %v1172, 0
    %v1178 = vsel %vm220, %v1174, 0
    %1180 = vmatpush.msra.mxu0 0.0
    %1181 = vmatpush.msra.mxu0 0.0
    %1182 = vmatpush.msra.mxu0 0.0
    %1183 = vmatpush.msra.mxu0 0.0
    %1184 = vmatpush.msra.mxu0 0.0
    %1185 = vmatpush.msra.mxu0 0.0
    %1186 = vmatpush.msra.mxu0 0.0
    %1187 = vmatpush.msra.mxu0 0.0
    %1188 = vmatpush.msra.mxu0 0.0
    %1189 = vmatpush.msra.mxu0 0.0
    %1190 = vmatpush.msra.mxu0 0.0
    %1191 = vmatpush.msra.mxu0 0.0
    %1192 = vmatpush.msra.mxu0 0.0
    %1193 = vmatpush.msra.mxu0 0.0
    %1194 = vmatpush.msra.mxu0 0.0
    %1195 = vmatpush.msra.mxu0 %v1178
    %1196 = vmatmul.f32.gmra.mxu0 %v1176
    %v1197 = vpop.f32.mrf.mxu0
    %v1198 = vadd.f32 0.0, %v1197
    %1199 = vdwg.mxu0
    %1200 = vrot.lane.b32.xlu0 %v1130, 112
    %v1201 = vpop.permute.xlu0 %1200
    %1202 = vrot.lane.b32.xlu0 %v1130, 80
    %v1203 = vpop.permute.xlu0 %1202
    %v1204 = vsel %vm258, %v1201, 0
    %v1206 = vsel %vm258, %v1203, 0
    %1208 = vmatpush.xpose.msra.mxu0 0.0
    %1209 = vmatpush.xpose.msra.mxu0 0.0
    %1210 = vmatpush.xpose.msra.mxu0 0.0
    %1211 = vmatpush.xpose.msra.mxu0 0.0
    %1212 = vmatpush.xpose.msra.mxu0 0.0
    %1213 = vmatpush.xpose.msra.mxu0 0.0
    %1214 = vmatpush.xpose.msra.mxu0 0.0
    %1215 = vmatpush.xpose.msra.mxu0 0.0
    %1216 = vmatpush.xpose.msra.mxu0 0.0
    %1217 = vmatpush.xpose.msra.mxu0 0.0
    %1218 = vmatpush.xpose.msra.mxu0 0.0
    %1219 = vmatpush.xpose.msra.mxu0 0.0
    %1220 = vmatpush.xpose.msra.mxu0 0.0
    %1221 = vmatpush.xpose.msra.mxu0 0.0
    %1222 = vmatpush.xpose.msra.mxu0 0.0
    %1223 = vmatpush.xpose.msra.mxu0 %v1206
    %1224 = vmatmul.f32.gmra.mxu0 %v1204
    %v1225 = vpop.f32.mrf.mxu0
    %v1226 = vadd.f32 0.0, %v1225
    %1227 = vdwg.mxu0
    %v1228 = vmul.f32 %v1226, 0.25
    %v1229 = vadd.f32 %v1228, %v1160
    %v1230 = vsel %vm377, %v1229, -inf
    %1231 = vmax.xlane.f32.xlu0 %v1230
    %v1232 = vpop.xlane.xlu0 %1231
    %v1233 = vsub.f32 %v1229, %v1232
    %v1234 = vmul.f32 %v1233, 1.442695
    %v1235 = vpow.pop %v1234
    %v1236 = vsel %vm377, %v1235, 0.0
    %1237 = vadd.xlane.f32.xlu0 %v1236
    %v1238 = vpop.xlane.xlu0 %1237
    %v1239 = vrcp.pop %v1238
    %v1240 = vmul.f32 %v1235, %v1239
    %1241 = vrot.lane.b32.xlu0 %v1130, 48
    %v1242 = vpop.permute.xlu0 %1241
    %v1244 = vsel %vm216, %v1240, 0
    %v1246 = vsel %vm220, %v1242, 0
    %1248 = vmatpush.msra.mxu0 0.0
    %1249 = vmatpush.msra.mxu0 0.0
    %1250 = vmatpush.msra.mxu0 0.0
    %1251 = vmatpush.msra.mxu0 0.0
    %1252 = vmatpush.msra.mxu0 0.0
    %1253 = vmatpush.msra.mxu0 0.0
    %1254 = vmatpush.msra.mxu0 0.0
    %1255 = vmatpush.msra.mxu0 0.0
    %1256 = vmatpush.msra.mxu0 0.0
    %1257 = vmatpush.msra.mxu0 0.0
    %1258 = vmatpush.msra.mxu0 0.0
    %1259 = vmatpush.msra.mxu0 0.0
    %1260 = vmatpush.msra.mxu0 0.0
    %1261 = vmatpush.msra.mxu0 0.0
    %1262 = vmatpush.msra.mxu0 0.0
    %1263 = vmatpush.msra.mxu0 %v1246
    %1264 = vmatmul.f32.gmra.mxu0 %v1244
    %v1265 = vpop.f32.mrf.mxu0
    %v1266 = vadd.f32 0.0, %v1265
    %1267 = vdwg.mxu0
    %1269 = vrot.lane.b32.xlu0 %v1266, 16
    %v1270 = vpop.permute.xlu0 %1269
    %v1272 = vsel %vm258, %v1198, %v1270
    %v1274 = vperm.slane %v1087, 0
    %v1277 = vsel %vm323, %v1272, 0
    %1279 = vmatpush.msra.mxu0 0.0
    %1280 = vmatpush.msra.mxu0 0.0
    %1281 = vmatpush.msra.mxu0 0.0
    %1282 = vmatpush.msra.mxu0 0.0
    %1283 = vmatpush.msra.mxu0 0.0
    %1284 = vmatpush.msra.mxu0 0.0
    %1285 = vmatpush.msra.mxu0 0.0
    %1286 = vmatpush.msra.mxu0 0.0
    %1287 = vmatpush.msra.mxu0 0.0
    %1288 = vmatpush.msra.mxu0 0.0
    %1289 = vmatpush.msra.mxu0 0.0
    %1290 = vmatpush.msra.mxu0 0.0
    %1291 = vmatpush.msra.mxu0 %v1086
    %1292 = vmatpush.msra.mxu0 %v1085
    %1293 = vmatpush.msra.mxu0 %v1084
    %1294 = vmatpush.msra.mxu0 %v1083
    %1295 = vmatmul.f32.gmra.mxu0 %v1277
    %v1296 = vpop.f32.mrf.mxu0
    %v1297 = vadd.f32 %v1274, %v1296
    %1298 = vdwg.mxu0
    %v1299 = vadd.f32 %v1074, %v1297
    %v1300 = vsel %vm516, %v1299, 0.0
    %1301 = vadd.xlane.f32.xlu0 %v1300
    %v1302 = vpop.xlane.xlu0 %1301
    %v1303 = vmul.f32 %v1302, %v526
    %v1304 = vsub.f32 %v1299, %v1303
    %v1305 = vmul.f32 %v1304, %v1304
    %v1306 = vsel %vm516, %v1305, 0.0
    %1307 = vadd.xlane.f32.xlu0 %v1306
    %v1308 = vpop.xlane.xlu0 %1307
    %v1309 = vmul.f32 %v1308, %v526
    %v1310 = vadd.f32 %v1309, 1e-05
    %v1311 = vrsqrt.pop %v1310
    %v1312 = vmul.f32 %v1311, %v1310
    %v1313 = vmul.f32 %v1312, %v1311
    %v1314 = vmul.f32 0.5, %v1313
    %v1315 = vsub.f32 1.5, %v1314
    %v1316 = vmul.f32 %v1311, %v1315
    %vm1317 = vweird.f32 %v1310
    %vm1318 = vweird.f32 %v1311
    %vm1319 = vmor %vm1317, %vm1318
    %v1320 = vsel %vm1319, %v1311, %v1316
    %v1321 = vmul.f32 %v1304, %v1320
    %v1323 = vperm.slane %v1088, 0
    %v1325 = vmul.f32 %v1321, %v1323
    %v1327 = vperm.slane %v1089, 0
    %v1329 = vadd.f32 %v1325, %v1327
    %v1331 = vperm.slane %v1096, 0
    %v1334 = vsel %vm323, %v1329, 0
    %1336 = vmatpush.msra.mxu0 0.0
    %1337 = vmatpush.msra.mxu0 0.0
    %1338 = vmatpush.msra.mxu0 0.0
    %1339 = vmatpush.msra.mxu0 0.0
    %1340 = vmatpush.msra.mxu0 0.0
    %1341 = vmatpush.msra.mxu0 0.0
    %1342 = vmatpush.msra.mxu0 0.0
    %1343 = vmatpush.msra.mxu0 0.0
    %1344 = vmatpush.msra.mxu0 0.0
    %1345 = vmatpush.msra.mxu0 0.0
    %1346 = vmatpush.msra.mxu0 0.0
    %1347 = vmatpush.msra.mxu0 0.0
    %1348 = vmatpush.msra.mxu0 %v1095
    %1349 = vmatpush.msra.mxu0 %v1094
    %1350 = vmatpush.msra.mxu0 %v1093
    %1351 = vmatpush.msra.mxu0 %v1092
    %1352 = vmatmul.f32.gmra.mxu0 %v1334
    %v1353 = vpop.f32.mrf.mxu0
    %v1354 = vadd.f32 %v1331, %v1353
    %1355 = vdwg.mxu0
    %v1356 = vmul.f32 %v1354, %v1354
    %v1357 = vmul.f32 %v1354, %v1356
    %v1358 = vmul.f32 %v1357, 0.044715
    %v1359 = vadd.f32 %v1354, %v1358
    %v1360 = vmul.f32 %v1359, 0.7978846
    %v1361 = vtanh.pop %v1360
    %v1362 = vadd.f32 %v1361, 1.0
    %v1363 = vmul.f32 %v1362, 0.5
    %v1364 = vmul.f32 %v1354, %v1363
    %v1366 = vperm.slane %v1105, 0
    %v1369 = vsel %vm592, %v1364, 0
    %1371 = vmatpush.msra.mxu0 0.0
    %1372 = vmatpush.msra.mxu0 0.0
    %1373 = vmatpush.msra.mxu0 0.0
    %1374 = vmatpush.msra.mxu0 0.0
    %1375 = vmatpush.msra.mxu0 0.0
    %1376 = vmatpush.msra.mxu0 0.0
    %1377 = vmatpush.msra.mxu0 0.0
    %1378 = vmatpush.msra.mxu0 0.0
    %1379 = vmatpush.msra.mxu0 %v1104
    %1380 = vmatpush.msra.mxu0 %v1103
    %1381 = vmatpush.msra.mxu0 %v1102
    %1382 = vmatpush.msra.mxu0 %v1101
    %1383 = vmatpush.msra.mxu0 %v1100
    %1384 = vmatpush.msra.mxu0 %v1099
    %1385 = vmatpush.msra.mxu0 %v1098
    %1386 = vmatpush.msra.mxu0 %v1097
    %1387 = vmatmul.f32.gmra.mxu0 %v1369
    %v1388 = vpop.f32.mrf.mxu0
    %v1389 = vadd.f32 %v1366, %v1388
    %1390 = vdwg.mxu0
    %v1391 = vadd.f32 %v1329, %v1389
    %v1392 = vsel %vm516, %v1391, 0.0
    %1393 = vadd.xlane.f32.xlu0 %v1392
    %v1394 = vpop.xlane.xlu0 %1393
    %v1395 = vmul.f32 %v1394, %v526
    %v1396 = vsub.f32 %v1391, %v1395
    %v1397 = vmul.f32 %v1396, %v1396
    %v1398 = vsel %vm516, %v1397, 0.0
    %1399 = vadd.xlane.f32.xlu0 %v1398
    %v1400 = vpop.xlane.xlu0 %1399
    %v1401 = vmul.f32 %v1400, %v526
    %v1402 = vadd.f32 %v1401, 1e-05
    %v1403 = vrsqrt.pop %v1402
    %v1404 = vmul.f32 %v1403, %v1402
    %v1405 = vmul.f32 %v1404, %v1403
    %v1406 = vmul.f32 0.5, %v1405
    %v1407 = vsub.f32 1.5, %v1406
    %v1408 = vmul.f32 %v1403, %v1407
    %vm1409 = vweird.f32 %v1402
    %vm1410 = vweird.f32 %v1403
    %vm1411 = vmor %vm1409, %vm1410
    %v1412 = vsel %vm1411, %v1403, %v1408
    %v1413 = vmul.f32 %v1396, %v1412
    %v1415 = vperm.slane %v1090, 0
    %v1417 = vmul.f32 %v1413, %v1415
    %v1419 = vperm.slane %v1091, 0
    %v1421 = vadd.f32 %v1417, %v1419
    %v1422 = vld [vmem:[%s647] sm:$0xff]
    %v1423 = vld [vmem:[%s647 + $0x8] sm:$0xff]
    %v1424 = vld [vmem:[%s647 + $0x10] sm:$0xff]
    %v1425 = vld [vmem:[%s647 + $0x18] sm:$0xff]
    %v1426 = vld [vmem:[%s652] sm:$0x1]
    %v1427 = vld [vmem:[%s654] sm:$0xff]
    %v1428 = vld [vmem:[%s654 + $0x8] sm:$0xff]
    %v1429 = vld [vmem:[%s654 + $0x10] sm:$0xff]
    %v1430 = vld [vmem:[%s654 + $0x18] sm:$0xff]
    %v1431 = vld [vmem:[%s659] sm:$0x1]
    %v1432 = vld [vmem:[%s661] sm:$0x1]
    %v1433 = vld [vmem:[%s663] sm:$0x1]
    %v1434 = vld [vmem:[%s665] sm:$0x1]
    %v1435 = vld [vmem:[%s667] sm:$0x1]
    %v1436 = vld [vmem:[%s669] sm:$0xff]
    %v1437 = vld [vmem:[%s669 + $0x8] sm:$0xff]
    %v1438 = vld [vmem:[%s669 + $0x10] sm:$0xff]
    %v1439 = vld [vmem:[%s669 + $0x18] sm:$0xff]
    %v1440 = vld [vmem:[%s674] sm:$0x1]
    %v1441 = vld [vmem:[%s676] sm:$0xff]
    %v1442 = vld [vmem:[%s676 + $0x8] sm:$0xff]
    %v1443 = vld [vmem:[%s676 + $0x10] sm:$0xff]
    %v1444 = vld [vmem:[%s676 + $0x18] sm:$0xff]
    %v1445 = vld [vmem:[%s676 + $0x20] sm:$0xff]
    %v1446 = vld [vmem:[%s676 + $0x28] sm:$0xff]
    %v1447 = vld [vmem:[%s676 + $0x30] sm:$0xff]
    %v1448 = vld [vmem:[%s676 + $0x38] sm:$0xff]
    %v1449 = vld [vmem:[%s685] sm:$0x1]
    %v1451 = vperm.slane %v1426, 0
    %v1454 = vsel %vm323, %v1421, 0
    %1456 = vmatpush.msra.mxu0 0.0
    %1457 = vmatpush.msra.mxu0 0.0
    %1458 = vmatpush.msra.mxu0 0.0
    %1459 = vmatpush.msra.mxu0 0.0
    %1460 = vmatpush.msra.mxu0 0.0
    %1461 = vmatpush.msra.mxu0 0.0
    %1462 = vmatpush.msra.mxu0 0.0
    %1463 = vmatpush.msra.mxu0 0.0
    %1464 = vmatpush.msra.mxu0 0.0
    %1465 = vmatpush.msra.mxu0 0.0
    %1466 = vmatpush.msra.mxu0 0.0
    %1467 = vmatpush.msra.mxu0 0.0
    %1468 = vmatpush.msra.mxu0 %v1425
    %1469 = vmatpush.msra.mxu0 %v1424
    %1470 = vmatpush.msra.mxu0 %v1423
    %1471 = vmatpush.msra.mxu0 %v1422
    %1472 = vmatmul.f32.gmra.mxu0 %v1454
    %v1473 = vpop.f32.mrf.mxu0
    %v1474 = vadd.f32 %v1451, %v1473
    %1475 = vdwg.mxu0
    %1477 = vrot.lane.b32.xlu0 %v1474, 96
    %v1478 = vpop.permute.xlu0 %1477
    %v1479 = vsel %vm258, %v1474, 0
    %v1481 = vsel %vm258, %v1478, 0
    %1483 = vmatpush.xpose.msra.mxu0 0.0
    %1484 = vmatpush.xpose.msra.mxu0 0.0
    %1485 = vmatpush.xpose.msra.mxu0 0.0
    %1486 = vmatpush.xpose.msra.mxu0 0.0
    %1487 = vmatpush.xpose.msra.mxu0 0.0
    %1488 = vmatpush.xpose.msra.mxu0 0.0
    %1489 = vmatpush.xpose.msra.mxu0 0.0
    %1490 = vmatpush.xpose.msra.mxu0 0.0
    %1491 = vmatpush.xpose.msra.mxu0 0.0
    %1492 = vmatpush.xpose.msra.mxu0 0.0
    %1493 = vmatpush.xpose.msra.mxu0 0.0
    %1494 = vmatpush.xpose.msra.mxu0 0.0
    %1495 = vmatpush.xpose.msra.mxu0 0.0
    %1496 = vmatpush.xpose.msra.mxu0 0.0
    %1497 = vmatpush.xpose.msra.mxu0 0.0
    %1498 = vmatpush.xpose.msra.mxu0 %v1481
    %1499 = vmatmul.f32.gmra.mxu0 %v1479
    %v1500 = vpop.f32.mrf.mxu0
    %v1501 = vadd.f32 0.0, %v1500
    %1502 = vdwg.mxu0
    %v1503 = vmul.f32 %v1501, 0.25
    %v1504 = vadd.f32 %v1503, %v1160
    %v1505 = vsel %vm377, %v1504, -inf
    %1506 = vmax.xlane.f32.xlu0 %v1505
    %v1507 = vpop.xlane.xlu0 %1506
    %v1508 = vsub.f32 %v1504, %v1507
    %v1509 = vmul.f32 %v1508, 1.442695
    %v1510 = vpow.pop %v1509
    %v1511 = vsel %vm377, %v1510, 0.0
    %1512 = vadd.xlane.f32.xlu0 %v1511
    %v1513 = vpop.xlane.xlu0 %1512
    %v1514 = vrcp.pop %v1513
    %v1515 = vmul.f32 %v1510, %v1514
    %1516 = vrot.lane.b32.xlu0 %v1474, 64
    %v1517 = vpop.permute.xlu0 %1516
    %v1519 = vsel %vm216, %v1515, 0
    %v1521 = vsel %vm220, %v1517, 0
    %1523 = vmatpush.msra.mxu0 0.0
    %1524 = vmatpush.msra.mxu0 0.0
    %1525 = vmatpush.msra.mxu0 0.0
    %1526 = vmatpush.msra.mxu0 0.0
    %1527 = vmatpush.msra.mxu0 0.0
    %1528 = vmatpush.msra.mxu0 0.0
    %1529 = vmatpush.msra.mxu0 0.0
    %1530 = vmatpush.msra.mxu0 0.0
    %1531 = vmatpush.msra.mxu0 0.0
    %1532 = vmatpush.msra.mxu0 0.0
    %1533 = vmatpush.msra.mxu0 0.0
    %1534 = vmatpush.msra.mxu0 0.0
    %1535 = vmatpush.msra.mxu0 0.0
    %1536 = vmatpush.msra.mxu0 0.0
    %1537 = vmatpush.msra.mxu0 0.0
    %1538 = vmatpush.msra.mxu0 %v1521
    %1539 = vmatmul.f32.gmra.mxu0 %v1519
    %v1540 = vpop.f32.mrf.mxu0
    %v1541 = vadd.f32 0.0, %v1540
    %1542 = vdwg.mxu0
    %1543 = vrot.lane.b32.xlu0 %v1474, 112
    %v1544 = vpop.permute.xlu0 %1543
    %1545 = vrot.lane.b32.xlu0 %v1474, 80
    %v1546 = vpop.permute.xlu0 %1545
    %v1547 = vsel %vm258, %v1544, 0
    %v1549 = vsel %vm258, %v1546, 0
    %1551 = vmatpush.xpose.msra.mxu0 0.0
    %1552 = vmatpush.xpose.msra.mxu0 0.0
    %1553 = vmatpush.xpose.msra.mxu0 0.0
    %1554 = vmatpush.xpose.msra.mxu0 0.0
    %1555 = vmatpush.xpose.msra.mxu0 0.0
    %1556 = vmatpush.xpose.msra.mxu0 0.0
    %1557 = vmatpush.xpose.msra.mxu0 0.0
    %1558 = vmatpush.xpose.msra.mxu0 0.0
    %1559 = vmatpush.xpose.msra.mxu0 0.0
    %1560 = vmatpush.xpose.msra.mxu0 0.0
    %1561 = vmatpush.xpose.msra.mxu0 0.0
    %1562 = vmatpush.xpose.msra.mxu0 0.0
    %1563 = vmatpush.xpose.msra.mxu0 0.0
    %1564 = vmatpush.xpose.msra.mxu0 0.0
    %1565 = vmatpush.xpose.msra.mxu0 0.0
    %1566 = vmatpush.xpose.msra.mxu0 %v1549
    %1567 = vmatmul.f32.gmra.mxu0 %v1547
    %v1568 = vpop.f32.mrf.mxu0
    %v1569 = vadd.f32 0.0, %v1568
    %1570 = vdwg.mxu0
    %v1571 = vmul.f32 %v1569, 0.25
    %v1572 = vadd.f32 %v1571, %v1160
    %v1573 = vsel %vm377, %v1572, -inf
    %1574 = vmax.xlane.f32.xlu0 %v1573
    %v1575 = vpop.xlane.xlu0 %1574
    %v1576 = vsub.f32 %v1572, %v1575
    %v1577 = vmul.f32 %v1576, 1.442695
    %v1578 = vpow.pop %v1577
    %v1579 = vsel %vm377, %v1578, 0.0
    %1580 = vadd.xlane.f32.xlu0 %v1579
    %v1581 = vpop.xlane.xlu0 %1580
    %v1582 = vrcp.pop %v1581
    %v1583 = vmul.f32 %v1578, %v1582
    %1584 = vrot.lane.b32.xlu0 %v1474, 48
    %v1585 = vpop.permute.xlu0 %1584
    %v1587 = vsel %vm216, %v1583, 0
    %v1589 = vsel %vm220, %v1585, 0
    %1591 = vmatpush.msra.mxu0 0.0
    %1592 = vmatpush.msra.mxu0 0.0
    %1593 = vmatpush.msra.mxu0 0.0
    %1594 = vmatpush.msra.mxu0 0.0
    %1595 = vmatpush.msra.mxu0 0.0
    %1596 = vmatpush.msra.mxu0 0.0
    %1597 = vmatpush.msra.mxu0 0.0
    %1598 = vmatpush.msra.mxu0 0.0
    %1599 = vmatpush.msra.mxu0 0.0
    %1600 = vmatpush.msra.mxu0 0.0
    %1601 = vmatpush.msra.mxu0 0.0
    %1602 = vmatpush.msra.mxu0 0.0
    %1603 = vmatpush.msra.mxu0 0.0
    %1604 = vmatpush.msra.mxu0 0.0
    %1605 = vmatpush.msra.mxu0 0.0
    %1606 = vmatpush.msra.mxu0 %v1589
    %1607 = vmatmul.f32.gmra.mxu0 %v1587
    %v1608 = vpop.f32.mrf.mxu0
    %v1609 = vadd.f32 0.0, %v1608
    %1610 = vdwg.mxu0
    %1612 = vrot.lane.b32.xlu0 %v1609, 16
    %v1613 = vpop.permute.xlu0 %1612
    %v1615 = vsel %vm258, %v1541, %v1613
    %v1617 = vperm.slane %v1431, 0
    %v1620 = vsel %vm323, %v1615, 0
    %1622 = vmatpush.msra.mxu0 0.0
    %1623 = vmatpush.msra.mxu0 0.0
    %1624 = vmatpush.msra.mxu0 0.0
    %1625 = vmatpush.msra.mxu0 0.0
    %1626 = vmatpush.msra.mxu0 0.0
    %1627 = vmatpush.msra.mxu0 0.0
    %1628 = vmatpush.msra.mxu0 0.0
    %1629 = vmatpush.msra.mxu0 0.0
    %1630 = vmatpush.msra.mxu0 0.0
    %1631 = vmatpush.msra.mxu0 0.0
    %1632 = vmatpush.msra.mxu0 0.0
    %1633 = vmatpush.msra.mxu0 0.0
    %1634 = vmatpush.msra.mxu0 %v1430
    %1635 = vmatpush.msra.mxu0 %v1429
    %1636 = vmatpush.msra.mxu0 %v1428
    %1637 = vmatpush.msra.mxu0 %v1427
    %1638 = vmatmul.f32.gmra.mxu0 %v1620
    %v1639 = vpop.f32.mrf.mxu0
    %v1640 = vadd.f32 %v1617, %v1639
    %1641 = vdwg.mxu0
    %v1642 = vadd.f32 %v1421, %v1640
    %v1643 = vsel %vm516, %v1642, 0.0
    %1644 = vadd.xlane.f32.xlu0 %v1643
    %v1645 = vpop.xlane.xlu0 %1644
    %v1646 = vmul.f32 %v1645, %v526
    %v1647 = vsub.f32 %v1642, %v1646
    %v1648 = vmul.f32 %v1647, %v1647
    %v1649 = vsel %vm516, %v1648, 0.0
    %1650 = vadd.xlane.f32.xlu0 %v1649
    %v1651 = vpop.xlane.xlu0 %1650
    %v1652 = vmul.f32 %v1651, %v526
    %v1653 = vadd.f32 %v1652, 1e-05
    %v1654 = vrsqrt.pop %v1653
    %v1655 = vmul.f32 %v1654, %v1653
    %v1656 = vmul.f32 %v1655, %v1654
    %v1657 = vmul.f32 0.5, %v1656
    %v1658 = vsub.f32 1.5, %v1657
    %v1659 = vmul.f32 %v1654, %v1658
    %vm1660 = vweird.f32 %v1653
    %vm1661 = vweird.f32 %v1654
    %vm1662 = vmor %vm1660, %vm1661
    %v1663 = vsel %vm1662, %v1654, %v1659
    %v1664 = vmul.f32 %v1647, %v1663
    %v1666 = vperm.slane %v1432, 0
    %v1668 = vmul.f32 %v1664, %v1666
    %v1670 = vperm.slane %v1433, 0
    %v1672 = vadd.f32 %v1668, %v1670
    %v1674 = vperm.slane %v1440, 0
    %v1677 = vsel %vm323, %v1672, 0
    %1679 = vmatpush.msra.mxu0 0.0
    %1680 = vmatpush.msra.mxu0 0.0
    %1681 = vmatpush.msra.mxu0 0.0
    %1682 = vmatpush.msra.mxu0 0.0
    %1683 = vmatpush.msra.mxu0 0.0
    %1684 = vmatpush.msra.mxu0 0.0
    %1685 = vmatpush.msra.mxu0 0.0
    %1686 = vmatpush.msra.mxu0 0.0
    %1687 = vmatpush.msra.mxu0 0.0
    %1688 = vmatpush.msra.mxu0 0.0
    %1689 = vmatpush.msra.mxu0 0.0
    %1690 = vmatpush.msra.mxu0 0.0
    %1691 = vmatpush.msra.mxu0 %v1439
    %1692 = vmatpush.msra.mxu0 %v1438
    %1693 = vmatpush.msra.mxu0 %v1437
    %1694 = vmatpush.msra.mxu0 %v1436
    %1695 = vmatmul.f32.gmra.mxu0 %v1677
    %v1696 = vpop.f32.mrf.mxu0
    %v1697 = vadd.f32 %v1674, %v1696
    %1698 = vdwg.mxu0
    %v1699 = vmul.f32 %v1697, %v1697
    %v1700 = vmul.f32 %v1697, %v1699
    %v1701 = vmul.f32 %v1700, 0.044715
    %v1702 = vadd.f32 %v1697, %v1701
    %v1703 = vmul.f32 %v1702, 0.7978846
    %v1704 = vtanh.pop %v1703
    %v1705 = vadd.f32 %v1704, 1.0
    %v1706 = vmul.f32 %v1705, 0.5
    %v1707 = vmul.f32 %v1697, %v1706
    %v1709 = vperm.slane %v1449, 0
    %v1712 = vsel %vm592, %v1707, 0
    %1714 = vmatpush.msra.mxu0 0.0
    %1715 = vmatpush.msra.mxu0 0.0
    %1716 = vmatpush.msra.mxu0 0.0
    %1717 = vmatpush.msra.mxu0 0.0
    %1718 = vmatpush.msra.mxu0 0.0
    %1719 = vmatpush.msra.mxu0 0.0
    %1720 = vmatpush.msra.mxu0 0.0
    %1721 = vmatpush.msra.mxu0 0.0
    %1722 = vmatpush.msra.mxu0 %v1448
    %1723 = vmatpush.msra.mxu0 %v1447
    %1724 = vmatpush.msra.mxu0 %v1446
    %1725 = vmatpush.msra.mxu0 %v1445
    %1726 = vmatpush.msra.mxu0 %v1444
    %1727 = vmatpush.msra.mxu0 %v1443
    %1728 = vmatpush.msra.mxu0 %v1442
    %1729 = vmatpush.msra.mxu0 %v1441
    %1730 = vmatmul.f32.gmra.mxu0 %v1712
    %v1731 = vpop.f32.mrf.mxu0
    %v1732 = vadd.f32 %v1709, %v1731
    %1733 = vdwg.mxu0
    %v1734 = vadd.f32 %v1672, %v1732
    %v1735 = vsel %vm516, %v1734, 0.0
    %1736 = vadd.xlane.f32.xlu0 %v1735
    %v1737 = vpop.xlane.xlu0 %1736
    %v1738 = vmul.f32 %v1737, %v526
    %v1739 = vsub.f32 %v1734, %v1738
    %v1740 = vmul.f32 %v1739, %v1739
    %v1741 = vsel %vm516, %v1740, 0.0
    %1742 = vadd.xlane.f32.xlu0 %v1741
    %v1743 = vpop.xlane.xlu0 %1742
    %v1744 = vmul.f32 %v1743, %v526
    %v1745 = vadd.f32 %v1744, 1e-05
    %v1746 = vrsqrt.pop %v1745
    %v1747 = vmul.f32 %v1746, %v1745
    %v1748 = vmul.f32 %v1747, %v1746
    %v1749 = vmul.f32 0.5, %v1748
    %v1750 = vsub.f32 1.5, %v1749
    %v1751 = vmul.f32 %v1746, %v1750
    %vm1752 = vweird.f32 %v1745
    %vm1753 = vweird.f32 %v1746
    %vm1754 = vmor %vm1752, %vm1753
    %v1755 = vsel %vm1754, %v1746, %v1751
    %v1756 = vmul.f32 %v1739, %v1755
    %v1758 = vperm.slane %v1434, 0
    %v1760 = vmul.f32 %v1756, %v1758
    %v1762 = vperm.slane %v1435, 0
    %v1764 = vadd.f32 %v1760, %v1762
    %s1765 = scalar_lea.vmem %s19, 2
    %1766 = vst.msk [vmem:[%s1765] sm:$0x3] %vm1002, %v1764
    // Predicated region
    $region118: #{transformer_vae_forward.4} parent=1 // pred_check
      _
    $region119: #{transformer_vae_forward.4} parent=1 // pred_check_branch
      %1768 = sbr.rel (0) target = $region121
    $region120: #{transformer_vae_forward.4} parent=1 // pred_region
      _
    $region121: #{transformer_vae_forward.4} parent=1 // pred_fallthru
      _
    // Predicated region
    $region122: #{transformer_vae_forward.4} parent=1 // pred_check
      _
    $region123: #{transformer_vae_forward.4} parent=1 // pred_check_branch
      %1770 = sbr.rel (0) target = $region125
    $region124: #{transformer_vae_forward.4} parent=1 // pred_region
      _
    $region125: #{transformer_vae_forward.4} parent=1 // pred_fallthru
      _
    %1771 = vsyncpa [#allocation3], 1
    %1772 = vsyncpa [#allocation5], 1
    %1773 = vsyncpa [#allocation8], 1
    %1774 = vsyncpa [#allocation11], 1
    %1775 = vsyncpa [#allocation14], 1
    %1776 = vsyncpa [#allocation17], 1

// kernel: transformer_vae_forward.3
$region0: #{transformer_vae_forward.3}
  #allocation0 [shape = 'u32[]', space=smem, size = 0x4, offset = 0x4, fixed_abs, tag = 'smem constant byte address 0x4 - core index']
  #allocation1 [shape = 'u32[72,128]{1,0:T(1,128)}', space=vmem, size = 0x9000, scoped, tag = 'internal scratch']
  %s0 = inlined_call_operand.hbm [shape: f32[2,6], index: 0, kind: input, shape index: {}]
  %s1 = inlined_call_operand.vmem [shape: f32[2,12,16], index: 1, kind: input, shape index: {}]
  %s2 = inlined_call_operand.vmem [shape: f32[2,14], index: 2, kind: input, shape index: {}]
  %s3 = inlined_call_operand.vmem [shape: f32[14,32], index: 3, kind: input, shape index: {}]
  %s4 = inlined_call_operand.vmem [shape: f32[6,64], index: 4, kind: input, shape index: {}]
  %s5 = inlined_call_operand.vmem [shape: f32[16,32], index: 5, kind: input, shape index: {}]
  %s6 = inlined_call_operand.hbm [shape: f32[1,32], index: 6, kind: input, shape index: {}]
  %s7 = inlined_call_operand.vmem [shape: f32[2,32,96], index: 7, kind: input, shape index: {}]
  %s8 = inlined_call_operand.vmem [shape: f32[2,1,96], index: 8, kind: input, shape index: {}]
  %s9 = inlined_call_operand.vmem [shape: f32[2,32,32], index: 9, kind: input, shape index: {}]
  %s10 = inlined_call_operand.vmem [shape: f32[2,1,32], index: 10, kind: input, shape index: {}]
  %s11 = inlined_call_operand.hbm [shape: f32[2,1,32], index: 11, kind: input, shape index: {}]
  %s12 = inlined_call_operand.hbm [shape: f32[2,1,32], index: 12, kind: input, shape index: {}]
  %s13 = inlined_call_operand.hbm [shape: f32[2,1,32], index: 13, kind: input, shape index: {}]
  %s14 = inlined_call_operand.hbm [shape: f32[2,1,32], index: 14, kind: input, shape index: {}]
  %s15 = inlined_call_operand.hbm [shape: f32[2,32,64], index: 15, kind: input, shape index: {}]
  %s16 = inlined_call_operand.hbm [shape: f32[2,1,64], index: 16, kind: input, shape index: {}]
  %s17 = inlined_call_operand.vmem [shape: f32[2,64,32], index: 17, kind: input, shape index: {}]
  %s18 = inlined_call_operand.hbm [shape: f32[2,1,32], index: 18, kind: input, shape index: {}]
  %s19 = inlined_call_operand.vmem [shape: f32[2,2,32], index: 19, kind: output, shape index: {}]
  %s20 = sld [smem:[#allocation0]]
  $region122: #{transformer_vae_forward.3} parent=0
    _
  %s22 = ssub.s32 1, %s20
  %s23 = scalar_select 0, %s22, %s20
  $region1: #{transformer_vae_forward.3} parent=0
    #allocation2 [shape = 'u8[1024]{0}', space=vmem, size = 0x400, scoped, tag = 'input window, operand 0, single buffered']
    #allocation3 [shape = 's32[1]{0}', space=sflag, size = 0x4, scoped, tag = 'scoped memory for transformer_vae_forward.3']
    #allocation4 [shape = 'u8[512]{0}', space=vmem, size = 0x400, scoped, tag = 'input window, operand 6, single buffered']
    #allocation5 [shape = 's32[1]{0}', space=sflag, size = 0x4, scoped, tag = 'scoped memory for transformer_vae_forward.3']
    #allocation6 [shape = 'u8[1024]{0}', space=vmem, size = 0x400, scoped, tag = 'input window, operand 11, single buffered']
    #allocation7 [shape = 'u8[1024]{0}', space=vmem, size = 0x400, scoped, tag = 'input window, operand 12, single buffered']
    #allocation8 [shape = 's32[1]{0}', space=sflag, size = 0x4, scoped, tag = 'scoped memory for transformer_vae_forward.3']
    #allocation9 [shape = 'u8[1024]{0}', space=vmem, size = 0x400, scoped, tag = 'input window, operand 13, single buffered']
    #allocation10 [shape = 'u8[1024]{0}', space=vmem, size = 0x400, scoped, tag = 'input window, operand 14, single buffered']
    #allocation11 [shape = 's32[1]{0}', space=sflag, size = 0x4, scoped, tag = 'scoped memory for transformer_vae_forward.3']
    #allocation12 [shape = 'u8[32768]{0}', space=vmem, size = 0x8000, scoped, tag = 'input window, operand 15, single buffered']
    #allocation13 [shape = 'u8[1024]{0}', space=vmem, size = 0x400, scoped, tag = 'input window, operand 16, single buffered']
    #allocation14 [shape = 's32[1]{0}', space=sflag, size = 0x4, scoped, tag = 'scoped memory for transformer_vae_forward.3']
    #allocation15 [shape = 'u8[1024]{0}', space=vmem, size = 0x400, scoped, tag = 'input window, operand 18, single buffered']
    %24 = vsyncpa [#allocation3], 0
    %25 = vsyncpa [#allocation5], 0
    %26 = vsyncpa [#allocation8], 0
    %27 = vsyncpa [#allocation11], 0
    %28 = vsyncpa [#allocation14], 0
    // Predicated region
    $region2: #{transformer_vae_forward.3} parent=1 // pred_check
      _
    $region3: #{transformer_vae_forward.3} parent=1 // pred_check_branch
      %30 = sbr.rel (0) target = $region5
    $region4: #{transformer_vae_forward.3} parent=1 // pred_region
      %32 = vsyncadd [#allocation3], 0
      %s34 = sshll.u32 %s0, 4
      %s35 = int_to_ptr.hbm [resolvable:$true] %s34
      %s36 = sshll.u32 [#allocation2], 4
      %s37 = int_to_ptr.vmem [resolvable:$true] %s36
      %39 = dma.hbm_to_vmem [thread:$0]  %s35, 32, %s37, [#allocation3]
    $region5: #{transformer_vae_forward.3} parent=1 // pred_fallthru
      _
    // Predicated region
    $region6: #{transformer_vae_forward.3} parent=1 // pred_check
      _
    $region7: #{transformer_vae_forward.3} parent=1 // pred_check_branch
      %41 = sbr.rel (0) target = $region9
    $region8: #{transformer_vae_forward.3} parent=1 // pred_region
      _
    $region9: #{transformer_vae_forward.3} parent=1 // pred_fallthru
      _
    // Predicated region
    $region10: #{transformer_vae_forward.3} parent=1 // pred_check
      _
    $region11: #{transformer_vae_forward.3} parent=1 // pred_check_branch
      %43 = sbr.rel (0) target = $region13
    $region12: #{transformer_vae_forward.3} parent=1 // pred_region
      _
    $region13: #{transformer_vae_forward.3} parent=1 // pred_fallthru
      _
    // Predicated region
    $region14: #{transformer_vae_forward.3} parent=1 // pred_check
      _
    $region15: #{transformer_vae_forward.3} parent=1 // pred_check_branch
      %45 = sbr.rel (0) target = $region17
    $region16: #{transformer_vae_forward.3} parent=1 // pred_region
      _
    $region17: #{transformer_vae_forward.3} parent=1 // pred_fallthru
      _
    // Predicated region
    $region18: #{transformer_vae_forward.3} parent=1 // pred_check
      _
    $region19: #{transformer_vae_forward.3} parent=1 // pred_check_branch
      %47 = sbr.rel (0) target = $region21
    $region20: #{transformer_vae_forward.3} parent=1 // pred_region
      _
    $region21: #{transformer_vae_forward.3} parent=1 // pred_fallthru
      _
    // Predicated region
    $region22: #{transformer_vae_forward.3} parent=1 // pred_check
      _
    $region23: #{transformer_vae_forward.3} parent=1 // pred_check_branch
      %49 = sbr.rel (0) target = $region25
    $region24: #{transformer_vae_forward.3} parent=1 // pred_region
      _
    $region25: #{transformer_vae_forward.3} parent=1 // pred_fallthru
      _
    // Predicated region
    $region26: #{transformer_vae_forward.3} parent=1 // pred_check
      _
    $region27: #{transformer_vae_forward.3} parent=1 // pred_check_branch
      %51 = sbr.rel (0) target = $region29
    $region28: #{transformer_vae_forward.3} parent=1 // pred_region
      %53 = vsyncadd [#allocation5], 0
      %s55 = sshll.u32 %s6, 4
      %s56 = int_to_ptr.hbm [resolvable:$true] %s55
      %s57 = sshll.u32 [#allocation4], 4
      %s58 = int_to_ptr.vmem [resolvable:$true] %s57
      %60 = dma.hbm_to_vmem [thread:$0]  %s56, 16, %s58, [#allocation5]
    $region29: #{transformer_vae_forward.3} parent=1 // pred_fallthru
      _
    // Predicated region
    $region30: #{transformer_vae_forward.3} parent=1 // pred_check
      _
    $region31: #{transformer_vae_forward.3} parent=1 // pred_check_branch
      %62 = sbr.rel (0) target = $region33
    $region32: #{transformer_vae_forward.3} parent=1 // pred_region
      _
    $region33: #{transformer_vae_forward.3} parent=1 // pred_fallthru
      _
    // Predicated region
    $region34: #{transformer_vae_forward.3} parent=1 // pred_check
      _
    $region35: #{transformer_vae_forward.3} parent=1 // pred_check_branch
      %64 = sbr.rel (0) target = $region37
    $region36: #{transformer_vae_forward.3} parent=1 // pred_region
      _
    $region37: #{transformer_vae_forward.3} parent=1 // pred_fallthru
      _
    // Predicated region
    $region38: #{transformer_vae_forward.3} parent=1 // pred_check
      _
    $region39: #{transformer_vae_forward.3} parent=1 // pred_check_branch
      %66 = sbr.rel (0) target = $region41
    $region40: #{transformer_vae_forward.3} parent=1 // pred_region
      _
    $region41: #{transformer_vae_forward.3} parent=1 // pred_fallthru
      _
    // Predicated region
    $region42: #{transformer_vae_forward.3} parent=1 // pred_check
      _
    $region43: #{transformer_vae_forward.3} parent=1 // pred_check_branch
      %68 = sbr.rel (0) target = $region45
    $region44: #{transformer_vae_forward.3} parent=1 // pred_region
      _
    $region45: #{transformer_vae_forward.3} parent=1 // pred_fallthru
      _
    // Predicated region
    $region46: #{transformer_vae_forward.3} parent=1 // pred_check
      _
    $region47: #{transformer_vae_forward.3} parent=1 // pred_check_branch
      %70 = sbr.rel (0) target = $region49
    $region48: #{transformer_vae_forward.3} parent=1 // pred_region
      %72 = vsyncadd [#allocation5], 0
      %s73 = sshll.u32 %s11, 4
      %s74 = int_to_ptr.hbm [resolvable:$true] %s73
      %s75 = sshll.u32 [#allocation6], 4
      %s76 = int_to_ptr.vmem [resolvable:$true] %s75
      %81 = dma.hbm_to_vmem [thread:$0]  %s74, 32, %s76, [#allocation5], 16, 16, 1
    $region49: #{transformer_vae_forward.3} parent=1 // pred_fallthru
      _
    // Predicated region
    $region50: #{transformer_vae_forward.3} parent=1 // pred_check
      _
    $region51: #{transformer_vae_forward.3} parent=1 // pred_check_branch
      %83 = sbr.rel (0) target = $region53
    $region52: #{transformer_vae_forward.3} parent=1 // pred_region
      %85 = vsyncadd [#allocation8], 0
      %s86 = sshll.u32 %s12, 4
      %s87 = int_to_ptr.hbm [resolvable:$true] %s86
      %s88 = sshll.u32 [#allocation7], 4
      %s89 = int_to_ptr.vmem [resolvable:$true] %s88
      %94 = dma.hbm_to_vmem [thread:$0]  %s87, 32, %s89, [#allocation8], 16, 16, 1
    $region53: #{transformer_vae_forward.3} parent=1 // pred_fallthru
      _
    // Predicated region
    $region54: #{transformer_vae_forward.3} parent=1 // pred_check
      _
    $region55: #{transformer_vae_forward.3} parent=1 // pred_check_branch
      %96 = sbr.rel (0) target = $region57
    $region56: #{transformer_vae_forward.3} parent=1 // pred_region
      %98 = vsyncadd [#allocation8], 0
      %s99 = sshll.u32 %s13, 4
      %s100 = int_to_ptr.hbm [resolvable:$true] %s99
      %s101 = sshll.u32 [#allocation9], 4
      %s102 = int_to_ptr.vmem [resolvable:$true] %s101
      %107 = dma.hbm_to_vmem [thread:$0]  %s100, 32, %s102, [#allocation8], 16, 16, 1
    $region57: #{transformer_vae_forward.3} parent=1 // pred_fallthru
      _
    // Predicated region
    $region58: #{transformer_vae_forward.3} parent=1 // pred_check
      _
    $region59: #{transformer_vae_forward.3} parent=1 // pred_check_branch
      %109 = sbr.rel (0) target = $region61
    $region60: #{transformer_vae_forward.3} parent=1 // pred_region
      %111 = vsyncadd [#allocation11], 0
      %s112 = sshll.u32 %s14, 4
      %s113 = int_to_ptr.hbm [resolvable:$true] %s112
      %s114 = sshll.u32 [#allocation10], 4
      %s115 = int_to_ptr.vmem [resolvable:$true] %s114
      %120 = dma.hbm_to_vmem [thread:$0]  %s113, 32, %s115, [#allocation11], 16, 16, 1
    $region61: #{transformer_vae_forward.3} parent=1 // pred_fallthru
      _
    // Predicated region
    $region62: #{transformer_vae_forward.3} parent=1 // pred_check
      _
    $region63: #{transformer_vae_forward.3} parent=1 // pred_check_branch
      %122 = sbr.rel (0) target = $region65
    $region64: #{transformer_vae_forward.3} parent=1 // pred_region
      %124 = vsyncadd [#allocation11], 0
      %s125 = sshll.u32 %s15, 4
      %s126 = int_to_ptr.hbm [resolvable:$true] %s125
      %s127 = sshll.u32 [#allocation12], 4
      %s128 = int_to_ptr.vmem [resolvable:$true] %s127
      %133 = dma.hbm_to_vmem [thread:$0]  %s126, 1024, %s128, [#allocation11], 128, 128, 8
    $region65: #{transformer_vae_forward.3} parent=1 // pred_fallthru
      _
    // Predicated region
    $region66: #{transformer_vae_forward.3} parent=1 // pred_check
      _
    $region67: #{transformer_vae_forward.3} parent=1 // pred_check_branch
      %135 = sbr.rel (0) target = $region69
    $region68: #{transformer_vae_forward.3} parent=1 // pred_region
      %137 = vsyncadd [#allocation14], 0
      %s138 = sshll.u32 %s16, 4
      %s139 = int_to_ptr.hbm [resolvable:$true] %s138
      %s140 = sshll.u32 [#allocation13], 4
      %s141 = int_to_ptr.vmem [resolvable:$true] %s140
      %146 = dma.hbm_to_vmem [thread:$0]  %s139, 32, %s141, [#allocation14], 16, 16, 1
    $region69: #{transformer_vae_forward.3} parent=1 // pred_fallthru
      _
    // Predicated region
    $region70: #{transformer_vae_forward.3} parent=1 // pred_check
      _
    $region71: #{transformer_vae_forward.3} parent=1 // pred_check_branch
      %148 = sbr.rel (0) target = $region73
    $region72: #{transformer_vae_forward.3} parent=1 // pred_region
      _
    $region73: #{transformer_vae_forward.3} parent=1 // pred_fallthru
      _
    // Predicated region
    $region74: #{transformer_vae_forward.3} parent=1 // pred_check
      _
    $region75: #{transformer_vae_forward.3} parent=1 // pred_check_branch
      %150 = sbr.rel (0) target = $region77
    $region76: #{transformer_vae_forward.3} parent=1 // pred_region
      %152 = vsyncadd [#allocation14], 0
      %s153 = sshll.u32 %s18, 4
      %s154 = int_to_ptr.hbm [resolvable:$true] %s153
      %s155 = sshll.u32 [#allocation15], 4
      %s156 = int_to_ptr.vmem [resolvable:$true] %s155
      %161 = dma.hbm_to_vmem [thread:$0]  %s154, 32, %s156, [#allocation14], 16, 16, 1
    $region77: #{transformer_vae_forward.3} parent=1 // pred_fallthru
      _
    // Predicated region
    $region78: #{transformer_vae_forward.3} parent=1 // pred_check
      _
    $region79: #{transformer_vae_forward.3} parent=1 // pred_check_branch
      %163 = sbr.rel (0) target = $region81
    $region80: #{transformer_vae_forward.3} parent=1 // pred_region
      %165 = dma.done [#allocation3], 32
    $region81: #{transformer_vae_forward.3} parent=1 // pred_fallthru
      _
    // Predicated region
    $region82: #{transformer_vae_forward.3} parent=1 // pred_check
      _
    $region83: #{transformer_vae_forward.3} parent=1 // pred_check_branch
      %167 = sbr.rel (0) target = $region85
    $region84: #{transformer_vae_forward.3} parent=1 // pred_region
      %169 = dma.done [#allocation5], 16
    $region85: #{transformer_vae_forward.3} parent=1 // pred_fallthru
      _
    // Predicated region
    $region86: #{transformer_vae_forward.3} parent=1 // pred_check
      _
    $region87: #{transformer_vae_forward.3} parent=1 // pred_check_branch
      %171 = sbr.rel (0) target = $region89
    $region88: #{transformer_vae_forward.3} parent=1 // pred_region
      %173 = dma.done [#allocation5], 32
    $region89: #{transformer_vae_forward.3} parent=1 // pred_fallthru
      _
    // Predicated region
    $region90: #{transformer_vae_forward.3} parent=1 // pred_check
      _
    $region91: #{transformer_vae_forward.3} parent=1 // pred_check_branch
      %175 = sbr.rel (0) target = $region93
    $region92: #{transformer_vae_forward.3} parent=1 // pred_region
      %177 = dma.done [#allocation8], 32
    $region93: #{transformer_vae_forward.3} parent=1 // pred_fallthru
      _
    // Predicated region
    $region94: #{transformer_vae_forward.3} parent=1 // pred_check
      _
    $region95: #{transformer_vae_forward.3} parent=1 // pred_check_branch
      %179 = sbr.rel (0) target = $region97
    $region96: #{transformer_vae_forward.3} parent=1 // pred_region
      %181 = dma.done [#allocation8], 32
    $region97: #{transformer_vae_forward.3} parent=1 // pred_fallthru
      _
    // Predicated region
    $region98: #{transformer_vae_forward.3} parent=1 // pred_check
      _
    $region99: #{transformer_vae_forward.3} parent=1 // pred_check_branch
      %183 = sbr.rel (0) target = $region101
    $region100: #{transformer_vae_forward.3} parent=1 // pred_region
      %185 = dma.done [#allocation11], 32
    $region101: #{transformer_vae_forward.3} parent=1 // pred_fallthru
      _
    // Predicated region
    $region102: #{transformer_vae_forward.3} parent=1 // pred_check
      _
    $region103: #{transformer_vae_forward.3} parent=1 // pred_check_branch
      %187 = sbr.rel (0) target = $region105
    $region104: #{transformer_vae_forward.3} parent=1 // pred_region
      %189 = dma.done [#allocation11], 1024
    $region105: #{transformer_vae_forward.3} parent=1 // pred_fallthru
      _
    // Predicated region
    $region106: #{transformer_vae_forward.3} parent=1 // pred_check
      _
    $region107: #{transformer_vae_forward.3} parent=1 // pred_check_branch
      %191 = sbr.rel (0) target = $region109
    $region108: #{transformer_vae_forward.3} parent=1 // pred_region
      %193 = dma.done [#allocation14], 32
    $region109: #{transformer_vae_forward.3} parent=1 // pred_fallthru
      _
    // Predicated region
    $region110: #{transformer_vae_forward.3} parent=1 // pred_check
      _
    $region111: #{transformer_vae_forward.3} parent=1 // pred_check_branch
      %195 = sbr.rel (0) target = $region113
    $region112: #{transformer_vae_forward.3} parent=1 // pred_region
      %197 = dma.done [#allocation14], 32
    $region113: #{transformer_vae_forward.3} parent=1 // pred_fallthru
      _
    %v198 = vld [vmem:[#allocation2] sm:$0x1]
    %v199 = vld [vmem:[%s4] sm:$0x3f]
    %vm200 = vcmask 48128
    %v202 = vsel %vm200, %v198, 0
    %vm204 = vcmask 1045504
    %v206 = vsel %vm204, %v199, 0
    %208 = vmatpush.msra.mxu0 0.0
    %209 = vmatpush.msra.mxu0 0.0
    %210 = vmatpush.msra.mxu0 0.0
    %211 = vmatpush.msra.mxu0 0.0
    %212 = vmatpush.msra.mxu0 0.0
    %213 = vmatpush.msra.mxu0 0.0
    %214 = vmatpush.msra.mxu0 0.0
    %215 = vmatpush.msra.mxu0 0.0
    %216 = vmatpush.msra.mxu0 0.0
    %217 = vmatpush.msra.mxu0 0.0
    %218 = vmatpush.msra.mxu0 0.0
    %219 = vmatpush.msra.mxu0 0.0
    %220 = vmatpush.msra.mxu0 0.0
    %221 = vmatpush.msra.mxu0 0.0
    %222 = vmatpush.msra.mxu0 0.0
    %223 = vmatpush.msra.mxu0 %v206
    %224 = vmatmul.f32.gmra.mxu0 %v202
    %v225 = vpop.f32.mrf.mxu0
    %v226 = vadd.f32 0.0, %v225
    %227 = vdwg.mxu0
    %v229 = vrot.slane %v226, 7
    %230 = vrot.lane.b32.xlu0 %v229, 96
    %v231 = vpop.permute.xlu0 %230
    %vm233 = vcmask 1040384
    %v234 = vsel %vm233, %v226, %v231
    %v235 = vld [vmem:[%s1] sm:$0xff]
    %v236 = vld [vmem:[%s1 + $0x8] sm:$0xf]
    %v237 = vld [vmem:[%s5] sm:$0xff]
    %v238 = vld [vmem:[%s5 + $0x8] sm:$0xff]
    %v239 = vld [vmem:[#allocation4] sm:$0x1]
    %v241 = vperm.slane %v239, 0
    %vm243 = vcmask 130048
    %v245 = vsel %vm243, %v235, 0
    %v248 = vsel %vm243, %v236, 0
    %250 = vmatpush.msra.mxu0 0.0
    %251 = vmatpush.msra.mxu0 0.0
    %252 = vmatpush.msra.mxu0 0.0
    %253 = vmatpush.msra.mxu0 0.0
    %254 = vmatpush.msra.mxu0 0.0
    %255 = vmatpush.msra.mxu0 0.0
    %256 = vmatpush.msra.mxu0 0.0
    %257 = vmatpush.msra.mxu0 0.0
    %258 = vmatpush.msra.mxu0 0.0
    %259 = vmatpush.msra.mxu0 0.0
    %260 = vmatpush.msra.mxu0 0.0
    %261 = vmatpush.msra.mxu0 0.0
    %262 = vmatpush.msra.mxu0 0.0
    %263 = vmatpush.msra.mxu0 0.0
    %264 = vmatpush.msra.mxu0 %v238
    %265 = vmatpush.msra.mxu0 %v237
    %266 = vmatmul.f32.gmra.mxu0 %v245
    %v267 = vpop.f32.mrf.mxu0
    %v268 = vadd.f32 %v241, %v267
    %269 = vmatmul.f32.gmra.mxu0 %v248
    %v270 = vpop.f32.mrf.mxu0
    %v271 = vadd.f32 %v241, %v270
    %272 = vdwg.mxu0
    %vm275 = vcmask 1041408
    %v276 = vrot.slane %v268, 6
    %v277 = vrot.slane %v271, 6
    %v278 = vsel %vm275, %v276, %v277
    %v281 = vsel %vm275, %v234, %v276
    %v282 = vld [vmem:[%s3] sm:$0xff]
    %v283 = vld [vmem:[%s3 + $0x8] sm:$0x3f]
    %v284 = vadd.f32 %v281, %v282
    %v285 = vadd.f32 %v278, %v283
    %v286 = vld [vmem:[%s2] sm:$0x1]
    %vm287 = vcmp.gt.f32.partialorder %v286, 0.5
    %v288 = vsel %vm287, -1e+30, 0.0
    %v289 = vld [vmem:[%s7] sm:$0xff]
    %v290 = vld [vmem:[%s7 + $0x8] sm:$0xff]
    %v291 = vld [vmem:[%s7 + $0x10] sm:$0xff]
    %v292 = vld [vmem:[%s7 + $0x18] sm:$0xff]
    %v293 = vld [vmem:[%s8] sm:$0x1]
    %v294 = vld [vmem:[%s9] sm:$0xff]
    %v295 = vld [vmem:[%s9 + $0x8] sm:$0xff]
    %v296 = vld [vmem:[%s9 + $0x10] sm:$0xff]
    %v297 = vld [vmem:[%s9 + $0x18] sm:$0xff]
    %v298 = vld [vmem:[%s10] sm:$0x1]
    %v299 = vld [vmem:[#allocation6] sm:$0x1]
    %v300 = vld [vmem:[#allocation7] sm:$0x1]
    %v301 = vld [vmem:[#allocation9] sm:$0x1]
    %v302 = vld [vmem:[#allocation10] sm:$0x1]
    %v303 = vld [vmem:[#allocation12] sm:$0xff]
    %v304 = vld [vmem:[#allocation12 + $0x8] sm:$0xff]
    %v305 = vld [vmem:[#allocation12 + $0x10] sm:$0xff]
    %v306 = vld [vmem:[#allocation12 + $0x18] sm:$0xff]
    %v307 = vld [vmem:[#allocation13] sm:$0x1]
    %v308 = vld [vmem:[%s17] sm:$0xff]
    %v309 = vld [vmem:[%s17 + $0x8] sm:$0xff]
    %v310 = vld [vmem:[%s17 + $0x10] sm:$0xff]
    %v311 = vld [vmem:[%s17 + $0x18] sm:$0xff]
    %v312 = vld [vmem:[%s17 + $0x20] sm:$0xff]
    %v313 = vld [vmem:[%s17 + $0x28] sm:$0xff]
    %v314 = vld [vmem:[%s17 + $0x30] sm:$0xff]
    %v315 = vld [vmem:[%s17 + $0x38] sm:$0xff]
    %v316 = vld [vmem:[#allocation15] sm:$0x1]
    %v318 = vperm.slane %v293, 0
    %vm320 = vcmask 261120
    %v322 = vsel %vm320, %v284, 0
    %v325 = vsel %vm320, %v285, 0
    %327 = vmatpush.msra.mxu0 0.0
    %328 = vmatpush.msra.mxu0 0.0
    %329 = vmatpush.msra.mxu0 0.0
    %330 = vmatpush.msra.mxu0 0.0
    %331 = vmatpush.msra.mxu0 0.0
    %332 = vmatpush.msra.mxu0 0.0
    %333 = vmatpush.msra.mxu0 0.0
    %334 = vmatpush.msra.mxu0 0.0
    %335 = vmatpush.msra.mxu0 0.0
    %336 = vmatpush.msra.mxu0 0.0
    %337 = vmatpush.msra.mxu0 0.0
    %338 = vmatpush.msra.mxu0 0.0
    %339 = vmatpush.msra.mxu0 %v292
    %340 = vmatpush.msra.mxu0 %v291
    %341 = vmatpush.msra.mxu0 %v290
    %342 = vmatpush.msra.mxu0 %v289
    %343 = vmatmul.f32.gmra.mxu0 %v322
    %v344 = vpop.f32.mrf.mxu0
    %v345 = vadd.f32 %v318, %v344
    %346 = vmatmul.f32.gmra.mxu0 %v325
    %v347 = vpop.f32.mrf.mxu0
    %v348 = vadd.f32 %v318, %v347
    %349 = vdwg.mxu0
    %352 = vrot.lane.b32.xlu0 %v345, 96
    %v353 = vpop.permute.xlu0 %352
    %354 = vrot.lane.b32.xlu0 %v348, 96
    %v355 = vpop.permute.xlu0 %354
    %v356 = vsel %vm243, %v345, 0
    %v358 = vsel %vm243, %v348, 0
    %v360 = vsel %vm243, %v353, 0
    %v362 = vsel %vm243, %v355, 0
    %364 = vmatpush.xpose.msra.mxu0 0.0
    %365 = vmatpush.xpose.msra.mxu0 0.0
    %366 = vmatpush.xpose.msra.mxu0 0.0
    %367 = vmatpush.xpose.msra.mxu0 0.0
    %368 = vmatpush.xpose.msra.mxu0 0.0
    %369 = vmatpush.xpose.msra.mxu0 0.0
    %370 = vmatpush.xpose.msra.mxu0 0.0
    %371 = vmatpush.xpose.msra.mxu0 0.0
    %372 = vmatpush.xpose.msra.mxu0 0.0
    %373 = vmatpush.xpose.msra.mxu0 0.0
    %374 = vmatpush.xpose.msra.mxu0 0.0
    %375 = vmatpush.xpose.msra.mxu0 0.0
    %376 = vmatpush.xpose.msra.mxu0 0.0
    %377 = vmatpush.xpose.msra.mxu0 0.0
    %378 = vmatpush.xpose.msra.mxu0 %v362
    %379 = vmatpush.xpose.msra.mxu0 %v360
    %380 = vmatmul.f32.gmra.mxu0 %v356
    %v381 = vpop.f32.mrf.mxu0
    %v382 = vadd.f32 0.0, %v381
    %383 = vmatmul.f32.gmra.mxu0 %v358
    %v384 = vpop.f32.mrf.mxu0
    %v385 = vadd.f32 0.0, %v384
    %386 = vdwg.mxu0
    %v387 = vmul.f32 %v382, 0.25
    %v388 = vmul.f32 %v385, 0.25
    %v389 = vperm.slane %v288, 0
    %v390 = vadd.f32 %v387, %v389
    %v391 = vadd.f32 %v388, %v389
    %vm392 = vcmask 113664
    %v393 = vsel %vm392, %v390, -inf
    %394 = vmax.xlane.f32.xlu0 %v393
    %v395 = vpop.xlane.xlu0 %394
    %vm396 = vcmask 111616
    %v397 = vsel %vm396, %v391, -inf
    %398 = vmax.xlane.f32.xlu0 %v397
    %v399 = vpop.xlane.xlu0 %398
    %v400 = vsub.f32 %v390, %v395
    %v401 = vsub.f32 %v391, %v399
    %v402 = vmul.f32 %v400, 1.442695
    %v403 = vpow.pop %v402
    %v404 = vmul.f32 %v401, 1.442695
    %v405 = vpow.pop %v404
    %v406 = vsel %vm392, %v403, 0.0
    %407 = vadd.xlane.f32.xlu0 %v406
    %v408 = vpop.xlane.xlu0 %407
    %v409 = vsel %vm396, %v405, 0.0
    %410 = vadd.xlane.f32.xlu0 %v409
    %v411 = vpop.xlane.xlu0 %410
    %v412 = vrcp.pop %v408
    %v413 = vrcp.pop %v411
    %v414 = vmul.f32 %v403, %v412
    %v415 = vmul.f32 %v405, %v413
    %416 = vrot.lane.b32.xlu0 %v345, 64
    %v417 = vpop.permute.xlu0 %416
    %418 = vrot.lane.b32.xlu0 %v348, 64
    %v419 = vpop.permute.xlu0 %418
    %v422 = vsel %vm392, %v414, 0
    %v425 = vsel %vm392, %v415, 0
    %v427 = vsel %vm204, %v419, 0
    %429 = vmatpush.msra.mxu0 0.0
    %430 = vmatpush.msra.mxu0 0.0
    %431 = vmatpush.msra.mxu0 0.0
    %432 = vmatpush.msra.mxu0 0.0
    %433 = vmatpush.msra.mxu0 0.0
    %434 = vmatpush.msra.mxu0 0.0
    %435 = vmatpush.msra.mxu0 0.0
    %436 = vmatpush.msra.mxu0 0.0
    %437 = vmatpush.msra.mxu0 0.0
    %438 = vmatpush.msra.mxu0 0.0
    %439 = vmatpush.msra.mxu0 0.0
    %440 = vmatpush.msra.mxu0 0.0
    %441 = vmatpush.msra.mxu0 0.0
    %442 = vmatpush.msra.mxu0 0.0
    %443 = vmatpush.msra.mxu0 %v427
    %444 = vmatpush.msra.mxu0 %v417
    %445 = vmatmul.f32.gmra.mxu0 %v422
    %v446 = vpop.f32.mrf.mxu0
    %v447 = vadd.f32 0.0, %v446
    %448 = vmatmul.f32.gmra.mxu0 %v425
    %v449 = vpop.f32.mrf.mxu0
    %v450 = vadd.f32 0.0, %v449
    %451 = vdwg.mxu0
    %452 = vrot.lane.b32.xlu0 %v345, 112
    %v453 = vpop.permute.xlu0 %452
    %454 = vrot.lane.b32.xlu0 %v348, 112
    %v455 = vpop.permute.xlu0 %454
    %456 = vrot.lane.b32.xlu0 %v345, 80
    %v457 = vpop.permute.xlu0 %456
    %458 = vrot.lane.b32.xlu0 %v348, 80
    %v459 = vpop.permute.xlu0 %458
    %v460 = vsel %vm243, %v453, 0
    %v462 = vsel %vm243, %v455, 0
    %v464 = vsel %vm243, %v457, 0
    %v466 = vsel %vm243, %v459, 0
    %468 = vmatpush.xpose.msra.mxu0 0.0
    %469 = vmatpush.xpose.msra.mxu0 0.0
    %470 = vmatpush.xpose.msra.mxu0 0.0
    %471 = vmatpush.xpose.msra.mxu0 0.0
    %472 = vmatpush.xpose.msra.mxu0 0.0
    %473 = vmatpush.xpose.msra.mxu0 0.0
    %474 = vmatpush.xpose.msra.mxu0 0.0
    %475 = vmatpush.xpose.msra.mxu0 0.0
    %476 = vmatpush.xpose.msra.mxu0 0.0
    %477 = vmatpush.xpose.msra.mxu0 0.0
    %478 = vmatpush.xpose.msra.mxu0 0.0
    %479 = vmatpush.xpose.msra.mxu0 0.0
    %480 = vmatpush.xpose.msra.mxu0 0.0
    %481 = vmatpush.xpose.msra.mxu0 0.0
    %482 = vmatpush.xpose.msra.mxu0 %v466
    %483 = vmatpush.xpose.msra.mxu0 %v464
    %484 = vmatmul.f32.gmra.mxu0 %v460
    %v485 = vpop.f32.mrf.mxu0
    %v486 = vadd.f32 0.0, %v485
    %487 = vmatmul.f32.gmra.mxu0 %v462
    %v488 = vpop.f32.mrf.mxu0
    %v489 = vadd.f32 0.0, %v488
    %490 = vdwg.mxu0
    %v491 = vmul.f32 %v486, 0.25
    %v492 = vmul.f32 %v489, 0.25
    %v493 = vadd.f32 %v491, %v389
    %v494 = vadd.f32 %v492, %v389
    %v495 = vsel %vm392, %v493, -inf
    %496 = vmax.xlane.f32.xlu0 %v495
    %v497 = vpop.xlane.xlu0 %496
    %v498 = vsel %vm396, %v494, -inf
    %499 = vmax.xlane.f32.xlu0 %v498
    %v500 = vpop.xlane.xlu0 %499
    %v501 = vsub.f32 %v493, %v497
    %v502 = vsub.f32 %v494, %v500
    %v503 = vmul.f32 %v501, 1.442695
    %v504 = vpow.pop %v503
    %v505 = vmul.f32 %v502, 1.442695
    %v506 = vpow.pop %v505
    %v507 = vsel %vm392, %v504, 0.0
    %508 = vadd.xlane.f32.xlu0 %v507
    %v509 = vpop.xlane.xlu0 %508
    %v510 = vsel %vm396, %v506, 0.0
    %511 = vadd.xlane.f32.xlu0 %v510
    %v512 = vpop.xlane.xlu0 %511
    %v513 = vrcp.pop %v509
    %v514 = vrcp.pop %v512
    %v515 = vmul.f32 %v504, %v513
    %v516 = vmul.f32 %v506, %v514
    %517 = vrot.lane.b32.xlu0 %v345, 48
    %v518 = vpop.permute.xlu0 %517
    %519 = vrot.lane.b32.xlu0 %v348, 48
    %v520 = vpop.permute.xlu0 %519
    %v523 = vsel %vm392, %v515, 0
    %v526 = vsel %vm392, %v516, 0
    %v528 = vsel %vm204, %v520, 0
    %530 = vmatpush.msra.mxu0 0.0
    %531 = vmatpush.msra.mxu0 0.0
    %532 = vmatpush.msra.mxu0 0.0
    %533 = vmatpush.msra.mxu0 0.0
    %534 = vmatpush.msra.mxu0 0.0
    %535 = vmatpush.msra.mxu0 0.0
    %536 = vmatpush.msra.mxu0 0.0
    %537 = vmatpush.msra.mxu0 0.0
    %538 = vmatpush.msra.mxu0 0.0
    %539 = vmatpush.msra.mxu0 0.0
    %540 = vmatpush.msra.mxu0 0.0
    %541 = vmatpush.msra.mxu0 0.0
    %542 = vmatpush.msra.mxu0 0.0
    %543 = vmatpush.msra.mxu0 0.0
    %544 = vmatpush.msra.mxu0 %v528
    %545 = vmatpush.msra.mxu0 %v518
    %546 = vmatmul.f32.gmra.mxu0 %v523
    %v547 = vpop.f32.mrf.mxu0
    %v548 = vadd.f32 0.0, %v547
    %549 = vmatmul.f32.gmra.mxu0 %v526
    %v550 = vpop.f32.mrf.mxu0
    %v551 = vadd.f32 0.0, %v550
    %552 = vdwg.mxu0
    %555 = vrot.lane.b32.xlu0 %v548, 16
    %v556 = vpop.permute.xlu0 %555
    %557 = vrot.lane.b32.xlu0 %v551, 16
    %v558 = vpop.permute.xlu0 %557
    %v561 = vsel %vm243, %v447, %v556
    %v562 = vsel %vm243, %v450, %v558
    %v564 = vperm.slane %v298, 0
    %v567 = vsel %vm320, %v561, 0
    %v570 = vsel %vm320, %v562, 0
    %572 = vmatpush.msra.mxu0 0.0
    %573 = vmatpush.msra.mxu0 0.0
    %574 = vmatpush.msra.mxu0 0.0
    %575 = vmatpush.msra.mxu0 0.0
    %576 = vmatpush.msra.mxu0 0.0
    %577 = vmatpush.msra.mxu0 0.0
    %578 = vmatpush.msra.mxu0 0.0
    %579 = vmatpush.msra.mxu0 0.0
    %580 = vmatpush.msra.mxu0 0.0
    %581 = vmatpush.msra.mxu0 0.0
    %582 = vmatpush.msra.mxu0 0.0
    %583 = vmatpush.msra.mxu0 0.0
    %584 = vmatpush.msra.mxu0 %v297
    %585 = vmatpush.msra.mxu0 %v296
    %586 = vmatpush.msra.mxu0 %v295
    %587 = vmatpush.msra.mxu0 %v294
    %588 = vmatmul.f32.gmra.mxu0 %v567
    %v589 = vpop.f32.mrf.mxu0
    %v590 = vadd.f32 %v564, %v589
    %591 = vmatmul.f32.gmra.mxu0 %v570
    %v592 = vpop.f32.mrf.mxu0
    %v593 = vadd.f32 %v564, %v592
    %594 = vdwg.mxu0
    %v595 = vadd.f32 %v284, %v590
    %v596 = vadd.f32 %v285, %v593
    %v597 = vsel %vm320, %v595, 0.0
    %598 = vadd.xlane.f32.xlu0 %v597
    %v599 = vpop.xlane.xlu0 %598
    %vm600 = vcmask 259072
    %v601 = vsel %vm600, %v596, 0.0
    %602 = vadd.xlane.f32.xlu0 %v601
    %v603 = vpop.xlane.xlu0 %602
    %v604 = vrcp.pop 32.0
    %v605 = vmul.f32 32.0, %v604
    %v606 = vsub.f32 1.0, %v605
    %v607 = vmul.f32 %v604, %v606
    %v608 = vadd.f32 %v604, %v607
    %vm609 = vweird.f32 %v604
    %v610 = vsel %vm609, %v604, %v608
    %v611 = vmul.f32 %v599, %v610
    %v612 = vmul.f32 %v603, %v610
    %v613 = vsub.f32 %v595, %v611
    %v614 = vsub.f32 %v596, %v612
    %v615 = vmul.f32 %v613, %v613
    %v616 = vmul.f32 %v614, %v614
    %v617 = vsel %vm320, %v615, 0.0
    %618 = vadd.xlane.f32.xlu0 %v617
    %v619 = vpop.xlane.xlu0 %618
    %v620 = vsel %vm600, %v616, 0.0
    %621 = vadd.xlane.f32.xlu0 %v620
    %v622 = vpop.xlane.xlu0 %621
    %v623 = vmul.f32 %v619, %v610
    %v624 = vmul.f32 %v622, %v610
    %v625 = vadd.f32 %v623, 1e-05
    %v626 = vadd.f32 %v624, 1e-05
    %v627 = vrsqrt.pop %v625
    %v628 = vmul.f32 %v627, %v625
    %v629 = vmul.f32 %v628, %v627
    %v630 = vmul.f32 0.5, %v629
    %v631 = vsub.f32 1.5, %v630
    %v632 = vmul.f32 %v627, %v631
    %vm633 = vweird.f32 %v625
    %vm634 = vweird.f32 %v627
    %vm635 = vmor %vm633, %vm634
    %v636 = vsel %vm635, %v627, %v632
    %v637 = vrsqrt.pop %v626
    %v638 = vmul.f32 %v637, %v626
    %v639 = vmul.f32 %v638, %v637
    %v640 = vmul.f32 0.5, %v639
    %v641 = vsub.f32 1.5, %v640
    %v642 = vmul.f32 %v637, %v641
    %vm643 = vweird.f32 %v626
    %vm644 = vweird.f32 %v637
    %vm645 = vmor %vm643, %vm644
    %v646 = vsel %vm645, %v637, %v642
    %v647 = vmul.f32 %v613, %v636
    %v648 = vmul.f32 %v614, %v646
    %v650 = vperm.slane %v299, 0
    %v652 = vmul.f32 %v647, %v650
    %v653 = vmul.f32 %v648, %v650
    %v655 = vperm.slane %v300, 0
    %v657 = vadd.f32 %v652, %v655
    %v658 = vadd.f32 %v653, %v655
    %v660 = vperm.slane %v307, 0
    %v663 = vsel %vm320, %v657, 0
    %v666 = vsel %vm320, %v658, 0
    %668 = vmatpush.msra.mxu0 0.0
    %669 = vmatpush.msra.mxu0 0.0
    %670 = vmatpush.msra.mxu0 0.0
    %671 = vmatpush.msra.mxu0 0.0
    %672 = vmatpush.msra.mxu0 0.0
    %673 = vmatpush.msra.mxu0 0.0
    %674 = vmatpush.msra.mxu0 0.0
    %675 = vmatpush.msra.mxu0 0.0
    %676 = vmatpush.msra.mxu0 0.0
    %677 = vmatpush.msra.mxu0 0.0
    %678 = vmatpush.msra.mxu0 0.0
    %679 = vmatpush.msra.mxu0 0.0
    %680 = vmatpush.msra.mxu0 %v306
    %681 = vmatpush.msra.mxu0 %v305
    %682 = vmatpush.msra.mxu0 %v304
    %683 = vmatpush.msra.mxu0 %v303
    %684 = vmatmul.f32.gmra.mxu0 %v663
    %v685 = vpop.f32.mrf.mxu0
    %v686 = vadd.f32 %v660, %v685
    %687 = vmatmul.f32.gmra.mxu0 %v666
    %v688 = vpop.f32.mrf.mxu0
    %v689 = vadd.f32 %v660, %v688
    %690 = vdwg.mxu0
    %v691 = vmul.f32 %v686, %v686
    %v692 = vmul.f32 %v689, %v689
    %v693 = vmul.f32 %v686, %v691
    %v694 = vmul.f32 %v689, %v692
    %v695 = vmul.f32 %v693, 0.044715
    %v696 = vmul.f32 %v694, 0.044715
    %v697 = vadd.f32 %v686, %v695
    %v698 = vadd.f32 %v689, %v696
    %v699 = vmul.f32 %v697, 0.7978846
    %v700 = vmul.f32 %v698, 0.7978846
    %v701 = vtanh.pop %v699
    %v702 = vtanh.pop %v700
    %v703 = vadd.f32 %v701, 1.0
    %v704 = vadd.f32 %v702, 1.0
    %v705 = vmul.f32 %v703, 0.5
    %v706 = vmul.f32 %v704, 0.5
    %v707 = vmul.f32 %v686, %v705
    %v708 = vmul.f32 %v689, %v706
    %v710 = vperm.slane %v316, 0
    %vm712 = vcmask 523264
    %v714 = vsel %vm712, %v707, 0
    %v717 = vsel %vm712, %v708, 0
    %719 = vmatpush.msra.mxu0 0.0
    %720 = vmatpush.msra.mxu0 0.0
    %721 = vmatpush.msra.mxu0 0.0
    %722 = vmatpush.msra.mxu0 0.0
    %723 = vmatpush.msra.mxu0 0.0
    %724 = vmatpush.msra.mxu0 0.0
    %725 = vmatpush.msra.mxu0 0.0
    %726 = vmatpush.msra.mxu0 0.0
    %727 = vmatpush.msra.mxu0 %v315
    %728 = vmatpush.msra.mxu0 %v314
    %729 = vmatpush.msra.mxu0 %v313
    %730 = vmatpush.msra.mxu0 %v312
    %731 = vmatpush.msra.mxu0 %v311
    %732 = vmatpush.msra.mxu0 %v310
    %733 = vmatpush.msra.mxu0 %v309
    %734 = vmatpush.msra.mxu0 %v308
    %735 = vmatmul.f32.gmra.mxu0 %v714
    %v736 = vpop.f32.mrf.mxu0
    %v737 = vadd.f32 %v710, %v736
    %738 = vmatmul.f32.gmra.mxu0 %v717
    %v739 = vpop.f32.mrf.mxu0
    %v740 = vadd.f32 %v710, %v739
    %741 = vdwg.mxu0
    %v742 = vadd.f32 %v657, %v737
    %v743 = vadd.f32 %v658, %v740
    %v744 = vsel %vm320, %v742, 0.0
    %745 = vadd.xlane.f32.xlu0 %v744
    %v746 = vpop.xlane.xlu0 %745
    %v747 = vsel %vm600, %v743, 0.0
    %748 = vadd.xlane.f32.xlu0 %v747
    %v749 = vpop.xlane.xlu0 %748
    %v750 = vmul.f32 %v746, %v610
    %v751 = vmul.f32 %v749, %v610
    %v752 = vsub.f32 %v742, %v750
    %v753 = vsub.f32 %v743, %v751
    %v754 = vmul.f32 %v752, %v752
    %v755 = vmul.f32 %v753, %v753
    %v756 = vsel %vm320, %v754, 0.0
    %757 = vadd.xlane.f32.xlu0 %v756
    %v758 = vpop.xlane.xlu0 %757
    %v759 = vsel %vm600, %v755, 0.0
    %760 = vadd.xlane.f32.xlu0 %v759
    %v761 = vpop.xlane.xlu0 %760
    %v762 = vmul.f32 %v758, %v610
    %v763 = vmul.f32 %v761, %v610
    %v764 = vadd.f32 %v762, 1e-05
    %v765 = vadd.f32 %v763, 1e-05
    %v766 = vrsqrt.pop %v764
    %v767 = vmul.f32 %v766, %v764
    %v768 = vmul.f32 %v767, %v766
    %v769 = vmul.f32 0.5, %v768
    %v770 = vsub.f32 1.5, %v769
    %v771 = vmul.f32 %v766, %v770
    %vm772 = vweird.f32 %v764
    %vm773 = vweird.f32 %v766
    %vm774 = vmor %vm772, %vm773
    %v775 = vsel %vm774, %v766, %v771
    %v776 = vrsqrt.pop %v765
    %v777 = vmul.f32 %v776, %v765
    %v778 = vmul.f32 %v777, %v776
    %v779 = vmul.f32 0.5, %v778
    %v780 = vsub.f32 1.5, %v779
    %v781 = vmul.f32 %v776, %v780
    %vm782 = vweird.f32 %v765
    %vm783 = vweird.f32 %v776
    %vm784 = vmor %vm782, %vm783
    %v785 = vsel %vm784, %v776, %v781
    %v786 = vmul.f32 %v752, %v775
    %v787 = vmul.f32 %v753, %v785
    %v789 = vperm.slane %v301, 0
    %v791 = vmul.f32 %v786, %v789
    %v792 = vmul.f32 %v787, %v789
    %v794 = vperm.slane %v302, 0
    %v796 = vadd.f32 %v791, %v794
    %v797 = vadd.f32 %v792, %v794
    %s798 = scalar_lea.vmem %s7, 32
    %v799 = vld [vmem:[%s798] sm:$0xff]
    %v800 = vld [vmem:[%s798 + $0x8] sm:$0xff]
    %v801 = vld [vmem:[%s798 + $0x10] sm:$0xff]
    %v802 = vld [vmem:[%s798 + $0x18] sm:$0xff]
    %s803 = scalar_lea.vmem %s8, 1
    %v804 = vld [vmem:[%s803] sm:$0x1]
    %s805 = scalar_lea.vmem %s9, 32
    %v806 = vld [vmem:[%s805] sm:$0xff]
    %v807 = vld [vmem:[%s805 + $0x8] sm:$0xff]
    %v808 = vld [vmem:[%s805 + $0x10] sm:$0xff]
    %v809 = vld [vmem:[%s805 + $0x18] sm:$0xff]
    %s810 = scalar_lea.vmem %s10, 1
    %v811 = vld [vmem:[%s810] sm:$0x1]
    %s812 = scalar_lea.vmem [#allocation6], 1
    %v813 = vld [vmem:[%s812] sm:$0x1]
    %s814 = scalar_lea.vmem [#allocation7], 1
    %v815 = vld [vmem:[%s814] sm:$0x1]
    %s816 = scalar_lea.vmem [#allocation9], 1
    %v817 = vld [vmem:[%s816] sm:$0x1]
    %s818 = scalar_lea.vmem [#allocation10], 1
    %v819 = vld [vmem:[%s818] sm:$0x1]
    %s820 = scalar_lea.vmem [#allocation12], 32
    %v821 = vld [vmem:[%s820] sm:$0xff]
    %v822 = vld [vmem:[%s820 + $0x8] sm:$0xff]
    %v823 = vld [vmem:[%s820 + $0x10] sm:$0xff]
    %v824 = vld [vmem:[%s820 + $0x18] sm:$0xff]
    %s825 = scalar_lea.vmem [#allocation13], 1
    %v826 = vld [vmem:[%s825] sm:$0x1]
    %s827 = scalar_lea.vmem %s17, 64
    %v828 = vld [vmem:[%s827] sm:$0xff]
    %v829 = vld [vmem:[%s827 + $0x8] sm:$0xff]
    %v830 = vld [vmem:[%s827 + $0x10] sm:$0xff]
    %v831 = vld [vmem:[%s827 + $0x18] sm:$0xff]
    %v832 = vld [vmem:[%s827 + $0x20] sm:$0xff]
    %v833 = vld [vmem:[%s827 + $0x28] sm:$0xff]
    %v834 = vld [vmem:[%s827 + $0x30] sm:$0xff]
    %v835 = vld [vmem:[%s827 + $0x38] sm:$0xff]
    %s836 = scalar_lea.vmem [#allocation15], 1
    %v837 = vld [vmem:[%s836] sm:$0x1]
    %v839 = vperm.slane %v804, 0
    %v842 = vsel %vm320, %v796, 0
    %v845 = vsel %vm320, %v797, 0
    %847 = vmatpush.msra.mxu0 0.0
    %848 = vmatpush.msra.mxu0 0.0
    %849 = vmatpush.msra.mxu0 0.0
    %850 = vmatpush.msra.mxu0 0.0
    %851 = vmatpush.msra.mxu0 0.0
    %852 = vmatpush.msra.mxu0 0.0
    %853 = vmatpush.msra.mxu0 0.0
    %854 = vmatpush.msra.mxu0 0.0
    %855 = vmatpush.msra.mxu0 0.0
    %856 = vmatpush.msra.mxu0 0.0
    %857 = vmatpush.msra.mxu0 0.0
    %858 = vmatpush.msra.mxu0 0.0
    %859 = vmatpush.msra.mxu0 %v802
    %860 = vmatpush.msra.mxu0 %v801
    %861 = vmatpush.msra.mxu0 %v800
    %862 = vmatpush.msra.mxu0 %v799
    %863 = vmatmul.f32.gmra.mxu0 %v842
    %v864 = vpop.f32.mrf.mxu0
    %v865 = vadd.f32 %v839, %v864
    %866 = vmatmul.f32.gmra.mxu0 %v845
    %v867 = vpop.f32.mrf.mxu0
    %v868 = vadd.f32 %v839, %v867
    %869 = vdwg.mxu0
    %872 = vrot.lane.b32.xlu0 %v865, 96
    %v873 = vpop.permute.xlu0 %872
    %874 = vrot.lane.b32.xlu0 %v868, 96
    %v875 = vpop.permute.xlu0 %874
    %v876 = vsel %vm243, %v865, 0
    %v878 = vsel %vm243, %v868, 0
    %v880 = vsel %vm243, %v873, 0
    %v882 = vsel %vm243, %v875, 0
    %884 = vmatpush.xpose.msra.mxu0 0.0
    %885 = vmatpush.xpose.msra.mxu0 0.0
    %886 = vmatpush.xpose.msra.mxu0 0.0
    %887 = vmatpush.xpose.msra.mxu0 0.0
    %888 = vmatpush.xpose.msra.mxu0 0.0
    %889 = vmatpush.xpose.msra.mxu0 0.0
    %890 = vmatpush.xpose.msra.mxu0 0.0
    %891 = vmatpush.xpose.msra.mxu0 0.0
    %892 = vmatpush.xpose.msra.mxu0 0.0
    %893 = vmatpush.xpose.msra.mxu0 0.0
    %894 = vmatpush.xpose.msra.mxu0 0.0
    %895 = vmatpush.xpose.msra.mxu0 0.0
    %896 = vmatpush.xpose.msra.mxu0 0.0
    %897 = vmatpush.xpose.msra.mxu0 0.0
    %898 = vmatpush.xpose.msra.mxu0 %v882
    %899 = vmatpush.xpose.msra.mxu0 %v880
    %900 = vmatmul.f32.gmra.mxu0 %v876
    %v901 = vpop.f32.mrf.mxu0
    %v902 = vadd.f32 0.0, %v901
    %903 = vmatmul.f32.gmra.mxu0 %v878
    %v904 = vpop.f32.mrf.mxu0
    %v905 = vadd.f32 0.0, %v904
    %906 = vdwg.mxu0
    %v907 = vmul.f32 %v902, 0.25
    %v908 = vmul.f32 %v905, 0.25
    %v909 = vadd.f32 %v907, %v389
    %v910 = vadd.f32 %v908, %v389
    %v911 = vsel %vm392, %v909, -inf
    %912 = vmax.xlane.f32.xlu0 %v911
    %v913 = vpop.xlane.xlu0 %912
    %v914 = vsel %vm396, %v910, -inf
    %915 = vmax.xlane.f32.xlu0 %v914
    %v916 = vpop.xlane.xlu0 %915
    %v917 = vsub.f32 %v909, %v913
    %v918 = vsub.f32 %v910, %v916
    %v919 = vmul.f32 %v917, 1.442695
    %v920 = vpow.pop %v919
    %v921 = vmul.f32 %v918, 1.442695
    %v922 = vpow.pop %v921
    %v923 = vsel %vm392, %v920, 0.0
    %924 = vadd.xlane.f32.xlu0 %v923
    %v925 = vpop.xlane.xlu0 %924
    %v926 = vsel %vm396, %v922, 0.0
    %927 = vadd.xlane.f32.xlu0 %v926
    %v928 = vpop.xlane.xlu0 %927
    %v929 = vrcp.pop %v925
    %v930 = vrcp.pop %v928
    %v931 = vmul.f32 %v920, %v929
    %v932 = vmul.f32 %v922, %v930
    %933 = vrot.lane.b32.xlu0 %v865, 64
    %v934 = vpop.permute.xlu0 %933
    %935 = vrot.lane.b32.xlu0 %v868, 64
    %v936 = vpop.permute.xlu0 %935
    %v939 = vsel %vm392, %v931, 0
    %v942 = vsel %vm392, %v932, 0
    %v944 = vsel %vm204, %v936, 0
    %946 = vmatpush.msra.mxu0 0.0
    %947 = vmatpush.msra.mxu0 0.0
    %948 = vmatpush.msra.mxu0 0.0
    %949 = vmatpush.msra.mxu0 0.0
    %950 = vmatpush.msra.mxu0 0.0
    %951 = vmatpush.msra.mxu0 0.0
    %952 = vmatpush.msra.mxu0 0.0
    %953 = vmatpush.msra.mxu0 0.0
    %954 = vmatpush.msra.mxu0 0.0
    %955 = vmatpush.msra.mxu0 0.0
    %956 = vmatpush.msra.mxu0 0.0
    %957 = vmatpush.msra.mxu0 0.0
    %958 = vmatpush.msra.mxu0 0.0
    %959 = vmatpush.msra.mxu0 0.0
    %960 = vmatpush.msra.mxu0 %v944
    %961 = vmatpush.msra.mxu0 %v934
    %962 = vmatmul.f32.gmra.mxu0 %v939
    %v963 = vpop.f32.mrf.mxu0
    %v964 = vadd.f32 0.0, %v963
    %965 = vmatmul.f32.gmra.mxu0 %v942
    %v966 = vpop.f32.mrf.mxu0
    %v967 = vadd.f32 0.0, %v966
    %968 = vdwg.mxu0
    %969 = vrot.lane.b32.xlu0 %v865, 112
    %v970 = vpop.permute.xlu0 %969
    %971 = vrot.lane.b32.xlu0 %v868, 112
    %v972 = vpop.permute.xlu0 %971
    %973 = vrot.lane.b32.xlu0 %v865, 80
    %v974 = vpop.permute.xlu0 %973
    %975 = vrot.lane.b32.xlu0 %v868, 80
    %v976 = vpop.permute.xlu0 %975
    %v977 = vsel %vm243, %v970, 0
    %v979 = vsel %vm243, %v972, 0
    %v981 = vsel %vm243, %v974, 0
    %v983 = vsel %vm243, %v976, 0
    %985 = vmatpush.xpose.msra.mxu0 0.0
    %986 = vmatpush.xpose.msra.mxu0 0.0
    %987 = vmatpush.xpose.msra.mxu0 0.0
    %988 = vmatpush.xpose.msra.mxu0 0.0
    %989 = vmatpush.xpose.msra.mxu0 0.0
    %990 = vmatpush.xpose.msra.mxu0 0.0
    %991 = vmatpush.xpose.msra.mxu0 0.0
    %992 = vmatpush.xpose.msra.mxu0 0.0
    %993 = vmatpush.xpose.msra.mxu0 0.0
    %994 = vmatpush.xpose.msra.mxu0 0.0
    %995 = vmatpush.xpose.msra.mxu0 0.0
    %996 = vmatpush.xpose.msra.mxu0 0.0
    %997 = vmatpush.xpose.msra.mxu0 0.0
    %998 = vmatpush.xpose.msra.mxu0 0.0
    %999 = vmatpush.xpose.msra.mxu0 %v983
    %1000 = vmatpush.xpose.msra.mxu0 %v981
    %1001 = vmatmul.f32.gmra.mxu0 %v977
    %v1002 = vpop.f32.mrf.mxu0
    %v1003 = vadd.f32 0.0, %v1002
    %1004 = vmatmul.f32.gmra.mxu0 %v979
    %v1005 = vpop.f32.mrf.mxu0
    %v1006 = vadd.f32 0.0, %v1005
    %1007 = vdwg.mxu0
    %v1008 = vmul.f32 %v1003, 0.25
    %v1009 = vmul.f32 %v1006, 0.25
    %v1010 = vadd.f32 %v1008, %v389
    %v1011 = vadd.f32 %v1009, %v389
    %v1012 = vsel %vm392, %v1010, -inf
    %1013 = vmax.xlane.f32.xlu0 %v1012
    %v1014 = vpop.xlane.xlu0 %1013
    %v1015 = vsel %vm396, %v1011, -inf
    %1016 = vmax.xlane.f32.xlu0 %v1015
    %v1017 = vpop.xlane.xlu0 %1016
    %v1018 = vsub.f32 %v1010, %v1014
    %v1019 = vsub.f32 %v1011, %v1017
    %v1020 = vmul.f32 %v1018, 1.442695
    %v1021 = vpow.pop %v1020
    %v1022 = vmul.f32 %v1019, 1.442695
    %v1023 = vpow.pop %v1022
    %v1024 = vsel %vm392, %v1021, 0.0
    %1025 = vadd.xlane.f32.xlu0 %v1024
    %v1026 = vpop.xlane.xlu0 %1025
    %v1027 = vsel %vm396, %v1023, 0.0
    %1028 = vadd.xlane.f32.xlu0 %v1027
    %v1029 = vpop.xlane.xlu0 %1028
    %v1030 = vrcp.pop %v1026
    %v1031 = vrcp.pop %v1029
    %v1032 = vmul.f32 %v1021, %v1030
    %v1033 = vmul.f32 %v1023, %v1031
    %1034 = vrot.lane.b32.xlu0 %v865, 48
    %v1035 = vpop.permute.xlu0 %1034
    %1036 = vrot.lane.b32.xlu0 %v868, 48
    %v1037 = vpop.permute.xlu0 %1036
    %v1040 = vsel %vm392, %v1032, 0
    %v1043 = vsel %vm392, %v1033, 0
    %v1045 = vsel %vm204, %v1037, 0
    %1047 = vmatpush.msra.mxu0 0.0
    %1048 = vmatpush.msra.mxu0 0.0
    %1049 = vmatpush.msra.mxu0 0.0
    %1050 = vmatpush.msra.mxu0 0.0
    %1051 = vmatpush.msra.mxu0 0.0
    %1052 = vmatpush.msra.mxu0 0.0
    %1053 = vmatpush.msra.mxu0 0.0
    %1054 = vmatpush.msra.mxu0 0.0
    %1055 = vmatpush.msra.mxu0 0.0
    %1056 = vmatpush.msra.mxu0 0.0
    %1057 = vmatpush.msra.mxu0 0.0
    %1058 = vmatpush.msra.mxu0 0.0
    %1059 = vmatpush.msra.mxu0 0.0
    %1060 = vmatpush.msra.mxu0 0.0
    %1061 = vmatpush.msra.mxu0 %v1045
    %1062 = vmatpush.msra.mxu0 %v1035
    %1063 = vmatmul.f32.gmra.mxu0 %v1040
    %v1064 = vpop.f32.mrf.mxu0
    %v1065 = vadd.f32 0.0, %v1064
    %1066 = vmatmul.f32.gmra.mxu0 %v1043
    %v1067 = vpop.f32.mrf.mxu0
    %v1068 = vadd.f32 0.0, %v1067
    %1069 = vdwg.mxu0
    %1072 = vrot.lane.b32.xlu0 %v1065, 16
    %v1073 = vpop.permute.xlu0 %1072
    %1074 = vrot.lane.b32.xlu0 %v1068, 16
    %v1075 = vpop.permute.xlu0 %1074
    %v1078 = vsel %vm243, %v964, %v1073
    %v1079 = vsel %vm243, %v967, %v1075
    %v1081 = vperm.slane %v811, 0
    %v1084 = vsel %vm320, %v1078, 0
    %v1087 = vsel %vm320, %v1079, 0
    %1089 = vmatpush.msra.mxu0 0.0
    %1090 = vmatpush.msra.mxu0 0.0
    %1091 = vmatpush.msra.mxu0 0.0
    %1092 = vmatpush.msra.mxu0 0.0
    %1093 = vmatpush.msra.mxu0 0.0
    %1094 = vmatpush.msra.mxu0 0.0
    %1095 = vmatpush.msra.mxu0 0.0
    %1096 = vmatpush.msra.mxu0 0.0
    %1097 = vmatpush.msra.mxu0 0.0
    %1098 = vmatpush.msra.mxu0 0.0
    %1099 = vmatpush.msra.mxu0 0.0
    %1100 = vmatpush.msra.mxu0 0.0
    %1101 = vmatpush.msra.mxu0 %v809
    %1102 = vmatpush.msra.mxu0 %v808
    %1103 = vmatpush.msra.mxu0 %v807
    %1104 = vmatpush.msra.mxu0 %v806
    %1105 = vmatmul.f32.gmra.mxu0 %v1084
    %v1106 = vpop.f32.mrf.mxu0
    %v1107 = vadd.f32 %v1081, %v1106
    %1108 = vmatmul.f32.gmra.mxu0 %v1087
    %v1109 = vpop.f32.mrf.mxu0
    %v1110 = vadd.f32 %v1081, %v1109
    %1111 = vdwg.mxu0
    %v1112 = vadd.f32 %v796, %v1107
    %v1113 = vadd.f32 %v797, %v1110
    %v1114 = vsel %vm320, %v1112, 0.0
    %1115 = vadd.xlane.f32.xlu0 %v1114
    %v1116 = vpop.xlane.xlu0 %1115
    %v1117 = vsel %vm600, %v1113, 0.0
    %1118 = vadd.xlane.f32.xlu0 %v1117
    %v1119 = vpop.xlane.xlu0 %1118
    %v1120 = vmul.f32 %v1116, %v610
    %v1121 = vmul.f32 %v1119, %v610
    %v1122 = vsub.f32 %v1112, %v1120
    %v1123 = vsub.f32 %v1113, %v1121
    %v1124 = vmul.f32 %v1122, %v1122
    %v1125 = vmul.f32 %v1123, %v1123
    %v1126 = vsel %vm320, %v1124, 0.0
    %1127 = vadd.xlane.f32.xlu0 %v1126
    %v1128 = vpop.xlane.xlu0 %1127
    %v1129 = vsel %vm600, %v1125, 0.0
    %1130 = vadd.xlane.f32.xlu0 %v1129
    %v1131 = vpop.xlane.xlu0 %1130
    %v1132 = vmul.f32 %v1128, %v610
    %v1133 = vmul.f32 %v1131, %v610
    %v1134 = vadd.f32 %v1132, 1e-05
    %v1135 = vadd.f32 %v1133, 1e-05
    %v1136 = vrsqrt.pop %v1134
    %v1137 = vmul.f32 %v1136, %v1134
    %v1138 = vmul.f32 %v1137, %v1136
    %v1139 = vmul.f32 0.5, %v1138
    %v1140 = vsub.f32 1.5, %v1139
    %v1141 = vmul.f32 %v1136, %v1140
    %vm1142 = vweird.f32 %v1134
    %vm1143 = vweird.f32 %v1136
    %vm1144 = vmor %vm1142, %vm1143
    %v1145 = vsel %vm1144, %v1136, %v1141
    %v1146 = vrsqrt.pop %v1135
    %v1147 = vmul.f32 %v1146, %v1135
    %v1148 = vmul.f32 %v1147, %v1146
    %v1149 = vmul.f32 0.5, %v1148
    %v1150 = vsub.f32 1.5, %v1149
    %v1151 = vmul.f32 %v1146, %v1150
    %vm1152 = vweird.f32 %v1135
    %vm1153 = vweird.f32 %v1146
    %vm1154 = vmor %vm1152, %vm1153
    %v1155 = vsel %vm1154, %v1146, %v1151
    %v1156 = vmul.f32 %v1122, %v1145
    %v1157 = vmul.f32 %v1123, %v1155
    %v1159 = vperm.slane %v813, 0
    %v1161 = vmul.f32 %v1156, %v1159
    %v1162 = vmul.f32 %v1157, %v1159
    %v1164 = vperm.slane %v815, 0
    %v1166 = vadd.f32 %v1161, %v1164
    %v1167 = vadd.f32 %v1162, %v1164
    %v1169 = vperm.slane %v826, 0
    %v1172 = vsel %vm320, %v1166, 0
    %v1175 = vsel %vm320, %v1167, 0
    %1177 = vmatpush.msra.mxu0 0.0
    %1178 = vmatpush.msra.mxu0 0.0
    %1179 = vmatpush.msra.mxu0 0.0
    %1180 = vmatpush.msra.mxu0 0.0
    %1181 = vmatpush.msra.mxu0 0.0
    %1182 = vmatpush.msra.mxu0 0.0
    %1183 = vmatpush.msra.mxu0 0.0
    %1184 = vmatpush.msra.mxu0 0.0
    %1185 = vmatpush.msra.mxu0 0.0
    %1186 = vmatpush.msra.mxu0 0.0
    %1187 = vmatpush.msra.mxu0 0.0
    %1188 = vmatpush.msra.mxu0 0.0
    %1189 = vmatpush.msra.mxu0 %v824
    %1190 = vmatpush.msra.mxu0 %v823
    %1191 = vmatpush.msra.mxu0 %v822
    %1192 = vmatpush.msra.mxu0 %v821
    %1193 = vmatmul.f32.gmra.mxu0 %v1172
    %v1194 = vpop.f32.mrf.mxu0
    %v1195 = vadd.f32 %v1169, %v1194
    %1196 = vmatmul.f32.gmra.mxu0 %v1175
    %v1197 = vpop.f32.mrf.mxu0
    %v1198 = vadd.f32 %v1169, %v1197
    %1199 = vdwg.mxu0
    %v1200 = vmul.f32 %v1195, %v1195
    %v1201 = vmul.f32 %v1198, %v1198
    %v1202 = vmul.f32 %v1195, %v1200
    %v1203 = vmul.f32 %v1198, %v1201
    %v1204 = vmul.f32 %v1202, 0.044715
    %v1205 = vmul.f32 %v1203, 0.044715
    %v1206 = vadd.f32 %v1195, %v1204
    %v1207 = vadd.f32 %v1198, %v1205
    %v1208 = vmul.f32 %v1206, 0.7978846
    %v1209 = vmul.f32 %v1207, 0.7978846
    %v1210 = vtanh.pop %v1208
    %v1211 = vtanh.pop %v1209
    %v1212 = vadd.f32 %v1210, 1.0
    %v1213 = vadd.f32 %v1211, 1.0
    %v1214 = vmul.f32 %v1212, 0.5
    %v1215 = vmul.f32 %v1213, 0.5
    %v1216 = vmul.f32 %v1195, %v1214
    %v1217 = vmul.f32 %v1198, %v1215
    %v1219 = vperm.slane %v837, 0
    %v1222 = vsel %vm712, %v1216, 0
    %v1225 = vsel %vm712, %v1217, 0
    %1227 = vmatpush.msra.mxu0 0.0
    %1228 = vmatpush.msra.mxu0 0.0
    %1229 = vmatpush.msra.mxu0 0.0
    %1230 = vmatpush.msra.mxu0 0.0
    %1231 = vmatpush.msra.mxu0 0.0
    %1232 = vmatpush.msra.mxu0 0.0
    %1233 = vmatpush.msra.mxu0 0.0
    %1234 = vmatpush.msra.mxu0 0.0
    %1235 = vmatpush.msra.mxu0 %v835
    %1236 = vmatpush.msra.mxu0 %v834
    %1237 = vmatpush.msra.mxu0 %v833
    %1238 = vmatpush.msra.mxu0 %v832
    %1239 = vmatpush.msra.mxu0 %v831
    %1240 = vmatpush.msra.mxu0 %v830
    %1241 = vmatpush.msra.mxu0 %v829
    %1242 = vmatpush.msra.mxu0 %v828
    %1243 = vmatmul.f32.gmra.mxu0 %v1222
    %v1244 = vpop.f32.mrf.mxu0
    %v1245 = vadd.f32 %v1219, %v1244
    %1246 = vmatmul.f32.gmra.mxu0 %v1225
    %v1247 = vpop.f32.mrf.mxu0
    %1248 = vdwg.mxu0
    %v1249 = vadd.f32 %v1166, %v1245
    %v1250 = vsel %vm320, %v1249, 0.0
    %1251 = vadd.xlane.f32.xlu0 %v1250
    %v1252 = vpop.xlane.xlu0 %1251
    %v1253 = vmul.f32 %v1252, %v610
    %v1254 = vsub.f32 %v1249, %v1253
    %v1255 = vmul.f32 %v1254, %v1254
    %v1256 = vsel %vm320, %v1255, 0.0
    %1257 = vadd.xlane.f32.xlu0 %v1256
    %v1258 = vpop.xlane.xlu0 %1257
    %v1259 = vmul.f32 %v1258, %v610
    %v1260 = vadd.f32 %v1259, 1e-05
    %v1261 = vrsqrt.pop %v1260
    %v1262 = vmul.f32 %v1261, %v1260
    %v1263 = vmul.f32 %v1262, %v1261
    %v1264 = vmul.f32 0.5, %v1263
    %v1265 = vsub.f32 1.5, %v1264
    %v1266 = vmul.f32 %v1261, %v1265
    %vm1267 = vweird.f32 %v1260
    %vm1268 = vweird.f32 %v1261
    %vm1269 = vmor %vm1267, %vm1268
    %v1270 = vsel %vm1269, %v1261, %v1266
    %v1271 = vmul.f32 %v1254, %v1270
    %v1273 = vperm.slane %v817, 0
    %v1275 = vmul.f32 %v1271, %v1273
    %v1277 = vperm.slane %v819, 0
    %v1279 = vadd.f32 %v1275, %v1277
    %vm1280 = vcmask 254976
    %1281 = vst.msk [vmem:[%s19] sm:$0x3] %vm1280, %v1279
    %v1282 = vld [vmem:[#allocation2 + $0x1] sm:$0x1]
    %v1283 = vld [vmem:[%s4] sm:$0x3f]
    %v1285 = vsel %vm200, %v1282, 0
    %v1288 = vsel %vm204, %v1283, 0
    %1290 = vmatpush.msra.mxu0 0.0
    %1291 = vmatpush.msra.mxu0 0.0
    %1292 = vmatpush.msra.mxu0 0.0
    %1293 = vmatpush.msra.mxu0 0.0
    %1294 = vmatpush.msra.mxu0 0.0
    %1295 = vmatpush.msra.mxu0 0.0
    %1296 = vmatpush.msra.mxu0 0.0
    %1297 = vmatpush.msra.mxu0 0.0
    %1298 = vmatpush.msra.mxu0 0.0
    %1299 = vmatpush.msra.mxu0 0.0
    %1300 = vmatpush.msra.mxu0 0.0
    %1301 = vmatpush.msra.mxu0 0.0
    %1302 = vmatpush.msra.mxu0 0.0
    %1303 = vmatpush.msra.mxu0 0.0
    %1304 = vmatpush.msra.mxu0 0.0
    %1305 = vmatpush.msra.mxu0 %v1288
    %1306 = vmatmul.f32.gmra.mxu0 %v1285
    %v1307 = vpop.f32.mrf.mxu0
    %v1308 = vadd.f32 0.0, %v1307
    %1309 = vdwg.mxu0
    %v1311 = vrot.slane %v1308, 7
    %1312 = vrot.lane.b32.xlu0 %v1311, 96
    %v1313 = vpop.permute.xlu0 %1312
    %v1315 = vsel %vm233, %v1308, %v1313
    %s1316 = scalar_lea.vmem %s1, 16
    %v1317 = vld [vmem:[%s1316] sm:$0xff]
    %v1318 = vld [vmem:[%s1316 + $0x8] sm:$0xf]
    %v1319 = vld [vmem:[%s5] sm:$0xff]
    %v1320 = vld [vmem:[%s5 + $0x8] sm:$0xff]
    %v1321 = vld [vmem:[#allocation4] sm:$0x1]
    %v1323 = vperm.slane %v1321, 0
    %v1326 = vsel %vm243, %v1317, 0
    %v1329 = vsel %vm243, %v1318, 0
    %1331 = vmatpush.msra.mxu0 0.0
    %1332 = vmatpush.msra.mxu0 0.0
    %1333 = vmatpush.msra.mxu0 0.0
    %1334 = vmatpush.msra.mxu0 0.0
    %1335 = vmatpush.msra.mxu0 0.0
    %1336 = vmatpush.msra.mxu0 0.0
    %1337 = vmatpush.msra.mxu0 0.0
    %1338 = vmatpush.msra.mxu0 0.0
    %1339 = vmatpush.msra.mxu0 0.0
    %1340 = vmatpush.msra.mxu0 0.0
    %1341 = vmatpush.msra.mxu0 0.0
    %1342 = vmatpush.msra.mxu0 0.0
    %1343 = vmatpush.msra.mxu0 0.0
    %1344 = vmatpush.msra.mxu0 0.0
    %1345 = vmatpush.msra.mxu0 %v1320
    %1346 = vmatpush.msra.mxu0 %v1319
    %1347 = vmatmul.f32.gmra.mxu0 %v1326
    %v1348 = vpop.f32.mrf.mxu0
    %v1349 = vadd.f32 %v1323, %v1348
    %1350 = vmatmul.f32.gmra.mxu0 %v1329
    %v1351 = vpop.f32.mrf.mxu0
    %v1352 = vadd.f32 %v1323, %v1351
    %1353 = vdwg.mxu0
    %v1356 = vrot.slane %v1349, 6
    %v1357 = vrot.slane %v1352, 6
    %v1358 = vsel %vm275, %v1356, %v1357
    %v1361 = vsel %vm275, %v1315, %v1356
    %v1362 = vld [vmem:[%s3] sm:$0xff]
    %v1363 = vld [vmem:[%s3 + $0x8] sm:$0x3f]
    %v1364 = vadd.f32 %v1361, %v1362
    %v1365 = vadd.f32 %v1358, %v1363
    %v1366 = vld [vmem:[%s2 + $0x1] sm:$0x1]
    %vm1367 = vcmp.gt.f32.partialorder %v1366, 0.5
    %v1368 = vsel %vm1367, -1e+30, 0.0
    %v1369 = vld [vmem:[%s7] sm:$0xff]
    %v1370 = vld [vmem:[%s7 + $0x8] sm:$0xff]
    %v1371 = vld [vmem:[%s7 + $0x10] sm:$0xff]
    %v1372 = vld [vmem:[%s7 + $0x18] sm:$0xff]
    %v1373 = vld [vmem:[%s8] sm:$0x1]
    %v1374 = vld [vmem:[%s9] sm:$0xff]
    %v1375 = vld [vmem:[%s9 + $0x8] sm:$0xff]
    %v1376 = vld [vmem:[%s9 + $0x10] sm:$0xff]
    %v1377 = vld [vmem:[%s9 + $0x18] sm:$0xff]
    %v1378 = vld [vmem:[%s10] sm:$0x1]
    %v1379 = vld [vmem:[#allocation6] sm:$0x1]
    %v1380 = vld [vmem:[#allocation7] sm:$0x1]
    %v1381 = vld [vmem:[#allocation9] sm:$0x1]
    %v1382 = vld [vmem:[#allocation10] sm:$0x1]
    %v1383 = vld [vmem:[#allocation12] sm:$0xff]
    %v1384 = vld [vmem:[#allocation12 + $0x8] sm:$0xff]
    %v1385 = vld [vmem:[#allocation12 + $0x10] sm:$0xff]
    %v1386 = vld [vmem:[#allocation12 + $0x18] sm:$0xff]
    %v1387 = vld [vmem:[#allocation13] sm:$0x1]
    %v1388 = vld [vmem:[%s17] sm:$0xff]
    %v1389 = vld [vmem:[%s17 + $0x8] sm:$0xff]
    %v1390 = vld [vmem:[%s17 + $0x10] sm:$0xff]
    %v1391 = vld [vmem:[%s17 + $0x18] sm:$0xff]
    %v1392 = vld [vmem:[%s17 + $0x20] sm:$0xff]
    %v1393 = vld [vmem:[%s17 + $0x28] sm:$0xff]
    %v1394 = vld [vmem:[%s17 + $0x30] sm:$0xff]
    %v1395 = vld [vmem:[%s17 + $0x38] sm:$0xff]
    %v1396 = vld [vmem:[#allocation15] sm:$0x1]
    %v1398 = vperm.slane %v1373, 0
    %v1401 = vsel %vm320, %v1364, 0
    %v1404 = vsel %vm320, %v1365, 0
    %1406 = vmatpush.msra.mxu0 0.0
    %1407 = vmatpush.msra.mxu0 0.0
    %1408 = vmatpush.msra.mxu0 0.0
    %1409 = vmatpush.msra.mxu0 0.0
    %1410 = vmatpush.msra.mxu0 0.0
    %1411 = vmatpush.msra.mxu0 0.0
    %1412 = vmatpush.msra.mxu0 0.0
    %1413 = vmatpush.msra.mxu0 0.0
    %1414 = vmatpush.msra.mxu0 0.0
    %1415 = vmatpush.msra.mxu0 0.0
    %1416 = vmatpush.msra.mxu0 0.0
    %1417 = vmatpush.msra.mxu0 0.0
    %1418 = vmatpush.msra.mxu0 %v1372
    %1419 = vmatpush.msra.mxu0 %v1371
    %1420 = vmatpush.msra.mxu0 %v1370
    %1421 = vmatpush.msra.mxu0 %v1369
    %1422 = vmatmul.f32.gmra.mxu0 %v1401
    %v1423 = vpop.f32.mrf.mxu0
    %v1424 = vadd.f32 %v1398, %v1423
    %1425 = vmatmul.f32.gmra.mxu0 %v1404
    %v1426 = vpop.f32.mrf.mxu0
    %v1427 = vadd.f32 %v1398, %v1426
    %1428 = vdwg.mxu0
    %1431 = vrot.lane.b32.xlu0 %v1424, 96
    %v1432 = vpop.permute.xlu0 %1431
    %1433 = vrot.lane.b32.xlu0 %v1427, 96
    %v1434 = vpop.permute.xlu0 %1433
    %v1435 = vsel %vm243, %v1424, 0
    %v1437 = vsel %vm243, %v1427, 0
    %v1439 = vsel %vm243, %v1432, 0
    %v1441 = vsel %vm243, %v1434, 0
    %1443 = vmatpush.xpose.msra.mxu0 0.0
    %1444 = vmatpush.xpose.msra.mxu0 0.0
    %1445 = vmatpush.xpose.msra.mxu0 0.0
    %1446 = vmatpush.xpose.msra.mxu0 0.0
    %1447 = vmatpush.xpose.msra.mxu0 0.0
    %1448 = vmatpush.xpose.msra.mxu0 0.0
    %1449 = vmatpush.xpose.msra.mxu0 0.0
    %1450 = vmatpush.xpose.msra.mxu0 0.0
    %1451 = vmatpush.xpose.msra.mxu0 0.0
    %1452 = vmatpush.xpose.msra.mxu0 0.0
    %1453 = vmatpush.xpose.msra.mxu0 0.0
    %1454 = vmatpush.xpose.msra.mxu0 0.0
    %1455 = vmatpush.xpose.msra.mxu0 0.0
    %1456 = vmatpush.xpose.msra.mxu0 0.0
    %1457 = vmatpush.xpose.msra.mxu0 %v1441
    %1458 = vmatpush.xpose.msra.mxu0 %v1439
    %1459 = vmatmul.f32.gmra.mxu0 %v1435
    %v1460 = vpop.f32.mrf.mxu0
    %v1461 = vadd.f32 0.0, %v1460
    %1462 = vmatmul.f32.gmra.mxu0 %v1437
    %v1463 = vpop.f32.mrf.mxu0
    %v1464 = vadd.f32 0.0, %v1463
    %1465 = vdwg.mxu0
    %v1466 = vmul.f32 %v1461, 0.25
    %v1467 = vmul.f32 %v1464, 0.25
    %v1468 = vperm.slane %v1368, 0
    %v1469 = vadd.f32 %v1466, %v1468
    %v1470 = vadd.f32 %v1467, %v1468
    %v1471 = vsel %vm392, %v1469, -inf
    %1472 = vmax.xlane.f32.xlu0 %v1471
    %v1473 = vpop.xlane.xlu0 %1472
    %v1474 = vsel %vm396, %v1470, -inf
    %1475 = vmax.xlane.f32.xlu0 %v1474
    %v1476 = vpop.xlane.xlu0 %1475
    %v1477 = vsub.f32 %v1469, %v1473
    %v1478 = vsub.f32 %v1470, %v1476
    %v1479 = vmul.f32 %v1477, 1.442695
    %v1480 = vpow.pop %v1479
    %v1481 = vmul.f32 %v1478, 1.442695
    %v1482 = vpow.pop %v1481
    %v1483 = vsel %vm392, %v1480, 0.0
    %1484 = vadd.xlane.f32.xlu0 %v1483
    %v1485 = vpop.xlane.xlu0 %1484
    %v1486 = vsel %vm396, %v1482, 0.0
    %1487 = vadd.xlane.f32.xlu0 %v1486
    %v1488 = vpop.xlane.xlu0 %1487
    %v1489 = vrcp.pop %v1485
    %v1490 = vrcp.pop %v1488
    %v1491 = vmul.f32 %v1480, %v1489
    %v1492 = vmul.f32 %v1482, %v1490
    %1493 = vrot.lane.b32.xlu0 %v1424, 64
    %v1494 = vpop.permute.xlu0 %1493
    %1495 = vrot.lane.b32.xlu0 %v1427, 64
    %v1496 = vpop.permute.xlu0 %1495
    %v1499 = vsel %vm392, %v1491, 0
    %v1502 = vsel %vm392, %v1492, 0
    %v1504 = vsel %vm204, %v1496, 0
    %1506 = vmatpush.msra.mxu0 0.0
    %1507 = vmatpush.msra.mxu0 0.0
    %1508 = vmatpush.msra.mxu0 0.0
    %1509 = vmatpush.msra.mxu0 0.0
    %1510 = vmatpush.msra.mxu0 0.0
    %1511 = vmatpush.msra.mxu0 0.0
    %1512 = vmatpush.msra.mxu0 0.0
    %1513 = vmatpush.msra.mxu0 0.0
    %1514 = vmatpush.msra.mxu0 0.0
    %1515 = vmatpush.msra.mxu0 0.0
    %1516 = vmatpush.msra.mxu0 0.0
    %1517 = vmatpush.msra.mxu0 0.0
    %1518 = vmatpush.msra.mxu0 0.0
    %1519 = vmatpush.msra.mxu0 0.0
    %1520 = vmatpush.msra.mxu0 %v1504
    %1521 = vmatpush.msra.mxu0 %v1494
    %1522 = vmatmul.f32.gmra.mxu0 %v1499
    %v1523 = vpop.f32.mrf.mxu0
    %v1524 = vadd.f32 0.0, %v1523
    %1525 = vmatmul.f32.gmra.mxu0 %v1502
    %v1526 = vpop.f32.mrf.mxu0
    %v1527 = vadd.f32 0.0, %v1526
    %1528 = vdwg.mxu0
    %1529 = vrot.lane.b32.xlu0 %v1424, 112
    %v1530 = vpop.permute.xlu0 %1529
    %1531 = vrot.lane.b32.xlu0 %v1427, 112
    %v1532 = vpop.permute.xlu0 %1531
    %1533 = vrot.lane.b32.xlu0 %v1424, 80
    %v1534 = vpop.permute.xlu0 %1533
    %1535 = vrot.lane.b32.xlu0 %v1427, 80
    %v1536 = vpop.permute.xlu0 %1535
    %v1537 = vsel %vm243, %v1530, 0
    %v1539 = vsel %vm243, %v1532, 0
    %v1541 = vsel %vm243, %v1534, 0
    %v1543 = vsel %vm243, %v1536, 0
    %1545 = vmatpush.xpose.msra.mxu0 0.0
    %1546 = vmatpush.xpose.msra.mxu0 0.0
    %1547 = vmatpush.xpose.msra.mxu0 0.0
    %1548 = vmatpush.xpose.msra.mxu0 0.0
    %1549 = vmatpush.xpose.msra.mxu0 0.0
    %1550 = vmatpush.xpose.msra.mxu0 0.0
    %1551 = vmatpush.xpose.msra.mxu0 0.0
    %1552 = vmatpush.xpose.msra.mxu0 0.0
    %1553 = vmatpush.xpose.msra.mxu0 0.0
    %1554 = vmatpush.xpose.msra.mxu0 0.0
    %1555 = vmatpush.xpose.msra.mxu0 0.0
    %1556 = vmatpush.xpose.msra.mxu0 0.0
    %1557 = vmatpush.xpose.msra.mxu0 0.0
    %1558 = vmatpush.xpose.msra.mxu0 0.0
    %1559 = vmatpush.xpose.msra.mxu0 %v1543
    %1560 = vmatpush.xpose.msra.mxu0 %v1541
    %1561 = vmatmul.f32.gmra.mxu0 %v1537
    %v1562 = vpop.f32.mrf.mxu0
    %v1563 = vadd.f32 0.0, %v1562
    %1564 = vmatmul.f32.gmra.mxu0 %v1539
    %v1565 = vpop.f32.mrf.mxu0
    %v1566 = vadd.f32 0.0, %v1565
    %1567 = vdwg.mxu0
    %v1568 = vmul.f32 %v1563, 0.25
    %v1569 = vmul.f32 %v1566, 0.25
    %v1570 = vadd.f32 %v1568, %v1468
    %v1571 = vadd.f32 %v1569, %v1468
    %v1572 = vsel %vm392, %v1570, -inf
    %1573 = vmax.xlane.f32.xlu0 %v1572
    %v1574 = vpop.xlane.xlu0 %1573
    %v1575 = vsel %vm396, %v1571, -inf
    %1576 = vmax.xlane.f32.xlu0 %v1575
    %v1577 = vpop.xlane.xlu0 %1576
    %v1578 = vsub.f32 %v1570, %v1574
    %v1579 = vsub.f32 %v1571, %v1577
    %v1580 = vmul.f32 %v1578, 1.442695
    %v1581 = vpow.pop %v1580
    %v1582 = vmul.f32 %v1579, 1.442695
    %v1583 = vpow.pop %v1582
    %v1584 = vsel %vm392, %v1581, 0.0
    %1585 = vadd.xlane.f32.xlu0 %v1584
    %v1586 = vpop.xlane.xlu0 %1585
    %v1587 = vsel %vm396, %v1583, 0.0
    %1588 = vadd.xlane.f32.xlu0 %v1587
    %v1589 = vpop.xlane.xlu0 %1588
    %v1590 = vrcp.pop %v1586
    %v1591 = vrcp.pop %v1589
    %v1592 = vmul.f32 %v1581, %v1590
    %v1593 = vmul.f32 %v1583, %v1591
    %1594 = vrot.lane.b32.xlu0 %v1424, 48
    %v1595 = vpop.permute.xlu0 %1594
    %1596 = vrot.lane.b32.xlu0 %v1427, 48
    %v1597 = vpop.permute.xlu0 %1596
    %v1600 = vsel %vm392, %v1592, 0
    %v1603 = vsel %vm392, %v1593, 0
    %v1605 = vsel %vm204, %v1597, 0
    %1607 = vmatpush.msra.mxu0 0.0
    %1608 = vmatpush.msra.mxu0 0.0
    %1609 = vmatpush.msra.mxu0 0.0
    %1610 = vmatpush.msra.mxu0 0.0
    %1611 = vmatpush.msra.mxu0 0.0
    %1612 = vmatpush.msra.mxu0 0.0
    %1613 = vmatpush.msra.mxu0 0.0
    %1614 = vmatpush.msra.mxu0 0.0
    %1615 = vmatpush.msra.mxu0 0.0
    %1616 = vmatpush.msra.mxu0 0.0
    %1617 = vmatpush.msra.mxu0 0.0
    %1618 = vmatpush.msra.mxu0 0.0
    %1619 = vmatpush.msra.mxu0 0.0
    %1620 = vmatpush.msra.mxu0 0.0
    %1621 = vmatpush.msra.mxu0 %v1605
    %1622 = vmatpush.msra.mxu0 %v1595
    %1623 = vmatmul.f32.gmra.mxu0 %v1600
    %v1624 = vpop.f32.mrf.mxu0
    %v1625 = vadd.f32 0.0, %v1624
    %1626 = vmatmul.f32.gmra.mxu0 %v1603
    %v1627 = vpop.f32.mrf.mxu0
    %v1628 = vadd.f32 0.0, %v1627
    %1629 = vdwg.mxu0
    %1632 = vrot.lane.b32.xlu0 %v1625, 16
    %v1633 = vpop.permute.xlu0 %1632
    %1634 = vrot.lane.b32.xlu0 %v1628, 16
    %v1635 = vpop.permute.xlu0 %1634
    %v1638 = vsel %vm243, %v1524, %v1633
    %v1639 = vsel %vm243, %v1527, %v1635
    %v1641 = vperm.slane %v1378, 0
    %v1644 = vsel %vm320, %v1638, 0
    %v1647 = vsel %vm320, %v1639, 0
    %1649 = vmatpush.msra.mxu0 0.0
    %1650 = vmatpush.msra.mxu0 0.0
    %1651 = vmatpush.msra.mxu0 0.0
    %1652 = vmatpush.msra.mxu0 0.0
    %1653 = vmatpush.msra.mxu0 0.0
    %1654 = vmatpush.msra.mxu0 0.0
    %1655 = vmatpush.msra.mxu0 0.0
    %1656 = vmatpush.msra.mxu0 0.0
    %1657 = vmatpush.msra.mxu0 0.0
    %1658 = vmatpush.msra.mxu0 0.0
    %1659 = vmatpush.msra.mxu0 0.0
    %1660 = vmatpush.msra.mxu0 0.0
    %1661 = vmatpush.msra.mxu0 %v1377
    %1662 = vmatpush.msra.mxu0 %v1376
    %1663 = vmatpush.msra.mxu0 %v1375
    %1664 = vmatpush.msra.mxu0 %v1374
    %1665 = vmatmul.f32.gmra.mxu0 %v1644
    %v1666 = vpop.f32.mrf.mxu0
    %v1667 = vadd.f32 %v1641, %v1666
    %1668 = vmatmul.f32.gmra.mxu0 %v1647
    %v1669 = vpop.f32.mrf.mxu0
    %v1670 = vadd.f32 %v1641, %v1669
    %1671 = vdwg.mxu0
    %v1672 = vadd.f32 %v1364, %v1667
    %v1673 = vadd.f32 %v1365, %v1670
    %v1674 = vsel %vm320, %v1672, 0.0
    %1675 = vadd.xlane.f32.xlu0 %v1674
    %v1676 = vpop.xlane.xlu0 %1675
    %v1677 = vsel %vm600, %v1673, 0.0
    %1678 = vadd.xlane.f32.xlu0 %v1677
    %v1679 = vpop.xlane.xlu0 %1678
    %v1680 = vmul.f32 %v1676, %v610
    %v1681 = vmul.f32 %v1679, %v610
    %v1682 = vsub.f32 %v1672, %v1680
    %v1683 = vsub.f32 %v1673, %v1681
    %v1684 = vmul.f32 %v1682, %v1682
    %v1685 = vmul.f32 %v1683, %v1683
    %v1686 = vsel %vm320, %v1684, 0.0
    %1687 = vadd.xlane.f32.xlu0 %v1686
    %v1688 = vpop.xlane.xlu0 %1687
    %v1689 = vsel %vm600, %v1685, 0.0
    %1690 = vadd.xlane.f32.xlu0 %v1689
    %v1691 = vpop.xlane.xlu0 %1690
    %v1692 = vmul.f32 %v1688, %v610
    %v1693 = vmul.f32 %v1691, %v610
    %v1694 = vadd.f32 %v1692, 1e-05
    %v1695 = vadd.f32 %v1693, 1e-05
    %v1696 = vrsqrt.pop %v1694
    %v1697 = vmul.f32 %v1696, %v1694
    %v1698 = vmul.f32 %v1697, %v1696
    %v1699 = vmul.f32 0.5, %v1698
    %v1700 = vsub.f32 1.5, %v1699
    %v1701 = vmul.f32 %v1696, %v1700
    %vm1702 = vweird.f32 %v1694
    %vm1703 = vweird.f32 %v1696
    %vm1704 = vmor %vm1702, %vm1703
    %v1705 = vsel %vm1704, %v1696, %v1701
    %v1706 = vrsqrt.pop %v1695
    %v1707 = vmul.f32 %v1706, %v1695
    %v1708 = vmul.f32 %v1707, %v1706
    %v1709 = vmul.f32 0.5, %v1708
    %v1710 = vsub.f32 1.5, %v1709
    %v1711 = vmul.f32 %v1706, %v1710
    %vm1712 = vweird.f32 %v1695
    %vm1713 = vweird.f32 %v1706
    %vm1714 = vmor %vm1712, %vm1713
    %v1715 = vsel %vm1714, %v1706, %v1711
    %v1716 = vmul.f32 %v1682, %v1705
    %v1717 = vmul.f32 %v1683, %v1715
    %v1719 = vperm.slane %v1379, 0
    %v1721 = vmul.f32 %v1716, %v1719
    %v1722 = vmul.f32 %v1717, %v1719
    %v1724 = vperm.slane %v1380, 0
    %v1726 = vadd.f32 %v1721, %v1724
    %v1727 = vadd.f32 %v1722, %v1724
    %v1729 = vperm.slane %v1387, 0
    %v1732 = vsel %vm320, %v1726, 0
    %v1735 = vsel %vm320, %v1727, 0
    %1737 = vmatpush.msra.mxu0 0.0
    %1738 = vmatpush.msra.mxu0 0.0
    %1739 = vmatpush.msra.mxu0 0.0
    %1740 = vmatpush.msra.mxu0 0.0
    %1741 = vmatpush.msra.mxu0 0.0
    %1742 = vmatpush.msra.mxu0 0.0
    %1743 = vmatpush.msra.mxu0 0.0
    %1744 = vmatpush.msra.mxu0 0.0
    %1745 = vmatpush.msra.mxu0 0.0
    %1746 = vmatpush.msra.mxu0 0.0
    %1747 = vmatpush.msra.mxu0 0.0
    %1748 = vmatpush.msra.mxu0 0.0
    %1749 = vmatpush.msra.mxu0 %v1386
    %1750 = vmatpush.msra.mxu0 %v1385
    %1751 = vmatpush.msra.mxu0 %v1384
    %1752 = vmatpush.msra.mxu0 %v1383
    %1753 = vmatmul.f32.gmra.mxu0 %v1732
    %v1754 = vpop.f32.mrf.mxu0
    %v1755 = vadd.f32 %v1729, %v1754
    %1756 = vmatmul.f32.gmra.mxu0 %v1735
    %v1757 = vpop.f32.mrf.mxu0
    %v1758 = vadd.f32 %v1729, %v1757
    %1759 = vdwg.mxu0
    %v1760 = vmul.f32 %v1755, %v1755
    %v1761 = vmul.f32 %v1758, %v1758
    %v1762 = vmul.f32 %v1755, %v1760
    %v1763 = vmul.f32 %v1758, %v1761
    %v1764 = vmul.f32 %v1762, 0.044715
    %v1765 = vmul.f32 %v1763, 0.044715
    %v1766 = vadd.f32 %v1755, %v1764
    %v1767 = vadd.f32 %v1758, %v1765
    %v1768 = vmul.f32 %v1766, 0.7978846
    %v1769 = vmul.f32 %v1767, 0.7978846
    %v1770 = vtanh.pop %v1768
    %v1771 = vtanh.pop %v1769
    %v1772 = vadd.f32 %v1770, 1.0
    %v1773 = vadd.f32 %v1771, 1.0
    %v1774 = vmul.f32 %v1772, 0.5
    %v1775 = vmul.f32 %v1773, 0.5
    %v1776 = vmul.f32 %v1755, %v1774
    %v1777 = vmul.f32 %v1758, %v1775
    %v1779 = vperm.slane %v1396, 0
    %v1782 = vsel %vm712, %v1776, 0
    %v1785 = vsel %vm712, %v1777, 0
    %1787 = vmatpush.msra.mxu0 0.0
    %1788 = vmatpush.msra.mxu0 0.0
    %1789 = vmatpush.msra.mxu0 0.0
    %1790 = vmatpush.msra.mxu0 0.0
    %1791 = vmatpush.msra.mxu0 0.0
    %1792 = vmatpush.msra.mxu0 0.0
    %1793 = vmatpush.msra.mxu0 0.0
    %1794 = vmatpush.msra.mxu0 0.0
    %1795 = vmatpush.msra.mxu0 %v1395
    %1796 = vmatpush.msra.mxu0 %v1394
    %1797 = vmatpush.msra.mxu0 %v1393
    %1798 = vmatpush.msra.mxu0 %v1392
    %1799 = vmatpush.msra.mxu0 %v1391
    %1800 = vmatpush.msra.mxu0 %v1390
    %1801 = vmatpush.msra.mxu0 %v1389
    %1802 = vmatpush.msra.mxu0 %v1388
    %1803 = vmatmul.f32.gmra.mxu0 %v1782
    %v1804 = vpop.f32.mrf.mxu0
    %v1805 = vadd.f32 %v1779, %v1804
    %1806 = vmatmul.f32.gmra.mxu0 %v1785
    %v1807 = vpop.f32.mrf.mxu0
    %v1808 = vadd.f32 %v1779, %v1807
    %1809 = vdwg.mxu0
    %v1810 = vadd.f32 %v1726, %v1805
    %v1811 = vadd.f32 %v1727, %v1808
    %v1812 = vsel %vm320, %v1810, 0.0
    %1813 = vadd.xlane.f32.xlu0 %v1812
    %v1814 = vpop.xlane.xlu0 %1813
    %v1815 = vsel %vm600, %v1811, 0.0
    %1816 = vadd.xlane.f32.xlu0 %v1815
    %v1817 = vpop.xlane.xlu0 %1816
    %v1818 = vmul.f32 %v1814, %v610
    %v1819 = vmul.f32 %v1817, %v610
    %v1820 = vsub.f32 %v1810, %v1818
    %v1821 = vsub.f32 %v1811, %v1819
    %v1822 = vmul.f32 %v1820, %v1820
    %v1823 = vmul.f32 %v1821, %v1821
    %v1824 = vsel %vm320, %v1822, 0.0
    %1825 = vadd.xlane.f32.xlu0 %v1824
    %v1826 = vpop.xlane.xlu0 %1825
    %v1827 = vsel %vm600, %v1823, 0.0
    %1828 = vadd.xlane.f32.xlu0 %v1827
    %v1829 = vpop.xlane.xlu0 %1828
    %v1830 = vmul.f32 %v1826, %v610
    %v1831 = vmul.f32 %v1829, %v610
    %v1832 = vadd.f32 %v1830, 1e-05
    %v1833 = vadd.f32 %v1831, 1e-05
    %v1834 = vrsqrt.pop %v1832
    %v1835 = vmul.f32 %v1834, %v1832
    %v1836 = vmul.f32 %v1835, %v1834
    %v1837 = vmul.f32 0.5, %v1836
    %v1838 = vsub.f32 1.5, %v1837
    %v1839 = vmul.f32 %v1834, %v1838
    %vm1840 = vweird.f32 %v1832
    %vm1841 = vweird.f32 %v1834
    %vm1842 = vmor %vm1840, %vm1841
    %v1843 = vsel %vm1842, %v1834, %v1839
    %v1844 = vrsqrt.pop %v1833
    %v1845 = vmul.f32 %v1844, %v1833
    %v1846 = vmul.f32 %v1845, %v1844
    %v1847 = vmul.f32 0.5, %v1846
    %v1848 = vsub.f32 1.5, %v1847
    %v1849 = vmul.f32 %v1844, %v1848
    %vm1850 = vweird.f32 %v1833
    %vm1851 = vweird.f32 %v1844
    %vm1852 = vmor %vm1850, %vm1851
    %v1853 = vsel %vm1852, %v1844, %v1849
    %v1854 = vmul.f32 %v1820, %v1843
    %v1855 = vmul.f32 %v1821, %v1853
    %v1857 = vperm.slane %v1381, 0
    %v1859 = vmul.f32 %v1854, %v1857
    %v1860 = vmul.f32 %v1855, %v1857
    %v1862 = vperm.slane %v1382, 0
    %v1864 = vadd.f32 %v1859, %v1862
    %v1865 = vadd.f32 %v1860, %v1862
    %v1866 = vld [vmem:[%s798] sm:$0xff]
    %v1867 = vld [vmem:[%s798 + $0x8] sm:$0xff]
    %v1868 = vld [vmem:[%s798 + $0x10] sm:$0xff]
    %v1869 = vld [vmem:[%s798 + $0x18] sm:$0xff]
    %v1870 = vld [vmem:[%s803] sm:$0x1]
    %v1871 = vld [vmem:[%s805] sm:$0xff]
    %v1872 = vld [vmem:[%s805 + $0x8] sm:$0xff]
    %v1873 = vld [vmem:[%s805 + $0x10] sm:$0xff]
    %v1874 = vld [vmem:[%s805 + $0x18] sm:$0xff]
    %v1875 = vld [vmem:[%s810] sm:$0x1]
    %v1876 = vld [vmem:[%s812] sm:$0x1]
    %v1877 = vld [vmem:[%s814] sm:$0x1]
    %v1878 = vld [vmem:[%s816] sm:$0x1]
    %v1879 = vld [vmem:[%s818] sm:$0x1]
    %v1880 = vld [vmem:[%s820] sm:$0xff]
    %v1881 = vld [vmem:[%s820 + $0x8] sm:$0xff]
    %v1882 = vld [vmem:[%s820 + $0x10] sm:$0xff]
    %v1883 = vld [vmem:[%s820 + $0x18] sm:$0xff]
    %v1884 = vld [vmem:[%s825] sm:$0x1]
    %v1885 = vld [vmem:[%s827] sm:$0xff]
    %v1886 = vld [vmem:[%s827 + $0x8] sm:$0xff]
    %v1887 = vld [vmem:[%s827 + $0x10] sm:$0xff]
    %v1888 = vld [vmem:[%s827 + $0x18] sm:$0xff]
    %v1889 = vld [vmem:[%s827 + $0x20] sm:$0xff]
    %v1890 = vld [vmem:[%s827 + $0x28] sm:$0xff]
    %v1891 = vld [vmem:[%s827 + $0x30] sm:$0xff]
    %v1892 = vld [vmem:[%s827 + $0x38] sm:$0xff]
    %v1893 = vld [vmem:[%s836] sm:$0x1]
    %v1895 = vperm.slane %v1870, 0
    %v1898 = vsel %vm320, %v1864, 0
    %v1901 = vsel %vm320, %v1865, 0
    %1903 = vmatpush.msra.mxu0 0.0
    %1904 = vmatpush.msra.mxu0 0.0
    %1905 = vmatpush.msra.mxu0 0.0
    %1906 = vmatpush.msra.mxu0 0.0
    %1907 = vmatpush.msra.mxu0 0.0
    %1908 = vmatpush.msra.mxu0 0.0
    %1909 = vmatpush.msra.mxu0 0.0
    %1910 = vmatpush.msra.mxu0 0.0
    %1911 = vmatpush.msra.mxu0 0.0
    %1912 = vmatpush.msra.mxu0 0.0
    %1913 = vmatpush.msra.mxu0 0.0
    %1914 = vmatpush.msra.mxu0 0.0
    %1915 = vmatpush.msra.mxu0 %v1869
    %1916 = vmatpush.msra.mxu0 %v1868
    %1917 = vmatpush.msra.mxu0 %v1867
    %1918 = vmatpush.msra.mxu0 %v1866
    %1919 = vmatmul.f32.gmra.mxu0 %v1898
    %v1920 = vpop.f32.mrf.mxu0
    %v1921 = vadd.f32 %v1895, %v1920
    %1922 = vmatmul.f32.gmra.mxu0 %v1901
    %v1923 = vpop.f32.mrf.mxu0
    %v1924 = vadd.f32 %v1895, %v1923
    %1925 = vdwg.mxu0
    %1928 = vrot.lane.b32.xlu0 %v1921, 96
    %v1929 = vpop.permute.xlu0 %1928
    %1930 = vrot.lane.b32.xlu0 %v1924, 96
    %v1931 = vpop.permute.xlu0 %1930
    %v1932 = vsel %vm243, %v1921, 0
    %v1934 = vsel %vm243, %v1924, 0
    %v1936 = vsel %vm243, %v1929, 0
    %v1938 = vsel %vm243, %v1931, 0
    %1940 = vmatpush.xpose.msra.mxu0 0.0
    %1941 = vmatpush.xpose.msra.mxu0 0.0
    %1942 = vmatpush.xpose.msra.mxu0 0.0
    %1943 = vmatpush.xpose.msra.mxu0 0.0
    %1944 = vmatpush.xpose.msra.mxu0 0.0
    %1945 = vmatpush.xpose.msra.mxu0 0.0
    %1946 = vmatpush.xpose.msra.mxu0 0.0
    %1947 = vmatpush.xpose.msra.mxu0 0.0
    %1948 = vmatpush.xpose.msra.mxu0 0.0
    %1949 = vmatpush.xpose.msra.mxu0 0.0
    %1950 = vmatpush.xpose.msra.mxu0 0.0
    %1951 = vmatpush.xpose.msra.mxu0 0.0
    %1952 = vmatpush.xpose.msra.mxu0 0.0
    %1953 = vmatpush.xpose.msra.mxu0 0.0
    %1954 = vmatpush.xpose.msra.mxu0 %v1938
    %1955 = vmatpush.xpose.msra.mxu0 %v1936
    %1956 = vmatmul.f32.gmra.mxu0 %v1932
    %v1957 = vpop.f32.mrf.mxu0
    %v1958 = vadd.f32 0.0, %v1957
    %1959 = vmatmul.f32.gmra.mxu0 %v1934
    %v1960 = vpop.f32.mrf.mxu0
    %v1961 = vadd.f32 0.0, %v1960
    %1962 = vdwg.mxu0
    %v1963 = vmul.f32 %v1958, 0.25
    %v1964 = vmul.f32 %v1961, 0.25
    %v1965 = vadd.f32 %v1963, %v1468
    %v1966 = vadd.f32 %v1964, %v1468
    %v1967 = vsel %vm392, %v1965, -inf
    %1968 = vmax.xlane.f32.xlu0 %v1967
    %v1969 = vpop.xlane.xlu0 %1968
    %v1970 = vsel %vm396, %v1966, -inf
    %1971 = vmax.xlane.f32.xlu0 %v1970
    %v1972 = vpop.xlane.xlu0 %1971
    %v1973 = vsub.f32 %v1965, %v1969
    %v1974 = vsub.f32 %v1966, %v1972
    %v1975 = vmul.f32 %v1973, 1.442695
    %v1976 = vpow.pop %v1975
    %v1977 = vmul.f32 %v1974, 1.442695
    %v1978 = vpow.pop %v1977
    %v1979 = vsel %vm392, %v1976, 0.0
    %1980 = vadd.xlane.f32.xlu0 %v1979
    %v1981 = vpop.xlane.xlu0 %1980
    %v1982 = vsel %vm396, %v1978, 0.0
    %1983 = vadd.xlane.f32.xlu0 %v1982
    %v1984 = vpop.xlane.xlu0 %1983
    %v1985 = vrcp.pop %v1981
    %v1986 = vrcp.pop %v1984
    %v1987 = vmul.f32 %v1976, %v1985
    %v1988 = vmul.f32 %v1978, %v1986
    %1989 = vrot.lane.b32.xlu0 %v1921, 64
    %v1990 = vpop.permute.xlu0 %1989
    %1991 = vrot.lane.b32.xlu0 %v1924, 64
    %v1992 = vpop.permute.xlu0 %1991
    %v1995 = vsel %vm392, %v1987, 0
    %v1998 = vsel %vm392, %v1988, 0
    %v2000 = vsel %vm204, %v1992, 0
    %2002 = vmatpush.msra.mxu0 0.0
    %2003 = vmatpush.msra.mxu0 0.0
    %2004 = vmatpush.msra.mxu0 0.0
    %2005 = vmatpush.msra.mxu0 0.0
    %2006 = vmatpush.msra.mxu0 0.0
    %2007 = vmatpush.msra.mxu0 0.0
    %2008 = vmatpush.msra.mxu0 0.0
    %2009 = vmatpush.msra.mxu0 0.0
    %2010 = vmatpush.msra.mxu0 0.0
    %2011 = vmatpush.msra.mxu0 0.0
    %2012 = vmatpush.msra.mxu0 0.0
    %2013 = vmatpush.msra.mxu0 0.0
    %2014 = vmatpush.msra.mxu0 0.0
    %2015 = vmatpush.msra.mxu0 0.0
    %2016 = vmatpush.msra.mxu0 %v2000
    %2017 = vmatpush.msra.mxu0 %v1990
    %2018 = vmatmul.f32.gmra.mxu0 %v1995
    %v2019 = vpop.f32.mrf.mxu0
    %v2020 = vadd.f32 0.0, %v2019
    %2021 = vmatmul.f32.gmra.mxu0 %v1998
    %v2022 = vpop.f32.mrf.mxu0
    %v2023 = vadd.f32 0.0, %v2022
    %2024 = vdwg.mxu0
    %2025 = vrot.lane.b32.xlu0 %v1921, 112
    %v2026 = vpop.permute.xlu0 %2025
    %2027 = vrot.lane.b32.xlu0 %v1924, 112
    %v2028 = vpop.permute.xlu0 %2027
    %2029 = vrot.lane.b32.xlu0 %v1921, 80
    %v2030 = vpop.permute.xlu0 %2029
    %2031 = vrot.lane.b32.xlu0 %v1924, 80
    %v2032 = vpop.permute.xlu0 %2031
    %v2033 = vsel %vm243, %v2026, 0
    %v2035 = vsel %vm243, %v2028, 0
    %v2037 = vsel %vm243, %v2030, 0
    %v2039 = vsel %vm243, %v2032, 0
    %2041 = vmatpush.xpose.msra.mxu0 0.0
    %2042 = vmatpush.xpose.msra.mxu0 0.0
    %2043 = vmatpush.xpose.msra.mxu0 0.0
    %2044 = vmatpush.xpose.msra.mxu0 0.0
    %2045 = vmatpush.xpose.msra.mxu0 0.0
    %2046 = vmatpush.xpose.msra.mxu0 0.0
    %2047 = vmatpush.xpose.msra.mxu0 0.0
    %2048 = vmatpush.xpose.msra.mxu0 0.0
    %2049 = vmatpush.xpose.msra.mxu0 0.0
    %2050 = vmatpush.xpose.msra.mxu0 0.0
    %2051 = vmatpush.xpose.msra.mxu0 0.0
    %2052 = vmatpush.xpose.msra.mxu0 0.0
    %2053 = vmatpush.xpose.msra.mxu0 0.0
    %2054 = vmatpush.xpose.msra.mxu0 0.0
    %2055 = vmatpush.xpose.msra.mxu0 %v2039
    %2056 = vmatpush.xpose.msra.mxu0 %v2037
    %2057 = vmatmul.f32.gmra.mxu0 %v2033
    %v2058 = vpop.f32.mrf.mxu0
    %v2059 = vadd.f32 0.0, %v2058
    %2060 = vmatmul.f32.gmra.mxu0 %v2035
    %v2061 = vpop.f32.mrf.mxu0
    %v2062 = vadd.f32 0.0, %v2061
    %2063 = vdwg.mxu0
    %v2064 = vmul.f32 %v2059, 0.25
    %v2065 = vmul.f32 %v2062, 0.25
    %v2066 = vadd.f32 %v2064, %v1468
    %v2067 = vadd.f32 %v2065, %v1468
    %v2068 = vsel %vm392, %v2066, -inf
    %2069 = vmax.xlane.f32.xlu0 %v2068
    %v2070 = vpop.xlane.xlu0 %2069
    %v2071 = vsel %vm396, %v2067, -inf
    %2072 = vmax.xlane.f32.xlu0 %v2071
    %v2073 = vpop.xlane.xlu0 %2072
    %v2074 = vsub.f32 %v2066, %v2070
    %v2075 = vsub.f32 %v2067, %v2073
    %v2076 = vmul.f32 %v2074, 1.442695
    %v2077 = vpow.pop %v2076
    %v2078 = vmul.f32 %v2075, 1.442695
    %v2079 = vpow.pop %v2078
    %v2080 = vsel %vm392, %v2077, 0.0
    %2081 = vadd.xlane.f32.xlu0 %v2080
    %v2082 = vpop.xlane.xlu0 %2081
    %v2083 = vsel %vm396, %v2079, 0.0
    %2084 = vadd.xlane.f32.xlu0 %v2083
    %v2085 = vpop.xlane.xlu0 %2084
    %v2086 = vrcp.pop %v2082
    %v2087 = vrcp.pop %v2085
    %v2088 = vmul.f32 %v2077, %v2086
    %v2089 = vmul.f32 %v2079, %v2087
    %2090 = vrot.lane.b32.xlu0 %v1921, 48
    %v2091 = vpop.permute.xlu0 %2090
    %2092 = vrot.lane.b32.xlu0 %v1924, 48
    %v2093 = vpop.permute.xlu0 %2092
    %v2096 = vsel %vm392, %v2088, 0
    %v2099 = vsel %vm392, %v2089, 0
    %v2101 = vsel %vm204, %v2093, 0
    %2103 = vmatpush.msra.mxu0 0.0
    %2104 = vmatpush.msra.mxu0 0.0
    %2105 = vmatpush.msra.mxu0 0.0
    %2106 = vmatpush.msra.mxu0 0.0
    %2107 = vmatpush.msra.mxu0 0.0
    %2108 = vmatpush.msra.mxu0 0.0
    %2109 = vmatpush.msra.mxu0 0.0
    %2110 = vmatpush.msra.mxu0 0.0
    %2111 = vmatpush.msra.mxu0 0.0
    %2112 = vmatpush.msra.mxu0 0.0
    %2113 = vmatpush.msra.mxu0 0.0
    %2114 = vmatpush.msra.mxu0 0.0
    %2115 = vmatpush.msra.mxu0 0.0
    %2116 = vmatpush.msra.mxu0 0.0
    %2117 = vmatpush.msra.mxu0 %v2101
    %2118 = vmatpush.msra.mxu0 %v2091
    %2119 = vmatmul.f32.gmra.mxu0 %v2096
    %v2120 = vpop.f32.mrf.mxu0
    %v2121 = vadd.f32 0.0, %v2120
    %2122 = vmatmul.f32.gmra.mxu0 %v2099
    %v2123 = vpop.f32.mrf.mxu0
    %v2124 = vadd.f32 0.0, %v2123
    %2125 = vdwg.mxu0
    %2128 = vrot.lane.b32.xlu0 %v2121, 16
    %v2129 = vpop.permute.xlu0 %2128
    %2130 = vrot.lane.b32.xlu0 %v2124, 16
    %v2131 = vpop.permute.xlu0 %2130
    %v2134 = vsel %vm243, %v2020, %v2129
    %v2135 = vsel %vm243, %v2023, %v2131
    %v2137 = vperm.slane %v1875, 0
    %v2140 = vsel %vm320, %v2134, 0
    %v2143 = vsel %vm320, %v2135, 0
    %2145 = vmatpush.msra.mxu0 0.0
    %2146 = vmatpush.msra.mxu0 0.0
    %2147 = vmatpush.msra.mxu0 0.0
    %2148 = vmatpush.msra.mxu0 0.0
    %2149 = vmatpush.msra.mxu0 0.0
    %2150 = vmatpush.msra.mxu0 0.0
    %2151 = vmatpush.msra.mxu0 0.0
    %2152 = vmatpush.msra.mxu0 0.0
    %2153 = vmatpush.msra.mxu0 0.0
    %2154 = vmatpush.msra.mxu0 0.0
    %2155 = vmatpush.msra.mxu0 0.0
    %2156 = vmatpush.msra.mxu0 0.0
    %2157 = vmatpush.msra.mxu0 %v1874
    %2158 = vmatpush.msra.mxu0 %v1873
    %2159 = vmatpush.msra.mxu0 %v1872
    %2160 = vmatpush.msra.mxu0 %v1871
    %2161 = vmatmul.f32.gmra.mxu0 %v2140
    %v2162 = vpop.f32.mrf.mxu0
    %v2163 = vadd.f32 %v2137, %v2162
    %2164 = vmatmul.f32.gmra.mxu0 %v2143
    %v2165 = vpop.f32.mrf.mxu0
    %v2166 = vadd.f32 %v2137, %v2165
    %2167 = vdwg.mxu0
    %v2168 = vadd.f32 %v1864, %v2163
    %v2169 = vadd.f32 %v1865, %v2166
    %v2170 = vsel %vm320, %v2168, 0.0
    %2171 = vadd.xlane.f32.xlu0 %v2170
    %v2172 = vpop.xlane.xlu0 %2171
    %v2173 = vsel %vm600, %v2169, 0.0
    %2174 = vadd.xlane.f32.xlu0 %v2173
    %v2175 = vpop.xlane.xlu0 %2174
    %v2176 = vmul.f32 %v2172, %v610
    %v2177 = vmul.f32 %v2175, %v610
    %v2178 = vsub.f32 %v2168, %v2176
    %v2179 = vsub.f32 %v2169, %v2177
    %v2180 = vmul.f32 %v2178, %v2178
    %v2181 = vmul.f32 %v2179, %v2179
    %v2182 = vsel %vm320, %v2180, 0.0
    %2183 = vadd.xlane.f32.xlu0 %v2182
    %v2184 = vpop.xlane.xlu0 %2183
    %v2185 = vsel %vm600, %v2181, 0.0
    %2186 = vadd.xlane.f32.xlu0 %v2185
    %v2187 = vpop.xlane.xlu0 %2186
    %v2188 = vmul.f32 %v2184, %v610
    %v2189 = vmul.f32 %v2187, %v610
    %v2190 = vadd.f32 %v2188, 1e-05
    %v2191 = vadd.f32 %v2189, 1e-05
    %v2192 = vrsqrt.pop %v2190
    %v2193 = vmul.f32 %v2192, %v2190
    %v2194 = vmul.f32 %v2193, %v2192
    %v2195 = vmul.f32 0.5, %v2194
    %v2196 = vsub.f32 1.5, %v2195
    %v2197 = vmul.f32 %v2192, %v2196
    %vm2198 = vweird.f32 %v2190
    %vm2199 = vweird.f32 %v2192
    %vm2200 = vmor %vm2198, %vm2199
    %v2201 = vsel %vm2200, %v2192, %v2197
    %v2202 = vrsqrt.pop %v2191
    %v2203 = vmul.f32 %v2202, %v2191
    %v2204 = vmul.f32 %v2203, %v2202
    %v2205 = vmul.f32 0.5, %v2204
    %v2206 = vsub.f32 1.5, %v2205
    %v2207 = vmul.f32 %v2202, %v2206
    %vm2208 = vweird.f32 %v2191
    %vm2209 = vweird.f32 %v2202
    %vm2210 = vmor %vm2208, %vm2209
    %v2211 = vsel %vm2210, %v2202, %v2207
    %v2212 = vmul.f32 %v2178, %v2201
    %v2213 = vmul.f32 %v2179, %v2211
    %v2215 = vperm.slane %v1876, 0
    %v2217 = vmul.f32 %v2212, %v2215
    %v2218 = vmul.f32 %v2213, %v2215
    %v2220 = vperm.slane %v1877, 0
    %v2222 = vadd.f32 %v2217, %v2220
    %v2223 = vadd.f32 %v2218, %v2220
    %v2225 = vperm.slane %v1884, 0
    %v2228 = vsel %vm320, %v2222, 0
    %v2231 = vsel %vm320, %v2223, 0
    %2233 = vmatpush.msra.mxu0 0.0
    %2234 = vmatpush.msra.mxu0 0.0
    %2235 = vmatpush.msra.mxu0 0.0
    %2236 = vmatpush.msra.mxu0 0.0
    %2237 = vmatpush.msra.mxu0 0.0
    %2238 = vmatpush.msra.mxu0 0.0
    %2239 = vmatpush.msra.mxu0 0.0
    %2240 = vmatpush.msra.mxu0 0.0
    %2241 = vmatpush.msra.mxu0 0.0
    %2242 = vmatpush.msra.mxu0 0.0
    %2243 = vmatpush.msra.mxu0 0.0
    %2244 = vmatpush.msra.mxu0 0.0
    %2245 = vmatpush.msra.mxu0 %v1883
    %2246 = vmatpush.msra.mxu0 %v1882
    %2247 = vmatpush.msra.mxu0 %v1881
    %2248 = vmatpush.msra.mxu0 %v1880
    %2249 = vmatmul.f32.gmra.mxu0 %v2228
    %v2250 = vpop.f32.mrf.mxu0
    %v2251 = vadd.f32 %v2225, %v2250
    %2252 = vmatmul.f32.gmra.mxu0 %v2231
    %v2253 = vpop.f32.mrf.mxu0
    %v2254 = vadd.f32 %v2225, %v2253
    %2255 = vdwg.mxu0
    %v2256 = vmul.f32 %v2251, %v2251
    %v2257 = vmul.f32 %v2254, %v2254
    %v2258 = vmul.f32 %v2251, %v2256
    %v2259 = vmul.f32 %v2254, %v2257
    %v2260 = vmul.f32 %v2258, 0.044715
    %v2261 = vmul.f32 %v2259, 0.044715
    %v2262 = vadd.f32 %v2251, %v2260
    %v2263 = vadd.f32 %v2254, %v2261
    %v2264 = vmul.f32 %v2262, 0.7978846
    %v2265 = vmul.f32 %v2263, 0.7978846
    %v2266 = vtanh.pop %v2264
    %v2267 = vtanh.pop %v2265
    %v2268 = vadd.f32 %v2266, 1.0
    %v2269 = vadd.f32 %v2267, 1.0
    %v2270 = vmul.f32 %v2268, 0.5
    %v2271 = vmul.f32 %v2269, 0.5
    %v2272 = vmul.f32 %v2251, %v2270
    %v2273 = vmul.f32 %v2254, %v2271
    %v2275 = vperm.slane %v1893, 0
    %v2278 = vsel %vm712, %v2272, 0
    %v2281 = vsel %vm712, %v2273, 0
    %2283 = vmatpush.msra.mxu0 0.0
    %2284 = vmatpush.msra.mxu0 0.0
    %2285 = vmatpush.msra.mxu0 0.0
    %2286 = vmatpush.msra.mxu0 0.0
    %2287 = vmatpush.msra.mxu0 0.0
    %2288 = vmatpush.msra.mxu0 0.0
    %2289 = vmatpush.msra.mxu0 0.0
    %2290 = vmatpush.msra.mxu0 0.0
    %2291 = vmatpush.msra.mxu0 %v1892
    %2292 = vmatpush.msra.mxu0 %v1891
    %2293 = vmatpush.msra.mxu0 %v1890
    %2294 = vmatpush.msra.mxu0 %v1889
    %2295 = vmatpush.msra.mxu0 %v1888
    %2296 = vmatpush.msra.mxu0 %v1887
    %2297 = vmatpush.msra.mxu0 %v1886
    %2298 = vmatpush.msra.mxu0 %v1885
    %2299 = vmatmul.f32.gmra.mxu0 %v2278
    %v2300 = vpop.f32.mrf.mxu0
    %v2301 = vadd.f32 %v2275, %v2300
    %2302 = vmatmul.f32.gmra.mxu0 %v2281
    %v2303 = vpop.f32.mrf.mxu0
    %2304 = vdwg.mxu0
    %v2305 = vadd.f32 %v2222, %v2301
    %v2306 = vsel %vm320, %v2305, 0.0
    %2307 = vadd.xlane.f32.xlu0 %v2306
    %v2308 = vpop.xlane.xlu0 %2307
    %v2309 = vmul.f32 %v2308, %v610
    %v2310 = vsub.f32 %v2305, %v2309
    %v2311 = vmul.f32 %v2310, %v2310
    %v2312 = vsel %vm320, %v2311, 0.0
    %2313 = vadd.xlane.f32.xlu0 %v2312
    %v2314 = vpop.xlane.xlu0 %2313
    %v2315 = vmul.f32 %v2314, %v610
    %v2316 = vadd.f32 %v2315, 1e-05
    %v2317 = vrsqrt.pop %v2316
    %v2318 = vmul.f32 %v2317, %v2316
    %v2319 = vmul.f32 %v2318, %v2317
    %v2320 = vmul.f32 0.5, %v2319
    %v2321 = vsub.f32 1.5, %v2320
    %v2322 = vmul.f32 %v2317, %v2321
    %vm2323 = vweird.f32 %v2316
    %vm2324 = vweird.f32 %v2317
    %vm2325 = vmor %vm2323, %vm2324
    %v2326 = vsel %vm2325, %v2317, %v2322
    %v2327 = vmul.f32 %v2310, %v2326
    %v2329 = vperm.slane %v1878, 0
    %v2331 = vmul.f32 %v2327, %v2329
    %v2333 = vperm.slane %v1879, 0
    %v2335 = vadd.f32 %v2331, %v2333
    %s2336 = scalar_lea.vmem %s19, 2
    %2337 = vst.msk [vmem:[%s2336] sm:$0x3] %vm1280, %v2335
    // Predicated region
    $region114: #{transformer_vae_forward.3} parent=1 // pred_check
      _
    $region115: #{transformer_vae_forward.3} parent=1 // pred_check_branch
      %2339 = sbr.rel (0) target = $region117
    $region116: #{transformer_vae_forward.3} parent=1 // pred_region
      _
    $region117: #{transformer_vae_forward.3} parent=1 // pred_fallthru
      _
    // Predicated region
    $region118: #{transformer_vae_forward.3} parent=1 // pred_check
      _
    $region119: #{transformer_vae_forward.3} parent=1 // pred_check_branch
      %2341 = sbr.rel (0) target = $region121
    $region120: #{transformer_vae_forward.3} parent=1 // pred_region
      _
    $region121: #{transformer_vae_forward.3} parent=1 // pred_fallthru
      _
    %2342 = vsyncpa [#allocation3], 1
    %2343 = vsyncpa [#allocation5], 1
    %2344 = vsyncpa [#allocation8], 1
    %2345 = vsyncpa [#allocation11], 1
    %2346 = vsyncpa [#allocation14], 1

// kernel: transformer_vae_forward.5
$region0: #{transformer_vae_forward.5}
  #allocation0 [shape = 'u32[]', space=smem, size = 0x4, offset = 0x4, fixed_abs, tag = 'smem constant byte address 0x4 - core index']
  #allocation1 [shape = 'u32[72,128]{1,0:T(1,128)}', space=vmem, size = 0x9000, scoped, tag = 'internal scratch']
  %s0 = inlined_call_operand.vmem [shape: f32[2,32], index: 0, kind: input, shape index: {}]
  %s1 = inlined_call_operand.vmem [shape: f32[2,4,16], index: 1, kind: input, shape index: {}]
  %s2 = inlined_call_operand.hbm [shape: f32[12,32], index: 2, kind: input, shape index: {}]
  %s3 = inlined_call_operand.vmem [shape: f32[16,32], index: 3, kind: input, shape index: {}]
  %s4 = inlined_call_operand.hbm [shape: f32[1,32], index: 4, kind: input, shape index: {}]
  %s5 = inlined_call_operand.vmem [shape: f32[32,16], index: 5, kind: input, shape index: {}]
  %s6 = inlined_call_operand.hbm [shape: f32[1,16], index: 6, kind: input, shape index: {}]
  %s7 = inlined_call_operand.vmem [shape: f32[2,32,32], index: 7, kind: input, shape index: {}]
  %s8 = inlined_call_operand.hbm [shape: f32[2,1,32], index: 8, kind: input, shape index: {}]
  %s9 = inlined_call_operand.vmem [shape: f32[2,32,96], index: 9, kind: input, shape index: {}]
  %s10 = inlined_call_operand.hbm [shape: f32[2,1,96], index: 10, kind: input, shape index: {}]
  %s11 = inlined_call_operand.vmem [shape: f32[2,32,32], index: 11, kind: input, shape index: {}]
  %s12 = inlined_call_operand.hbm [shape: f32[2,1,32], index: 12, kind: input, shape index: {}]
  %s13 = inlined_call_operand.hbm [shape: f32[2,1,32], index: 13, kind: input, shape index: {}]
  %s14 = inlined_call_operand.hbm [shape: f32[2,1,32], index: 14, kind: input, shape index: {}]
  %s15 = inlined_call_operand.hbm [shape: f32[2,1,32], index: 15, kind: input, shape index: {}]
  %s16 = inlined_call_operand.hbm [shape: f32[2,1,32], index: 16, kind: input, shape index: {}]
  %s17 = inlined_call_operand.hbm [shape: f32[2,32,64], index: 17, kind: input, shape index: {}]
  %s18 = inlined_call_operand.hbm [shape: f32[2,1,64], index: 18, kind: input, shape index: {}]
  %s19 = inlined_call_operand.vmem [shape: f32[2,64,32], index: 19, kind: input, shape index: {}]
  %s20 = inlined_call_operand.hbm [shape: f32[2,1,32], index: 20, kind: input, shape index: {}]
  %s21 = inlined_call_operand.vmem [shape: f32[2,8,16], index: 21, kind: output, shape index: {}]
  %s22 = sld [smem:[#allocation0]]
  $region146: #{transformer_vae_forward.5} parent=0
    _
  %s24 = ssub.s32 1, %s22
  %s25 = scalar_select 0, %s24, %s22
  $region1: #{transformer_vae_forward.5} parent=0
    #allocation2 [shape = 'u8[8192]{0}', space=vmem, size = 0x2000, scoped, tag = 'input window, operand 2, single buffered']
    #allocation3 [shape = 's32[1]{0}', space=sflag, size = 0x4, scoped, tag = 'scoped memory for transformer_vae_forward.5']
    #allocation4 [shape = 'u8[512]{0}', space=vmem, size = 0x400, scoped, tag = 'input window, operand 4, single buffered']
    #allocation5 [shape = 's32[1]{0}', space=sflag, size = 0x4, scoped, tag = 'scoped memory for transformer_vae_forward.5']
    #allocation6 [shape = 'u8[512]{0}', space=vmem, size = 0x400, scoped, tag = 'input window, operand 6, single buffered']
    #allocation7 [shape = 'u8[1024]{0}', space=vmem, size = 0x400, scoped, tag = 'input window, operand 8, single buffered']
    #allocation8 [shape = 's32[1]{0}', space=sflag, size = 0x4, scoped, tag = 'scoped memory for transformer_vae_forward.5']
    #allocation9 [shape = 'u8[1024]{0}', space=vmem, size = 0x400, scoped, tag = 'input window, operand 10, single buffered']
    #allocation10 [shape = 'u8[1024]{0}', space=vmem, size = 0x400, scoped, tag = 'input window, operand 12, single buffered']
    #allocation11 [shape = 's32[1]{0}', space=sflag, size = 0x4, scoped, tag = 'scoped memory for transformer_vae_forward.5']
    #allocation12 [shape = 'u8[1024]{0}', space=vmem, size = 0x400, scoped, tag = 'input window, operand 13, single buffered']
    #allocation13 [shape = 'u8[1024]{0}', space=vmem, size = 0x400, scoped, tag = 'input window, operand 14, single buffered']
    #allocation14 [shape = 's32[1]{0}', space=sflag, size = 0x4, scoped, tag = 'scoped memory for transformer_vae_forward.5']
    #allocation15 [shape = 'u8[1024]{0}', space=vmem, size = 0x400, scoped, tag = 'input window, operand 15, single buffered']
    #allocation16 [shape = 'u8[1024]{0}', space=vmem, size = 0x400, scoped, tag = 'input window, operand 16, single buffered']
    #allocation17 [shape = 's32[1]{0}', space=sflag, size = 0x4, scoped, tag = 'scoped memory for transformer_vae_forward.5']
    #allocation18 [shape = 'u8[32768]{0}', space=vmem, size = 0x8000, scoped, tag = 'input window, operand 17, single buffered']
    #allocation19 [shape = 'u8[1024]{0}', space=vmem, size = 0x400, scoped, tag = 'input window, operand 18, single buffered']
    #allocation20 [shape = 's32[1]{0}', space=sflag, size = 0x4, scoped, tag = 'scoped memory for transformer_vae_forward.5']
    #allocation21 [shape = 'u8[1024]{0}', space=vmem, size = 0x400, scoped, tag = 'input window, operand 20, single buffered']
    %26 = vsyncpa [#allocation3], 0
    %27 = vsyncpa [#allocation5], 0
    %28 = vsyncpa [#allocation8], 0
    %29 = vsyncpa [#allocation11], 0
    %30 = vsyncpa [#allocation14], 0
    %31 = vsyncpa [#allocation17], 0
    %32 = vsyncpa [#allocation20], 0
    // Predicated region
    $region2: #{transformer_vae_forward.5} parent=1 // pred_check
      _
    $region3: #{transformer_vae_forward.5} parent=1 // pred_check_branch
      %34 = sbr.rel (0) target = $region5
    $region4: #{transformer_vae_forward.5} parent=1 // pred_region
      _
    $region5: #{transformer_vae_forward.5} parent=1 // pred_fallthru
      _
    // Predicated region
    $region6: #{transformer_vae_forward.5} parent=1 // pred_check
      _
    $region7: #{transformer_vae_forward.5} parent=1 // pred_check_branch
      %36 = sbr.rel (0) target = $region9
    $region8: #{transformer_vae_forward.5} parent=1 // pred_region
      _
    $region9: #{transformer_vae_forward.5} parent=1 // pred_fallthru
      _
    // Predicated region
    $region10: #{transformer_vae_forward.5} parent=1 // pred_check
      _
    $region11: #{transformer_vae_forward.5} parent=1 // pred_check_branch
      %38 = sbr.rel (0) target = $region13
    $region12: #{transformer_vae_forward.5} parent=1 // pred_region
      %40 = vsyncadd [#allocation3], 0
      %s41 = sshll.u32 %s2, 4
      %s42 = int_to_ptr.hbm [resolvable:$true] %s41
      %s43 = sshll.u32 [#allocation2], 4
      %s44 = int_to_ptr.vmem [resolvable:$true] %s43
      %49 = dma.hbm_to_vmem [thread:$0]  %s42, 256, %s44, [#allocation3], 128, 128, 8
    $region13: #{transformer_vae_forward.5} parent=1 // pred_fallthru
      _
    // Predicated region
    $region14: #{transformer_vae_forward.5} parent=1 // pred_check
      _
    $region15: #{transformer_vae_forward.5} parent=1 // pred_check_branch
      %51 = sbr.rel (0) target = $region17
    $region16: #{transformer_vae_forward.5} parent=1 // pred_region
      _
    $region17: #{transformer_vae_forward.5} parent=1 // pred_fallthru
      _
    // Predicated region
    $region18: #{transformer_vae_forward.5} parent=1 // pred_check
      _
    $region19: #{transformer_vae_forward.5} parent=1 // pred_check_branch
      %53 = sbr.rel (0) target = $region21
    $region20: #{transformer_vae_forward.5} parent=1 // pred_region
      %55 = vsyncadd [#allocation5], 0
      %s57 = sshll.u32 %s4, 4
      %s58 = int_to_ptr.hbm [resolvable:$true] %s57
      %s59 = sshll.u32 [#allocation4], 4
      %s60 = int_to_ptr.vmem [resolvable:$true] %s59
      %62 = dma.hbm_to_vmem [thread:$0]  %s58, 16, %s60, [#allocation5]
    $region21: #{transformer_vae_forward.5} parent=1 // pred_fallthru
      _
    // Predicated region
    $region22: #{transformer_vae_forward.5} parent=1 // pred_check
      _
    $region23: #{transformer_vae_forward.5} parent=1 // pred_check_branch
      %64 = sbr.rel (0) target = $region25
    $region24: #{transformer_vae_forward.5} parent=1 // pred_region
      _
    $region25: #{transformer_vae_forward.5} parent=1 // pred_fallthru
      _
    // Predicated region
    $region26: #{transformer_vae_forward.5} parent=1 // pred_check
      _
    $region27: #{transformer_vae_forward.5} parent=1 // pred_check_branch
      %66 = sbr.rel (0) target = $region29
    $region28: #{transformer_vae_forward.5} parent=1 // pred_region
      %68 = vsyncadd [#allocation5], 0
      %s70 = sshll.u32 %s6, 4
      %s71 = int_to_ptr.hbm [resolvable:$true] %s70
      %s72 = sshll.u32 [#allocation6], 4
      %s73 = int_to_ptr.vmem [resolvable:$true] %s72
      %75 = dma.hbm_to_vmem [thread:$0]  %s71, 16, %s73, [#allocation5]
    $region29: #{transformer_vae_forward.5} parent=1 // pred_fallthru
      _
    // Predicated region
    $region30: #{transformer_vae_forward.5} parent=1 // pred_check
      _
    $region31: #{transformer_vae_forward.5} parent=1 // pred_check_branch
      %77 = sbr.rel (0) target = $region33
    $region32: #{transformer_vae_forward.5} parent=1 // pred_region
      _
    $region33: #{transformer_vae_forward.5} parent=1 // pred_fallthru
      _
    // Predicated region
    $region34: #{transformer_vae_forward.5} parent=1 // pred_check
      _
    $region35: #{transformer_vae_forward.5} parent=1 // pred_check_branch
      %79 = sbr.rel (0) target = $region37
    $region36: #{transformer_vae_forward.5} parent=1 // pred_region
      %81 = vsyncadd [#allocation8], 0
      %s82 = sshll.u32 %s8, 4
      %s83 = int_to_ptr.hbm [resolvable:$true] %s82
      %s84 = sshll.u32 [#allocation7], 4
      %s85 = int_to_ptr.vmem [resolvable:$true] %s84
      %90 = dma.hbm_to_vmem [thread:$0]  %s83, 32, %s85, [#allocation8], 16, 16, 1
    $region37: #{transformer_vae_forward.5} parent=1 // pred_fallthru
      _
    // Predicated region
    $region38: #{transformer_vae_forward.5} parent=1 // pred_check
      _
    $region39: #{transformer_vae_forward.5} parent=1 // pred_check_branch
      %92 = sbr.rel (0) target = $region41
    $region40: #{transformer_vae_forward.5} parent=1 // pred_region
      _
    $region41: #{transformer_vae_forward.5} parent=1 // pred_fallthru
      _
    // Predicated region
    $region42: #{transformer_vae_forward.5} parent=1 // pred_check
      _
    $region43: #{transformer_vae_forward.5} parent=1 // pred_check_branch
      %94 = sbr.rel (0) target = $region45
    $region44: #{transformer_vae_forward.5} parent=1 // pred_region
      %96 = vsyncadd [#allocation8], 0
      %s97 = sshll.u32 %s10, 4
      %s98 = int_to_ptr.hbm [resolvable:$true] %s97
      %s99 = sshll.u32 [#allocation9], 4
      %s100 = int_to_ptr.vmem [resolvable:$true] %s99
      %105 = dma.hbm_to_vmem [thread:$0]  %s98, 32, %s100, [#allocation8], 16, 16, 1
    $region45: #{transformer_vae_forward.5} parent=1 // pred_fallthru
      _
    // Predicated region
    $region46: #{transformer_vae_forward.5} parent=1 // pred_check
      _
    $region47: #{transformer_vae_forward.5} parent=1 // pred_check_branch
      %107 = sbr.rel (0) target = $region49
    $region48: #{transformer_vae_forward.5} parent=1 // pred_region
      _
    $region49: #{transformer_vae_forward.5} parent=1 // pred_fallthru
      _
    // Predicated region
    $region50: #{transformer_vae_forward.5} parent=1 // pred_check
      _
    $region51: #{transformer_vae_forward.5} parent=1 // pred_check_branch
      %109 = sbr.rel (0) target = $region53
    $region52: #{transformer_vae_forward.5} parent=1 // pred_region
      %111 = vsyncadd [#allocation11], 0
      %s112 = sshll.u32 %s12, 4
      %s113 = int_to_ptr.hbm [resolvable:$true] %s112
      %s114 = sshll.u32 [#allocation10], 4
      %s115 = int_to_ptr.vmem [resolvable:$true] %s114
      %120 = dma.hbm_to_vmem [thread:$0]  %s113, 32, %s115, [#allocation11], 16, 16, 1
    $region53: #{transformer_vae_forward.5} parent=1 // pred_fallthru
      _
    // Predicated region
    $region54: #{transformer_vae_forward.5} parent=1 // pred_check
      _
    $region55: #{transformer_vae_forward.5} parent=1 // pred_check_branch
      %122 = sbr.rel (0) target = $region57
    $region56: #{transformer_vae_forward.5} parent=1 // pred_region
      %124 = vsyncadd [#allocation11], 0
      %s125 = sshll.u32 %s13, 4
      %s126 = int_to_ptr.hbm [resolvable:$true] %s125
      %s127 = sshll.u32 [#allocation12], 4
      %s128 = int_to_ptr.vmem [resolvable:$true] %s127
      %133 = dma.hbm_to_vmem [thread:$0]  %s126, 32, %s128, [#allocation11], 16, 16, 1
    $region57: #{transformer_vae_forward.5} parent=1 // pred_fallthru
      _
    // Predicated region
    $region58: #{transformer_vae_forward.5} parent=1 // pred_check
      _
    $region59: #{transformer_vae_forward.5} parent=1 // pred_check_branch
      %135 = sbr.rel (0) target = $region61
    $region60: #{transformer_vae_forward.5} parent=1 // pred_region
      %137 = vsyncadd [#allocation14], 0
      %s138 = sshll.u32 %s14, 4
      %s139 = int_to_ptr.hbm [resolvable:$true] %s138
      %s140 = sshll.u32 [#allocation13], 4
      %s141 = int_to_ptr.vmem [resolvable:$true] %s140
      %146 = dma.hbm_to_vmem [thread:$0]  %s139, 32, %s141, [#allocation14], 16, 16, 1
    $region61: #{transformer_vae_forward.5} parent=1 // pred_fallthru
      _
    // Predicated region
    $region62: #{transformer_vae_forward.5} parent=1 // pred_check
      _
    $region63: #{transformer_vae_forward.5} parent=1 // pred_check_branch
      %148 = sbr.rel (0) target = $region65
    $region64: #{transformer_vae_forward.5} parent=1 // pred_region
      %150 = vsyncadd [#allocation14], 0
      %s151 = sshll.u32 %s15, 4
      %s152 = int_to_ptr.hbm [resolvable:$true] %s151
      %s153 = sshll.u32 [#allocation15], 4
      %s154 = int_to_ptr.vmem [resolvable:$true] %s153
      %159 = dma.hbm_to_vmem [thread:$0]  %s152, 32, %s154, [#allocation14], 16, 16, 1
    $region65: #{transformer_vae_forward.5} parent=1 // pred_fallthru
      _
    // Predicated region
    $region66: #{transformer_vae_forward.5} parent=1 // pred_check
      _
    $region67: #{transformer_vae_forward.5} parent=1 // pred_check_branch
      %161 = sbr.rel (0) target = $region69
    $region68: #{transformer_vae_forward.5} parent=1 // pred_region
      %163 = vsyncadd [#allocation17], 0
      %s164 = sshll.u32 %s16, 4
      %s165 = int_to_ptr.hbm [resolvable:$true] %s164
      %s166 = sshll.u32 [#allocation16], 4
      %s167 = int_to_ptr.vmem [resolvable:$true] %s166
      %172 = dma.hbm_to_vmem [thread:$0]  %s165, 32, %s167, [#allocation17], 16, 16, 1
    $region69: #{transformer_vae_forward.5} parent=1 // pred_fallthru
      _
    // Predicated region
    $region70: #{transformer_vae_forward.5} parent=1 // pred_check
      _
    $region71: #{transformer_vae_forward.5} parent=1 // pred_check_branch
      %174 = sbr.rel (0) target = $region73
    $region72: #{transformer_vae_forward.5} parent=1 // pred_region
      %176 = vsyncadd [#allocation17], 0
      %s177 = sshll.u32 %s17, 4
      %s178 = int_to_ptr.hbm [resolvable:$true] %s177
      %s179 = sshll.u32 [#allocation18], 4
      %s180 = int_to_ptr.vmem [resolvable:$true] %s179
      %185 = dma.hbm_to_vmem [thread:$0]  %s178, 1024, %s180, [#allocation17], 128, 128, 8
    $region73: #{transformer_vae_forward.5} parent=1 // pred_fallthru
      _
    // Predicated region
    $region74: #{transformer_vae_forward.5} parent=1 // pred_check
      _
    $region75: #{transformer_vae_forward.5} parent=1 // pred_check_branch
      %187 = sbr.rel (0) target = $region77
    $region76: #{transformer_vae_forward.5} parent=1 // pred_region
      %189 = vsyncadd [#allocation20], 0
      %s190 = sshll.u32 %s18, 4
      %s191 = int_to_ptr.hbm [resolvable:$true] %s190
      %s192 = sshll.u32 [#allocation19], 4
      %s193 = int_to_ptr.vmem [resolvable:$true] %s192
      %198 = dma.hbm_to_vmem [thread:$0]  %s191, 32, %s193, [#allocation20], 16, 16, 1
    $region77: #{transformer_vae_forward.5} parent=1 // pred_fallthru
      _
    // Predicated region
    $region78: #{transformer_vae_forward.5} parent=1 // pred_check
      _
    $region79: #{transformer_vae_forward.5} parent=1 // pred_check_branch
      %200 = sbr.rel (0) target = $region81
    $region80: #{transformer_vae_forward.5} parent=1 // pred_region
      _
    $region81: #{transformer_vae_forward.5} parent=1 // pred_fallthru
      _
    // Predicated region
    $region82: #{transformer_vae_forward.5} parent=1 // pred_check
      _
    $region83: #{transformer_vae_forward.5} parent=1 // pred_check_branch
      %202 = sbr.rel (0) target = $region85
    $region84: #{transformer_vae_forward.5} parent=1 // pred_region
      %204 = vsyncadd [#allocation20], 0
      %s205 = sshll.u32 %s20, 4
      %s206 = int_to_ptr.hbm [resolvable:$true] %s205
      %s207 = sshll.u32 [#allocation21], 4
      %s208 = int_to_ptr.vmem [resolvable:$true] %s207
      %213 = dma.hbm_to_vmem [thread:$0]  %s206, 32, %s208, [#allocation20], 16, 16, 1
    $region85: #{transformer_vae_forward.5} parent=1 // pred_fallthru
      _
    // Predicated region
    $region86: #{transformer_vae_forward.5} parent=1 // pred_check
      _
    $region87: #{transformer_vae_forward.5} parent=1 // pred_check_branch
      %215 = sbr.rel (0) target = $region89
    $region88: #{transformer_vae_forward.5} parent=1 // pred_region
      %217 = dma.done [#allocation3], 256
    $region89: #{transformer_vae_forward.5} parent=1 // pred_fallthru
      _
    // Predicated region
    $region90: #{transformer_vae_forward.5} parent=1 // pred_check
      _
    $region91: #{transformer_vae_forward.5} parent=1 // pred_check_branch
      %219 = sbr.rel (0) target = $region93
    $region92: #{transformer_vae_forward.5} parent=1 // pred_region
      %221 = dma.done [#allocation5], 16
    $region93: #{transformer_vae_forward.5} parent=1 // pred_fallthru
      _
    // Predicated region
    $region94: #{transformer_vae_forward.5} parent=1 // pred_check
      _
    $region95: #{transformer_vae_forward.5} parent=1 // pred_check_branch
      %223 = sbr.rel (0) target = $region97
    $region96: #{transformer_vae_forward.5} parent=1 // pred_region
      %225 = dma.done [#allocation5], 16
    $region97: #{transformer_vae_forward.5} parent=1 // pred_fallthru
      _
    // Predicated region
    $region98: #{transformer_vae_forward.5} parent=1 // pred_check
      _
    $region99: #{transformer_vae_forward.5} parent=1 // pred_check_branch
      %227 = sbr.rel (0) target = $region101
    $region100: #{transformer_vae_forward.5} parent=1 // pred_region
      %229 = dma.done [#allocation8], 32
    $region101: #{transformer_vae_forward.5} parent=1 // pred_fallthru
      _
    // Predicated region
    $region102: #{transformer_vae_forward.5} parent=1 // pred_check
      _
    $region103: #{transformer_vae_forward.5} parent=1 // pred_check_branch
      %231 = sbr.rel (0) target = $region105
    $region104: #{transformer_vae_forward.5} parent=1 // pred_region
      %233 = dma.done [#allocation8], 32
    $region105: #{transformer_vae_forward.5} parent=1 // pred_fallthru
      _
    // Predicated region
    $region106: #{transformer_vae_forward.5} parent=1 // pred_check
      _
    $region107: #{transformer_vae_forward.5} parent=1 // pred_check_branch
      %235 = sbr.rel (0) target = $region109
    $region108: #{transformer_vae_forward.5} parent=1 // pred_region
      %237 = dma.done [#allocation11], 32
    $region109: #{transformer_vae_forward.5} parent=1 // pred_fallthru
      _
    // Predicated region
    $region110: #{transformer_vae_forward.5} parent=1 // pred_check
      _
    $region111: #{transformer_vae_forward.5} parent=1 // pred_check_branch
      %239 = sbr.rel (0) target = $region113
    $region112: #{transformer_vae_forward.5} parent=1 // pred_region
      %241 = dma.done [#allocation11], 32
    $region113: #{transformer_vae_forward.5} parent=1 // pred_fallthru
      _
    // Predicated region
    $region114: #{transformer_vae_forward.5} parent=1 // pred_check
      _
    $region115: #{transformer_vae_forward.5} parent=1 // pred_check_branch
      %243 = sbr.rel (0) target = $region117
    $region116: #{transformer_vae_forward.5} parent=1 // pred_region
      %245 = dma.done [#allocation14], 32
    $region117: #{transformer_vae_forward.5} parent=1 // pred_fallthru
      _
    // Predicated region
    $region118: #{transformer_vae_forward.5} parent=1 // pred_check
      _
    $region119: #{transformer_vae_forward.5} parent=1 // pred_check_branch
      %247 = sbr.rel (0) target = $region121
    $region120: #{transformer_vae_forward.5} parent=1 // pred_region
      %249 = dma.done [#allocation14], 32
    $region121: #{transformer_vae_forward.5} parent=1 // pred_fallthru
      _
    // Predicated region
    $region122: #{transformer_vae_forward.5} parent=1 // pred_check
      _
    $region123: #{transformer_vae_forward.5} parent=1 // pred_check_branch
      %251 = sbr.rel (0) target = $region125
    $region124: #{transformer_vae_forward.5} parent=1 // pred_region
      %253 = dma.done [#allocation17], 32
    $region125: #{transformer_vae_forward.5} parent=1 // pred_fallthru
      _
    // Predicated region
    $region126: #{transformer_vae_forward.5} parent=1 // pred_check
      _
    $region127: #{transformer_vae_forward.5} parent=1 // pred_check_branch
      %255 = sbr.rel (0) target = $region129
    $region128: #{transformer_vae_forward.5} parent=1 // pred_region
      %257 = dma.done [#allocation17], 1024
    $region129: #{transformer_vae_forward.5} parent=1 // pred_fallthru
      _
    // Predicated region
    $region130: #{transformer_vae_forward.5} parent=1 // pred_check
      _
    $region131: #{transformer_vae_forward.5} parent=1 // pred_check_branch
      %259 = sbr.rel (0) target = $region133
    $region132: #{transformer_vae_forward.5} parent=1 // pred_region
      %261 = dma.done [#allocation20], 32
    $region133: #{transformer_vae_forward.5} parent=1 // pred_fallthru
      _
    // Predicated region
    $region134: #{transformer_vae_forward.5} parent=1 // pred_check
      _
    $region135: #{transformer_vae_forward.5} parent=1 // pred_check_branch
      %263 = sbr.rel (0) target = $region137
    $region136: #{transformer_vae_forward.5} parent=1 // pred_region
      %265 = dma.done [#allocation20], 32
    $region137: #{transformer_vae_forward.5} parent=1 // pred_fallthru
      _
    %v266 = vlaneseq
    %v267 = vshrl.u32 %v266, 7
    %v268 = vadd.s32 %v267, 8
    %v269 = vlaneseq
    %v270 = vand.u32 %v269, 127
    %vm271 = vcmp.lt.s32.totalorder %v267, 5
    %vm272 = vcmp.lt.s32.totalorder %v268, 5
    %vm273 = vcmp.lt.s32.totalorder %v270, 5
    %vm274 = vmand %vm271, %vm273
    %vm275 = vmand %vm272, %vm273
    %vm276 = vcmp.ge.s32.totalorder %v267, 5
    %vm277 = vcmp.ge.s32.totalorder %v268, 5
    %vm278 = vcmp.le.s32.totalorder %v270, %v267
    %vm279 = vcmp.le.s32.totalorder %v270, %v268
    %vm280 = vmand %vm276, %vm278
    %vm281 = vmand %vm277, %vm279
    %vm282 = vmor %vm274, %vm280
    %vm283 = vmor %vm275, %vm281
    %v284 = vsel %vm282, 0.0, -1e+30
    %v285 = vsel %vm283, 0.0, -1e+30
    %v286 = vld [vmem:[%s1] sm:$0xf]
    %v287 = vld [vmem:[%s3] sm:$0xff]
    %v288 = vld [vmem:[%s3 + $0x8] sm:$0xff]
    %v289 = vld [vmem:[#allocation4] sm:$0x1]
    %v291 = vperm.slane %v289, 0
    %vm293 = vcmask 130048
    %v295 = vsel %vm293, %v286, 0
    %297 = vmatpush.msra.mxu0 0.0
    %298 = vmatpush.msra.mxu0 0.0
    %299 = vmatpush.msra.mxu0 0.0
    %300 = vmatpush.msra.mxu0 0.0
    %301 = vmatpush.msra.mxu0 0.0
    %302 = vmatpush.msra.mxu0 0.0
    %303 = vmatpush.msra.mxu0 0.0
    %304 = vmatpush.msra.mxu0 0.0
    %305 = vmatpush.msra.mxu0 0.0
    %306 = vmatpush.msra.mxu0 0.0
    %307 = vmatpush.msra.mxu0 0.0
    %308 = vmatpush.msra.mxu0 0.0
    %309 = vmatpush.msra.mxu0 0.0
    %310 = vmatpush.msra.mxu0 0.0
    %311 = vmatpush.msra.mxu0 %v288
    %312 = vmatpush.msra.mxu0 %v287
    %313 = vmatmul.f32.gmra.mxu0 %v295
    %v314 = vpop.f32.mrf.mxu0
    %v315 = vadd.f32 %v291, %v314
    %316 = vdwg.mxu0
    %v317 = vperm.slane %v315, 3
    %vm318 = vcmask 1043456
    %v319 = vsel %vm318, %v315, %v317
    %v320 = vld [vmem:[#allocation2] sm:$0xff]
    %v321 = vld [vmem:[#allocation2 + $0x8] sm:$0xf]
    %v322 = vadd.f32 %v319, %v320
    %v323 = vadd.f32 %v317, %v321
    %v324 = vld [vmem:[%s0] sm:$0x1]
    %v325 = vld [vmem:[%s7] sm:$0xff]
    %v326 = vld [vmem:[%s7 + $0x8] sm:$0xff]
    %v327 = vld [vmem:[%s7 + $0x10] sm:$0xff]
    %v328 = vld [vmem:[%s7 + $0x18] sm:$0xff]
    %v329 = vld [vmem:[#allocation7] sm:$0x1]
    %vm330 = vcmask 261120
    %v332 = vsel %vm330, %v324, 0
    %334 = vmatpush.msra.mxu0 0.0
    %335 = vmatpush.msra.mxu0 0.0
    %336 = vmatpush.msra.mxu0 0.0
    %337 = vmatpush.msra.mxu0 0.0
    %338 = vmatpush.msra.mxu0 0.0
    %339 = vmatpush.msra.mxu0 0.0
    %340 = vmatpush.msra.mxu0 0.0
    %341 = vmatpush.msra.mxu0 0.0
    %342 = vmatpush.msra.mxu0 0.0
    %343 = vmatpush.msra.mxu0 0.0
    %344 = vmatpush.msra.mxu0 0.0
    %345 = vmatpush.msra.mxu0 0.0
    %346 = vmatpush.msra.mxu0 %v328
    %347 = vmatpush.msra.mxu0 %v327
    %348 = vmatpush.msra.mxu0 %v326
    %349 = vmatpush.msra.mxu0 %v325
    %350 = vmatmul.f32.gmra.mxu0 %v332
    %v351 = vpop.f32.mrf.mxu0
    %v352 = vadd.f32 %v329, %v351
    %353 = vdwg.mxu0
    %vm356 = vcmask 1040384
    %v357 = vrot.slane %v322, 7
    %v358 = vrot.slane %v323, 7
    %v359 = vsel %vm356, %v357, %v358
    %v362 = vsel %vm356, %v352, %v357
    %v363 = vld [vmem:[%s9] sm:$0xff]
    %v364 = vld [vmem:[%s9 + $0x8] sm:$0xff]
    %v365 = vld [vmem:[%s9 + $0x10] sm:$0xff]
    %v366 = vld [vmem:[%s9 + $0x18] sm:$0xff]
    %v367 = vld [vmem:[#allocation9] sm:$0x1]
    %v368 = vld [vmem:[%s11] sm:$0xff]
    %v369 = vld [vmem:[%s11 + $0x8] sm:$0xff]
    %v370 = vld [vmem:[%s11 + $0x10] sm:$0xff]
    %v371 = vld [vmem:[%s11 + $0x18] sm:$0xff]
    %v372 = vld [vmem:[#allocation10] sm:$0x1]
    %v373 = vld [vmem:[#allocation12] sm:$0x1]
    %v374 = vld [vmem:[#allocation13] sm:$0x1]
    %v375 = vld [vmem:[#allocation15] sm:$0x1]
    %v376 = vld [vmem:[#allocation16] sm:$0x1]
    %v377 = vld [vmem:[#allocation18] sm:$0xff]
    %v378 = vld [vmem:[#allocation18 + $0x8] sm:$0xff]
    %v379 = vld [vmem:[#allocation18 + $0x10] sm:$0xff]
    %v380 = vld [vmem:[#allocation18 + $0x18] sm:$0xff]
    %v381 = vld [vmem:[#allocation19] sm:$0x1]
    %v382 = vld [vmem:[%s19] sm:$0xff]
    %v383 = vld [vmem:[%s19 + $0x8] sm:$0xff]
    %v384 = vld [vmem:[%s19 + $0x10] sm:$0xff]
    %v385 = vld [vmem:[%s19 + $0x18] sm:$0xff]
    %v386 = vld [vmem:[%s19 + $0x20] sm:$0xff]
    %v387 = vld [vmem:[%s19 + $0x28] sm:$0xff]
    %v388 = vld [vmem:[%s19 + $0x30] sm:$0xff]
    %v389 = vld [vmem:[%s19 + $0x38] sm:$0xff]
    %v390 = vld [vmem:[#allocation21] sm:$0x1]
    %v392 = vperm.slane %v367, 0
    %v395 = vsel %vm330, %v362, 0
    %v397 = vsel %vm330, %v359, 0
    %399 = vmatpush.msra.mxu0 0.0
    %400 = vmatpush.msra.mxu0 0.0
    %401 = vmatpush.msra.mxu0 0.0
    %402 = vmatpush.msra.mxu0 0.0
    %403 = vmatpush.msra.mxu0 0.0
    %404 = vmatpush.msra.mxu0 0.0
    %405 = vmatpush.msra.mxu0 0.0
    %406 = vmatpush.msra.mxu0 0.0
    %407 = vmatpush.msra.mxu0 0.0
    %408 = vmatpush.msra.mxu0 0.0
    %409 = vmatpush.msra.mxu0 0.0
    %410 = vmatpush.msra.mxu0 0.0
    %411 = vmatpush.msra.mxu0 %v366
    %412 = vmatpush.msra.mxu0 %v365
    %413 = vmatpush.msra.mxu0 %v364
    %414 = vmatpush.msra.mxu0 %v363
    %415 = vmatmul.f32.gmra.mxu0 %v395
    %v416 = vpop.f32.mrf.mxu0
    %v417 = vadd.f32 %v392, %v416
    %418 = vmatmul.f32.gmra.mxu0 %v397
    %v419 = vpop.f32.mrf.mxu0
    %v420 = vadd.f32 %v392, %v419
    %421 = vdwg.mxu0
    %424 = vrot.lane.b32.xlu0 %v417, 96
    %v425 = vpop.permute.xlu0 %424
    %426 = vrot.lane.b32.xlu0 %v420, 96
    %v427 = vpop.permute.xlu0 %426
    %v428 = vsel %vm293, %v417, 0
    %v430 = vsel %vm293, %v420, 0
    %v432 = vsel %vm293, %v425, 0
    %v434 = vsel %vm293, %v427, 0
    %436 = vmatpush.xpose.msra.mxu0 0.0
    %437 = vmatpush.xpose.msra.mxu0 0.0
    %438 = vmatpush.xpose.msra.mxu0 0.0
    %439 = vmatpush.xpose.msra.mxu0 0.0
    %440 = vmatpush.xpose.msra.mxu0 0.0
    %441 = vmatpush.xpose.msra.mxu0 0.0
    %442 = vmatpush.xpose.msra.mxu0 0.0
    %443 = vmatpush.xpose.msra.mxu0 0.0
    %444 = vmatpush.xpose.msra.mxu0 0.0
    %445 = vmatpush.xpose.msra.mxu0 0.0
    %446 = vmatpush.xpose.msra.mxu0 0.0
    %447 = vmatpush.xpose.msra.mxu0 0.0
    %448 = vmatpush.xpose.msra.mxu0 0.0
    %449 = vmatpush.xpose.msra.mxu0 0.0
    %450 = vmatpush.xpose.msra.mxu0 %v434
    %451 = vmatpush.xpose.msra.mxu0 %v432
    %452 = vmatmul.f32.gmra.mxu0 %v428
    %v453 = vpop.f32.mrf.mxu0
    %v454 = vadd.f32 0.0, %v453
    %455 = vmatmul.f32.gmra.mxu0 %v430
    %v456 = vpop.f32.mrf.mxu0
    %v457 = vadd.f32 0.0, %v456
    %458 = vdwg.mxu0
    %v459 = vmul.f32 %v454, 0.25
    %v460 = vmul.f32 %v457, 0.25
    %v461 = vadd.f32 %v459, %v284
    %v462 = vadd.f32 %v460, %v285
    %vm463 = vcmask 105472
    %v464 = vsel %vm463, %v461, -inf
    %465 = vmax.xlane.f32.xlu0 %v464
    %v466 = vpop.xlane.xlu0 %465
    %vm467 = vcmask 102400
    %v468 = vsel %vm467, %v462, -inf
    %469 = vmax.xlane.f32.xlu0 %v468
    %v470 = vpop.xlane.xlu0 %469
    %v471 = vsub.f32 %v461, %v466
    %v472 = vsub.f32 %v462, %v470
    %v473 = vmul.f32 %v471, 1.442695
    %v474 = vpow.pop %v473
    %v475 = vmul.f32 %v472, 1.442695
    %v476 = vpow.pop %v475
    %v477 = vsel %vm463, %v474, 0.0
    %478 = vadd.xlane.f32.xlu0 %v477
    %v479 = vpop.xlane.xlu0 %478
    %v480 = vsel %vm467, %v476, 0.0
    %481 = vadd.xlane.f32.xlu0 %v480
    %v482 = vpop.xlane.xlu0 %481
    %v483 = vrcp.pop %v479
    %v484 = vrcp.pop %v482
    %v485 = vmul.f32 %v474, %v483
    %v486 = vmul.f32 %v476, %v484
    %487 = vrot.lane.b32.xlu0 %v417, 64
    %v488 = vpop.permute.xlu0 %487
    %489 = vrot.lane.b32.xlu0 %v420, 64
    %v490 = vpop.permute.xlu0 %489
    %v493 = vsel %vm463, %v485, 0
    %v496 = vsel %vm463, %v486, 0
    %vm498 = vcmask 1044480
    %v499 = vsel %vm498, %v490, 0
    %501 = vmatpush.msra.mxu0 0.0
    %502 = vmatpush.msra.mxu0 0.0
    %503 = vmatpush.msra.mxu0 0.0
    %504 = vmatpush.msra.mxu0 0.0
    %505 = vmatpush.msra.mxu0 0.0
    %506 = vmatpush.msra.mxu0 0.0
    %507 = vmatpush.msra.mxu0 0.0
    %508 = vmatpush.msra.mxu0 0.0
    %509 = vmatpush.msra.mxu0 0.0
    %510 = vmatpush.msra.mxu0 0.0
    %511 = vmatpush.msra.mxu0 0.0
    %512 = vmatpush.msra.mxu0 0.0
    %513 = vmatpush.msra.mxu0 0.0
    %514 = vmatpush.msra.mxu0 0.0
    %515 = vmatpush.msra.mxu0 %v499
    %516 = vmatpush.msra.mxu0 %v488
    %517 = vmatmul.f32.gmra.mxu0 %v493
    %v518 = vpop.f32.mrf.mxu0
    %v519 = vadd.f32 0.0, %v518
    %520 = vmatmul.f32.gmra.mxu0 %v496
    %v521 = vpop.f32.mrf.mxu0
    %v522 = vadd.f32 0.0, %v521
    %523 = vdwg.mxu0
    %524 = vrot.lane.b32.xlu0 %v417, 112
    %v525 = vpop.permute.xlu0 %524
    %526 = vrot.lane.b32.xlu0 %v420, 112
    %v527 = vpop.permute.xlu0 %526
    %528 = vrot.lane.b32.xlu0 %v417, 80
    %v529 = vpop.permute.xlu0 %528
    %530 = vrot.lane.b32.xlu0 %v420, 80
    %v531 = vpop.permute.xlu0 %530
    %v532 = vsel %vm293, %v525, 0
    %v534 = vsel %vm293, %v527, 0
    %v536 = vsel %vm293, %v529, 0
    %v538 = vsel %vm293, %v531, 0
    %540 = vmatpush.xpose.msra.mxu0 0.0
    %541 = vmatpush.xpose.msra.mxu0 0.0
    %542 = vmatpush.xpose.msra.mxu0 0.0
    %543 = vmatpush.xpose.msra.mxu0 0.0
    %544 = vmatpush.xpose.msra.mxu0 0.0
    %545 = vmatpush.xpose.msra.mxu0 0.0
    %546 = vmatpush.xpose.msra.mxu0 0.0
    %547 = vmatpush.xpose.msra.mxu0 0.0
    %548 = vmatpush.xpose.msra.mxu0 0.0
    %549 = vmatpush.xpose.msra.mxu0 0.0
    %550 = vmatpush.xpose.msra.mxu0 0.0
    %551 = vmatpush.xpose.msra.mxu0 0.0
    %552 = vmatpush.xpose.msra.mxu0 0.0
    %553 = vmatpush.xpose.msra.mxu0 0.0
    %554 = vmatpush.xpose.msra.mxu0 %v538
    %555 = vmatpush.xpose.msra.mxu0 %v536
    %556 = vmatmul.f32.gmra.mxu0 %v532
    %v557 = vpop.f32.mrf.mxu0
    %v558 = vadd.f32 0.0, %v557
    %559 = vmatmul.f32.gmra.mxu0 %v534
    %v560 = vpop.f32.mrf.mxu0
    %v561 = vadd.f32 0.0, %v560
    %562 = vdwg.mxu0
    %v563 = vmul.f32 %v558, 0.25
    %v564 = vmul.f32 %v561, 0.25
    %v565 = vadd.f32 %v563, %v284
    %v566 = vadd.f32 %v564, %v285
    %v567 = vsel %vm463, %v565, -inf
    %568 = vmax.xlane.f32.xlu0 %v567
    %v569 = vpop.xlane.xlu0 %568
    %v570 = vsel %vm467, %v566, -inf
    %571 = vmax.xlane.f32.xlu0 %v570
    %v572 = vpop.xlane.xlu0 %571
    %v573 = vsub.f32 %v565, %v569
    %v574 = vsub.f32 %v566, %v572
    %v575 = vmul.f32 %v573, 1.442695
    %v576 = vpow.pop %v575
    %v577 = vmul.f32 %v574, 1.442695
    %v578 = vpow.pop %v577
    %v579 = vsel %vm463, %v576, 0.0
    %580 = vadd.xlane.f32.xlu0 %v579
    %v581 = vpop.xlane.xlu0 %580
    %v582 = vsel %vm467, %v578, 0.0
    %583 = vadd.xlane.f32.xlu0 %v582
    %v584 = vpop.xlane.xlu0 %583
    %v585 = vrcp.pop %v581
    %v586 = vrcp.pop %v584
    %v587 = vmul.f32 %v576, %v585
    %v588 = vmul.f32 %v578, %v586
    %589 = vrot.lane.b32.xlu0 %v417, 48
    %v590 = vpop.permute.xlu0 %589
    %591 = vrot.lane.b32.xlu0 %v420, 48
    %v592 = vpop.permute.xlu0 %591
    %v595 = vsel %vm463, %v587, 0
    %v598 = vsel %vm463, %v588, 0
    %v600 = vsel %vm498, %v592, 0
    %602 = vmatpush.msra.mxu0 0.0
    %603 = vmatpush.msra.mxu0 0.0
    %604 = vmatpush.msra.mxu0 0.0
    %605 = vmatpush.msra.mxu0 0.0
    %606 = vmatpush.msra.mxu0 0.0
    %607 = vmatpush.msra.mxu0 0.0
    %608 = vmatpush.msra.mxu0 0.0
    %609 = vmatpush.msra.mxu0 0.0
    %610 = vmatpush.msra.mxu0 0.0
    %611 = vmatpush.msra.mxu0 0.0
    %612 = vmatpush.msra.mxu0 0.0
    %613 = vmatpush.msra.mxu0 0.0
    %614 = vmatpush.msra.mxu0 0.0
    %615 = vmatpush.msra.mxu0 0.0
    %616 = vmatpush.msra.mxu0 %v600
    %617 = vmatpush.msra.mxu0 %v590
    %618 = vmatmul.f32.gmra.mxu0 %v595
    %v619 = vpop.f32.mrf.mxu0
    %v620 = vadd.f32 0.0, %v619
    %621 = vmatmul.f32.gmra.mxu0 %v598
    %v622 = vpop.f32.mrf.mxu0
    %v623 = vadd.f32 0.0, %v622
    %624 = vdwg.mxu0
    %627 = vrot.lane.b32.xlu0 %v620, 16
    %v628 = vpop.permute.xlu0 %627
    %629 = vrot.lane.b32.xlu0 %v623, 16
    %v630 = vpop.permute.xlu0 %629
    %v633 = vsel %vm293, %v519, %v628
    %v634 = vsel %vm293, %v522, %v630
    %v636 = vperm.slane %v372, 0
    %v639 = vsel %vm330, %v633, 0
    %v642 = vsel %vm330, %v634, 0
    %644 = vmatpush.msra.mxu0 0.0
    %645 = vmatpush.msra.mxu0 0.0
    %646 = vmatpush.msra.mxu0 0.0
    %647 = vmatpush.msra.mxu0 0.0
    %648 = vmatpush.msra.mxu0 0.0
    %649 = vmatpush.msra.mxu0 0.0
    %650 = vmatpush.msra.mxu0 0.0
    %651 = vmatpush.msra.mxu0 0.0
    %652 = vmatpush.msra.mxu0 0.0
    %653 = vmatpush.msra.mxu0 0.0
    %654 = vmatpush.msra.mxu0 0.0
    %655 = vmatpush.msra.mxu0 0.0
    %656 = vmatpush.msra.mxu0 %v371
    %657 = vmatpush.msra.mxu0 %v370
    %658 = vmatpush.msra.mxu0 %v369
    %659 = vmatpush.msra.mxu0 %v368
    %660 = vmatmul.f32.gmra.mxu0 %v639
    %v661 = vpop.f32.mrf.mxu0
    %v662 = vadd.f32 %v636, %v661
    %663 = vmatmul.f32.gmra.mxu0 %v642
    %v664 = vpop.f32.mrf.mxu0
    %v665 = vadd.f32 %v636, %v664
    %666 = vdwg.mxu0
    %v667 = vadd.f32 %v362, %v662
    %v668 = vadd.f32 %v359, %v665
    %v669 = vsel %vm330, %v667, 0.0
    %670 = vadd.xlane.f32.xlu0 %v669
    %v671 = vpop.xlane.xlu0 %670
    %vm672 = vcmask 258048
    %v673 = vsel %vm672, %v668, 0.0
    %674 = vadd.xlane.f32.xlu0 %v673
    %v675 = vpop.xlane.xlu0 %674
    %v676 = vrcp.pop 32.0
    %v677 = vmul.f32 32.0, %v676
    %v678 = vsub.f32 1.0, %v677
    %v679 = vmul.f32 %v676, %v678
    %v680 = vadd.f32 %v676, %v679
    %vm681 = vweird.f32 %v676
    %v682 = vsel %vm681, %v676, %v680
    %v683 = vmul.f32 %v671, %v682
    %v684 = vmul.f32 %v675, %v682
    %v685 = vsub.f32 %v667, %v683
    %v686 = vsub.f32 %v668, %v684
    %v687 = vmul.f32 %v685, %v685
    %v688 = vmul.f32 %v686, %v686
    %v689 = vsel %vm330, %v687, 0.0
    %690 = vadd.xlane.f32.xlu0 %v689
    %v691 = vpop.xlane.xlu0 %690
    %v692 = vsel %vm672, %v688, 0.0
    %693 = vadd.xlane.f32.xlu0 %v692
    %v694 = vpop.xlane.xlu0 %693
    %v695 = vmul.f32 %v691, %v682
    %v696 = vmul.f32 %v694, %v682
    %v697 = vadd.f32 %v695, 1e-05
    %v698 = vadd.f32 %v696, 1e-05
    %v699 = vrsqrt.pop %v697
    %v700 = vmul.f32 %v699, %v697
    %v701 = vmul.f32 %v700, %v699
    %v702 = vmul.f32 0.5, %v701
    %v703 = vsub.f32 1.5, %v702
    %v704 = vmul.f32 %v699, %v703
    %vm705 = vweird.f32 %v697
    %vm706 = vweird.f32 %v699
    %vm707 = vmor %vm705, %vm706
    %v708 = vsel %vm707, %v699, %v704
    %v709 = vrsqrt.pop %v698
    %v710 = vmul.f32 %v709, %v698
    %v711 = vmul.f32 %v710, %v709
    %v712 = vmul.f32 0.5, %v711
    %v713 = vsub.f32 1.5, %v712
    %v714 = vmul.f32 %v709, %v713
    %vm715 = vweird.f32 %v698
    %vm716 = vweird.f32 %v709
    %vm717 = vmor %vm715, %vm716
    %v718 = vsel %vm717, %v709, %v714
    %v719 = vmul.f32 %v685, %v708
    %v720 = vmul.f32 %v686, %v718
    %v722 = vperm.slane %v373, 0
    %v724 = vmul.f32 %v719, %v722
    %v725 = vmul.f32 %v720, %v722
    %v727 = vperm.slane %v374, 0
    %v729 = vadd.f32 %v724, %v727
    %v730 = vadd.f32 %v725, %v727
    %v732 = vperm.slane %v381, 0
    %v735 = vsel %vm330, %v729, 0
    %v738 = vsel %vm330, %v730, 0
    %740 = vmatpush.msra.mxu0 0.0
    %741 = vmatpush.msra.mxu0 0.0
    %742 = vmatpush.msra.mxu0 0.0
    %743 = vmatpush.msra.mxu0 0.0
    %744 = vmatpush.msra.mxu0 0.0
    %745 = vmatpush.msra.mxu0 0.0
    %746 = vmatpush.msra.mxu0 0.0
    %747 = vmatpush.msra.mxu0 0.0
    %748 = vmatpush.msra.mxu0 0.0
    %749 = vmatpush.msra.mxu0 0.0
    %750 = vmatpush.msra.mxu0 0.0
    %751 = vmatpush.msra.mxu0 0.0
    %752 = vmatpush.msra.mxu0 %v380
    %753 = vmatpush.msra.mxu0 %v379
    %754 = vmatpush.msra.mxu0 %v378
    %755 = vmatpush.msra.mxu0 %v377
    %756 = vmatmul.f32.gmra.mxu0 %v735
    %v757 = vpop.f32.mrf.mxu0
    %v758 = vadd.f32 %v732, %v757
    %759 = vmatmul.f32.gmra.mxu0 %v738
    %v760 = vpop.f32.mrf.mxu0
    %v761 = vadd.f32 %v732, %v760
    %762 = vdwg.mxu0
    %v763 = vmul.f32 %v758, %v758
    %v764 = vmul.f32 %v761, %v761
    %v765 = vmul.f32 %v758, %v763
    %v766 = vmul.f32 %v761, %v764
    %v767 = vmul.f32 %v765, 0.044715
    %v768 = vmul.f32 %v766, 0.044715
    %v769 = vadd.f32 %v758, %v767
    %v770 = vadd.f32 %v761, %v768
    %v771 = vmul.f32 %v769, 0.7978846
    %v772 = vmul.f32 %v770, 0.7978846
    %v773 = vtanh.pop %v771
    %v774 = vtanh.pop %v772
    %v775 = vadd.f32 %v773, 1.0
    %v776 = vadd.f32 %v774, 1.0
    %v777 = vmul.f32 %v775, 0.5
    %v778 = vmul.f32 %v776, 0.5
    %v779 = vmul.f32 %v758, %v777
    %v780 = vmul.f32 %v761, %v778
    %v782 = vperm.slane %v390, 0
    %vm784 = vcmask 523264
    %v786 = vsel %vm784, %v779, 0
    %v789 = vsel %vm784, %v780, 0
    %791 = vmatpush.msra.mxu0 0.0
    %792 = vmatpush.msra.mxu0 0.0
    %793 = vmatpush.msra.mxu0 0.0
    %794 = vmatpush.msra.mxu0 0.0
    %795 = vmatpush.msra.mxu0 0.0
    %796 = vmatpush.msra.mxu0 0.0
    %797 = vmatpush.msra.mxu0 0.0
    %798 = vmatpush.msra.mxu0 0.0
    %799 = vmatpush.msra.mxu0 %v389
    %800 = vmatpush.msra.mxu0 %v388
    %801 = vmatpush.msra.mxu0 %v387
    %802 = vmatpush.msra.mxu0 %v386
    %803 = vmatpush.msra.mxu0 %v385
    %804 = vmatpush.msra.mxu0 %v384
    %805 = vmatpush.msra.mxu0 %v383
    %806 = vmatpush.msra.mxu0 %v382
    %807 = vmatmul.f32.gmra.mxu0 %v786
    %v808 = vpop.f32.mrf.mxu0
    %v809 = vadd.f32 %v782, %v808
    %810 = vmatmul.f32.gmra.mxu0 %v789
    %v811 = vpop.f32.mrf.mxu0
    %v812 = vadd.f32 %v782, %v811
    %813 = vdwg.mxu0
    %v814 = vadd.f32 %v729, %v809
    %v815 = vadd.f32 %v730, %v812
    %v816 = vsel %vm330, %v814, 0.0
    %817 = vadd.xlane.f32.xlu0 %v816
    %v818 = vpop.xlane.xlu0 %817
    %v819 = vsel %vm672, %v815, 0.0
    %820 = vadd.xlane.f32.xlu0 %v819
    %v821 = vpop.xlane.xlu0 %820
    %v822 = vmul.f32 %v818, %v682
    %v823 = vmul.f32 %v821, %v682
    %v824 = vsub.f32 %v814, %v822
    %v825 = vsub.f32 %v815, %v823
    %v826 = vmul.f32 %v824, %v824
    %v827 = vmul.f32 %v825, %v825
    %v828 = vsel %vm330, %v826, 0.0
    %829 = vadd.xlane.f32.xlu0 %v828
    %v830 = vpop.xlane.xlu0 %829
    %v831 = vsel %vm672, %v827, 0.0
    %832 = vadd.xlane.f32.xlu0 %v831
    %v833 = vpop.xlane.xlu0 %832
    %v834 = vmul.f32 %v830, %v682
    %v835 = vmul.f32 %v833, %v682
    %v836 = vadd.f32 %v834, 1e-05
    %v837 = vadd.f32 %v835, 1e-05
    %v838 = vrsqrt.pop %v836
    %v839 = vmul.f32 %v838, %v836
    %v840 = vmul.f32 %v839, %v838
    %v841 = vmul.f32 0.5, %v840
    %v842 = vsub.f32 1.5, %v841
    %v843 = vmul.f32 %v838, %v842
    %vm844 = vweird.f32 %v836
    %vm845 = vweird.f32 %v838
    %vm846 = vmor %vm844, %vm845
    %v847 = vsel %vm846, %v838, %v843
    %v848 = vrsqrt.pop %v837
    %v849 = vmul.f32 %v848, %v837
    %v850 = vmul.f32 %v849, %v848
    %v851 = vmul.f32 0.5, %v850
    %v852 = vsub.f32 1.5, %v851
    %v853 = vmul.f32 %v848, %v852
    %vm854 = vweird.f32 %v837
    %vm855 = vweird.f32 %v848
    %vm856 = vmor %vm854, %vm855
    %v857 = vsel %vm856, %v848, %v853
    %v858 = vmul.f32 %v824, %v847
    %v859 = vmul.f32 %v825, %v857
    %v861 = vperm.slane %v375, 0
    %v863 = vmul.f32 %v858, %v861
    %v864 = vmul.f32 %v859, %v861
    %v866 = vperm.slane %v376, 0
    %v868 = vadd.f32 %v863, %v866
    %v869 = vadd.f32 %v864, %v866
    %s870 = scalar_lea.vmem %s7, 32
    %v871 = vld [vmem:[%s870] sm:$0xff]
    %v872 = vld [vmem:[%s870 + $0x8] sm:$0xff]
    %v873 = vld [vmem:[%s870 + $0x10] sm:$0xff]
    %v874 = vld [vmem:[%s870 + $0x18] sm:$0xff]
    %s875 = scalar_lea.vmem [#allocation7], 1
    %v876 = vld [vmem:[%s875] sm:$0x1]
    %877 = vmatpush.msra.mxu0 0.0
    %878 = vmatpush.msra.mxu0 0.0
    %879 = vmatpush.msra.mxu0 0.0
    %880 = vmatpush.msra.mxu0 0.0
    %881 = vmatpush.msra.mxu0 0.0
    %882 = vmatpush.msra.mxu0 0.0
    %883 = vmatpush.msra.mxu0 0.0
    %884 = vmatpush.msra.mxu0 0.0
    %885 = vmatpush.msra.mxu0 0.0
    %886 = vmatpush.msra.mxu0 0.0
    %887 = vmatpush.msra.mxu0 0.0
    %888 = vmatpush.msra.mxu0 0.0
    %889 = vmatpush.msra.mxu0 %v874
    %890 = vmatpush.msra.mxu0 %v873
    %891 = vmatpush.msra.mxu0 %v872
    %892 = vmatpush.msra.mxu0 %v871
    %893 = vmatmul.f32.gmra.mxu0 %v332
    %v894 = vpop.f32.mrf.mxu0
    %v895 = vadd.f32 %v876, %v894
    %896 = vdwg.mxu0
    %v897 = vsel %vm356, %v895, %v868
    %s898 = scalar_lea.vmem %s9, 32
    %v899 = vld [vmem:[%s898] sm:$0xff]
    %v900 = vld [vmem:[%s898 + $0x8] sm:$0xff]
    %v901 = vld [vmem:[%s898 + $0x10] sm:$0xff]
    %v902 = vld [vmem:[%s898 + $0x18] sm:$0xff]
    %s903 = scalar_lea.vmem [#allocation9], 1
    %v904 = vld [vmem:[%s903] sm:$0x1]
    %s905 = scalar_lea.vmem %s11, 32
    %v906 = vld [vmem:[%s905] sm:$0xff]
    %v907 = vld [vmem:[%s905 + $0x8] sm:$0xff]
    %v908 = vld [vmem:[%s905 + $0x10] sm:$0xff]
    %v909 = vld [vmem:[%s905 + $0x18] sm:$0xff]
    %s910 = scalar_lea.vmem [#allocation10], 1
    %v911 = vld [vmem:[%s910] sm:$0x1]
    %s912 = scalar_lea.vmem [#allocation12], 1
    %v913 = vld [vmem:[%s912] sm:$0x1]
    %s914 = scalar_lea.vmem [#allocation13], 1
    %v915 = vld [vmem:[%s914] sm:$0x1]
    %s916 = scalar_lea.vmem [#allocation15], 1
    %v917 = vld [vmem:[%s916] sm:$0x1]
    %s918 = scalar_lea.vmem [#allocation16], 1
    %v919 = vld [vmem:[%s918] sm:$0x1]
    %s920 = scalar_lea.vmem [#allocation18], 32
    %v921 = vld [vmem:[%s920] sm:$0xff]
    %v922 = vld [vmem:[%s920 + $0x8] sm:$0xff]
    %v923 = vld [vmem:[%s920 + $0x10] sm:$0xff]
    %v924 = vld [vmem:[%s920 + $0x18] sm:$0xff]
    %s925 = scalar_lea.vmem [#allocation19], 1
    %v926 = vld [vmem:[%s925] sm:$0x1]
    %s927 = scalar_lea.vmem %s19, 64
    %v928 = vld [vmem:[%s927] sm:$0xff]
    %v929 = vld [vmem:[%s927 + $0x8] sm:$0xff]
    %v930 = vld [vmem:[%s927 + $0x10] sm:$0xff]
    %v931 = vld [vmem:[%s927 + $0x18] sm:$0xff]
    %v932 = vld [vmem:[%s927 + $0x20] sm:$0xff]
    %v933 = vld [vmem:[%s927 + $0x28] sm:$0xff]
    %v934 = vld [vmem:[%s927 + $0x30] sm:$0xff]
    %v935 = vld [vmem:[%s927 + $0x38] sm:$0xff]
    %s936 = scalar_lea.vmem [#allocation21], 1
    %v937 = vld [vmem:[%s936] sm:$0x1]
    %v939 = vperm.slane %v904, 0
    %v942 = vsel %vm330, %v897, 0
    %v945 = vsel %vm330, %v869, 0
    %947 = vmatpush.msra.mxu0 0.0
    %948 = vmatpush.msra.mxu0 0.0
    %949 = vmatpush.msra.mxu0 0.0
    %950 = vmatpush.msra.mxu0 0.0
    %951 = vmatpush.msra.mxu0 0.0
    %952 = vmatpush.msra.mxu0 0.0
    %953 = vmatpush.msra.mxu0 0.0
    %954 = vmatpush.msra.mxu0 0.0
    %955 = vmatpush.msra.mxu0 0.0
    %956 = vmatpush.msra.mxu0 0.0
    %957 = vmatpush.msra.mxu0 0.0
    %958 = vmatpush.msra.mxu0 0.0
    %959 = vmatpush.msra.mxu0 %v902
    %960 = vmatpush.msra.mxu0 %v901
    %961 = vmatpush.msra.mxu0 %v900
    %962 = vmatpush.msra.mxu0 %v899
    %963 = vmatmul.f32.gmra.mxu0 %v942
    %v964 = vpop.f32.mrf.mxu0
    %v965 = vadd.f32 %v939, %v964
    %966 = vmatmul.f32.gmra.mxu0 %v945
    %v967 = vpop.f32.mrf.mxu0
    %v968 = vadd.f32 %v939, %v967
    %969 = vdwg.mxu0
    %972 = vrot.lane.b32.xlu0 %v965, 96
    %v973 = vpop.permute.xlu0 %972
    %974 = vrot.lane.b32.xlu0 %v968, 96
    %v975 = vpop.permute.xlu0 %974
    %v976 = vsel %vm293, %v965, 0
    %v978 = vsel %vm293, %v968, 0
    %v980 = vsel %vm293, %v973, 0
    %v982 = vsel %vm293, %v975, 0
    %984 = vmatpush.xpose.msra.mxu0 0.0
    %985 = vmatpush.xpose.msra.mxu0 0.0
    %986 = vmatpush.xpose.msra.mxu0 0.0
    %987 = vmatpush.xpose.msra.mxu0 0.0
    %988 = vmatpush.xpose.msra.mxu0 0.0
    %989 = vmatpush.xpose.msra.mxu0 0.0
    %990 = vmatpush.xpose.msra.mxu0 0.0
    %991 = vmatpush.xpose.msra.mxu0 0.0
    %992 = vmatpush.xpose.msra.mxu0 0.0
    %993 = vmatpush.xpose.msra.mxu0 0.0
    %994 = vmatpush.xpose.msra.mxu0 0.0
    %995 = vmatpush.xpose.msra.mxu0 0.0
    %996 = vmatpush.xpose.msra.mxu0 0.0
    %997 = vmatpush.xpose.msra.mxu0 0.0
    %998 = vmatpush.xpose.msra.mxu0 %v982
    %999 = vmatpush.xpose.msra.mxu0 %v980
    %1000 = vmatmul.f32.gmra.mxu0 %v976
    %v1001 = vpop.f32.mrf.mxu0
    %v1002 = vadd.f32 0.0, %v1001
    %1003 = vmatmul.f32.gmra.mxu0 %v978
    %v1004 = vpop.f32.mrf.mxu0
    %v1005 = vadd.f32 0.0, %v1004
    %1006 = vdwg.mxu0
    %v1007 = vmul.f32 %v1002, 0.25
    %v1008 = vmul.f32 %v1005, 0.25
    %v1009 = vadd.f32 %v1007, %v284
    %v1010 = vadd.f32 %v1008, %v285
    %v1011 = vsel %vm463, %v1009, -inf
    %1012 = vmax.xlane.f32.xlu0 %v1011
    %v1013 = vpop.xlane.xlu0 %1012
    %v1014 = vsel %vm467, %v1010, -inf
    %1015 = vmax.xlane.f32.xlu0 %v1014
    %v1016 = vpop.xlane.xlu0 %1015
    %v1017 = vsub.f32 %v1009, %v1013
    %v1018 = vsub.f32 %v1010, %v1016
    %v1019 = vmul.f32 %v1017, 1.442695
    %v1020 = vpow.pop %v1019
    %v1021 = vmul.f32 %v1018, 1.442695
    %v1022 = vpow.pop %v1021
    %v1023 = vsel %vm463, %v1020, 0.0
    %1024 = vadd.xlane.f32.xlu0 %v1023
    %v1025 = vpop.xlane.xlu0 %1024
    %v1026 = vsel %vm467, %v1022, 0.0
    %1027 = vadd.xlane.f32.xlu0 %v1026
    %v1028 = vpop.xlane.xlu0 %1027
    %v1029 = vrcp.pop %v1025
    %v1030 = vrcp.pop %v1028
    %v1031 = vmul.f32 %v1020, %v1029
    %v1032 = vmul.f32 %v1022, %v1030
    %1033 = vrot.lane.b32.xlu0 %v965, 64
    %v1034 = vpop.permute.xlu0 %1033
    %1035 = vrot.lane.b32.xlu0 %v968, 64
    %v1036 = vpop.permute.xlu0 %1035
    %v1039 = vsel %vm463, %v1031, 0
    %v1042 = vsel %vm463, %v1032, 0
    %v1044 = vsel %vm498, %v1036, 0
    %1046 = vmatpush.msra.mxu0 0.0
    %1047 = vmatpush.msra.mxu0 0.0
    %1048 = vmatpush.msra.mxu0 0.0
    %1049 = vmatpush.msra.mxu0 0.0
    %1050 = vmatpush.msra.mxu0 0.0
    %1051 = vmatpush.msra.mxu0 0.0
    %1052 = vmatpush.msra.mxu0 0.0
    %1053 = vmatpush.msra.mxu0 0.0
    %1054 = vmatpush.msra.mxu0 0.0
    %1055 = vmatpush.msra.mxu0 0.0
    %1056 = vmatpush.msra.mxu0 0.0
    %1057 = vmatpush.msra.mxu0 0.0
    %1058 = vmatpush.msra.mxu0 0.0
    %1059 = vmatpush.msra.mxu0 0.0
    %1060 = vmatpush.msra.mxu0 %v1044
    %1061 = vmatpush.msra.mxu0 %v1034
    %1062 = vmatmul.f32.gmra.mxu0 %v1039
    %v1063 = vpop.f32.mrf.mxu0
    %v1064 = vadd.f32 0.0, %v1063
    %1065 = vmatmul.f32.gmra.mxu0 %v1042
    %v1066 = vpop.f32.mrf.mxu0
    %v1067 = vadd.f32 0.0, %v1066
    %1068 = vdwg.mxu0
    %1069 = vrot.lane.b32.xlu0 %v965, 112
    %v1070 = vpop.permute.xlu0 %1069
    %1071 = vrot.lane.b32.xlu0 %v968, 112
    %v1072 = vpop.permute.xlu0 %1071
    %1073 = vrot.lane.b32.xlu0 %v965, 80
    %v1074 = vpop.permute.xlu0 %1073
    %1075 = vrot.lane.b32.xlu0 %v968, 80
    %v1076 = vpop.permute.xlu0 %1075
    %v1077 = vsel %vm293, %v1070, 0
    %v1079 = vsel %vm293, %v1072, 0
    %v1081 = vsel %vm293, %v1074, 0
    %v1083 = vsel %vm293, %v1076, 0
    %1085 = vmatpush.xpose.msra.mxu0 0.0
    %1086 = vmatpush.xpose.msra.mxu0 0.0
    %1087 = vmatpush.xpose.msra.mxu0 0.0
    %1088 = vmatpush.xpose.msra.mxu0 0.0
    %1089 = vmatpush.xpose.msra.mxu0 0.0
    %1090 = vmatpush.xpose.msra.mxu0 0.0
    %1091 = vmatpush.xpose.msra.mxu0 0.0
    %1092 = vmatpush.xpose.msra.mxu0 0.0
    %1093 = vmatpush.xpose.msra.mxu0 0.0
    %1094 = vmatpush.xpose.msra.mxu0 0.0
    %1095 = vmatpush.xpose.msra.mxu0 0.0
    %1096 = vmatpush.xpose.msra.mxu0 0.0
    %1097 = vmatpush.xpose.msra.mxu0 0.0
    %1098 = vmatpush.xpose.msra.mxu0 0.0
    %1099 = vmatpush.xpose.msra.mxu0 %v1083
    %1100 = vmatpush.xpose.msra.mxu0 %v1081
    %1101 = vmatmul.f32.gmra.mxu0 %v1077
    %v1102 = vpop.f32.mrf.mxu0
    %v1103 = vadd.f32 0.0, %v1102
    %1104 = vmatmul.f32.gmra.mxu0 %v1079
    %v1105 = vpop.f32.mrf.mxu0
    %v1106 = vadd.f32 0.0, %v1105
    %1107 = vdwg.mxu0
    %v1108 = vmul.f32 %v1103, 0.25
    %v1109 = vmul.f32 %v1106, 0.25
    %v1110 = vadd.f32 %v1108, %v284
    %v1111 = vadd.f32 %v1109, %v285
    %v1112 = vsel %vm463, %v1110, -inf
    %1113 = vmax.xlane.f32.xlu0 %v1112
    %v1114 = vpop.xlane.xlu0 %1113
    %v1115 = vsel %vm467, %v1111, -inf
    %1116 = vmax.xlane.f32.xlu0 %v1115
    %v1117 = vpop.xlane.xlu0 %1116
    %v1118 = vsub.f32 %v1110, %v1114
    %v1119 = vsub.f32 %v1111, %v1117
    %v1120 = vmul.f32 %v1118, 1.442695
    %v1121 = vpow.pop %v1120
    %v1122 = vmul.f32 %v1119, 1.442695
    %v1123 = vpow.pop %v1122
    %v1124 = vsel %vm463, %v1121, 0.0
    %1125 = vadd.xlane.f32.xlu0 %v1124
    %v1126 = vpop.xlane.xlu0 %1125
    %v1127 = vsel %vm467, %v1123, 0.0
    %1128 = vadd.xlane.f32.xlu0 %v1127
    %v1129 = vpop.xlane.xlu0 %1128
    %v1130 = vrcp.pop %v1126
    %v1131 = vrcp.pop %v1129
    %v1132 = vmul.f32 %v1121, %v1130
    %v1133 = vmul.f32 %v1123, %v1131
    %1134 = vrot.lane.b32.xlu0 %v965, 48
    %v1135 = vpop.permute.xlu0 %1134
    %1136 = vrot.lane.b32.xlu0 %v968, 48
    %v1137 = vpop.permute.xlu0 %1136
    %v1140 = vsel %vm463, %v1132, 0
    %v1143 = vsel %vm463, %v1133, 0
    %v1145 = vsel %vm498, %v1137, 0
    %1147 = vmatpush.msra.mxu0 0.0
    %1148 = vmatpush.msra.mxu0 0.0
    %1149 = vmatpush.msra.mxu0 0.0
    %1150 = vmatpush.msra.mxu0 0.0
    %1151 = vmatpush.msra.mxu0 0.0
    %1152 = vmatpush.msra.mxu0 0.0
    %1153 = vmatpush.msra.mxu0 0.0
    %1154 = vmatpush.msra.mxu0 0.0
    %1155 = vmatpush.msra.mxu0 0.0
    %1156 = vmatpush.msra.mxu0 0.0
    %1157 = vmatpush.msra.mxu0 0.0
    %1158 = vmatpush.msra.mxu0 0.0
    %1159 = vmatpush.msra.mxu0 0.0
    %1160 = vmatpush.msra.mxu0 0.0
    %1161 = vmatpush.msra.mxu0 %v1145
    %1162 = vmatpush.msra.mxu0 %v1135
    %1163 = vmatmul.f32.gmra.mxu0 %v1140
    %v1164 = vpop.f32.mrf.mxu0
    %v1165 = vadd.f32 0.0, %v1164
    %1166 = vmatmul.f32.gmra.mxu0 %v1143
    %v1167 = vpop.f32.mrf.mxu0
    %v1168 = vadd.f32 0.0, %v1167
    %1169 = vdwg.mxu0
    %1172 = vrot.lane.b32.xlu0 %v1165, 16
    %v1173 = vpop.permute.xlu0 %1172
    %1174 = vrot.lane.b32.xlu0 %v1168, 16
    %v1175 = vpop.permute.xlu0 %1174
    %v1178 = vsel %vm293, %v1064, %v1173
    %v1179 = vsel %vm293, %v1067, %v1175
    %v1181 = vperm.slane %v911, 0
    %v1184 = vsel %vm330, %v1178, 0
    %v1187 = vsel %vm330, %v1179, 0
    %1189 = vmatpush.msra.mxu0 0.0
    %1190 = vmatpush.msra.mxu0 0.0
    %1191 = vmatpush.msra.mxu0 0.0
    %1192 = vmatpush.msra.mxu0 0.0
    %1193 = vmatpush.msra.mxu0 0.0
    %1194 = vmatpush.msra.mxu0 0.0
    %1195 = vmatpush.msra.mxu0 0.0
    %1196 = vmatpush.msra.mxu0 0.0
    %1197 = vmatpush.msra.mxu0 0.0
    %1198 = vmatpush.msra.mxu0 0.0
    %1199 = vmatpush.msra.mxu0 0.0
    %1200 = vmatpush.msra.mxu0 0.0
    %1201 = vmatpush.msra.mxu0 %v909
    %1202 = vmatpush.msra.mxu0 %v908
    %1203 = vmatpush.msra.mxu0 %v907
    %1204 = vmatpush.msra.mxu0 %v906
    %1205 = vmatmul.f32.gmra.mxu0 %v1184
    %v1206 = vpop.f32.mrf.mxu0
    %v1207 = vadd.f32 %v1181, %v1206
    %1208 = vmatmul.f32.gmra.mxu0 %v1187
    %v1209 = vpop.f32.mrf.mxu0
    %v1210 = vadd.f32 %v1181, %v1209
    %1211 = vdwg.mxu0
    %v1212 = vadd.f32 %v897, %v1207
    %v1213 = vadd.f32 %v869, %v1210
    %v1214 = vsel %vm330, %v1212, 0.0
    %1215 = vadd.xlane.f32.xlu0 %v1214
    %v1216 = vpop.xlane.xlu0 %1215
    %v1217 = vsel %vm672, %v1213, 0.0
    %1218 = vadd.xlane.f32.xlu0 %v1217
    %v1219 = vpop.xlane.xlu0 %1218
    %v1220 = vmul.f32 %v1216, %v682
    %v1221 = vmul.f32 %v1219, %v682
    %v1222 = vsub.f32 %v1212, %v1220
    %v1223 = vsub.f32 %v1213, %v1221
    %v1224 = vmul.f32 %v1222, %v1222
    %v1225 = vmul.f32 %v1223, %v1223
    %v1226 = vsel %vm330, %v1224, 0.0
    %1227 = vadd.xlane.f32.xlu0 %v1226
    %v1228 = vpop.xlane.xlu0 %1227
    %v1229 = vsel %vm672, %v1225, 0.0
    %1230 = vadd.xlane.f32.xlu0 %v1229
    %v1231 = vpop.xlane.xlu0 %1230
    %v1232 = vmul.f32 %v1228, %v682
    %v1233 = vmul.f32 %v1231, %v682
    %v1234 = vadd.f32 %v1232, 1e-05
    %v1235 = vadd.f32 %v1233, 1e-05
    %v1236 = vrsqrt.pop %v1234
    %v1237 = vmul.f32 %v1236, %v1234
    %v1238 = vmul.f32 %v1237, %v1236
    %v1239 = vmul.f32 0.5, %v1238
    %v1240 = vsub.f32 1.5, %v1239
    %v1241 = vmul.f32 %v1236, %v1240
    %vm1242 = vweird.f32 %v1234
    %vm1243 = vweird.f32 %v1236
    %vm1244 = vmor %vm1242, %vm1243
    %v1245 = vsel %vm1244, %v1236, %v1241
    %v1246 = vrsqrt.pop %v1235
    %v1247 = vmul.f32 %v1246, %v1235
    %v1248 = vmul.f32 %v1247, %v1246
    %v1249 = vmul.f32 0.5, %v1248
    %v1250 = vsub.f32 1.5, %v1249
    %v1251 = vmul.f32 %v1246, %v1250
    %vm1252 = vweird.f32 %v1235
    %vm1253 = vweird.f32 %v1246
    %vm1254 = vmor %vm1252, %vm1253
    %v1255 = vsel %vm1254, %v1246, %v1251
    %v1256 = vmul.f32 %v1222, %v1245
    %v1257 = vmul.f32 %v1223, %v1255
    %v1259 = vperm.slane %v913, 0
    %v1261 = vmul.f32 %v1256, %v1259
    %v1262 = vmul.f32 %v1257, %v1259
    %v1264 = vperm.slane %v915, 0
    %v1266 = vadd.f32 %v1261, %v1264
    %v1267 = vadd.f32 %v1262, %v1264
    %v1269 = vperm.slane %v926, 0
    %v1272 = vsel %vm330, %v1266, 0
    %v1275 = vsel %vm330, %v1267, 0
    %1277 = vmatpush.msra.mxu0 0.0
    %1278 = vmatpush.msra.mxu0 0.0
    %1279 = vmatpush.msra.mxu0 0.0
    %1280 = vmatpush.msra.mxu0 0.0
    %1281 = vmatpush.msra.mxu0 0.0
    %1282 = vmatpush.msra.mxu0 0.0
    %1283 = vmatpush.msra.mxu0 0.0
    %1284 = vmatpush.msra.mxu0 0.0
    %1285 = vmatpush.msra.mxu0 0.0
    %1286 = vmatpush.msra.mxu0 0.0
    %1287 = vmatpush.msra.mxu0 0.0
    %1288 = vmatpush.msra.mxu0 0.0
    %1289 = vmatpush.msra.mxu0 %v924
    %1290 = vmatpush.msra.mxu0 %v923
    %1291 = vmatpush.msra.mxu0 %v922
    %1292 = vmatpush.msra.mxu0 %v921
    %1293 = vmatmul.f32.gmra.mxu0 %v1272
    %v1294 = vpop.f32.mrf.mxu0
    %v1295 = vadd.f32 %v1269, %v1294
    %1296 = vmatmul.f32.gmra.mxu0 %v1275
    %v1297 = vpop.f32.mrf.mxu0
    %v1298 = vadd.f32 %v1269, %v1297
    %1299 = vdwg.mxu0
    %v1300 = vmul.f32 %v1295, %v1295
    %v1301 = vmul.f32 %v1298, %v1298
    %v1302 = vmul.f32 %v1295, %v1300
    %v1303 = vmul.f32 %v1298, %v1301
    %v1304 = vmul.f32 %v1302, 0.044715
    %v1305 = vmul.f32 %v1303, 0.044715
    %v1306 = vadd.f32 %v1295, %v1304
    %v1307 = vadd.f32 %v1298, %v1305
    %v1308 = vmul.f32 %v1306, 0.7978846
    %v1309 = vmul.f32 %v1307, 0.7978846
    %v1310 = vtanh.pop %v1308
    %v1311 = vtanh.pop %v1309
    %v1312 = vadd.f32 %v1310, 1.0
    %v1313 = vadd.f32 %v1311, 1.0
    %v1314 = vmul.f32 %v1312, 0.5
    %v1315 = vmul.f32 %v1313, 0.5
    %v1316 = vmul.f32 %v1295, %v1314
    %v1317 = vmul.f32 %v1298, %v1315
    %v1319 = vperm.slane %v937, 0
    %v1322 = vsel %vm784, %v1316, 0
    %v1325 = vsel %vm784, %v1317, 0
    %1327 = vmatpush.msra.mxu0 0.0
    %1328 = vmatpush.msra.mxu0 0.0
    %1329 = vmatpush.msra.mxu0 0.0
    %1330 = vmatpush.msra.mxu0 0.0
    %1331 = vmatpush.msra.mxu0 0.0
    %1332 = vmatpush.msra.mxu0 0.0
    %1333 = vmatpush.msra.mxu0 0.0
    %1334 = vmatpush.msra.mxu0 0.0
    %1335 = vmatpush.msra.mxu0 %v935
    %1336 = vmatpush.msra.mxu0 %v934
    %1337 = vmatpush.msra.mxu0 %v933
    %1338 = vmatpush.msra.mxu0 %v932
    %1339 = vmatpush.msra.mxu0 %v931
    %1340 = vmatpush.msra.mxu0 %v930
    %1341 = vmatpush.msra.mxu0 %v929
    %1342 = vmatpush.msra.mxu0 %v928
    %1343 = vmatmul.f32.gmra.mxu0 %v1322
    %v1344 = vpop.f32.mrf.mxu0
    %v1345 = vadd.f32 %v1319, %v1344
    %1346 = vmatmul.f32.gmra.mxu0 %v1325
    %v1347 = vpop.f32.mrf.mxu0
    %v1348 = vadd.f32 %v1319, %v1347
    %1349 = vdwg.mxu0
    %v1350 = vadd.f32 %v1266, %v1345
    %v1351 = vadd.f32 %v1267, %v1348
    %v1352 = vsel %vm330, %v1350, 0.0
    %1353 = vadd.xlane.f32.xlu0 %v1352
    %v1354 = vpop.xlane.xlu0 %1353
    %v1355 = vsel %vm672, %v1351, 0.0
    %1356 = vadd.xlane.f32.xlu0 %v1355
    %v1357 = vpop.xlane.xlu0 %1356
    %v1358 = vmul.f32 %v1354, %v682
    %v1359 = vmul.f32 %v1357, %v682
    %v1360 = vsub.f32 %v1350, %v1358
    %v1361 = vsub.f32 %v1351, %v1359
    %v1362 = vmul.f32 %v1360, %v1360
    %v1363 = vmul.f32 %v1361, %v1361
    %v1364 = vsel %vm330, %v1362, 0.0
    %1365 = vadd.xlane.f32.xlu0 %v1364
    %v1366 = vpop.xlane.xlu0 %1365
    %v1367 = vsel %vm672, %v1363, 0.0
    %1368 = vadd.xlane.f32.xlu0 %v1367
    %v1369 = vpop.xlane.xlu0 %1368
    %v1370 = vmul.f32 %v1366, %v682
    %v1371 = vmul.f32 %v1369, %v682
    %v1372 = vadd.f32 %v1370, 1e-05
    %v1373 = vadd.f32 %v1371, 1e-05
    %v1374 = vrsqrt.pop %v1372
    %v1375 = vmul.f32 %v1374, %v1372
    %v1376 = vmul.f32 %v1375, %v1374
    %v1377 = vmul.f32 0.5, %v1376
    %v1378 = vsub.f32 1.5, %v1377
    %v1379 = vmul.f32 %v1374, %v1378
    %vm1380 = vweird.f32 %v1372
    %vm1381 = vweird.f32 %v1374
    %vm1382 = vmor %vm1380, %vm1381
    %v1383 = vsel %vm1382, %v1374, %v1379
    %v1384 = vrsqrt.pop %v1373
    %v1385 = vmul.f32 %v1384, %v1373
    %v1386 = vmul.f32 %v1385, %v1384
    %v1387 = vmul.f32 0.5, %v1386
    %v1388 = vsub.f32 1.5, %v1387
    %v1389 = vmul.f32 %v1384, %v1388
    %vm1390 = vweird.f32 %v1373
    %vm1391 = vweird.f32 %v1384
    %vm1392 = vmor %vm1390, %vm1391
    %v1393 = vsel %vm1392, %v1384, %v1389
    %v1394 = vmul.f32 %v1360, %v1383
    %v1395 = vmul.f32 %v1361, %v1393
    %v1397 = vperm.slane %v917, 0
    %v1399 = vmul.f32 %v1394, %v1397
    %v1400 = vmul.f32 %v1395, %v1397
    %v1402 = vperm.slane %v919, 0
    %v1404 = vadd.f32 %v1399, %v1402
    %v1405 = vadd.f32 %v1400, %v1402
    %v1406 = vld [vmem:[%s5] sm:$0xff]
    %v1407 = vld [vmem:[%s5 + $0x8] sm:$0xff]
    %v1408 = vld [vmem:[%s5 + $0x10] sm:$0xff]
    %v1409 = vld [vmem:[%s5 + $0x18] sm:$0xff]
    %v1410 = vld [vmem:[#allocation6] sm:$0x1]
    %v1412 = vperm.slane %v1410, 0
    %vm1416 = vcmask 1042432
    %v1417 = vrot.slane %v1404, 5
    %v1418 = vrot.slane %v1405, 5
    %v1419 = vsel %vm1416, %v1417, %v1418
    %v1420 = vsel %vm330, %v1419, 0
    %1422 = vmatpush.msra.mxu0 0.0
    %1423 = vmatpush.msra.mxu0 0.0
    %1424 = vmatpush.msra.mxu0 0.0
    %1425 = vmatpush.msra.mxu0 0.0
    %1426 = vmatpush.msra.mxu0 0.0
    %1427 = vmatpush.msra.mxu0 0.0
    %1428 = vmatpush.msra.mxu0 0.0
    %1429 = vmatpush.msra.mxu0 0.0
    %1430 = vmatpush.msra.mxu0 0.0
    %1431 = vmatpush.msra.mxu0 0.0
    %1432 = vmatpush.msra.mxu0 0.0
    %1433 = vmatpush.msra.mxu0 0.0
    %1434 = vmatpush.msra.mxu0 %v1409
    %1435 = vmatpush.msra.mxu0 %v1408
    %1436 = vmatpush.msra.mxu0 %v1407
    %1437 = vmatpush.msra.mxu0 %v1406
    %1438 = vmatmul.f32.gmra.mxu0 %v1420
    %v1439 = vpop.f32.mrf.mxu0
    %v1440 = vadd.f32 %v1412, %v1439
    %1441 = vdwg.mxu0
    %v1442 = vperm.slane %v286, 3
    %v1443 = vadd.f32 %v1440, %v1442
    %1444 = vst.msk [vmem:[%s21] sm:$0xff] %vm293, %v1443
    %s1445 = scalar_lea.vmem %s1, 4
    %v1446 = vld [vmem:[%s1445] sm:$0xf]
    %v1447 = vld [vmem:[%s3] sm:$0xff]
    %v1448 = vld [vmem:[%s3 + $0x8] sm:$0xff]
    %v1449 = vld [vmem:[#allocation4] sm:$0x1]
    %v1451 = vperm.slane %v1449, 0
    %v1454 = vsel %vm293, %v1446, 0
    %1456 = vmatpush.msra.mxu0 0.0
    %1457 = vmatpush.msra.mxu0 0.0
    %1458 = vmatpush.msra.mxu0 0.0
    %1459 = vmatpush.msra.mxu0 0.0
    %1460 = vmatpush.msra.mxu0 0.0
    %1461 = vmatpush.msra.mxu0 0.0
    %1462 = vmatpush.msra.mxu0 0.0
    %1463 = vmatpush.msra.mxu0 0.0
    %1464 = vmatpush.msra.mxu0 0.0
    %1465 = vmatpush.msra.mxu0 0.0
    %1466 = vmatpush.msra.mxu0 0.0
    %1467 = vmatpush.msra.mxu0 0.0
    %1468 = vmatpush.msra.mxu0 0.0
    %1469 = vmatpush.msra.mxu0 0.0
    %1470 = vmatpush.msra.mxu0 %v1448
    %1471 = vmatpush.msra.mxu0 %v1447
    %1472 = vmatmul.f32.gmra.mxu0 %v1454
    %v1473 = vpop.f32.mrf.mxu0
    %v1474 = vadd.f32 %v1451, %v1473
    %1475 = vdwg.mxu0
    %v1476 = vperm.slane %v1474, 3
    %v1477 = vsel %vm318, %v1474, %v1476
    %v1478 = vld [vmem:[#allocation2] sm:$0xff]
    %v1479 = vld [vmem:[#allocation2 + $0x8] sm:$0xf]
    %v1480 = vadd.f32 %v1477, %v1478
    %v1481 = vadd.f32 %v1476, %v1479
    %v1482 = vld [vmem:[%s0 + $0x1] sm:$0x1]
    %v1483 = vld [vmem:[%s7] sm:$0xff]
    %v1484 = vld [vmem:[%s7 + $0x8] sm:$0xff]
    %v1485 = vld [vmem:[%s7 + $0x10] sm:$0xff]
    %v1486 = vld [vmem:[%s7 + $0x18] sm:$0xff]
    %v1487 = vld [vmem:[#allocation7] sm:$0x1]
    %v1489 = vsel %vm330, %v1482, 0
    %1491 = vmatpush.msra.mxu0 0.0
    %1492 = vmatpush.msra.mxu0 0.0
    %1493 = vmatpush.msra.mxu0 0.0
    %1494 = vmatpush.msra.mxu0 0.0
    %1495 = vmatpush.msra.mxu0 0.0
    %1496 = vmatpush.msra.mxu0 0.0
    %1497 = vmatpush.msra.mxu0 0.0
    %1498 = vmatpush.msra.mxu0 0.0
    %1499 = vmatpush.msra.mxu0 0.0
    %1500 = vmatpush.msra.mxu0 0.0
    %1501 = vmatpush.msra.mxu0 0.0
    %1502 = vmatpush.msra.mxu0 0.0
    %1503 = vmatpush.msra.mxu0 %v1486
    %1504 = vmatpush.msra.mxu0 %v1485
    %1505 = vmatpush.msra.mxu0 %v1484
    %1506 = vmatpush.msra.mxu0 %v1483
    %1507 = vmatmul.f32.gmra.mxu0 %v1489
    %v1508 = vpop.f32.mrf.mxu0
    %v1509 = vadd.f32 %v1487, %v1508
    %1510 = vdwg.mxu0
    %v1513 = vrot.slane %v1480, 7
    %v1514 = vrot.slane %v1481, 7
    %v1515 = vsel %vm356, %v1513, %v1514
    %v1518 = vsel %vm356, %v1509, %v1513
    %v1519 = vld [vmem:[%s9] sm:$0xff]
    %v1520 = vld [vmem:[%s9 + $0x8] sm:$0xff]
    %v1521 = vld [vmem:[%s9 + $0x10] sm:$0xff]
    %v1522 = vld [vmem:[%s9 + $0x18] sm:$0xff]
    %v1523 = vld [vmem:[#allocation9] sm:$0x1]
    %v1524 = vld [vmem:[%s11] sm:$0xff]
    %v1525 = vld [vmem:[%s11 + $0x8] sm:$0xff]
    %v1526 = vld [vmem:[%s11 + $0x10] sm:$0xff]
    %v1527 = vld [vmem:[%s11 + $0x18] sm:$0xff]
    %v1528 = vld [vmem:[#allocation10] sm:$0x1]
    %v1529 = vld [vmem:[#allocation12] sm:$0x1]
    %v1530 = vld [vmem:[#allocation13] sm:$0x1]
    %v1531 = vld [vmem:[#allocation15] sm:$0x1]
    %v1532 = vld [vmem:[#allocation16] sm:$0x1]
    %v1533 = vld [vmem:[#allocation18] sm:$0xff]
    %v1534 = vld [vmem:[#allocation18 + $0x8] sm:$0xff]
    %v1535 = vld [vmem:[#allocation18 + $0x10] sm:$0xff]
    %v1536 = vld [vmem:[#allocation18 + $0x18] sm:$0xff]
    %v1537 = vld [vmem:[#allocation19] sm:$0x1]
    %v1538 = vld [vmem:[%s19] sm:$0xff]
    %v1539 = vld [vmem:[%s19 + $0x8] sm:$0xff]
    %v1540 = vld [vmem:[%s19 + $0x10] sm:$0xff]
    %v1541 = vld [vmem:[%s19 + $0x18] sm:$0xff]
    %v1542 = vld [vmem:[%s19 + $0x20] sm:$0xff]
    %v1543 = vld [vmem:[%s19 + $0x28] sm:$0xff]
    %v1544 = vld [vmem:[%s19 + $0x30] sm:$0xff]
    %v1545 = vld [vmem:[%s19 + $0x38] sm:$0xff]
    %v1546 = vld [vmem:[#allocation21] sm:$0x1]
    %v1548 = vperm.slane %v1523, 0
    %v1551 = vsel %vm330, %v1518, 0
    %v1553 = vsel %vm330, %v1515, 0
    %1555 = vmatpush.msra.mxu0 0.0
    %1556 = vmatpush.msra.mxu0 0.0
    %1557 = vmatpush.msra.mxu0 0.0
    %1558 = vmatpush.msra.mxu0 0.0
    %1559 = vmatpush.msra.mxu0 0.0
    %1560 = vmatpush.msra.mxu0 0.0
    %1561 = vmatpush.msra.mxu0 0.0
    %1562 = vmatpush.msra.mxu0 0.0
    %1563 = vmatpush.msra.mxu0 0.0
    %1564 = vmatpush.msra.mxu0 0.0
    %1565 = vmatpush.msra.mxu0 0.0
    %1566 = vmatpush.msra.mxu0 0.0
    %1567 = vmatpush.msra.mxu0 %v1522
    %1568 = vmatpush.msra.mxu0 %v1521
    %1569 = vmatpush.msra.mxu0 %v1520
    %1570 = vmatpush.msra.mxu0 %v1519
    %1571 = vmatmul.f32.gmra.mxu0 %v1551
    %v1572 = vpop.f32.mrf.mxu0
    %v1573 = vadd.f32 %v1548, %v1572
    %1574 = vmatmul.f32.gmra.mxu0 %v1553
    %v1575 = vpop.f32.mrf.mxu0
    %v1576 = vadd.f32 %v1548, %v1575
    %1577 = vdwg.mxu0
    %1580 = vrot.lane.b32.xlu0 %v1573, 96
    %v1581 = vpop.permute.xlu0 %1580
    %1582 = vrot.lane.b32.xlu0 %v1576, 96
    %v1583 = vpop.permute.xlu0 %1582
    %v1584 = vsel %vm293, %v1573, 0
    %v1586 = vsel %vm293, %v1576, 0
    %v1588 = vsel %vm293, %v1581, 0
    %v1590 = vsel %vm293, %v1583, 0
    %1592 = vmatpush.xpose.msra.mxu0 0.0
    %1593 = vmatpush.xpose.msra.mxu0 0.0
    %1594 = vmatpush.xpose.msra.mxu0 0.0
    %1595 = vmatpush.xpose.msra.mxu0 0.0
    %1596 = vmatpush.xpose.msra.mxu0 0.0
    %1597 = vmatpush.xpose.msra.mxu0 0.0
    %1598 = vmatpush.xpose.msra.mxu0 0.0
    %1599 = vmatpush.xpose.msra.mxu0 0.0
    %1600 = vmatpush.xpose.msra.mxu0 0.0
    %1601 = vmatpush.xpose.msra.mxu0 0.0
    %1602 = vmatpush.xpose.msra.mxu0 0.0
    %1603 = vmatpush.xpose.msra.mxu0 0.0
    %1604 = vmatpush.xpose.msra.mxu0 0.0
    %1605 = vmatpush.xpose.msra.mxu0 0.0
    %1606 = vmatpush.xpose.msra.mxu0 %v1590
    %1607 = vmatpush.xpose.msra.mxu0 %v1588
    %1608 = vmatmul.f32.gmra.mxu0 %v1584
    %v1609 = vpop.f32.mrf.mxu0
    %v1610 = vadd.f32 0.0, %v1609
    %1611 = vmatmul.f32.gmra.mxu0 %v1586
    %v1612 = vpop.f32.mrf.mxu0
    %v1613 = vadd.f32 0.0, %v1612
    %1614 = vdwg.mxu0
    %v1615 = vmul.f32 %v1610, 0.25
    %v1616 = vmul.f32 %v1613, 0.25
    %v1617 = vadd.f32 %v1615, %v284
    %v1618 = vadd.f32 %v1616, %v285
    %v1619 = vsel %vm463, %v1617, -inf
    %1620 = vmax.xlane.f32.xlu0 %v1619
    %v1621 = vpop.xlane.xlu0 %1620
    %v1622 = vsel %vm467, %v1618, -inf
    %1623 = vmax.xlane.f32.xlu0 %v1622
    %v1624 = vpop.xlane.xlu0 %1623
    %v1625 = vsub.f32 %v1617, %v1621
    %v1626 = vsub.f32 %v1618, %v1624
    %v1627 = vmul.f32 %v1625, 1.442695
    %v1628 = vpow.pop %v1627
    %v1629 = vmul.f32 %v1626, 1.442695
    %v1630 = vpow.pop %v1629
    %v1631 = vsel %vm463, %v1628, 0.0
    %1632 = vadd.xlane.f32.xlu0 %v1631
    %v1633 = vpop.xlane.xlu0 %1632
    %v1634 = vsel %vm467, %v1630, 0.0
    %1635 = vadd.xlane.f32.xlu0 %v1634
    %v1636 = vpop.xlane.xlu0 %1635
    %v1637 = vrcp.pop %v1633
    %v1638 = vrcp.pop %v1636
    %v1639 = vmul.f32 %v1628, %v1637
    %v1640 = vmul.f32 %v1630, %v1638
    %1641 = vrot.lane.b32.xlu0 %v1573, 64
    %v1642 = vpop.permute.xlu0 %1641
    %1643 = vrot.lane.b32.xlu0 %v1576, 64
    %v1644 = vpop.permute.xlu0 %1643
    %v1647 = vsel %vm463, %v1639, 0
    %v1650 = vsel %vm463, %v1640, 0
    %v1652 = vsel %vm498, %v1644, 0
    %1654 = vmatpush.msra.mxu0 0.0
    %1655 = vmatpush.msra.mxu0 0.0
    %1656 = vmatpush.msra.mxu0 0.0
    %1657 = vmatpush.msra.mxu0 0.0
    %1658 = vmatpush.msra.mxu0 0.0
    %1659 = vmatpush.msra.mxu0 0.0
    %1660 = vmatpush.msra.mxu0 0.0
    %1661 = vmatpush.msra.mxu0 0.0
    %1662 = vmatpush.msra.mxu0 0.0
    %1663 = vmatpush.msra.mxu0 0.0
    %1664 = vmatpush.msra.mxu0 0.0
    %1665 = vmatpush.msra.mxu0 0.0
    %1666 = vmatpush.msra.mxu0 0.0
    %1667 = vmatpush.msra.mxu0 0.0
    %1668 = vmatpush.msra.mxu0 %v1652
    %1669 = vmatpush.msra.mxu0 %v1642
    %1670 = vmatmul.f32.gmra.mxu0 %v1647
    %v1671 = vpop.f32.mrf.mxu0
    %v1672 = vadd.f32 0.0, %v1671
    %1673 = vmatmul.f32.gmra.mxu0 %v1650
    %v1674 = vpop.f32.mrf.mxu0
    %v1675 = vadd.f32 0.0, %v1674
    %1676 = vdwg.mxu0
    %1677 = vrot.lane.b32.xlu0 %v1573, 112
    %v1678 = vpop.permute.xlu0 %1677
    %1679 = vrot.lane.b32.xlu0 %v1576, 112
    %v1680 = vpop.permute.xlu0 %1679
    %1681 = vrot.lane.b32.xlu0 %v1573, 80
    %v1682 = vpop.permute.xlu0 %1681
    %1683 = vrot.lane.b32.xlu0 %v1576, 80
    %v1684 = vpop.permute.xlu0 %1683
    %v1685 = vsel %vm293, %v1678, 0
    %v1687 = vsel %vm293, %v1680, 0
    %v1689 = vsel %vm293, %v1682, 0
    %v1691 = vsel %vm293, %v1684, 0
    %1693 = vmatpush.xpose.msra.mxu0 0.0
    %1694 = vmatpush.xpose.msra.mxu0 0.0
    %1695 = vmatpush.xpose.msra.mxu0 0.0
    %1696 = vmatpush.xpose.msra.mxu0 0.0
    %1697 = vmatpush.xpose.msra.mxu0 0.0
    %1698 = vmatpush.xpose.msra.mxu0 0.0
    %1699 = vmatpush.xpose.msra.mxu0 0.0
    %1700 = vmatpush.xpose.msra.mxu0 0.0
    %1701 = vmatpush.xpose.msra.mxu0 0.0
    %1702 = vmatpush.xpose.msra.mxu0 0.0
    %1703 = vmatpush.xpose.msra.mxu0 0.0
    %1704 = vmatpush.xpose.msra.mxu0 0.0
    %1705 = vmatpush.xpose.msra.mxu0 0.0
    %1706 = vmatpush.xpose.msra.mxu0 0.0
    %1707 = vmatpush.xpose.msra.mxu0 %v1691
    %1708 = vmatpush.xpose.msra.mxu0 %v1689
    %1709 = vmatmul.f32.gmra.mxu0 %v1685
    %v1710 = vpop.f32.mrf.mxu0
    %v1711 = vadd.f32 0.0, %v1710
    %1712 = vmatmul.f32.gmra.mxu0 %v1687
    %v1713 = vpop.f32.mrf.mxu0
    %v1714 = vadd.f32 0.0, %v1713
    %1715 = vdwg.mxu0
    %v1716 = vmul.f32 %v1711, 0.25
    %v1717 = vmul.f32 %v1714, 0.25
    %v1718 = vadd.f32 %v1716, %v284
    %v1719 = vadd.f32 %v1717, %v285
    %v1720 = vsel %vm463, %v1718, -inf
    %1721 = vmax.xlane.f32.xlu0 %v1720
    %v1722 = vpop.xlane.xlu0 %1721
    %v1723 = vsel %vm467, %v1719, -inf
    %1724 = vmax.xlane.f32.xlu0 %v1723
    %v1725 = vpop.xlane.xlu0 %1724
    %v1726 = vsub.f32 %v1718, %v1722
    %v1727 = vsub.f32 %v1719, %v1725
    %v1728 = vmul.f32 %v1726, 1.442695
    %v1729 = vpow.pop %v1728
    %v1730 = vmul.f32 %v1727, 1.442695
    %v1731 = vpow.pop %v1730
    %v1732 = vsel %vm463, %v1729, 0.0
    %1733 = vadd.xlane.f32.xlu0 %v1732
    %v1734 = vpop.xlane.xlu0 %1733
    %v1735 = vsel %vm467, %v1731, 0.0
    %1736 = vadd.xlane.f32.xlu0 %v1735
    %v1737 = vpop.xlane.xlu0 %1736
    %v1738 = vrcp.pop %v1734
    %v1739 = vrcp.pop %v1737
    %v1740 = vmul.f32 %v1729, %v1738
    %v1741 = vmul.f32 %v1731, %v1739
    %1742 = vrot.lane.b32.xlu0 %v1573, 48
    %v1743 = vpop.permute.xlu0 %1742
    %1744 = vrot.lane.b32.xlu0 %v1576, 48
    %v1745 = vpop.permute.xlu0 %1744
    %v1748 = vsel %vm463, %v1740, 0
    %v1751 = vsel %vm463, %v1741, 0
    %v1753 = vsel %vm498, %v1745, 0
    %1755 = vmatpush.msra.mxu0 0.0
    %1756 = vmatpush.msra.mxu0 0.0
    %1757 = vmatpush.msra.mxu0 0.0
    %1758 = vmatpush.msra.mxu0 0.0
    %1759 = vmatpush.msra.mxu0 0.0
    %1760 = vmatpush.msra.mxu0 0.0
    %1761 = vmatpush.msra.mxu0 0.0
    %1762 = vmatpush.msra.mxu0 0.0
    %1763 = vmatpush.msra.mxu0 0.0
    %1764 = vmatpush.msra.mxu0 0.0
    %1765 = vmatpush.msra.mxu0 0.0
    %1766 = vmatpush.msra.mxu0 0.0
    %1767 = vmatpush.msra.mxu0 0.0
    %1768 = vmatpush.msra.mxu0 0.0
    %1769 = vmatpush.msra.mxu0 %v1753
    %1770 = vmatpush.msra.mxu0 %v1743
    %1771 = vmatmul.f32.gmra.mxu0 %v1748
    %v1772 = vpop.f32.mrf.mxu0
    %v1773 = vadd.f32 0.0, %v1772
    %1774 = vmatmul.f32.gmra.mxu0 %v1751
    %v1775 = vpop.f32.mrf.mxu0
    %v1776 = vadd.f32 0.0, %v1775
    %1777 = vdwg.mxu0
    %1780 = vrot.lane.b32.xlu0 %v1773, 16
    %v1781 = vpop.permute.xlu0 %1780
    %1782 = vrot.lane.b32.xlu0 %v1776, 16
    %v1783 = vpop.permute.xlu0 %1782
    %v1786 = vsel %vm293, %v1672, %v1781
    %v1787 = vsel %vm293, %v1675, %v1783
    %v1789 = vperm.slane %v1528, 0
    %v1792 = vsel %vm330, %v1786, 0
    %v1795 = vsel %vm330, %v1787, 0
    %1797 = vmatpush.msra.mxu0 0.0
    %1798 = vmatpush.msra.mxu0 0.0
    %1799 = vmatpush.msra.mxu0 0.0
    %1800 = vmatpush.msra.mxu0 0.0
    %1801 = vmatpush.msra.mxu0 0.0
    %1802 = vmatpush.msra.mxu0 0.0
    %1803 = vmatpush.msra.mxu0 0.0
    %1804 = vmatpush.msra.mxu0 0.0
    %1805 = vmatpush.msra.mxu0 0.0
    %1806 = vmatpush.msra.mxu0 0.0
    %1807 = vmatpush.msra.mxu0 0.0
    %1808 = vmatpush.msra.mxu0 0.0
    %1809 = vmatpush.msra.mxu0 %v1527
    %1810 = vmatpush.msra.mxu0 %v1526
    %1811 = vmatpush.msra.mxu0 %v1525
    %1812 = vmatpush.msra.mxu0 %v1524
    %1813 = vmatmul.f32.gmra.mxu0 %v1792
    %v1814 = vpop.f32.mrf.mxu0
    %v1815 = vadd.f32 %v1789, %v1814
    %1816 = vmatmul.f32.gmra.mxu0 %v1795
    %v1817 = vpop.f32.mrf.mxu0
    %v1818 = vadd.f32 %v1789, %v1817
    %1819 = vdwg.mxu0
    %v1820 = vadd.f32 %v1518, %v1815
    %v1821 = vadd.f32 %v1515, %v1818
    %v1822 = vsel %vm330, %v1820, 0.0
    %1823 = vadd.xlane.f32.xlu0 %v1822
    %v1824 = vpop.xlane.xlu0 %1823
    %v1825 = vsel %vm672, %v1821, 0.0
    %1826 = vadd.xlane.f32.xlu0 %v1825
    %v1827 = vpop.xlane.xlu0 %1826
    %v1828 = vmul.f32 %v1824, %v682
    %v1829 = vmul.f32 %v1827, %v682
    %v1830 = vsub.f32 %v1820, %v1828
    %v1831 = vsub.f32 %v1821, %v1829
    %v1832 = vmul.f32 %v1830, %v1830
    %v1833 = vmul.f32 %v1831, %v1831
    %v1834 = vsel %vm330, %v1832, 0.0
    %1835 = vadd.xlane.f32.xlu0 %v1834
    %v1836 = vpop.xlane.xlu0 %1835
    %v1837 = vsel %vm672, %v1833, 0.0
    %1838 = vadd.xlane.f32.xlu0 %v1837
    %v1839 = vpop.xlane.xlu0 %1838
    %v1840 = vmul.f32 %v1836, %v682
    %v1841 = vmul.f32 %v1839, %v682
    %v1842 = vadd.f32 %v1840, 1e-05
    %v1843 = vadd.f32 %v1841, 1e-05
    %v1844 = vrsqrt.pop %v1842
    %v1845 = vmul.f32 %v1844, %v1842
    %v1846 = vmul.f32 %v1845, %v1844
    %v1847 = vmul.f32 0.5, %v1846
    %v1848 = vsub.f32 1.5, %v1847
    %v1849 = vmul.f32 %v1844, %v1848
    %vm1850 = vweird.f32 %v1842
    %vm1851 = vweird.f32 %v1844
    %vm1852 = vmor %vm1850, %vm1851
    %v1853 = vsel %vm1852, %v1844, %v1849
    %v1854 = vrsqrt.pop %v1843
    %v1855 = vmul.f32 %v1854, %v1843
    %v1856 = vmul.f32 %v1855, %v1854
    %v1857 = vmul.f32 0.5, %v1856
    %v1858 = vsub.f32 1.5, %v1857
    %v1859 = vmul.f32 %v1854, %v1858
    %vm1860 = vweird.f32 %v1843
    %vm1861 = vweird.f32 %v1854
    %vm1862 = vmor %vm1860, %vm1861
    %v1863 = vsel %vm1862, %v1854, %v1859
    %v1864 = vmul.f32 %v1830, %v1853
    %v1865 = vmul.f32 %v1831, %v1863
    %v1867 = vperm.slane %v1529, 0
    %v1869 = vmul.f32 %v1864, %v1867
    %v1870 = vmul.f32 %v1865, %v1867
    %v1872 = vperm.slane %v1530, 0
    %v1874 = vadd.f32 %v1869, %v1872
    %v1875 = vadd.f32 %v1870, %v1872
    %v1877 = vperm.slane %v1537, 0
    %v1880 = vsel %vm330, %v1874, 0
    %v1883 = vsel %vm330, %v1875, 0
    %1885 = vmatpush.msra.mxu0 0.0
    %1886 = vmatpush.msra.mxu0 0.0
    %1887 = vmatpush.msra.mxu0 0.0
    %1888 = vmatpush.msra.mxu0 0.0
    %1889 = vmatpush.msra.mxu0 0.0
    %1890 = vmatpush.msra.mxu0 0.0
    %1891 = vmatpush.msra.mxu0 0.0
    %1892 = vmatpush.msra.mxu0 0.0
    %1893 = vmatpush.msra.mxu0 0.0
    %1894 = vmatpush.msra.mxu0 0.0
    %1895 = vmatpush.msra.mxu0 0.0
    %1896 = vmatpush.msra.mxu0 0.0
    %1897 = vmatpush.msra.mxu0 %v1536
    %1898 = vmatpush.msra.mxu0 %v1535
    %1899 = vmatpush.msra.mxu0 %v1534
    %1900 = vmatpush.msra.mxu0 %v1533
    %1901 = vmatmul.f32.gmra.mxu0 %v1880
    %v1902 = vpop.f32.mrf.mxu0
    %v1903 = vadd.f32 %v1877, %v1902
    %1904 = vmatmul.f32.gmra.mxu0 %v1883
    %v1905 = vpop.f32.mrf.mxu0
    %v1906 = vadd.f32 %v1877, %v1905
    %1907 = vdwg.mxu0
    %v1908 = vmul.f32 %v1903, %v1903
    %v1909 = vmul.f32 %v1906, %v1906
    %v1910 = vmul.f32 %v1903, %v1908
    %v1911 = vmul.f32 %v1906, %v1909
    %v1912 = vmul.f32 %v1910, 0.044715
    %v1913 = vmul.f32 %v1911, 0.044715
    %v1914 = vadd.f32 %v1903, %v1912
    %v1915 = vadd.f32 %v1906, %v1913
    %v1916 = vmul.f32 %v1914, 0.7978846
    %v1917 = vmul.f32 %v1915, 0.7978846
    %v1918 = vtanh.pop %v1916
    %v1919 = vtanh.pop %v1917
    %v1920 = vadd.f32 %v1918, 1.0
    %v1921 = vadd.f32 %v1919, 1.0
    %v1922 = vmul.f32 %v1920, 0.5
    %v1923 = vmul.f32 %v1921, 0.5
    %v1924 = vmul.f32 %v1903, %v1922
    %v1925 = vmul.f32 %v1906, %v1923
    %v1927 = vperm.slane %v1546, 0
    %v1930 = vsel %vm784, %v1924, 0
    %v1933 = vsel %vm784, %v1925, 0
    %1935 = vmatpush.msra.mxu0 0.0
    %1936 = vmatpush.msra.mxu0 0.0
    %1937 = vmatpush.msra.mxu0 0.0
    %1938 = vmatpush.msra.mxu0 0.0
    %1939 = vmatpush.msra.mxu0 0.0
    %1940 = vmatpush.msra.mxu0 0.0
    %1941 = vmatpush.msra.mxu0 0.0
    %1942 = vmatpush.msra.mxu0 0.0
    %1943 = vmatpush.msra.mxu0 %v1545
    %1944 = vmatpush.msra.mxu0 %v1544
    %1945 = vmatpush.msra.mxu0 %v1543
    %1946 = vmatpush.msra.mxu0 %v1542
    %1947 = vmatpush.msra.mxu0 %v1541
    %1948 = vmatpush.msra.mxu0 %v1540
    %1949 = vmatpush.msra.mxu0 %v1539
    %1950 = vmatpush.msra.mxu0 %v1538
    %1951 = vmatmul.f32.gmra.mxu0 %v1930
    %v1952 = vpop.f32.mrf.mxu0
    %v1953 = vadd.f32 %v1927, %v1952
    %1954 = vmatmul.f32.gmra.mxu0 %v1933
    %v1955 = vpop.f32.mrf.mxu0
    %v1956 = vadd.f32 %v1927, %v1955
    %1957 = vdwg.mxu0
    %v1958 = vadd.f32 %v1874, %v1953
    %v1959 = vadd.f32 %v1875, %v1956
    %v1960 = vsel %vm330, %v1958, 0.0
    %1961 = vadd.xlane.f32.xlu0 %v1960
    %v1962 = vpop.xlane.xlu0 %1961
    %v1963 = vsel %vm672, %v1959, 0.0
    %1964 = vadd.xlane.f32.xlu0 %v1963
    %v1965 = vpop.xlane.xlu0 %1964
    %v1966 = vmul.f32 %v1962, %v682
    %v1967 = vmul.f32 %v1965, %v682
    %v1968 = vsub.f32 %v1958, %v1966
    %v1969 = vsub.f32 %v1959, %v1967
    %v1970 = vmul.f32 %v1968, %v1968
    %v1971 = vmul.f32 %v1969, %v1969
    %v1972 = vsel %vm330, %v1970, 0.0
    %1973 = vadd.xlane.f32.xlu0 %v1972
    %v1974 = vpop.xlane.xlu0 %1973
    %v1975 = vsel %vm672, %v1971, 0.0
    %1976 = vadd.xlane.f32.xlu0 %v1975
    %v1977 = vpop.xlane.xlu0 %1976
    %v1978 = vmul.f32 %v1974, %v682
    %v1979 = vmul.f32 %v1977, %v682
    %v1980 = vadd.f32 %v1978, 1e-05
    %v1981 = vadd.f32 %v1979, 1e-05
    %v1982 = vrsqrt.pop %v1980
    %v1983 = vmul.f32 %v1982, %v1980
    %v1984 = vmul.f32 %v1983, %v1982
    %v1985 = vmul.f32 0.5, %v1984
    %v1986 = vsub.f32 1.5, %v1985
    %v1987 = vmul.f32 %v1982, %v1986
    %vm1988 = vweird.f32 %v1980
    %vm1989 = vweird.f32 %v1982
    %vm1990 = vmor %vm1988, %vm1989
    %v1991 = vsel %vm1990, %v1982, %v1987
    %v1992 = vrsqrt.pop %v1981
    %v1993 = vmul.f32 %v1992, %v1981
    %v1994 = vmul.f32 %v1993, %v1992
    %v1995 = vmul.f32 0.5, %v1994
    %v1996 = vsub.f32 1.5, %v1995
    %v1997 = vmul.f32 %v1992, %v1996
    %vm1998 = vweird.f32 %v1981
    %vm1999 = vweird.f32 %v1992
    %vm2000 = vmor %vm1998, %vm1999
    %v2001 = vsel %vm2000, %v1992, %v1997
    %v2002 = vmul.f32 %v1968, %v1991
    %v2003 = vmul.f32 %v1969, %v2001
    %v2005 = vperm.slane %v1531, 0
    %v2007 = vmul.f32 %v2002, %v2005
    %v2008 = vmul.f32 %v2003, %v2005
    %v2010 = vperm.slane %v1532, 0
    %v2012 = vadd.f32 %v2007, %v2010
    %v2013 = vadd.f32 %v2008, %v2010
    %v2014 = vld [vmem:[%s870] sm:$0xff]
    %v2015 = vld [vmem:[%s870 + $0x8] sm:$0xff]
    %v2016 = vld [vmem:[%s870 + $0x10] sm:$0xff]
    %v2017 = vld [vmem:[%s870 + $0x18] sm:$0xff]
    %v2018 = vld [vmem:[%s875] sm:$0x1]
    %2019 = vmatpush.msra.mxu0 0.0
    %2020 = vmatpush.msra.mxu0 0.0
    %2021 = vmatpush.msra.mxu0 0.0
    %2022 = vmatpush.msra.mxu0 0.0
    %2023 = vmatpush.msra.mxu0 0.0
    %2024 = vmatpush.msra.mxu0 0.0
    %2025 = vmatpush.msra.mxu0 0.0
    %2026 = vmatpush.msra.mxu0 0.0
    %2027 = vmatpush.msra.mxu0 0.0
    %2028 = vmatpush.msra.mxu0 0.0
    %2029 = vmatpush.msra.mxu0 0.0
    %2030 = vmatpush.msra.mxu0 0.0
    %2031 = vmatpush.msra.mxu0 %v2017
    %2032 = vmatpush.msra.mxu0 %v2016
    %2033 = vmatpush.msra.mxu0 %v2015
    %2034 = vmatpush.msra.mxu0 %v2014
    %2035 = vmatmul.f32.gmra.mxu0 %v1489
    %v2036 = vpop.f32.mrf.mxu0
    %v2037 = vadd.f32 %v2018, %v2036
    %2038 = vdwg.mxu0
    %v2039 = vsel %vm356, %v2037, %v2012
    %v2040 = vld [vmem:[%s898] sm:$0xff]
    %v2041 = vld [vmem:[%s898 + $0x8] sm:$0xff]
    %v2042 = vld [vmem:[%s898 + $0x10] sm:$0xff]
    %v2043 = vld [vmem:[%s898 + $0x18] sm:$0xff]
    %v2044 = vld [vmem:[%s903] sm:$0x1]
    %v2045 = vld [vmem:[%s905] sm:$0xff]
    %v2046 = vld [vmem:[%s905 + $0x8] sm:$0xff]
    %v2047 = vld [vmem:[%s905 + $0x10] sm:$0xff]
    %v2048 = vld [vmem:[%s905 + $0x18] sm:$0xff]
    %v2049 = vld [vmem:[%s910] sm:$0x1]
    %v2050 = vld [vmem:[%s912] sm:$0x1]
    %v2051 = vld [vmem:[%s914] sm:$0x1]
    %v2052 = vld [vmem:[%s916] sm:$0x1]
    %v2053 = vld [vmem:[%s918] sm:$0x1]
    %v2054 = vld [vmem:[%s920] sm:$0xff]
    %v2055 = vld [vmem:[%s920 + $0x8] sm:$0xff]
    %v2056 = vld [vmem:[%s920 + $0x10] sm:$0xff]
    %v2057 = vld [vmem:[%s920 + $0x18] sm:$0xff]
    %v2058 = vld [vmem:[%s925] sm:$0x1]
    %v2059 = vld [vmem:[%s927] sm:$0xff]
    %v2060 = vld [vmem:[%s927 + $0x8] sm:$0xff]
    %v2061 = vld [vmem:[%s927 + $0x10] sm:$0xff]
    %v2062 = vld [vmem:[%s927 + $0x18] sm:$0xff]
    %v2063 = vld [vmem:[%s927 + $0x20] sm:$0xff]
    %v2064 = vld [vmem:[%s927 + $0x28] sm:$0xff]
    %v2065 = vld [vmem:[%s927 + $0x30] sm:$0xff]
    %v2066 = vld [vmem:[%s927 + $0x38] sm:$0xff]
    %v2067 = vld [vmem:[%s936] sm:$0x1]
    %v2069 = vperm.slane %v2044, 0
    %v2072 = vsel %vm330, %v2039, 0
    %v2075 = vsel %vm330, %v2013, 0
    %2077 = vmatpush.msra.mxu0 0.0
    %2078 = vmatpush.msra.mxu0 0.0
    %2079 = vmatpush.msra.mxu0 0.0
    %2080 = vmatpush.msra.mxu0 0.0
    %2081 = vmatpush.msra.mxu0 0.0
    %2082 = vmatpush.msra.mxu0 0.0
    %2083 = vmatpush.msra.mxu0 0.0
    %2084 = vmatpush.msra.mxu0 0.0
    %2085 = vmatpush.msra.mxu0 0.0
    %2086 = vmatpush.msra.mxu0 0.0
    %2087 = vmatpush.msra.mxu0 0.0
    %2088 = vmatpush.msra.mxu0 0.0
    %2089 = vmatpush.msra.mxu0 %v2043
    %2090 = vmatpush.msra.mxu0 %v2042
    %2091 = vmatpush.msra.mxu0 %v2041
    %2092 = vmatpush.msra.mxu0 %v2040
    %2093 = vmatmul.f32.gmra.mxu0 %v2072
    %v2094 = vpop.f32.mrf.mxu0
    %v2095 = vadd.f32 %v2069, %v2094
    %2096 = vmatmul.f32.gmra.mxu0 %v2075
    %v2097 = vpop.f32.mrf.mxu0
    %v2098 = vadd.f32 %v2069, %v2097
    %2099 = vdwg.mxu0
    %2102 = vrot.lane.b32.xlu0 %v2095, 96
    %v2103 = vpop.permute.xlu0 %2102
    %2104 = vrot.lane.b32.xlu0 %v2098, 96
    %v2105 = vpop.permute.xlu0 %2104
    %v2106 = vsel %vm293, %v2095, 0
    %v2108 = vsel %vm293, %v2098, 0
    %v2110 = vsel %vm293, %v2103, 0
    %v2112 = vsel %vm293, %v2105, 0
    %2114 = vmatpush.xpose.msra.mxu0 0.0
    %2115 = vmatpush.xpose.msra.mxu0 0.0
    %2116 = vmatpush.xpose.msra.mxu0 0.0
    %2117 = vmatpush.xpose.msra.mxu0 0.0
    %2118 = vmatpush.xpose.msra.mxu0 0.0
    %2119 = vmatpush.xpose.msra.mxu0 0.0
    %2120 = vmatpush.xpose.msra.mxu0 0.0
    %2121 = vmatpush.xpose.msra.mxu0 0.0
    %2122 = vmatpush.xpose.msra.mxu0 0.0
    %2123 = vmatpush.xpose.msra.mxu0 0.0
    %2124 = vmatpush.xpose.msra.mxu0 0.0
    %2125 = vmatpush.xpose.msra.mxu0 0.0
    %2126 = vmatpush.xpose.msra.mxu0 0.0
    %2127 = vmatpush.xpose.msra.mxu0 0.0
    %2128 = vmatpush.xpose.msra.mxu0 %v2112
    %2129 = vmatpush.xpose.msra.mxu0 %v2110
    %2130 = vmatmul.f32.gmra.mxu0 %v2106
    %v2131 = vpop.f32.mrf.mxu0
    %v2132 = vadd.f32 0.0, %v2131
    %2133 = vmatmul.f32.gmra.mxu0 %v2108
    %v2134 = vpop.f32.mrf.mxu0
    %v2135 = vadd.f32 0.0, %v2134
    %2136 = vdwg.mxu0
    %v2137 = vmul.f32 %v2132, 0.25
    %v2138 = vmul.f32 %v2135, 0.25
    %v2139 = vadd.f32 %v2137, %v284
    %v2140 = vadd.f32 %v2138, %v285
    %v2141 = vsel %vm463, %v2139, -inf
    %2142 = vmax.xlane.f32.xlu0 %v2141
    %v2143 = vpop.xlane.xlu0 %2142
    %v2144 = vsel %vm467, %v2140, -inf
    %2145 = vmax.xlane.f32.xlu0 %v2144
    %v2146 = vpop.xlane.xlu0 %2145
    %v2147 = vsub.f32 %v2139, %v2143
    %v2148 = vsub.f32 %v2140, %v2146
    %v2149 = vmul.f32 %v2147, 1.442695
    %v2150 = vpow.pop %v2149
    %v2151 = vmul.f32 %v2148, 1.442695
    %v2152 = vpow.pop %v2151
    %v2153 = vsel %vm463, %v2150, 0.0
    %2154 = vadd.xlane.f32.xlu0 %v2153
    %v2155 = vpop.xlane.xlu0 %2154
    %v2156 = vsel %vm467, %v2152, 0.0
    %2157 = vadd.xlane.f32.xlu0 %v2156
    %v2158 = vpop.xlane.xlu0 %2157
    %v2159 = vrcp.pop %v2155
    %v2160 = vrcp.pop %v2158
    %v2161 = vmul.f32 %v2150, %v2159
    %v2162 = vmul.f32 %v2152, %v2160
    %2163 = vrot.lane.b32.xlu0 %v2095, 64
    %v2164 = vpop.permute.xlu0 %2163
    %2165 = vrot.lane.b32.xlu0 %v2098, 64
    %v2166 = vpop.permute.xlu0 %2165
    %v2169 = vsel %vm463, %v2161, 0
    %v2172 = vsel %vm463, %v2162, 0
    %v2174 = vsel %vm498, %v2166, 0
    %2176 = vmatpush.msra.mxu0 0.0
    %2177 = vmatpush.msra.mxu0 0.0
    %2178 = vmatpush.msra.mxu0 0.0
    %2179 = vmatpush.msra.mxu0 0.0
    %2180 = vmatpush.msra.mxu0 0.0
    %2181 = vmatpush.msra.mxu0 0.0
    %2182 = vmatpush.msra.mxu0 0.0
    %2183 = vmatpush.msra.mxu0 0.0
    %2184 = vmatpush.msra.mxu0 0.0
    %2185 = vmatpush.msra.mxu0 0.0
    %2186 = vmatpush.msra.mxu0 0.0
    %2187 = vmatpush.msra.mxu0 0.0
    %2188 = vmatpush.msra.mxu0 0.0
    %2189 = vmatpush.msra.mxu0 0.0
    %2190 = vmatpush.msra.mxu0 %v2174
    %2191 = vmatpush.msra.mxu0 %v2164
    %2192 = vmatmul.f32.gmra.mxu0 %v2169
    %v2193 = vpop.f32.mrf.mxu0
    %v2194 = vadd.f32 0.0, %v2193
    %2195 = vmatmul.f32.gmra.mxu0 %v2172
    %v2196 = vpop.f32.mrf.mxu0
    %v2197 = vadd.f32 0.0, %v2196
    %2198 = vdwg.mxu0
    %2199 = vrot.lane.b32.xlu0 %v2095, 112
    %v2200 = vpop.permute.xlu0 %2199
    %2201 = vrot.lane.b32.xlu0 %v2098, 112
    %v2202 = vpop.permute.xlu0 %2201
    %2203 = vrot.lane.b32.xlu0 %v2095, 80
    %v2204 = vpop.permute.xlu0 %2203
    %2205 = vrot.lane.b32.xlu0 %v2098, 80
    %v2206 = vpop.permute.xlu0 %2205
    %v2207 = vsel %vm293, %v2200, 0
    %v2209 = vsel %vm293, %v2202, 0
    %v2211 = vsel %vm293, %v2204, 0
    %v2213 = vsel %vm293, %v2206, 0
    %2215 = vmatpush.xpose.msra.mxu0 0.0
    %2216 = vmatpush.xpose.msra.mxu0 0.0
    %2217 = vmatpush.xpose.msra.mxu0 0.0
    %2218 = vmatpush.xpose.msra.mxu0 0.0
    %2219 = vmatpush.xpose.msra.mxu0 0.0
    %2220 = vmatpush.xpose.msra.mxu0 0.0
    %2221 = vmatpush.xpose.msra.mxu0 0.0
    %2222 = vmatpush.xpose.msra.mxu0 0.0
    %2223 = vmatpush.xpose.msra.mxu0 0.0
    %2224 = vmatpush.xpose.msra.mxu0 0.0
    %2225 = vmatpush.xpose.msra.mxu0 0.0
    %2226 = vmatpush.xpose.msra.mxu0 0.0
    %2227 = vmatpush.xpose.msra.mxu0 0.0
    %2228 = vmatpush.xpose.msra.mxu0 0.0
    %2229 = vmatpush.xpose.msra.mxu0 %v2213
    %2230 = vmatpush.xpose.msra.mxu0 %v2211
    %2231 = vmatmul.f32.gmra.mxu0 %v2207
    %v2232 = vpop.f32.mrf.mxu0
    %v2233 = vadd.f32 0.0, %v2232
    %2234 = vmatmul.f32.gmra.mxu0 %v2209
    %v2235 = vpop.f32.mrf.mxu0
    %v2236 = vadd.f32 0.0, %v2235
    %2237 = vdwg.mxu0
    %v2238 = vmul.f32 %v2233, 0.25
    %v2239 = vmul.f32 %v2236, 0.25
    %v2240 = vadd.f32 %v2238, %v284
    %v2241 = vadd.f32 %v2239, %v285
    %v2242 = vsel %vm463, %v2240, -inf
    %2243 = vmax.xlane.f32.xlu0 %v2242
    %v2244 = vpop.xlane.xlu0 %2243
    %v2245 = vsel %vm467, %v2241, -inf
    %2246 = vmax.xlane.f32.xlu0 %v2245
    %v2247 = vpop.xlane.xlu0 %2246
    %v2248 = vsub.f32 %v2240, %v2244
    %v2249 = vsub.f32 %v2241, %v2247
    %v2250 = vmul.f32 %v2248, 1.442695
    %v2251 = vpow.pop %v2250
    %v2252 = vmul.f32 %v2249, 1.442695
    %v2253 = vpow.pop %v2252
    %v2254 = vsel %vm463, %v2251, 0.0
    %2255 = vadd.xlane.f32.xlu0 %v2254
    %v2256 = vpop.xlane.xlu0 %2255
    %v2257 = vsel %vm467, %v2253, 0.0
    %2258 = vadd.xlane.f32.xlu0 %v2257
    %v2259 = vpop.xlane.xlu0 %2258
    %v2260 = vrcp.pop %v2256
    %v2261 = vrcp.pop %v2259
    %v2262 = vmul.f32 %v2251, %v2260
    %v2263 = vmul.f32 %v2253, %v2261
    %2264 = vrot.lane.b32.xlu0 %v2095, 48
    %v2265 = vpop.permute.xlu0 %2264
    %2266 = vrot.lane.b32.xlu0 %v2098, 48
    %v2267 = vpop.permute.xlu0 %2266
    %v2270 = vsel %vm463, %v2262, 0
    %v2273 = vsel %vm463, %v2263, 0
    %v2275 = vsel %vm498, %v2267, 0
    %2277 = vmatpush.msra.mxu0 0.0
    %2278 = vmatpush.msra.mxu0 0.0
    %2279 = vmatpush.msra.mxu0 0.0
    %2280 = vmatpush.msra.mxu0 0.0
    %2281 = vmatpush.msra.mxu0 0.0
    %2282 = vmatpush.msra.mxu0 0.0
    %2283 = vmatpush.msra.mxu0 0.0
    %2284 = vmatpush.msra.mxu0 0.0
    %2285 = vmatpush.msra.mxu0 0.0
    %2286 = vmatpush.msra.mxu0 0.0
    %2287 = vmatpush.msra.mxu0 0.0
    %2288 = vmatpush.msra.mxu0 0.0
    %2289 = vmatpush.msra.mxu0 0.0
    %2290 = vmatpush.msra.mxu0 0.0
    %2291 = vmatpush.msra.mxu0 %v2275
    %2292 = vmatpush.msra.mxu0 %v2265
    %2293 = vmatmul.f32.gmra.mxu0 %v2270
    %v2294 = vpop.f32.mrf.mxu0
    %v2295 = vadd.f32 0.0, %v2294
    %2296 = vmatmul.f32.gmra.mxu0 %v2273
    %v2297 = vpop.f32.mrf.mxu0
    %v2298 = vadd.f32 0.0, %v2297
    %2299 = vdwg.mxu0
    %2302 = vrot.lane.b32.xlu0 %v2295, 16
    %v2303 = vpop.permute.xlu0 %2302
    %2304 = vrot.lane.b32.xlu0 %v2298, 16
    %v2305 = vpop.permute.xlu0 %2304
    %v2308 = vsel %vm293, %v2194, %v2303
    %v2309 = vsel %vm293, %v2197, %v2305
    %v2311 = vperm.slane %v2049, 0
    %v2314 = vsel %vm330, %v2308, 0
    %v2317 = vsel %vm330, %v2309, 0
    %2319 = vmatpush.msra.mxu0 0.0
    %2320 = vmatpush.msra.mxu0 0.0
    %2321 = vmatpush.msra.mxu0 0.0
    %2322 = vmatpush.msra.mxu0 0.0
    %2323 = vmatpush.msra.mxu0 0.0
    %2324 = vmatpush.msra.mxu0 0.0
    %2325 = vmatpush.msra.mxu0 0.0
    %2326 = vmatpush.msra.mxu0 0.0
    %2327 = vmatpush.msra.mxu0 0.0
    %2328 = vmatpush.msra.mxu0 0.0
    %2329 = vmatpush.msra.mxu0 0.0
    %2330 = vmatpush.msra.mxu0 0.0
    %2331 = vmatpush.msra.mxu0 %v2048
    %2332 = vmatpush.msra.mxu0 %v2047
    %2333 = vmatpush.msra.mxu0 %v2046
    %2334 = vmatpush.msra.mxu0 %v2045
    %2335 = vmatmul.f32.gmra.mxu0 %v2314
    %v2336 = vpop.f32.mrf.mxu0
    %v2337 = vadd.f32 %v2311, %v2336
    %2338 = vmatmul.f32.gmra.mxu0 %v2317
    %v2339 = vpop.f32.mrf.mxu0
    %v2340 = vadd.f32 %v2311, %v2339
    %2341 = vdwg.mxu0
    %v2342 = vadd.f32 %v2039, %v2337
    %v2343 = vadd.f32 %v2013, %v2340
    %v2344 = vsel %vm330, %v2342, 0.0
    %2345 = vadd.xlane.f32.xlu0 %v2344
    %v2346 = vpop.xlane.xlu0 %2345
    %v2347 = vsel %vm672, %v2343, 0.0
    %2348 = vadd.xlane.f32.xlu0 %v2347
    %v2349 = vpop.xlane.xlu0 %2348
    %v2350 = vmul.f32 %v2346, %v682
    %v2351 = vmul.f32 %v2349, %v682
    %v2352 = vsub.f32 %v2342, %v2350
    %v2353 = vsub.f32 %v2343, %v2351
    %v2354 = vmul.f32 %v2352, %v2352
    %v2355 = vmul.f32 %v2353, %v2353
    %v2356 = vsel %vm330, %v2354, 0.0
    %2357 = vadd.xlane.f32.xlu0 %v2356
    %v2358 = vpop.xlane.xlu0 %2357
    %v2359 = vsel %vm672, %v2355, 0.0
    %2360 = vadd.xlane.f32.xlu0 %v2359
    %v2361 = vpop.xlane.xlu0 %2360
    %v2362 = vmul.f32 %v2358, %v682
    %v2363 = vmul.f32 %v2361, %v682
    %v2364 = vadd.f32 %v2362, 1e-05
    %v2365 = vadd.f32 %v2363, 1e-05
    %v2366 = vrsqrt.pop %v2364
    %v2367 = vmul.f32 %v2366, %v2364
    %v2368 = vmul.f32 %v2367, %v2366
    %v2369 = vmul.f32 0.5, %v2368
    %v2370 = vsub.f32 1.5, %v2369
    %v2371 = vmul.f32 %v2366, %v2370
    %vm2372 = vweird.f32 %v2364
    %vm2373 = vweird.f32 %v2366
    %vm2374 = vmor %vm2372, %vm2373
    %v2375 = vsel %vm2374, %v2366, %v2371
    %v2376 = vrsqrt.pop %v2365
    %v2377 = vmul.f32 %v2376, %v2365
    %v2378 = vmul.f32 %v2377, %v2376
    %v2379 = vmul.f32 0.5, %v2378
    %v2380 = vsub.f32 1.5, %v2379
    %v2381 = vmul.f32 %v2376, %v2380
    %vm2382 = vweird.f32 %v2365
    %vm2383 = vweird.f32 %v2376
    %vm2384 = vmor %vm2382, %vm2383
    %v2385 = vsel %vm2384, %v2376, %v2381
    %v2386 = vmul.f32 %v2352, %v2375
    %v2387 = vmul.f32 %v2353, %v2385
    %v2389 = vperm.slane %v2050, 0
    %v2391 = vmul.f32 %v2386, %v2389
    %v2392 = vmul.f32 %v2387, %v2389
    %v2394 = vperm.slane %v2051, 0
    %v2396 = vadd.f32 %v2391, %v2394
    %v2397 = vadd.f32 %v2392, %v2394
    %v2399 = vperm.slane %v2058, 0
    %v2402 = vsel %vm330, %v2396, 0
    %v2405 = vsel %vm330, %v2397, 0
    %2407 = vmatpush.msra.mxu0 0.0
    %2408 = vmatpush.msra.mxu0 0.0
    %2409 = vmatpush.msra.mxu0 0.0
    %2410 = vmatpush.msra.mxu0 0.0
    %2411 = vmatpush.msra.mxu0 0.0
    %2412 = vmatpush.msra.mxu0 0.0
    %2413 = vmatpush.msra.mxu0 0.0
    %2414 = vmatpush.msra.mxu0 0.0
    %2415 = vmatpush.msra.mxu0 0.0
    %2416 = vmatpush.msra.mxu0 0.0
    %2417 = vmatpush.msra.mxu0 0.0
    %2418 = vmatpush.msra.mxu0 0.0
    %2419 = vmatpush.msra.mxu0 %v2057
    %2420 = vmatpush.msra.mxu0 %v2056
    %2421 = vmatpush.msra.mxu0 %v2055
    %2422 = vmatpush.msra.mxu0 %v2054
    %2423 = vmatmul.f32.gmra.mxu0 %v2402
    %v2424 = vpop.f32.mrf.mxu0
    %v2425 = vadd.f32 %v2399, %v2424
    %2426 = vmatmul.f32.gmra.mxu0 %v2405
    %v2427 = vpop.f32.mrf.mxu0
    %v2428 = vadd.f32 %v2399, %v2427
    %2429 = vdwg.mxu0
    %v2430 = vmul.f32 %v2425, %v2425
    %v2431 = vmul.f32 %v2428, %v2428
    %v2432 = vmul.f32 %v2425, %v2430
    %v2433 = vmul.f32 %v2428, %v2431
    %v2434 = vmul.f32 %v2432, 0.044715
    %v2435 = vmul.f32 %v2433, 0.044715
    %v2436 = vadd.f32 %v2425, %v2434
    %v2437 = vadd.f32 %v2428, %v2435
    %v2438 = vmul.f32 %v2436, 0.7978846
    %v2439 = vmul.f32 %v2437, 0.7978846
    %v2440 = vtanh.pop %v2438
    %v2441 = vtanh.pop %v2439
    %v2442 = vadd.f32 %v2440, 1.0
    %v2443 = vadd.f32 %v2441, 1.0
    %v2444 = vmul.f32 %v2442, 0.5
    %v2445 = vmul.f32 %v2443, 0.5
    %v2446 = vmul.f32 %v2425, %v2444
    %v2447 = vmul.f32 %v2428, %v2445
    %v2449 = vperm.slane %v2067, 0
    %v2452 = vsel %vm784, %v2446, 0
    %v2455 = vsel %vm784, %v2447, 0
    %2457 = vmatpush.msra.mxu0 0.0
    %2458 = vmatpush.msra.mxu0 0.0
    %2459 = vmatpush.msra.mxu0 0.0
    %2460 = vmatpush.msra.mxu0 0.0
    %2461 = vmatpush.msra.mxu0 0.0
    %2462 = vmatpush.msra.mxu0 0.0
    %2463 = vmatpush.msra.mxu0 0.0
    %2464 = vmatpush.msra.mxu0 0.0
    %2465 = vmatpush.msra.mxu0 %v2066
    %2466 = vmatpush.msra.mxu0 %v2065
    %2467 = vmatpush.msra.mxu0 %v2064
    %2468 = vmatpush.msra.mxu0 %v2063
    %2469 = vmatpush.msra.mxu0 %v2062
    %2470 = vmatpush.msra.mxu0 %v2061
    %2471 = vmatpush.msra.mxu0 %v2060
    %2472 = vmatpush.msra.mxu0 %v2059
    %2473 = vmatmul.f32.gmra.mxu0 %v2452
    %v2474 = vpop.f32.mrf.mxu0
    %v2475 = vadd.f32 %v2449, %v2474
    %2476 = vmatmul.f32.gmra.mxu0 %v2455
    %v2477 = vpop.f32.mrf.mxu0
    %v2478 = vadd.f32 %v2449, %v2477
    %2479 = vdwg.mxu0
    %v2480 = vadd.f32 %v2396, %v2475
    %v2481 = vadd.f32 %v2397, %v2478
    %v2482 = vsel %vm330, %v2480, 0.0
    %2483 = vadd.xlane.f32.xlu0 %v2482
    %v2484 = vpop.xlane.xlu0 %2483
    %v2485 = vsel %vm672, %v2481, 0.0
    %2486 = vadd.xlane.f32.xlu0 %v2485
    %v2487 = vpop.xlane.xlu0 %2486
    %v2488 = vmul.f32 %v2484, %v682
    %v2489 = vmul.f32 %v2487, %v682
    %v2490 = vsub.f32 %v2480, %v2488
    %v2491 = vsub.f32 %v2481, %v2489
    %v2492 = vmul.f32 %v2490, %v2490
    %v2493 = vmul.f32 %v2491, %v2491
    %v2494 = vsel %vm330, %v2492, 0.0
    %2495 = vadd.xlane.f32.xlu0 %v2494
    %v2496 = vpop.xlane.xlu0 %2495
    %v2497 = vsel %vm672, %v2493, 0.0
    %2498 = vadd.xlane.f32.xlu0 %v2497
    %v2499 = vpop.xlane.xlu0 %2498
    %v2500 = vmul.f32 %v2496, %v682
    %v2501 = vmul.f32 %v2499, %v682
    %v2502 = vadd.f32 %v2500, 1e-05
    %v2503 = vadd.f32 %v2501, 1e-05
    %v2504 = vrsqrt.pop %v2502
    %v2505 = vmul.f32 %v2504, %v2502
    %v2506 = vmul.f32 %v2505, %v2504
    %v2507 = vmul.f32 0.5, %v2506
    %v2508 = vsub.f32 1.5, %v2507
    %v2509 = vmul.f32 %v2504, %v2508
    %vm2510 = vweird.f32 %v2502
    %vm2511 = vweird.f32 %v2504
    %vm2512 = vmor %vm2510, %vm2511
    %v2513 = vsel %vm2512, %v2504, %v2509
    %v2514 = vrsqrt.pop %v2503
    %v2515 = vmul.f32 %v2514, %v2503
    %v2516 = vmul.f32 %v2515, %v2514
    %v2517 = vmul.f32 0.5, %v2516
    %v2518 = vsub.f32 1.5, %v2517
    %v2519 = vmul.f32 %v2514, %v2518
    %vm2520 = vweird.f32 %v2503
    %vm2521 = vweird.f32 %v2514
    %vm2522 = vmor %vm2520, %vm2521
    %v2523 = vsel %vm2522, %v2514, %v2519
    %v2524 = vmul.f32 %v2490, %v2513
    %v2525 = vmul.f32 %v2491, %v2523
    %v2527 = vperm.slane %v2052, 0
    %v2529 = vmul.f32 %v2524, %v2527
    %v2530 = vmul.f32 %v2525, %v2527
    %v2532 = vperm.slane %v2053, 0
    %v2534 = vadd.f32 %v2529, %v2532
    %v2535 = vadd.f32 %v2530, %v2532
    %v2536 = vld [vmem:[%s5] sm:$0xff]
    %v2537 = vld [vmem:[%s5 + $0x8] sm:$0xff]
    %v2538 = vld [vmem:[%s5 + $0x10] sm:$0xff]
    %v2539 = vld [vmem:[%s5 + $0x18] sm:$0xff]
    %v2540 = vld [vmem:[#allocation6] sm:$0x1]
    %v2542 = vperm.slane %v2540, 0
    %v2546 = vrot.slane %v2534, 5
    %v2547 = vrot.slane %v2535, 5
    %v2548 = vsel %vm1416, %v2546, %v2547
    %v2549 = vsel %vm330, %v2548, 0
    %2551 = vmatpush.msra.mxu0 0.0
    %2552 = vmatpush.msra.mxu0 0.0
    %2553 = vmatpush.msra.mxu0 0.0
    %2554 = vmatpush.msra.mxu0 0.0
    %2555 = vmatpush.msra.mxu0 0.0
    %2556 = vmatpush.msra.mxu0 0.0
    %2557 = vmatpush.msra.mxu0 0.0
    %2558 = vmatpush.msra.mxu0 0.0
    %2559 = vmatpush.msra.mxu0 0.0
    %2560 = vmatpush.msra.mxu0 0.0
    %2561 = vmatpush.msra.mxu0 0.0
    %2562 = vmatpush.msra.mxu0 0.0
    %2563 = vmatpush.msra.mxu0 %v2539
    %2564 = vmatpush.msra.mxu0 %v2538
    %2565 = vmatpush.msra.mxu0 %v2537
    %2566 = vmatpush.msra.mxu0 %v2536
    %2567 = vmatmul.f32.gmra.mxu0 %v2549
    %v2568 = vpop.f32.mrf.mxu0
    %v2569 = vadd.f32 %v2542, %v2568
    %2570 = vdwg.mxu0
    %v2571 = vperm.slane %v1446, 3
    %v2572 = vadd.f32 %v2569, %v2571
    %s2573 = scalar_lea.vmem %s21, 8
    %2574 = vst.msk [vmem:[%s2573] sm:$0xff] %vm293, %v2572
    // Predicated region
    $region138: #{transformer_vae_forward.5} parent=1 // pred_check
      _
    $region139: #{transformer_vae_forward.5} parent=1 // pred_check_branch
      %2576 = sbr.rel (0) target = $region141
    $region140: #{transformer_vae_forward.5} parent=1 // pred_region
      _
    $region141: #{transformer_vae_forward.5} parent=1 // pred_fallthru
      _
    // Predicated region
    $region142: #{transformer_vae_forward.5} parent=1 // pred_check
      _
    $region143: #{transformer_vae_forward.5} parent=1 // pred_check_branch
      %2578 = sbr.rel (0) target = $region145
    $region144: #{transformer_vae_forward.5} parent=1 // pred_region
      _
    $region145: #{transformer_vae_forward.5} parent=1 // pred_fallthru
      _
    %2579 = vsyncpa [#allocation3], 1
    %2580 = vsyncpa [#allocation5], 1
    %2581 = vsyncpa [#allocation8], 1
    %2582 = vsyncpa [#allocation11], 1
    %2583 = vsyncpa [#allocation14], 1
    %2584 = vsyncpa [#allocation17], 1
    %2585 = vsyncpa [#allocation20], 1

</llo_original>
